<compile_context>
chip_gen: v7x
topology: tpu7x:2x2x1
jax: 0.10.0
libtpu: 0.0.40
codegen_flags: <defaults>
</compile_context>

<pallas_src>
import functools

import jax
import jax.numpy as jnp
from jax import lax
from jax.experimental import pallas as pl
from jax.experimental.pallas import tpu as pltpu


# ----------------------------------------------------------------------------
# Fused kernel: conv1 (7x7 / s2 / p3) + folded BN + ReLU + maxpool (3x3/s2/p1)
# ----------------------------------------------------------------------------
def _stem_kernel(x_ref, w_ref, b_ref, o_ref, rhs_e_ref, rhs_o_ref, cm_ref):
    """One grid step = one image x one strip of TRp pooled output rows.

    x_ref : (1, 8*C, Hh, Wv)  parity planes of the zero-padded input.
            slab index = (row_parity*4 + col_residue)*C + c, and
            plane[pr, sc, c][u, v] = xpad[c, 2u+pr, 4v+sc]  (xpad: top pad 5,
            left pad 3, so conv row g / tap ki lives at plane row u = g+ki//2+1).
    w_ref : (Cout, K_pad)     BN-scale-folded weights, K order = (ki, kj, c).
    b_ref : (Cout, 1)         folded BN bias (f32).
    o_ref : (1, Cout, TRp, Wp) pooled output strip, written directly in NCHW.
    """
    cin = x_ref.shape[1] // 8
    cout = o_ref.shape[1]
    trp = o_ref.shape[2]          # pool rows per grid step
    wp = o_ref.shape[3]           # pooled width
    n_conv_rows = 2 * trp + 1     # conv rows needed by this strip

    # plane-row base for this strip (= 2 * first pool row of the strip)
    row0 = 2 * pl.program_id(1) * trp

    # Zero the K-padding rows once per step (uninitialised VMEM could hold NaN
    # and 0 * NaN = NaN even though the matching lhs columns are zero).
    rhs_e_ref[...] = jnp.zeros_like(rhs_e_ref)
    rhs_o_ref[...] = jnp.zeros_like(rhs_o_ref)

    w = w_ref[...]                          # (Cout, K_pad)
    bias = b_ref[...]                       # (Cout, 1) f32
    zcol = jnp.zeros((cout, 1), jnp.float32)

    def conv_row(j, carry):
        # Global conv row g = 2*rp0 - 1 + j (g = -1 only for the first strip;
        # it is the pool's top padding and gets masked to 0 below).
        for ki in range(7):
            a, pr = ki // 2, ki % 2
            u = row0 + j + a                # plane row (dynamic)
            for kj in range(7):
                k0 = cin * (ki * 7 + kj)
                # conv at even output cols (wo = 2*wp): padded col 4*wp + kj
                sc, bc = kj % 4, kj // 4
                slab = (pr * 4 + sc) * cin
                rhs_e_ref[k0:k0 + cin, :] = x_ref[0, slab:slab + cin, u,
                                                  bc:bc + wp]
                # conv at odd output cols (wo = 2*wp+1): padded col 4*wp + kj+2
                sc, bc = (kj + 2) % 4, (kj + 2) // 4
                slab = (pr * 4 + sc) * cin
                rhs_o_ref[k0:k0 + cin, :] = x_ref[0, slab:slab + cin, u,
                                                  bc:bc + wp]

        ce = jnp.dot(w, rhs_e_ref[...], preferred_element_type=jnp.float32)
        co = jnp.dot(w, rhs_o_ref[...], preferred_element_type=jnp.float32)
        ce = jnp.maximum(ce + bias, 0.0)    # BN bias + ReLU (scale in weights)
        co = jnp.maximum(co + bias, 0.0)

        # Column part of the 3x3/s2 pool for this conv row:
        #   max(conv[2wp-1], conv[2wp], conv[2wp+1]).
        # conv[2wp-1] = odd-column result shifted by one lane; the injected
        # zero column is the pool's left padding (safe: values are >= 0).
        co_left = jnp.concatenate([zcol, co[:, :wp - 1]], axis=1)
        colmax = jnp.maximum(jnp.maximum(ce, co), co_left)

        # Conv row g = -1 (first strip only) is the pool's top padding.
        colmax = jnp.where(row0 + j >= 1, colmax, 0.0)
        cm_ref[j] = colmax
        return carry

    lax.fori_loop(0, n_conv_rows, conv_row, 0)

    # Row part of the pool: pool row hp uses conv rows 2hp-1, 2hp, 2hp+1.
    for hp in range(trp):
        o_ref[0, :, hp, :] = jnp.maximum(
            jnp.maximum(cm_ref[2 * hp], cm_ref[2 * hp + 1]),
            cm_ref[2 * hp + 2])


# ----------------------------------------------------------------------------
# Wrapper: parameter folding, parity-plane prep (3-channel tensors only)
# ----------------------------------------------------------------------------
def visible_net_resnet_forward(x, params, *, compute_dtype=jnp.bfloat16,
                               pool_rows_per_step=8):
    """x: NCHW float32.  Returns NCHW float32 = maxpool(relu(bn(conv1(x))))."""
    n, c, h, w = x.shape
    assert h % 4 == 0 and w % 4 == 0, "spatial dims must be divisible by 4"
    cout = params["conv_w"].shape[0]
    hp, wp = h // 4, w // 4               # pooled output size
    hh, wv = h // 2 + 4, w // 4 + 2       # parity-plane size
    eps = 1e-5

    scale = params["bn_gamma"] * lax.rsqrt(params["bn_var"] + eps)
    bias = (params["bn_beta"] - params["bn_mean"] * scale)
    bias = bias.astype(jnp.float32).reshape(cout, 1)

    # Fold the BN scale into the conv weights; K order = (ki, kj, c), padded
    # to a multiple of 128 (2 x 128 lanes for C=3).
    k_real = 49 * c
    k_pad = max(256, ((k_real + 127) // 128) * 128)
    wmat = (params["conv_w"] * scale[:, None, None, None])
    wmat = wmat.transpose(0, 2, 3, 1).reshape(cout, k_real)
    wmat = jnp.pad(wmat, ((0, 0), (0, k_pad - k_real))).astype(compute_dtype)

    # Zero-pad and split the (3-channel) input into 8 parity planes
    # (row parity mod 2) x (column residue mod 4): every tap of the 7x7/s2
    # conv and every pool candidate becomes a unit-stride slice in the kernel.
    # Extra top rows (+2) cover the pool's top padding row (conv row -1).
    xp = jnp.pad(x, ((0, 0), (0, 0), (5, 3), (3, 5)))
    planes = xp.reshape(n, c, hh, 2, wv, 4).transpose(0, 3, 5, 1, 2, 4)
    planes = planes.reshape(n, 8 * c, hh, wv).astype(compute_dtype)

    trp = pool_rows_per_step
    if hp % trp != 0 or trp % 8 != 0:
        trp = hp                          # one strip per image
    r_steps = hp // trp

    out = pl.pallas_call(
        _stem_kernel,
        out_shape=jax.ShapeDtypeStruct((n, cout, hp, wp), jnp.float32),
        grid=(n, r_steps),
        in_specs=[
            # whole per-image plane stack stays resident across the strip axis
            pl.BlockSpec((1, 8 * c, hh, wv), lambda b, r: (b, 0, 0, 0)),
            pl.BlockSpec((cout, k_pad), lambda b, r: (0, 0)),
            pl.BlockSpec((cout, 1), lambda b, r: (0, 0)),
        ],
        out_specs=pl.BlockSpec((1, cout, trp, wp), lambda b, r: (b, 0, r, 0)),
        scratch_shapes=[
            pltpu.VMEM((k_pad, wp), compute_dtype),      # rhs, even conv cols
            pltpu.VMEM((k_pad, wp), compute_dtype),      # rhs, odd conv cols
            pltpu.VMEM((2 * trp + 1, cout, wp), jnp.float32),  # col-pooled rows
        ],
        compiler_params=pltpu.CompilerParams(
            dimension_semantics=("parallel", "parallel")),
    )(planes, wmat, bias)
    return out


# ----------------------------------------------------------------------------
# Pure-JAX reference for verification
# ----------------------------------------------------------------------------
def reference_forward(x, params):
    eps = 1e-5
    y = lax.conv_general_dilated(
        x, params["conv_w"], window_strides=(2, 2), padding=((3, 3), (3, 3)),
        dimension_numbers=("NCHW", "OIHW", "NCHW"))
    scale = params["bn_gamma"] / jnp.sqrt(params["bn_var"] + eps)
    bias = params["bn_beta"] - params["bn_mean"] * scale
    y = y * scale[None, :, None, None] + bias[None, :, None, None]
    y = jnp.maximum(y, 0.0)
    y = lax.reduce_window(y, -jnp.inf, lax.max,
                          window_dimensions=(1, 1, 3, 3),
                          window_strides=(1, 1, 2, 2),
                          padding=((0, 0), (0, 0), (1, 1), (1, 1)))
    return y


if __name__ == "__main__":
    key = jax.random.PRNGKey(0)
    k1, k2, k3, k4, k5, k6 = jax.random.split(key, 6)
    N, Cin, H, W, Cout = 2, 3, 32, 32, 64  # resnet18 stem: conv1 is 3 -> 64

    x = jax.random.normal(k1, (N, Cin, H, W), jnp.float32)
    params = dict(
        conv_w=jax.random.normal(k2, (Cout, Cin, 7, 7), jnp.float32) * 0.05,
        bn_gamma=jax.random.uniform(k3, (Cout,), jnp.float32, 0.5, 1.5),
        bn_beta=jax.random.normal(k4, (Cout,), jnp.float32) * 0.1,
        bn_mean=jax.random.normal(k5, (Cout,), jnp.float32) * 0.1,
        bn_var=jax.random.uniform(k6, (Cout,), jnp.float32, 0.5, 1.5),
    )

    ref = reference_forward(x, params)

    # 1) f32 compute path: proves the fused kernel's indexing / math is exact.
    fwd_f32 = jax.jit(functools.partial(visible_net_resnet_forward,
                                        compute_dtype=jnp.float32))
    out_f32 = jax.block_until_ready(fwd_f32(x, params))
    assert out_f32.shape == (N, Cout, H // 4, W // 4), out_f32.shape
    assert jnp.allclose(out_f32, ref, rtol=1e-3, atol=1e-3), float(
        jnp.max(jnp.abs(out_f32 - ref)))

    # 2) default bf16-MXU / f32-accumulate path (v6e/v7x recommendation).
    fwd_bf16 = jax.jit(visible_net_resnet_forward)
    out_bf16 = jax.block_until_ready(fwd_bf16(x, params))
    assert out_bf16.shape == (N, Cout, H // 4, W // 4), out_bf16.shape
    assert jnp.allclose(out_bf16, ref, rtol=2e-2, atol=2.5e-2), float(
        jnp.max(jnp.abs(out_bf16 - ref)))

    print("KERNEL_OK")
</pallas_src>

<mosaic_0001>
module attributes {stable_mosaic.version = 11 : i64} {
  func.func @_stem_kernel(%arg0: i32, %arg1: i32, %arg2: memref<1x24x20x10xf32, #tpu.memory_space<vmem>>, %arg3: memref<64x256xf32, #tpu.memory_space<vmem>>, %arg4: memref<64x1xf32, #tpu.memory_space<vmem>>, %arg5: memref<1x64x8x8xf32, #tpu.memory_space<vmem>>, %arg6: memref<256x8xf32, #tpu.memory_space<vmem>>, %arg7: memref<256x8xf32, #tpu.memory_space<vmem>>, %arg8: memref<17x64x8xf32, #tpu.memory_space<vmem>>) attributes {dimension_semantics = [#tpu.dimension_semantics<parallel>, #tpu.dimension_semantics<parallel>], iteration_bounds = array<i64: 2, 1>, scalar_prefetch = 0 : i64, scratch_operands = 3 : i64, tpu.core_type = #tpu.core_type<tc>, window_params = [{transform_indices = @transform_0, window_bounds = array<i64: 1, 24, 20, 10>}, {pipeline_mode = #tpu.pipeline_mode<synchronous>, transform_indices = @transform_1, window_bounds = array<i64: 64, 256>}, {pipeline_mode = #tpu.pipeline_mode<synchronous>, transform_indices = @transform_2, window_bounds = array<i64: 64, 1>}, {transform_indices = @transform_3, window_bounds = array<i64: 1, 64, 8, 8>}]} {
    %c2_i32 = arith.constant 2 : i32
    %0 = arith.muli %c2_i32, %arg1 : i32
    %c8_i32 = arith.constant 8 : i32
    %1 = arith.muli %0, %c8_i32 : i32
    %cst = arith.constant 0.000000e+00 : f32
    %2 = vector.broadcast %cst : f32 to vector<256x8xf32>
    %c0 = arith.constant 0 : index
    %c0_0 = arith.constant 0 : index
    %3 = vector.load %arg6[%c0, %c0_0] : memref<256x8xf32, #tpu.memory_space<vmem>>, vector<256x8xf32>
    tpu.vector_store %arg6[%c0, %c0_0], %2 {strides = array<i32>} : memref<256x8xf32, #tpu.memory_space<vmem>>, vector<256x8xf32>,
    %cst_1 = arith.constant 0.000000e+00 : f32
    %4 = vector.broadcast %cst_1 : f32 to vector<256x8xf32>
    %c0_2 = arith.constant 0 : index
    %c0_3 = arith.constant 0 : index
    %5 = vector.load %arg7[%c0_2, %c0_3] : memref<256x8xf32, #tpu.memory_space<vmem>>, vector<256x8xf32>
    tpu.vector_store %arg7[%c0_2, %c0_3], %4 {strides = array<i32>} : memref<256x8xf32, #tpu.memory_space<vmem>>, vector<256x8xf32>,
    %c0_4 = arith.constant 0 : index
    %c0_5 = arith.constant 0 : index
    %6 = vector.load %arg3[%c0_4, %c0_5] : memref<64x256xf32, #tpu.memory_space<vmem>>, vector<64x256xf32>
    %c0_6 = arith.constant 0 : index
    %c0_7 = arith.constant 0 : index
    %7 = vector.load %arg4[%c0_6, %c0_7] : memref<64x1xf32, #tpu.memory_space<vmem>>, vector<64x1xf32>
    %cst_8 = arith.constant 0.000000e+00 : f32
    %8 = vector.broadcast %cst_8 : f32 to vector<64x1xf32>
    %c0_i32 = arith.constant 0 : i32
    %c17_i32 = arith.constant 17 : i32
    %9 = arith.addi %c0_i32, %c17_i32 : i32
    %c1_i32 = arith.constant 1 : i32
    scf.for %arg9 = %c0_i32 to %9 step %c1_i32  : i32 {
      %98 = arith.addi %1, %arg9 : i32
      %c0_i32_98 = arith.constant 0 : i32
      %99 = arith.addi %98, %c0_i32_98 : i32
      %c0_99 = arith.constant 0 : index
      %c0_100 = arith.constant 0 : index
      %100 = arith.index_cast %99 : i32 to index
      %c0_101 = arith.constant 0 : index
      %101 = vector.load %arg2[%c0_99, %c0_100, %100, %c0_101] : memref<1x24x20x10xf32, #tpu.memory_space<vmem>>, vector<1x3x1x8xf32>
      %102 = vector.shape_cast %101 : vector<1x3x1x8xf32> to vector<3x8xf32>
      %c0_102 = arith.constant 0 : index
      %c0_103 = arith.constant 0 : index
      %103 = vector.load %arg6[%c0_102, %c0_103] : memref<256x8xf32, #tpu.memory_space<vmem>>, vector<3x8xf32>
      tpu.vector_store %arg6[%c0_102, %c0_103], %102 {strides = array<i32>} : memref<256x8xf32, #tpu.memory_space<vmem>>, vector<3x8xf32>,
      %c0_104 = arith.constant 0 : index
      %c6_105 = arith.constant 6 : index
      %104 = arith.index_cast %99 : i32 to index
      %c0_106 = arith.constant 0 : index
      %105 = vector.load %arg2[%c0_104, %c6_105, %104, %c0_106] : memref<1x24x20x10xf32, #tpu.memory_space<vmem>>, vector<1x3x1x8xf32>
      %106 = vector.shape_cast %105 : vector<1x3x1x8xf32> to vector<3x8xf32>
      %c0_107 = arith.constant 0 : index
      %c0_108 = arith.constant 0 : index
      %107 = vector.load %arg7[%c0_107, %c0_108] : memref<256x8xf32, #tpu.memory_space<vmem>>, vector<3x8xf32>
      tpu.vector_store %arg7[%c0_107, %c0_108], %106 {strides = array<i32>} : memref<256x8xf32, #tpu.memory_space<vmem>>, vector<3x8xf32>,
      %c0_109 = arith.constant 0 : index
      %c3_110 = arith.constant 3 : index
      %108 = arith.index_cast %99 : i32 to index
      %c0_111 = arith.constant 0 : index
      %109 = vector.load %arg2[%c0_109, %c3_110, %108, %c0_111] : memref<1x24x20x10xf32, #tpu.memory_space<vmem>>, vector<1x3x1x8xf32>
      %110 = vector.shape_cast %109 : vector<1x3x1x8xf32> to vector<3x8xf32>
      %c3_112 = arith.constant 3 : index
      %c0_113 = arith.constant 0 : index
      %111 = vector.load %arg6[%c3_112, %c0_113] : memref<256x8xf32, #tpu.memory_space<vmem>>, vector<3x8xf32>
      tpu.vector_store %arg6[%c3_112, %c0_113], %110 {strides = array<i32>} : memref<256x8xf32, #tpu.memory_space<vmem>>, vector<3x8xf32>,
      %c0_114 = arith.constant 0 : index
      %c9_115 = arith.constant 9 : index
      %112 = arith.index_cast %99 : i32 to index
      %c0_116 = arith.constant 0 : index
      %113 = vector.load %arg2[%c0_114, %c9_115, %112, %c0_116] : memref<1x24x20x10xf32, #tpu.memory_space<vmem>>, vector<1x3x1x8xf32>
      %114 = vector.shape_cast %113 : vector<1x3x1x8xf32> to vector<3x8xf32>
      %c3_117 = arith.constant 3 : index
      %c0_118 = arith.constant 0 : index
      %115 = vector.load %arg7[%c3_117, %c0_118] : memref<256x8xf32, #tpu.memory_space<vmem>>, vector<3x8xf32>
      tpu.vector_store %arg7[%c3_117, %c0_118], %114 {strides = array<i32>} : memref<256x8xf32, #tpu.memory_space<vmem>>, vector<3x8xf32>,
      %c0_119 = arith.constant 0 : index
      %c6_120 = arith.constant 6 : index
      %116 = arith.index_cast %99 : i32 to index
      %c0_121 = arith.constant 0 : index
      %117 = vector.load %arg2[%c0_119, %c6_120, %116, %c0_121] : memref<1x24x20x10xf32, #tpu.memory_space<vmem>>, vector<1x3x1x8xf32>
      %118 = vector.shape_cast %117 : vector<1x3x1x8xf32> to vector<3x8xf32>
      %c6_122 = arith.constant 6 : index
      %c0_123 = arith.constant 0 : index
      %119 = vector.load %arg6[%c6_122, %c0_123] : memref<256x8xf32, #tpu.memory_space<vmem>>, vector<3x8xf32>
      tpu.vector_store %arg6[%c6_122, %c0_123], %118 {strides = array<i32>} : memref<256x8xf32, #tpu.memory_space<vmem>>, vector<3x8xf32>,
      %c0_124 = arith.constant 0 : index
      %c0_125 = arith.constant 0 : index
      %120 = arith.index_cast %99 : i32 to index
      %c1_126 = arith.constant 1 : index
      %121 = vector.load %arg2[%c0_124, %c0_125, %120, %c1_126] : memref<1x24x20x10xf32, #tpu.memory_space<vmem>>, vector<1x3x1x8xf32>
      %122 = vector.shape_cast %121 : vector<1x3x1x8xf32> to vector<3x8xf32>
      %c6_127 = arith.constant 6 : index
      %c0_128 = arith.constant 0 : index
      %123 = vector.load %arg7[%c6_127, %c0_128] : memref<256x8xf32, #tpu.memory_space<vmem>>, vector<3x8xf32>
      tpu.vector_store %arg7[%c6_127, %c0_128], %122 {strides = array<i32>} : memref<256x8xf32, #tpu.memory_space<vmem>>, vector<3x8xf32>,
      %c0_129 = arith.constant 0 : index
      %c9_130 = arith.constant 9 : index
      %124 = arith.index_cast %99 : i32 to index
      %c0_131 = arith.constant 0 : index
      %125 = vector.load %arg2[%c0_129, %c9_130, %124, %c0_131] : memref<1x24x20x10xf32, #tpu.memory_space<vmem>>, vector<1x3x1x8xf32>
      %126 = vector.shape_cast %125 : vector<1x3x1x8xf32> to vector<3x8xf32>
      %c9_132 = arith.constant 9 : index
      %c0_133 = arith.constant 0 : index
      %127 = vector.load %arg6[%c9_132, %c0_133] : memref<256x8xf32, #tpu.memory_space<vmem>>, vector<3x8xf32>
      tpu.vector_store %arg6[%c9_132, %c0_133], %126 {strides = array<i32>} : memref<256x8xf32, #tpu.memory_space<vmem>>, vector<3x8xf32>,
      %c0_134 = arith.constant 0 : index
      %c3_135 = arith.constant 3 : index
      %128 = arith.index_cast %99 : i32 to index
      %c1_136 = arith.constant 1 : index
      %129 = vector.load %arg2[%c0_134, %c3_135, %128, %c1_136] : memref<1x24x20x10xf32, #tpu.memory_space<vmem>>, vector<1x3x1x8xf32>
      %130 = vector.shape_cast %129 : vector<1x3x1x8xf32> to vector<3x8xf32>
      %c9_137 = arith.constant 9 : index
      %c0_138 = arith.constant 0 : index
      %131 = vector.load %arg7[%c9_137, %c0_138] : memref<256x8xf32, #tpu.memory_space<vmem>>, vector<3x8xf32>
      tpu.vector_store %arg7[%c9_137, %c0_138], %130 {strides = array<i32>} : memref<256x8xf32, #tpu.memory_space<vmem>>, vector<3x8xf32>,
      %c0_139 = arith.constant 0 : index
      %c0_140 = arith.constant 0 : index
      %132 = arith.index_cast %99 : i32 to index
      %c1_141 = arith.constant 1 : index
      %133 = vector.load %arg2[%c0_139, %c0_140, %132, %c1_141] : memref<1x24x20x10xf32, #tpu.memory_space<vmem>>, vector<1x3x1x8xf32>
      %134 = vector.shape_cast %133 : vector<1x3x1x8xf32> to vector<3x8xf32>
      %c12_142 = arith.constant 12 : index
      %c0_143 = arith.constant 0 : index
      %135 = vector.load %arg6[%c12_142, %c0_143] : memref<256x8xf32, #tpu.memory_space<vmem>>, vector<3x8xf32>
      tpu.vector_store %arg6[%c12_142, %c0_143], %134 {strides = array<i32>} : memref<256x8xf32, #tpu.memory_space<vmem>>, vector<3x8xf32>,
      %c0_144 = arith.constant 0 : index
      %c6_145 = arith.constant 6 : index
      %136 = arith.index_cast %99 : i32 to index
      %c1_146 = arith.constant 1 : index
      %137 = vector.load %arg2[%c0_144, %c6_145, %136, %c1_146] : memref<1x24x20x10xf32, #tpu.memory_space<vmem>>, vector<1x3x1x8xf32>
      %138 = vector.shape_cast %137 : vector<1x3x1x8xf32> to vector<3x8xf32>
      %c12_147 = arith.constant 12 : index
      %c0_148 = arith.constant 0 : index
      %139 = vector.load %arg7[%c12_147, %c0_148] : memref<256x8xf32, #tpu.memory_space<vmem>>, vector<3x8xf32>
      tpu.vector_store %arg7[%c12_147, %c0_148], %138 {strides = array<i32>} : memref<256x8xf32, #tpu.memory_space<vmem>>, vector<3x8xf32>,
      %c0_149 = arith.constant 0 : index
      %c3_150 = arith.constant 3 : index
      %140 = arith.index_cast %99 : i32 to index
      %c1_151 = arith.constant 1 : index
      %141 = vector.load %arg2[%c0_149, %c3_150, %140, %c1_151] : memref<1x24x20x10xf32, #tpu.memory_space<vmem>>, vector<1x3x1x8xf32>
      %142 = vector.shape_cast %141 : vector<1x3x1x8xf32> to vector<3x8xf32>
      %c15_152 = arith.constant 15 : index
      %c0_153 = arith.constant 0 : index
      %143 = vector.load %arg6[%c15_152, %c0_153] : memref<256x8xf32, #tpu.memory_space<vmem>>, vector<3x8xf32>
      tpu.vector_store %arg6[%c15_152, %c0_153], %142 {strides = array<i32>} : memref<256x8xf32, #tpu.memory_space<vmem>>, vector<3x8xf32>,
      %c0_154 = arith.constant 0 : index
      %c9_155 = arith.constant 9 : index
      %144 = arith.index_cast %99 : i32 to index
      %c1_156 = arith.constant 1 : index
      %145 = vector.load %arg2[%c0_154, %c9_155, %144, %c1_156] : memref<1x24x20x10xf32, #tpu.memory_space<vmem>>, vector<1x3x1x8xf32>
      %146 = vector.shape_cast %145 : vector<1x3x1x8xf32> to vector<3x8xf32>
      %c15_157 = arith.constant 15 : index
      %c0_158 = arith.constant 0 : index
      %147 = vector.load %arg7[%c15_157, %c0_158] : memref<256x8xf32, #tpu.memory_space<vmem>>, vector<3x8xf32>
      tpu.vector_store %arg7[%c15_157, %c0_158], %146 {strides = array<i32>} : memref<256x8xf32, #tpu.memory_space<vmem>>, vector<3x8xf32>,
      %c0_159 = arith.constant 0 : index
      %c6_160 = arith.constant 6 : index
      %148 = arith.index_cast %99 : i32 to index
      %c1_161 = arith.constant 1 : index
      %149 = vector.load %arg2[%c0_159, %c6_160, %148, %c1_161] : memref<1x24x20x10xf32, #tpu.memory_space<vmem>>, vector<1x3x1x8xf32>
      %150 = vector.shape_cast %149 : vector<1x3x1x8xf32> to vector<3x8xf32>
      %c18 = arith.constant 18 : index
      %c0_162 = arith.constant 0 : index
      %151 = vector.load %arg6[%c18, %c0_162] : memref<256x8xf32, #tpu.memory_space<vmem>>, vector<3x8xf32>
      tpu.vector_store %arg6[%c18, %c0_162], %150 {strides = array<i32>} : memref<256x8xf32, #tpu.memory_space<vmem>>, vector<3x8xf32>,
      %c0_163 = arith.constant 0 : index
      %c0_164 = arith.constant 0 : index
      %152 = arith.index_cast %99 : i32 to index
      %c2_165 = arith.constant 2 : index
      %153 = vector.load %arg2[%c0_163, %c0_164, %152, %c2_165] : memref<1x24x20x10xf32, #tpu.memory_space<vmem>>, vector<1x3x1x8xf32>
      %154 = vector.shape_cast %153 : vector<1x3x1x8xf32> to vector<3x8xf32>
      %c18_166 = arith.constant 18 : index
      %c0_167 = arith.constant 0 : index
      %155 = vector.load %arg7[%c18_166, %c0_167] : memref<256x8xf32, #tpu.memory_space<vmem>>, vector<3x8xf32>
      tpu.vector_store %arg7[%c18_166, %c0_167], %154 {strides = array<i32>} : memref<256x8xf32, #tpu.memory_space<vmem>>, vector<3x8xf32>,
      %156 = arith.addi %1, %arg9 : i32
      %c0_i32_168 = arith.constant 0 : i32
      %157 = arith.addi %156, %c0_i32_168 : i32
      %c0_169 = arith.constant 0 : index
      %c12_170 = arith.constant 12 : index
      %158 = arith.index_cast %157 : i32 to index
      %c0_171 = arith.constant 0 : index
      %159 = vector.load %arg2[%c0_169, %c12_170, %158, %c0_171] : memref<1x24x20x10xf32, #tpu.memory_space<vmem>>, vector<1x3x1x8xf32>
      %160 = vector.shape_cast %159 : vector<1x3x1x8xf32> to vector<3x8xf32>
      %c21 = arith.constant 21 : index
      %c0_172 = arith.constant 0 : index
      %161 = vector.load %arg6[%c21, %c0_172] : memref<256x8xf32, #tpu.memory_space<vmem>>, vector<3x8xf32>
      tpu.vector_store %arg6[%c21, %c0_172], %160 {strides = array<i32>} : memref<256x8xf32, #tpu.memory_space<vmem>>, vector<3x8xf32>,
      %c0_173 = arith.constant 0 : index
      %c18_174 = arith.constant 18 : index
      %162 = arith.index_cast %157 : i32 to index
      %c0_175 = arith.constant 0 : index
      %163 = vector.load %arg2[%c0_173, %c18_174, %162, %c0_175] : memref<1x24x20x10xf32, #tpu.memory_space<vmem>>, vector<1x3x1x8xf32>
      %164 = vector.shape_cast %163 : vector<1x3x1x8xf32> to vector<3x8xf32>
      %c21_176 = arith.constant 21 : index
      %c0_177 = arith.constant 0 : index
      %165 = vector.load %arg7[%c21_176, %c0_177] : memref<256x8xf32, #tpu.memory_space<vmem>>, vector<3x8xf32>
      tpu.vector_store %arg7[%c21_176, %c0_177], %164 {strides = array<i32>} : memref<256x8xf32, #tpu.memory_space<vmem>>, vector<3x8xf32>,
      %c0_178 = arith.constant 0 : index
      %c15_179 = arith.constant 15 : index
      %166 = arith.index_cast %157 : i32 to index
      %c0_180 = arith.constant 0 : index
      %167 = vector.load %arg2[%c0_178, %c15_179, %166, %c0_180] : memref<1x24x20x10xf32, #tpu.memory_space<vmem>>, vector<1x3x1x8xf32>
      %168 = vector.shape_cast %167 : vector<1x3x1x8xf32> to vector<3x8xf32>
      %c24 = arith.constant 24 : index
      %c0_181 = arith.constant 0 : index
      %169 = vector.load %arg6[%c24, %c0_181] : memref<256x8xf32, #tpu.memory_space<vmem>>, vector<3x8xf32>
      tpu.vector_store %arg6[%c24, %c0_181], %168 {strides = array<i32>} : memref<256x8xf32, #tpu.memory_space<vmem>>, vector<3x8xf32>,
      %c0_182 = arith.constant 0 : index
      %c21_183 = arith.constant 21 : index
      %170 = arith.index_cast %157 : i32 to index
      %c0_184 = arith.constant 0 : index
      %171 = vector.load %arg2[%c0_182, %c21_183, %170, %c0_184] : memref<1x24x20x10xf32, #tpu.memory_space<vmem>>, vector<1x3x1x8xf32>
      %172 = vector.shape_cast %171 : vector<1x3x1x8xf32> to vector<3x8xf32>
      %c24_185 = arith.constant 24 : index
      %c0_186 = arith.constant 0 : index
      %173 = vector.load %arg7[%c24_185, %c0_186] : memref<256x8xf32, #tpu.memory_space<vmem>>, vector<3x8xf32>
      tpu.vector_store %arg7[%c24_185, %c0_186], %172 {strides = array<i32>} : memref<256x8xf32, #tpu.memory_space<vmem>>, vector<3x8xf32>,
      %c0_187 = arith.constant 0 : index
      %c18_188 = arith.constant 18 : index
      %174 = arith.index_cast %157 : i32 to index
      %c0_189 = arith.constant 0 : index
      %175 = vector.load %arg2[%c0_187, %c18_188, %174, %c0_189] : memref<1x24x20x10xf32, #tpu.memory_space<vmem>>, vector<1x3x1x8xf32>
      %176 = vector.shape_cast %175 : vector<1x3x1x8xf32> to vector<3x8xf32>
      %c27 = arith.constant 27 : index
      %c0_190 = arith.constant 0 : index
      %177 = vector.load %arg6[%c27, %c0_190] : memref<256x8xf32, #tpu.memory_space<vmem>>, vector<3x8xf32>
      tpu.vector_store %arg6[%c27, %c0_190], %176 {strides = array<i32>} : memref<256x8xf32, #tpu.memory_space<vmem>>, vector<3x8xf32>,
      %c0_191 = arith.constant 0 : index
      %c12_192 = arith.constant 12 : index
      %178 = arith.index_cast %157 : i32 to index
      %c1_193 = arith.constant 1 : index
      %179 = vector.load %arg2[%c0_191, %c12_192, %178, %c1_193] : memref<1x24x20x10xf32, #tpu.memory_space<vmem>>, vector<1x3x1x8xf32>
      %180 = vector.shape_cast %179 : vector<1x3x1x8xf32> to vector<3x8xf32>
      %c27_194 = arith.constant 27 : index
      %c0_195 = arith.constant 0 : index
      %181 = vector.load %arg7[%c27_194, %c0_195] : memref<256x8xf32, #tpu.memory_space<vmem>>, vector<3x8xf32>
      tpu.vector_store %arg7[%c27_194, %c0_195], %180 {strides = array<i32>} : memref<256x8xf32, #tpu.memory_space<vmem>>, vector<3x8xf32>,
      %c0_196 = arith.constant 0 : index
      %c21_197 = arith.constant 21 : index
      %182 = arith.index_cast %157 : i32 to index
      %c0_198 = arith.constant 0 : index
      %183 = vector.load %arg2[%c0_196, %c21_197, %182, %c0_198] : memref<1x24x20x10xf32, #tpu.memory_space<vmem>>, vector<1x3x1x8xf32>
      %184 = vector.shape_cast %183 : vector<1x3x1x8xf32> to vector<3x8xf32>
      %c30 = arith.constant 30 : index
      %c0_199 = arith.constant 0 : index
      %185 = vector.load %arg6[%c30, %c0_199] : memref<256x8xf32, #tpu.memory_space<vmem>>, vector<3x8xf32>
      tpu.vector_store %arg6[%c30, %c0_199], %184 {strides = array<i32>} : memref<256x8xf32, #tpu.memory_space<vmem>>, vector<3x8xf32>,
      %c0_200 = arith.constant 0 : index
      %c15_201 = arith.constant 15 : index
      %186 = arith.index_cast %157 : i32 to index
      %c1_202 = arith.constant 1 : index
      %187 = vector.load %arg2[%c0_200, %c15_201, %186, %c1_202] : memref<1x24x20x10xf32, #tpu.memory_space<vmem>>, vector<1x3x1x8xf32>
      %188 = vector.shape_cast %187 : vector<1x3x1x8xf32> to vector<3x8xf32>
      %c30_203 = arith.constant 30 : index
      %c0_204 = arith.constant 0 : index
      %189 = vector.load %arg7[%c30_203, %c0_204] : memref<256x8xf32, #tpu.memory_space<vmem>>, vector<3x8xf32>
      tpu.vector_store %arg7[%c30_203, %c0_204], %188 {strides = array<i32>} : memref<256x8xf32, #tpu.memory_space<vmem>>, vector<3x8xf32>,
      %c0_205 = arith.constant 0 : index
      %c12_206 = arith.constant 12 : index
      %190 = arith.index_cast %157 : i32 to index
      %c1_207 = arith.constant 1 : index
      %191 = vector.load %arg2[%c0_205, %c12_206, %190, %c1_207] : memref<1x24x20x10xf32, #tpu.memory_space<vmem>>, vector<1x3x1x8xf32>
      %192 = vector.shape_cast %191 : vector<1x3x1x8xf32> to vector<3x8xf32>
      %c33 = arith.constant 33 : index
      %c0_208 = arith.constant 0 : index
      %193 = vector.load %arg6[%c33, %c0_208] : memref<256x8xf32, #tpu.memory_space<vmem>>, vector<3x8xf32>
      tpu.vector_store %arg6[%c33, %c0_208], %192 {strides = array<i32>} : memref<256x8xf32, #tpu.memory_space<vmem>>, vector<3x8xf32>,
      %c0_209 = arith.constant 0 : index
      %c18_210 = arith.constant 18 : index
      %194 = arith.index_cast %157 : i32 to index
      %c1_211 = arith.constant 1 : index
      %195 = vector.load %arg2[%c0_209, %c18_210, %194, %c1_211] : memref<1x24x20x10xf32, #tpu.memory_space<vmem>>, vector<1x3x1x8xf32>
      %196 = vector.shape_cast %195 : vector<1x3x1x8xf32> to vector<3x8xf32>
      %c33_212 = arith.constant 33 : index
      %c0_213 = arith.constant 0 : index
      %197 = vector.load %arg7[%c33_212, %c0_213] : memref<256x8xf32, #tpu.memory_space<vmem>>, vector<3x8xf32>
      tpu.vector_store %arg7[%c33_212, %c0_213], %196 {strides = array<i32>} : memref<256x8xf32, #tpu.memory_space<vmem>>, vector<3x8xf32>,
      %c0_214 = arith.constant 0 : index
      %c15_215 = arith.constant 15 : index
      %198 = arith.index_cast %157 : i32 to index
      %c1_216 = arith.constant 1 : index
      %199 = vector.load %arg2[%c0_214, %c15_215, %198, %c1_216] : memref<1x24x20x10xf32, #tpu.memory_space<vmem>>, vector<1x3x1x8xf32>
      %200 = vector.shape_cast %199 : vector<1x3x1x8xf32> to vector<3x8xf32>
      %c36 = arith.constant 36 : index
      %c0_217 = arith.constant 0 : index
      %201 = vector.load %arg6[%c36, %c0_217] : memref<256x8xf32, #tpu.memory_space<vmem>>, vector<3x8xf32>
      tpu.vector_store %arg6[%c36, %c0_217], %200 {strides = array<i32>} : memref<256x8xf32, #tpu.memory_space<vmem>>, vector<3x8xf32>,
      %c0_218 = arith.constant 0 : index
      %c21_219 = arith.constant 21 : index
      %202 = arith.index_cast %157 : i32 to index
      %c1_220 = arith.constant 1 : index
      %203 = vector.load %arg2[%c0_218, %c21_219, %202, %c1_220] : memref<1x24x20x10xf32, #tpu.memory_space<vmem>>, vector<1x3x1x8xf32>
      %204 = vector.shape_cast %203 : vector<1x3x1x8xf32> to vector<3x8xf32>
      %c36_221 = arith.constant 36 : index
      %c0_222 = arith.constant 0 : index
      %205 = vector.load %arg7[%c36_221, %c0_222] : memref<256x8xf32, #tpu.memory_space<vmem>>, vector<3x8xf32>
      tpu.vector_store %arg7[%c36_221, %c0_222], %204 {strides = array<i32>} : memref<256x8xf32, #tpu.memory_space<vmem>>, vector<3x8xf32>,
      %c0_223 = arith.constant 0 : index
      %c18_224 = arith.constant 18 : index
      %206 = arith.index_cast %157 : i32 to index
      %c1_225 = arith.constant 1 : index
      %207 = vector.load %arg2[%c0_223, %c18_224, %206, %c1_225] : memref<1x24x20x10xf32, #tpu.memory_space<vmem>>, vector<1x3x1x8xf32>
      %208 = vector.shape_cast %207 : vector<1x3x1x8xf32> to vector<3x8xf32>
      %c39 = arith.constant 39 : index
      %c0_226 = arith.constant 0 : index
      %209 = vector.load %arg6[%c39, %c0_226] : memref<256x8xf32, #tpu.memory_space<vmem>>, vector<3x8xf32>
      tpu.vector_store %arg6[%c39, %c0_226], %208 {strides = array<i32>} : memref<256x8xf32, #tpu.memory_space<vmem>>, vector<3x8xf32>,
      %c0_227 = arith.constant 0 : index
      %c12_228 = arith.constant 12 : index
      %210 = arith.index_cast %157 : i32 to index
      %c2_229 = arith.constant 2 : index
      %211 = vector.load %arg2[%c0_227, %c12_228, %210, %c2_229] : memref<1x24x20x10xf32, #tpu.memory_space<vmem>>, vector<1x3x1x8xf32>
      %212 = vector.shape_cast %211 : vector<1x3x1x8xf32> to vector<3x8xf32>
      %c39_230 = arith.constant 39 : index
      %c0_231 = arith.constant 0 : index
      %213 = vector.load %arg7[%c39_230, %c0_231] : memref<256x8xf32, #tpu.memory_space<vmem>>, vector<3x8xf32>
      tpu.vector_store %arg7[%c39_230, %c0_231], %212 {strides = array<i32>} : memref<256x8xf32, #tpu.memory_space<vmem>>, vector<3x8xf32>,
      %214 = arith.addi %1, %arg9 : i32
      %c1_i32_232 = arith.constant 1 : i32
      %215 = arith.addi %214, %c1_i32_232 : i32
      %c0_233 = arith.constant 0 : index
      %c0_234 = arith.constant 0 : index
      %216 = arith.index_cast %215 : i32 to index
      %c0_235 = arith.constant 0 : index
      %217 = vector.load %arg2[%c0_233, %c0_234, %216, %c0_235] : memref<1x24x20x10xf32, #tpu.memory_space<vmem>>, vector<1x3x1x8xf32>
      %218 = vector.shape_cast %217 : vector<1x3x1x8xf32> to vector<3x8xf32>
      %c42 = arith.constant 42 : index
      %c0_236 = arith.constant 0 : index
      %219 = vector.load %arg6[%c42, %c0_236] : memref<256x8xf32, #tpu.memory_space<vmem>>, vector<3x8xf32>
      tpu.vector_store %arg6[%c42, %c0_236], %218 {strides = array<i32>} : memref<256x8xf32, #tpu.memory_space<vmem>>, vector<3x8xf32>,
      %c0_237 = arith.constant 0 : index
      %c6_238 = arith.constant 6 : index
      %220 = arith.index_cast %215 : i32 to index
      %c0_239 = arith.constant 0 : index
      %221 = vector.load %arg2[%c0_237, %c6_238, %220, %c0_239] : memref<1x24x20x10xf32, #tpu.memory_space<vmem>>, vector<1x3x1x8xf32>
      %222 = vector.shape_cast %221 : vector<1x3x1x8xf32> to vector<3x8xf32>
      %c42_240 = arith.constant 42 : index
      %c0_241 = arith.constant 0 : index
      %223 = vector.load %arg7[%c42_240, %c0_241] : memref<256x8xf32, #tpu.memory_space<vmem>>, vector<3x8xf32>
      tpu.vector_store %arg7[%c42_240, %c0_241], %222 {strides = array<i32>} : memref<256x8xf32, #tpu.memory_space<vmem>>, vector<3x8xf32>,
      %c0_242 = arith.constant 0 : index
      %c3_243 = arith.constant 3 : index
      %224 = arith.index_cast %215 : i32 to index
      %c0_244 = arith.constant 0 : index
      %225 = vector.load %arg2[%c0_242, %c3_243, %224, %c0_244] : memref<1x24x20x10xf32, #tpu.memory_space<vmem>>, vector<1x3x1x8xf32>
      %226 = vector.shape_cast %225 : vector<1x3x1x8xf32> to vector<3x8xf32>
      %c45 = arith.constant 45 : index
      %c0_245 = arith.constant 0 : index
      %227 = vector.load %arg6[%c45, %c0_245] : memref<256x8xf32, #tpu.memory_space<vmem>>, vector<3x8xf32>
      tpu.vector_store %arg6[%c45, %c0_245], %226 {strides = array<i32>} : memref<256x8xf32, #tpu.memory_space<vmem>>, vector<3x8xf32>,
      %c0_246 = arith.constant 0 : index
      %c9_247 = arith.constant 9 : index
      %228 = arith.index_cast %215 : i32 to index
      %c0_248 = arith.constant 0 : index
      %229 = vector.load %arg2[%c0_246, %c9_247, %228, %c0_248] : memref<1x24x20x10xf32, #tpu.memory_space<vmem>>, vector<1x3x1x8xf32>
      %230 = vector.shape_cast %229 : vector<1x3x1x8xf32> to vector<3x8xf32>
      %c45_249 = arith.constant 45 : index
      %c0_250 = arith.constant 0 : index
      %231 = vector.load %arg7[%c45_249, %c0_250] : memref<256x8xf32, #tpu.memory_space<vmem>>, vector<3x8xf32>
      tpu.vector_store %arg7[%c45_249, %c0_250], %230 {strides = array<i32>} : memref<256x8xf32, #tpu.memory_space<vmem>>, vector<3x8xf32>,
      %c0_251 = arith.constant 0 : index
      %c6_252 = arith.constant 6 : index
      %232 = arith.index_cast %215 : i32 to index
      %c0_253 = arith.constant 0 : index
      %233 = vector.load %arg2[%c0_251, %c6_252, %232, %c0_253] : memref<1x24x20x10xf32, #tpu.memory_space<vmem>>, vector<1x3x1x8xf32>
      %234 = vector.shape_cast %233 : vector<1x3x1x8xf32> to vector<3x8xf32>
      %c48 = arith.constant 48 : index
      %c0_254 = arith.constant 0 : index
      %235 = vector.load %arg6[%c48, %c0_254] : memref<256x8xf32, #tpu.memory_space<vmem>>, vector<3x8xf32>
      tpu.vector_store %arg6[%c48, %c0_254], %234 {strides = array<i32>} : memref<256x8xf32, #tpu.memory_space<vmem>>, vector<3x8xf32>,
      %c0_255 = arith.constant 0 : index
      %c0_256 = arith.constant 0 : index
      %236 = arith.index_cast %215 : i32 to index
      %c1_257 = arith.constant 1 : index
      %237 = vector.load %arg2[%c0_255, %c0_256, %236, %c1_257] : memref<1x24x20x10xf32, #tpu.memory_space<vmem>>, vector<1x3x1x8xf32>
      %238 = vector.shape_cast %237 : vector<1x3x1x8xf32> to vector<3x8xf32>
      %c48_258 = arith.constant 48 : index
      %c0_259 = arith.constant 0 : index
      %239 = vector.load %arg7[%c48_258, %c0_259] : memref<256x8xf32, #tpu.memory_space<vmem>>, vector<3x8xf32>
      tpu.vector_store %arg7[%c48_258, %c0_259], %238 {strides = array<i32>} : memref<256x8xf32, #tpu.memory_space<vmem>>, vector<3x8xf32>,
      %c0_260 = arith.constant 0 : index
      %c9_261 = arith.constant 9 : index
      %240 = arith.index_cast %215 : i32 to index
      %c0_262 = arith.constant 0 : index
      %241 = vector.load %arg2[%c0_260, %c9_261, %240, %c0_262] : memref<1x24x20x10xf32, #tpu.memory_space<vmem>>, vector<1x3x1x8xf32>
      %242 = vector.shape_cast %241 : vector<1x3x1x8xf32> to vector<3x8xf32>
      %c51 = arith.constant 51 : index
      %c0_263 = arith.constant 0 : index
      %243 = vector.load %arg6[%c51, %c0_263] : memref<256x8xf32, #tpu.memory_space<vmem>>, vector<3x8xf32>
      tpu.vector_store %arg6[%c51, %c0_263], %242 {strides = array<i32>} : memref<256x8xf32, #tpu.memory_space<vmem>>, vector<3x8xf32>,
      %c0_264 = arith.constant 0 : index
      %c3_265 = arith.constant 3 : index
      %244 = arith.index_cast %215 : i32 to index
      %c1_266 = arith.constant 1 : index
      %245 = vector.load %arg2[%c0_264, %c3_265, %244, %c1_266] : memref<1x24x20x10xf32, #tpu.memory_space<vmem>>, vector<1x3x1x8xf32>
      %246 = vector.shape_cast %245 : vector<1x3x1x8xf32> to vector<3x8xf32>
      %c51_267 = arith.constant 51 : index
      %c0_268 = arith.constant 0 : index
      %247 = vector.load %arg7[%c51_267, %c0_268] : memref<256x8xf32, #tpu.memory_space<vmem>>, vector<3x8xf32>
      tpu.vector_store %arg7[%c51_267, %c0_268], %246 {strides = array<i32>} : memref<256x8xf32, #tpu.memory_space<vmem>>, vector<3x8xf32>,
      %c0_269 = arith.constant 0 : index
      %c0_270 = arith.constant 0 : index
      %248 = arith.index_cast %215 : i32 to index
      %c1_271 = arith.constant 1 : index
      %249 = vector.load %arg2[%c0_269, %c0_270, %248, %c1_271] : memref<1x24x20x10xf32, #tpu.memory_space<vmem>>, vector<1x3x1x8xf32>
      %250 = vector.shape_cast %249 : vector<1x3x1x8xf32> to vector<3x8xf32>
      %c54 = arith.constant 54 : index
      %c0_272 = arith.constant 0 : index
      %251 = vector.load %arg6[%c54, %c0_272] : memref<256x8xf32, #tpu.memory_space<vmem>>, vector<3x8xf32>
      tpu.vector_store %arg6[%c54, %c0_272], %250 {strides = array<i32>} : memref<256x8xf32, #tpu.memory_space<vmem>>, vector<3x8xf32>,
      %c0_273 = arith.constant 0 : index
      %c6_274 = arith.constant 6 : index
      %252 = arith.index_cast %215 : i32 to index
      %c1_275 = arith.constant 1 : index
      %253 = vector.load %arg2[%c0_273, %c6_274, %252, %c1_275] : memref<1x24x20x10xf32, #tpu.memory_space<vmem>>, vector<1x3x1x8xf32>
      %254 = vector.shape_cast %253 : vector<1x3x1x8xf32> to vector<3x8xf32>
      %c54_276 = arith.constant 54 : index
      %c0_277 = arith.constant 0 : index
      %255 = vector.load %arg7[%c54_276, %c0_277] : memref<256x8xf32, #tpu.memory_space<vmem>>, vector<3x8xf32>
      tpu.vector_store %arg7[%c54_276, %c0_277], %254 {strides = array<i32>} : memref<256x8xf32, #tpu.memory_space<vmem>>, vector<3x8xf32>,
      %c0_278 = arith.constant 0 : index
      %c3_279 = arith.constant 3 : index
      %256 = arith.index_cast %215 : i32 to index
      %c1_280 = arith.constant 1 : index
      %257 = vector.load %arg2[%c0_278, %c3_279, %256, %c1_280] : memref<1x24x20x10xf32, #tpu.memory_space<vmem>>, vector<1x3x1x8xf32>
      %258 = vector.shape_cast %257 : vector<1x3x1x8xf32> to vector<3x8xf32>
      %c57 = arith.constant 57 : index
      %c0_281 = arith.constant 0 : index
      %259 = vector.load %arg6[%c57, %c0_281] : memref<256x8xf32, #tpu.memory_space<vmem>>, vector<3x8xf32>
      tpu.vector_store %arg6[%c57, %c0_281], %258 {strides = array<i32>} : memref<256x8xf32, #tpu.memory_space<vmem>>, vector<3x8xf32>,
      %c0_282 = arith.constant 0 : index
      %c9_283 = arith.constant 9 : index
      %260 = arith.index_cast %215 : i32 to index
      %c1_284 = arith.constant 1 : index
      %261 = vector.load %arg2[%c0_282, %c9_283, %260, %c1_284] : memref<1x24x20x10xf32, #tpu.memory_space<vmem>>, vector<1x3x1x8xf32>
      %262 = vector.shape_cast %261 : vector<1x3x1x8xf32> to vector<3x8xf32>
      %c57_285 = arith.constant 57 : index
      %c0_286 = arith.constant 0 : index
      %263 = vector.load %arg7[%c57_285, %c0_286] : memref<256x8xf32, #tpu.memory_space<vmem>>, vector<3x8xf32>
      tpu.vector_store %arg7[%c57_285, %c0_286], %262 {strides = array<i32>} : memref<256x8xf32, #tpu.memory_space<vmem>>, vector<3x8xf32>,
      %c0_287 = arith.constant 0 : index
      %c6_288 = arith.constant 6 : index
      %264 = arith.index_cast %215 : i32 to index
      %c1_289 = arith.constant 1 : index
      %265 = vector.load %arg2[%c0_287, %c6_288, %264, %c1_289] : memref<1x24x20x10xf32, #tpu.memory_space<vmem>>, vector<1x3x1x8xf32>
      %266 = vector.shape_cast %265 : vector<1x3x1x8xf32> to vector<3x8xf32>
      %c60 = arith.constant 60 : index
      %c0_290 = arith.constant 0 : index
      %267 = vector.load %arg6[%c60, %c0_290] : memref<256x8xf32, #tpu.memory_space<vmem>>, vector<3x8xf32>
      tpu.vector_store %arg6[%c60, %c0_290], %266 {strides = array<i32>} : memref<256x8xf32, #tpu.memory_space<vmem>>, vector<3x8xf32>,
      %c0_291 = arith.constant 0 : index
      %c0_292 = arith.constant 0 : index
      %268 = arith.index_cast %215 : i32 to index
      %c2_293 = arith.constant 2 : index
      %269 = vector.load %arg2[%c0_291, %c0_292, %268, %c2_293] : memref<1x24x20x10xf32, #tpu.memory_space<vmem>>, vector<1x3x1x8xf32>
      %270 = vector.shape_cast %269 : vector<1x3x1x8xf32> to vector<3x8xf32>
      %c60_294 = arith.constant 60 : index
      %c0_295 = arith.constant 0 : index
      %271 = vector.load %arg7[%c60_294, %c0_295] : memref<256x8xf32, #tpu.memory_space<vmem>>, vector<3x8xf32>
      tpu.vector_store %arg7[%c60_294, %c0_295], %270 {strides = array<i32>} : memref<256x8xf32, #tpu.memory_space<vmem>>, vector<3x8xf32>,
      %272 = arith.addi %1, %arg9 : i32
      %c1_i32_296 = arith.constant 1 : i32
      %273 = arith.addi %272, %c1_i32_296 : i32
      %c0_297 = arith.constant 0 : index
      %c12_298 = arith.constant 12 : index
      %274 = arith.index_cast %273 : i32 to index
      %c0_299 = arith.constant 0 : index
      %275 = vector.load %arg2[%c0_297, %c12_298, %274, %c0_299] : memref<1x24x20x10xf32, #tpu.memory_space<vmem>>, vector<1x3x1x8xf32>
      %276 = vector.shape_cast %275 : vector<1x3x1x8xf32> to vector<3x8xf32>
      %c63 = arith.constant 63 : index
      %c0_300 = arith.constant 0 : index
      %277 = vector.load %arg6[%c63, %c0_300] : memref<256x8xf32, #tpu.memory_space<vmem>>, vector<3x8xf32>
      tpu.vector_store %arg6[%c63, %c0_300], %276 {strides = array<i32>} : memref<256x8xf32, #tpu.memory_space<vmem>>, vector<3x8xf32>,
      %c0_301 = arith.constant 0 : index
      %c18_302 = arith.constant 18 : index
      %278 = arith.index_cast %273 : i32 to index
      %c0_303 = arith.constant 0 : index
      %279 = vector.load %arg2[%c0_301, %c18_302, %278, %c0_303] : memref<1x24x20x10xf32, #tpu.memory_space<vmem>>, vector<1x3x1x8xf32>
      %280 = vector.shape_cast %279 : vector<1x3x1x8xf32> to vector<3x8xf32>
      %c63_304 = arith.constant 63 : index
      %c0_305 = arith.constant 0 : index
      %281 = vector.load %arg7[%c63_304, %c0_305] : memref<256x8xf32, #tpu.memory_space<vmem>>, vector<3x8xf32>
      tpu.vector_store %arg7[%c63_304, %c0_305], %280 {strides = array<i32>} : memref<256x8xf32, #tpu.memory_space<vmem>>, vector<3x8xf32>,
      %c0_306 = arith.constant 0 : index
      %c15_307 = arith.constant 15 : index
      %282 = arith.index_cast %273 : i32 to index
      %c0_308 = arith.constant 0 : index
      %283 = vector.load %arg2[%c0_306, %c15_307, %282, %c0_308] : memref<1x24x20x10xf32, #tpu.memory_space<vmem>>, vector<1x3x1x8xf32>
      %284 = vector.shape_cast %283 : vector<1x3x1x8xf32> to vector<3x8xf32>
      %c66 = arith.constant 66 : index
      %c0_309 = arith.constant 0 : index
      %285 = vector.load %arg6[%c66, %c0_309] : memref<256x8xf32, #tpu.memory_space<vmem>>, vector<3x8xf32>
      tpu.vector_store %arg6[%c66, %c0_309], %284 {strides = array<i32>} : memref<256x8xf32, #tpu.memory_space<vmem>>, vector<3x8xf32>,
      %c0_310 = arith.constant 0 : index
      %c21_311 = arith.constant 21 : index
      %286 = arith.index_cast %273 : i32 to index
      %c0_312 = arith.constant 0 : index
      %287 = vector.load %arg2[%c0_310, %c21_311, %286, %c0_312] : memref<1x24x20x10xf32, #tpu.memory_space<vmem>>, vector<1x3x1x8xf32>
      %288 = vector.shape_cast %287 : vector<1x3x1x8xf32> to vector<3x8xf32>
      %c66_313 = arith.constant 66 : index
      %c0_314 = arith.constant 0 : index
      %289 = vector.load %arg7[%c66_313, %c0_314] : memref<256x8xf32, #tpu.memory_space<vmem>>, vector<3x8xf32>
      tpu.vector_store %arg7[%c66_313, %c0_314], %288 {strides = array<i32>} : memref<256x8xf32, #tpu.memory_space<vmem>>, vector<3x8xf32>,
      %c0_315 = arith.constant 0 : index
      %c18_316 = arith.constant 18 : index
      %290 = arith.index_cast %273 : i32 to index
      %c0_317 = arith.constant 0 : index
      %291 = vector.load %arg2[%c0_315, %c18_316, %290, %c0_317] : memref<1x24x20x10xf32, #tpu.memory_space<vmem>>, vector<1x3x1x8xf32>
      %292 = vector.shape_cast %291 : vector<1x3x1x8xf32> to vector<3x8xf32>
      %c69 = arith.constant 69 : index
      %c0_318 = arith.constant 0 : index
      %293 = vector.load %arg6[%c69, %c0_318] : memref<256x8xf32, #tpu.memory_space<vmem>>, vector<3x8xf32>
      tpu.vector_store %arg6[%c69, %c0_318], %292 {strides = array<i32>} : memref<256x8xf32, #tpu.memory_space<vmem>>, vector<3x8xf32>,
      %c0_319 = arith.constant 0 : index
      %c12_320 = arith.constant 12 : index
      %294 = arith.index_cast %273 : i32 to index
      %c1_321 = arith.constant 1 : index
      %295 = vector.load %arg2[%c0_319, %c12_320, %294, %c1_321] : memref<1x24x20x10xf32, #tpu.memory_space<vmem>>, vector<1x3x1x8xf32>
      %296 = vector.shape_cast %295 : vector<1x3x1x8xf32> to vector<3x8xf32>
      %c69_322 = arith.constant 69 : index
      %c0_323 = arith.constant 0 : index
      %297 = vector.load %arg7[%c69_322, %c0_323] : memref<256x8xf32, #tpu.memory_space<vmem>>, vector<3x8xf32>
      tpu.vector_store %arg7[%c69_322, %c0_323], %296 {strides = array<i32>} : memref<256x8xf32, #tpu.memory_space<vmem>>, vector<3x8xf32>,
      %c0_324 = arith.constant 0 : index
      %c21_325 = arith.constant 21 : index
      %298 = arith.index_cast %273 : i32 to index
      %c0_326 = arith.constant 0 : index
      %299 = vector.load %arg2[%c0_324, %c21_325, %298, %c0_326] : memref<1x24x20x10xf32, #tpu.memory_space<vmem>>, vector<1x3x1x8xf32>
      %300 = vector.shape_cast %299 : vector<1x3x1x8xf32> to vector<3x8xf32>
      %c72 = arith.constant 72 : index
      %c0_327 = arith.constant 0 : index
      %301 = vector.load %arg6[%c72, %c0_327] : memref<256x8xf32, #tpu.memory_space<vmem>>, vector<3x8xf32>
      tpu.vector_store %arg6[%c72, %c0_327], %300 {strides = array<i32>} : memref<256x8xf32, #tpu.memory_space<vmem>>, vector<3x8xf32>,
      %c0_328 = arith.constant 0 : index
      %c15_329 = arith.constant 15 : index
      %302 = arith.index_cast %273 : i32 to index
      %c1_330 = arith.constant 1 : index
      %303 = vector.load %arg2[%c0_328, %c15_329, %302, %c1_330] : memref<1x24x20x10xf32, #tpu.memory_space<vmem>>, vector<1x3x1x8xf32>
      %304 = vector.shape_cast %303 : vector<1x3x1x8xf32> to vector<3x8xf32>
      %c72_331 = arith.constant 72 : index
      %c0_332 = arith.constant 0 : index
      %305 = vector.load %arg7[%c72_331, %c0_332] : memref<256x8xf32, #tpu.memory_space<vmem>>, vector<3x8xf32>
      tpu.vector_store %arg7[%c72_331, %c0_332], %304 {strides = array<i32>} : memref<256x8xf32, #tpu.memory_space<vmem>>, vector<3x8xf32>,
      %c0_333 = arith.constant 0 : index
      %c12_334 = arith.constant 12 : index
      %306 = arith.index_cast %273 : i32 to index
      %c1_335 = arith.constant 1 : index
      %307 = vector.load %arg2[%c0_333, %c12_334, %306, %c1_335] : memref<1x24x20x10xf32, #tpu.memory_space<vmem>>, vector<1x3x1x8xf32>
      %308 = vector.shape_cast %307 : vector<1x3x1x8xf32> to vector<3x8xf32>
      %c75 = arith.constant 75 : index
      %c0_336 = arith.constant 0 : index
      %309 = vector.load %arg6[%c75, %c0_336] : memref<256x8xf32, #tpu.memory_space<vmem>>, vector<3x8xf32>
      tpu.vector_store %arg6[%c75, %c0_336], %308 {strides = array<i32>} : memref<256x8xf32, #tpu.memory_space<vmem>>, vector<3x8xf32>,
      %c0_337 = arith.constant 0 : index
      %c18_338 = arith.constant 18 : index
      %310 = arith.index_cast %273 : i32 to index
      %c1_339 = arith.constant 1 : index
      %311 = vector.load %arg2[%c0_337, %c18_338, %310, %c1_339] : memref<1x24x20x10xf32, #tpu.memory_space<vmem>>, vector<1x3x1x8xf32>
      %312 = vector.shape_cast %311 : vector<1x3x1x8xf32> to vector<3x8xf32>
      %c75_340 = arith.constant 75 : index
      %c0_341 = arith.constant 0 : index
      %313 = vector.load %arg7[%c75_340, %c0_341] : memref<256x8xf32, #tpu.memory_space<vmem>>, vector<3x8xf32>
      tpu.vector_store %arg7[%c75_340, %c0_341], %312 {strides = array<i32>} : memref<256x8xf32, #tpu.memory_space<vmem>>, vector<3x8xf32>,
      %c0_342 = arith.constant 0 : index
      %c15_343 = arith.constant 15 : index
      %314 = arith.index_cast %273 : i32 to index
      %c1_344 = arith.constant 1 : index
      %315 = vector.load %arg2[%c0_342, %c15_343, %314, %c1_344] : memref<1x24x20x10xf32, #tpu.memory_space<vmem>>, vector<1x3x1x8xf32>
      %316 = vector.shape_cast %315 : vector<1x3x1x8xf32> to vector<3x8xf32>
      %c78 = arith.constant 78 : index
      %c0_345 = arith.constant 0 : index
      %317 = vector.load %arg6[%c78, %c0_345] : memref<256x8xf32, #tpu.memory_space<vmem>>, vector<3x8xf32>
      tpu.vector_store %arg6[%c78, %c0_345], %316 {strides = array<i32>} : memref<256x8xf32, #tpu.memory_space<vmem>>, vector<3x8xf32>,
      %c0_346 = arith.constant 0 : index
      %c21_347 = arith.constant 21 : index
      %318 = arith.index_cast %273 : i32 to index
      %c1_348 = arith.constant 1 : index
      %319 = vector.load %arg2[%c0_346, %c21_347, %318, %c1_348] : memref<1x24x20x10xf32, #tpu.memory_space<vmem>>, vector<1x3x1x8xf32>
      %320 = vector.shape_cast %319 : vector<1x3x1x8xf32> to vector<3x8xf32>
      %c78_349 = arith.constant 78 : index
      %c0_350 = arith.constant 0 : index
      %321 = vector.load %arg7[%c78_349, %c0_350] : memref<256x8xf32, #tpu.memory_space<vmem>>, vector<3x8xf32>
      tpu.vector_store %arg7[%c78_349, %c0_350], %320 {strides = array<i32>} : memref<256x8xf32, #tpu.memory_space<vmem>>, vector<3x8xf32>,
      %c0_351 = arith.constant 0 : index
      %c18_352 = arith.constant 18 : index
      %322 = arith.index_cast %273 : i32 to index
      %c1_353 = arith.constant 1 : index
      %323 = vector.load %arg2[%c0_351, %c18_352, %322, %c1_353] : memref<1x24x20x10xf32, #tpu.memory_space<vmem>>, vector<1x3x1x8xf32>
      %324 = vector.shape_cast %323 : vector<1x3x1x8xf32> to vector<3x8xf32>
      %c81 = arith.constant 81 : index
      %c0_354 = arith.constant 0 : index
      %325 = vector.load %arg6[%c81, %c0_354] : memref<256x8xf32, #tpu.memory_space<vmem>>, vector<3x8xf32>
      tpu.vector_store %arg6[%c81, %c0_354], %324 {strides = array<i32>} : memref<256x8xf32, #tpu.memory_space<vmem>>, vector<3x8xf32>,
      %c0_355 = arith.constant 0 : index
      %c12_356 = arith.constant 12 : index
      %326 = arith.index_cast %273 : i32 to index
      %c2_357 = arith.constant 2 : index
      %327 = vector.load %arg2[%c0_355, %c12_356, %326, %c2_357] : memref<1x24x20x10xf32, #tpu.memory_space<vmem>>, vector<1x3x1x8xf32>
      %328 = vector.shape_cast %327 : vector<1x3x1x8xf32> to vector<3x8xf32>
      %c81_358 = arith.constant 81 : index
      %c0_359 = arith.constant 0 : index
      %329 = vector.load %arg7[%c81_358, %c0_359] : memref<256x8xf32, #tpu.memory_space<vmem>>, vector<3x8xf32>
      tpu.vector_store %arg7[%c81_358, %c0_359], %328 {strides = array<i32>} : memref<256x8xf32, #tpu.memory_space<vmem>>, vector<3x8xf32>,
      %330 = arith.addi %1, %arg9 : i32
      %c2_i32_360 = arith.constant 2 : i32
      %331 = arith.addi %330, %c2_i32_360 : i32
      %c0_361 = arith.constant 0 : index
      %c0_362 = arith.constant 0 : index
      %332 = arith.index_cast %331 : i32 to index
      %c0_363 = arith.constant 0 : index
      %333 = vector.load %arg2[%c0_361, %c0_362, %332, %c0_363] : memref<1x24x20x10xf32, #tpu.memory_space<vmem>>, vector<1x3x1x8xf32>
      %334 = vector.shape_cast %333 : vector<1x3x1x8xf32> to vector<3x8xf32>
      %c84 = arith.constant 84 : index
      %c0_364 = arith.constant 0 : index
      %335 = vector.load %arg6[%c84, %c0_364] : memref<256x8xf32, #tpu.memory_space<vmem>>, vector<3x8xf32>
      tpu.vector_store %arg6[%c84, %c0_364], %334 {strides = array<i32>} : memref<256x8xf32, #tpu.memory_space<vmem>>, vector<3x8xf32>,
      %c0_365 = arith.constant 0 : index
      %c6_366 = arith.constant 6 : index
      %336 = arith.index_cast %331 : i32 to index
      %c0_367 = arith.constant 0 : index
      %337 = vector.load %arg2[%c0_365, %c6_366, %336, %c0_367] : memref<1x24x20x10xf32, #tpu.memory_space<vmem>>, vector<1x3x1x8xf32>
      %338 = vector.shape_cast %337 : vector<1x3x1x8xf32> to vector<3x8xf32>
      %c84_368 = arith.constant 84 : index
      %c0_369 = arith.constant 0 : index
      %339 = vector.load %arg7[%c84_368, %c0_369] : memref<256x8xf32, #tpu.memory_space<vmem>>, vector<3x8xf32>
      tpu.vector_store %arg7[%c84_368, %c0_369], %338 {strides = array<i32>} : memref<256x8xf32, #tpu.memory_space<vmem>>, vector<3x8xf32>,
      %c0_370 = arith.constant 0 : index
      %c3_371 = arith.constant 3 : index
      %340 = arith.index_cast %331 : i32 to index
      %c0_372 = arith.constant 0 : index
      %341 = vector.load %arg2[%c0_370, %c3_371, %340, %c0_372] : memref<1x24x20x10xf32, #tpu.memory_space<vmem>>, vector<1x3x1x8xf32>
      %342 = vector.shape_cast %341 : vector<1x3x1x8xf32> to vector<3x8xf32>
      %c87 = arith.constant 87 : index
      %c0_373 = arith.constant 0 : index
      %343 = vector.load %arg6[%c87, %c0_373] : memref<256x8xf32, #tpu.memory_space<vmem>>, vector<3x8xf32>
      tpu.vector_store %arg6[%c87, %c0_373], %342 {strides = array<i32>} : memref<256x8xf32, #tpu.memory_space<vmem>>, vector<3x8xf32>,
      %c0_374 = arith.constant 0 : index
      %c9_375 = arith.constant 9 : index
      %344 = arith.index_cast %331 : i32 to index
      %c0_376 = arith.constant 0 : index
      %345 = vector.load %arg2[%c0_374, %c9_375, %344, %c0_376] : memref<1x24x20x10xf32, #tpu.memory_space<vmem>>, vector<1x3x1x8xf32>
      %346 = vector.shape_cast %345 : vector<1x3x1x8xf32> to vector<3x8xf32>
      %c87_377 = arith.constant 87 : index
      %c0_378 = arith.constant 0 : index
      %347 = vector.load %arg7[%c87_377, %c0_378] : memref<256x8xf32, #tpu.memory_space<vmem>>, vector<3x8xf32>
      tpu.vector_store %arg7[%c87_377, %c0_378], %346 {strides = array<i32>} : memref<256x8xf32, #tpu.memory_space<vmem>>, vector<3x8xf32>,
      %c0_379 = arith.constant 0 : index
      %c6_380 = arith.constant 6 : index
      %348 = arith.index_cast %331 : i32 to index
      %c0_381 = arith.constant 0 : index
      %349 = vector.load %arg2[%c0_379, %c6_380, %348, %c0_381] : memref<1x24x20x10xf32, #tpu.memory_space<vmem>>, vector<1x3x1x8xf32>
      %350 = vector.shape_cast %349 : vector<1x3x1x8xf32> to vector<3x8xf32>
      %c90 = arith.constant 90 : index
      %c0_382 = arith.constant 0 : index
      %351 = vector.load %arg6[%c90, %c0_382] : memref<256x8xf32, #tpu.memory_space<vmem>>, vector<3x8xf32>
      tpu.vector_store %arg6[%c90, %c0_382], %350 {strides = array<i32>} : memref<256x8xf32, #tpu.memory_space<vmem>>, vector<3x8xf32>,
      %c0_383 = arith.constant 0 : index
      %c0_384 = arith.constant 0 : index
      %352 = arith.index_cast %331 : i32 to index
      %c1_385 = arith.constant 1 : index
      %353 = vector.load %arg2[%c0_383, %c0_384, %352, %c1_385] : memref<1x24x20x10xf32, #tpu.memory_space<vmem>>, vector<1x3x1x8xf32>
      %354 = vector.shape_cast %353 : vector<1x3x1x8xf32> to vector<3x8xf32>
      %c90_386 = arith.constant 90 : index
      %c0_387 = arith.constant 0 : index
      %355 = vector.load %arg7[%c90_386, %c0_387] : memref<256x8xf32, #tpu.memory_space<vmem>>, vector<3x8xf32>
      tpu.vector_store %arg7[%c90_386, %c0_387], %354 {strides = array<i32>} : memref<256x8xf32, #tpu.memory_space<vmem>>, vector<3x8xf32>,
      %c0_388 = arith.constant 0 : index
      %c9_389 = arith.constant 9 : index
      %356 = arith.index_cast %331 : i32 to index
      %c0_390 = arith.constant 0 : index
      %357 = vector.load %arg2[%c0_388, %c9_389, %356, %c0_390] : memref<1x24x20x10xf32, #tpu.memory_space<vmem>>, vector<1x3x1x8xf32>
      %358 = vector.shape_cast %357 : vector<1x3x1x8xf32> to vector<3x8xf32>
      %c93 = arith.constant 93 : index
      %c0_391 = arith.constant 0 : index
      %359 = vector.load %arg6[%c93, %c0_391] : memref<256x8xf32, #tpu.memory_space<vmem>>, vector<3x8xf32>
      tpu.vector_store %arg6[%c93, %c0_391], %358 {strides = array<i32>} : memref<256x8xf32, #tpu.memory_space<vmem>>, vector<3x8xf32>,
      %c0_392 = arith.constant 0 : index
      %c3_393 = arith.constant 3 : index
      %360 = arith.index_cast %331 : i32 to index
      %c1_394 = arith.constant 1 : index
      %361 = vector.load %arg2[%c0_392, %c3_393, %360, %c1_394] : memref<1x24x20x10xf32, #tpu.memory_space<vmem>>, vector<1x3x1x8xf32>
      %362 = vector.shape_cast %361 : vector<1x3x1x8xf32> to vector<3x8xf32>
      %c93_395 = arith.constant 93 : index
      %c0_396 = arith.constant 0 : index
      %363 = vector.load %arg7[%c93_395, %c0_396] : memref<256x8xf32, #tpu.memory_space<vmem>>, vector<3x8xf32>
      tpu.vector_store %arg7[%c93_395, %c0_396], %362 {strides = array<i32>} : memref<256x8xf32, #tpu.memory_space<vmem>>, vector<3x8xf32>,
      %c0_397 = arith.constant 0 : index
      %c0_398 = arith.constant 0 : index
      %364 = arith.index_cast %331 : i32 to index
      %c1_399 = arith.constant 1 : index
      %365 = vector.load %arg2[%c0_397, %c0_398, %364, %c1_399] : memref<1x24x20x10xf32, #tpu.memory_space<vmem>>, vector<1x3x1x8xf32>
      %366 = vector.shape_cast %365 : vector<1x3x1x8xf32> to vector<3x8xf32>
      %c96 = arith.constant 96 : index
      %c0_400 = arith.constant 0 : index
      %367 = vector.load %arg6[%c96, %c0_400] : memref<256x8xf32, #tpu.memory_space<vmem>>, vector<3x8xf32>
      tpu.vector_store %arg6[%c96, %c0_400], %366 {strides = array<i32>} : memref<256x8xf32, #tpu.memory_space<vmem>>, vector<3x8xf32>,
      %c0_401 = arith.constant 0 : index
      %c6_402 = arith.constant 6 : index
      %368 = arith.index_cast %331 : i32 to index
      %c1_403 = arith.constant 1 : index
      %369 = vector.load %arg2[%c0_401, %c6_402, %368, %c1_403] : memref<1x24x20x10xf32, #tpu.memory_space<vmem>>, vector<1x3x1x8xf32>
      %370 = vector.shape_cast %369 : vector<1x3x1x8xf32> to vector<3x8xf32>
      %c96_404 = arith.constant 96 : index
      %c0_405 = arith.constant 0 : index
      %371 = vector.load %arg7[%c96_404, %c0_405] : memref<256x8xf32, #tpu.memory_space<vmem>>, vector<3x8xf32>
      tpu.vector_store %arg7[%c96_404, %c0_405], %370 {strides = array<i32>} : memref<256x8xf32, #tpu.memory_space<vmem>>, vector<3x8xf32>,
      %c0_406 = arith.constant 0 : index
      %c3_407 = arith.constant 3 : index
      %372 = arith.index_cast %331 : i32 to index
      %c1_408 = arith.constant 1 : index
      %373 = vector.load %arg2[%c0_406, %c3_407, %372, %c1_408] : memref<1x24x20x10xf32, #tpu.memory_space<vmem>>, vector<1x3x1x8xf32>
      %374 = vector.shape_cast %373 : vector<1x3x1x8xf32> to vector<3x8xf32>
      %c99 = arith.constant 99 : index
      %c0_409 = arith.constant 0 : index
      %375 = vector.load %arg6[%c99, %c0_409] : memref<256x8xf32, #tpu.memory_space<vmem>>, vector<3x8xf32>
      tpu.vector_store %arg6[%c99, %c0_409], %374 {strides = array<i32>} : memref<256x8xf32, #tpu.memory_space<vmem>>, vector<3x8xf32>,
      %c0_410 = arith.constant 0 : index
      %c9_411 = arith.constant 9 : index
      %376 = arith.index_cast %331 : i32 to index
      %c1_412 = arith.constant 1 : index
      %377 = vector.load %arg2[%c0_410, %c9_411, %376, %c1_412] : memref<1x24x20x10xf32, #tpu.memory_space<vmem>>, vector<1x3x1x8xf32>
      %378 = vector.shape_cast %377 : vector<1x3x1x8xf32> to vector<3x8xf32>
      %c99_413 = arith.constant 99 : index
      %c0_414 = arith.constant 0 : index
      %379 = vector.load %arg7[%c99_413, %c0_414] : memref<256x8xf32, #tpu.memory_space<vmem>>, vector<3x8xf32>
      tpu.vector_store %arg7[%c99_413, %c0_414], %378 {strides = array<i32>} : memref<256x8xf32, #tpu.memory_space<vmem>>, vector<3x8xf32>,
      %c0_415 = arith.constant 0 : index
      %c6_416 = arith.constant 6 : index
      %380 = arith.index_cast %331 : i32 to index
      %c1_417 = arith.constant 1 : index
      %381 = vector.load %arg2[%c0_415, %c6_416, %380, %c1_417] : memref<1x24x20x10xf32, #tpu.memory_space<vmem>>, vector<1x3x1x8xf32>
      %382 = vector.shape_cast %381 : vector<1x3x1x8xf32> to vector<3x8xf32>
      %c102 = arith.constant 102 : index
      %c0_418 = arith.constant 0 : index
      %383 = vector.load %arg6[%c102, %c0_418] : memref<256x8xf32, #tpu.memory_space<vmem>>, vector<3x8xf32>
      tpu.vector_store %arg6[%c102, %c0_418], %382 {strides = array<i32>} : memref<256x8xf32, #tpu.memory_space<vmem>>, vector<3x8xf32>,
      %c0_419 = arith.constant 0 : index
      %c0_420 = arith.constant 0 : index
      %384 = arith.index_cast %331 : i32 to index
      %c2_421 = arith.constant 2 : index
      %385 = vector.load %arg2[%c0_419, %c0_420, %384, %c2_421] : memref<1x24x20x10xf32, #tpu.memory_space<vmem>>, vector<1x3x1x8xf32>
      %386 = vector.shape_cast %385 : vector<1x3x1x8xf32> to vector<3x8xf32>
      %c102_422 = arith.constant 102 : index
      %c0_423 = arith.constant 0 : index
      %387 = vector.load %arg7[%c102_422, %c0_423] : memref<256x8xf32, #tpu.memory_space<vmem>>, vector<3x8xf32>
      tpu.vector_store %arg7[%c102_422, %c0_423], %386 {strides = array<i32>} : memref<256x8xf32, #tpu.memory_space<vmem>>, vector<3x8xf32>,
      %388 = arith.addi %1, %arg9 : i32
      %c2_i32_424 = arith.constant 2 : i32
      %389 = arith.addi %388, %c2_i32_424 : i32
      %c0_425 = arith.constant 0 : index
      %c12_426 = arith.constant 12 : index
      %390 = arith.index_cast %389 : i32 to index
      %c0_427 = arith.constant 0 : index
      %391 = vector.load %arg2[%c0_425, %c12_426, %390, %c0_427] : memref<1x24x20x10xf32, #tpu.memory_space<vmem>>, vector<1x3x1x8xf32>
      %392 = vector.shape_cast %391 : vector<1x3x1x8xf32> to vector<3x8xf32>
      %c105 = arith.constant 105 : index
      %c0_428 = arith.constant 0 : index
      %393 = vector.load %arg6[%c105, %c0_428] : memref<256x8xf32, #tpu.memory_space<vmem>>, vector<3x8xf32>
      tpu.vector_store %arg6[%c105, %c0_428], %392 {strides = array<i32>} : memref<256x8xf32, #tpu.memory_space<vmem>>, vector<3x8xf32>,
      %c0_429 = arith.constant 0 : index
      %c18_430 = arith.constant 18 : index
      %394 = arith.index_cast %389 : i32 to index
      %c0_431 = arith.constant 0 : index
      %395 = vector.load %arg2[%c0_429, %c18_430, %394, %c0_431] : memref<1x24x20x10xf32, #tpu.memory_space<vmem>>, vector<1x3x1x8xf32>
      %396 = vector.shape_cast %395 : vector<1x3x1x8xf32> to vector<3x8xf32>
      %c105_432 = arith.constant 105 : index
      %c0_433 = arith.constant 0 : index
      %397 = vector.load %arg7[%c105_432, %c0_433] : memref<256x8xf32, #tpu.memory_space<vmem>>, vector<3x8xf32>
      tpu.vector_store %arg7[%c105_432, %c0_433], %396 {strides = array<i32>} : memref<256x8xf32, #tpu.memory_space<vmem>>, vector<3x8xf32>,
      %c0_434 = arith.constant 0 : index
      %c15_435 = arith.constant 15 : index
      %398 = arith.index_cast %389 : i32 to index
      %c0_436 = arith.constant 0 : index
      %399 = vector.load %arg2[%c0_434, %c15_435, %398, %c0_436] : memref<1x24x20x10xf32, #tpu.memory_space<vmem>>, vector<1x3x1x8xf32>
      %400 = vector.shape_cast %399 : vector<1x3x1x8xf32> to vector<3x8xf32>
      %c108 = arith.constant 108 : index
      %c0_437 = arith.constant 0 : index
      %401 = vector.load %arg6[%c108, %c0_437] : memref<256x8xf32, #tpu.memory_space<vmem>>, vector<3x8xf32>
      tpu.vector_store %arg6[%c108, %c0_437], %400 {strides = array<i32>} : memref<256x8xf32, #tpu.memory_space<vmem>>, vector<3x8xf32>,
      %c0_438 = arith.constant 0 : index
      %c21_439 = arith.constant 21 : index
      %402 = arith.index_cast %389 : i32 to index
      %c0_440 = arith.constant 0 : index
      %403 = vector.load %arg2[%c0_438, %c21_439, %402, %c0_440] : memref<1x24x20x10xf32, #tpu.memory_space<vmem>>, vector<1x3x1x8xf32>
      %404 = vector.shape_cast %403 : vector<1x3x1x8xf32> to vector<3x8xf32>
      %c108_441 = arith.constant 108 : index
      %c0_442 = arith.constant 0 : index
      %405 = vector.load %arg7[%c108_441, %c0_442] : memref<256x8xf32, #tpu.memory_space<vmem>>, vector<3x8xf32>
      tpu.vector_store %arg7[%c108_441, %c0_442], %404 {strides = array<i32>} : memref<256x8xf32, #tpu.memory_space<vmem>>, vector<3x8xf32>,
      %c0_443 = arith.constant 0 : index
      %c18_444 = arith.constant 18 : index
      %406 = arith.index_cast %389 : i32 to index
      %c0_445 = arith.constant 0 : index
      %407 = vector.load %arg2[%c0_443, %c18_444, %406, %c0_445] : memref<1x24x20x10xf32, #tpu.memory_space<vmem>>, vector<1x3x1x8xf32>
      %408 = vector.shape_cast %407 : vector<1x3x1x8xf32> to vector<3x8xf32>
      %c111 = arith.constant 111 : index
      %c0_446 = arith.constant 0 : index
      %409 = vector.load %arg6[%c111, %c0_446] : memref<256x8xf32, #tpu.memory_space<vmem>>, vector<3x8xf32>
      tpu.vector_store %arg6[%c111, %c0_446], %408 {strides = array<i32>} : memref<256x8xf32, #tpu.memory_space<vmem>>, vector<3x8xf32>,
      %c0_447 = arith.constant 0 : index
      %c12_448 = arith.constant 12 : index
      %410 = arith.index_cast %389 : i32 to index
      %c1_449 = arith.constant 1 : index
      %411 = vector.load %arg2[%c0_447, %c12_448, %410, %c1_449] : memref<1x24x20x10xf32, #tpu.memory_space<vmem>>, vector<1x3x1x8xf32>
      %412 = vector.shape_cast %411 : vector<1x3x1x8xf32> to vector<3x8xf32>
      %c111_450 = arith.constant 111 : index
      %c0_451 = arith.constant 0 : index
      %413 = vector.load %arg7[%c111_450, %c0_451] : memref<256x8xf32, #tpu.memory_space<vmem>>, vector<3x8xf32>
      tpu.vector_store %arg7[%c111_450, %c0_451], %412 {strides = array<i32>} : memref<256x8xf32, #tpu.memory_space<vmem>>, vector<3x8xf32>,
      %c0_452 = arith.constant 0 : index
      %c21_453 = arith.constant 21 : index
      %414 = arith.index_cast %389 : i32 to index
      %c0_454 = arith.constant 0 : index
      %415 = vector.load %arg2[%c0_452, %c21_453, %414, %c0_454] : memref<1x24x20x10xf32, #tpu.memory_space<vmem>>, vector<1x3x1x8xf32>
      %416 = vector.shape_cast %415 : vector<1x3x1x8xf32> to vector<3x8xf32>
      %c114 = arith.constant 114 : index
      %c0_455 = arith.constant 0 : index
      %417 = vector.load %arg6[%c114, %c0_455] : memref<256x8xf32, #tpu.memory_space<vmem>>, vector<3x8xf32>
      tpu.vector_store %arg6[%c114, %c0_455], %416 {strides = array<i32>} : memref<256x8xf32, #tpu.memory_space<vmem>>, vector<3x8xf32>,
      %c0_456 = arith.constant 0 : index
      %c15_457 = arith.constant 15 : index
      %418 = arith.index_cast %389 : i32 to index
      %c1_458 = arith.constant 1 : index
      %419 = vector.load %arg2[%c0_456, %c15_457, %418, %c1_458] : memref<1x24x20x10xf32, #tpu.memory_space<vmem>>, vector<1x3x1x8xf32>
      %420 = vector.shape_cast %419 : vector<1x3x1x8xf32> to vector<3x8xf32>
      %c114_459 = arith.constant 114 : index
      %c0_460 = arith.constant 0 : index
      %421 = vector.load %arg7[%c114_459, %c0_460] : memref<256x8xf32, #tpu.memory_space<vmem>>, vector<3x8xf32>
      tpu.vector_store %arg7[%c114_459, %c0_460], %420 {strides = array<i32>} : memref<256x8xf32, #tpu.memory_space<vmem>>, vector<3x8xf32>,
      %c0_461 = arith.constant 0 : index
      %c12_462 = arith.constant 12 : index
      %422 = arith.index_cast %389 : i32 to index
      %c1_463 = arith.constant 1 : index
      %423 = vector.load %arg2[%c0_461, %c12_462, %422, %c1_463] : memref<1x24x20x10xf32, #tpu.memory_space<vmem>>, vector<1x3x1x8xf32>
      %424 = vector.shape_cast %423 : vector<1x3x1x8xf32> to vector<3x8xf32>
      %c117 = arith.constant 117 : index
      %c0_464 = arith.constant 0 : index
      %425 = vector.load %arg6[%c117, %c0_464] : memref<256x8xf32, #tpu.memory_space<vmem>>, vector<3x8xf32>
      tpu.vector_store %arg6[%c117, %c0_464], %424 {strides = array<i32>} : memref<256x8xf32, #tpu.memory_space<vmem>>, vector<3x8xf32>,
      %c0_465 = arith.constant 0 : index
      %c18_466 = arith.constant 18 : index
      %426 = arith.index_cast %389 : i32 to index
      %c1_467 = arith.constant 1 : index
      %427 = vector.load %arg2[%c0_465, %c18_466, %426, %c1_467] : memref<1x24x20x10xf32, #tpu.memory_space<vmem>>, vector<1x3x1x8xf32>
      %428 = vector.shape_cast %427 : vector<1x3x1x8xf32> to vector<3x8xf32>
      %c117_468 = arith.constant 117 : index
      %c0_469 = arith.constant 0 : index
      %429 = vector.load %arg7[%c117_468, %c0_469] : memref<256x8xf32, #tpu.memory_space<vmem>>, vector<3x8xf32>
      tpu.vector_store %arg7[%c117_468, %c0_469], %428 {strides = array<i32>} : memref<256x8xf32, #tpu.memory_space<vmem>>, vector<3x8xf32>,
      %c0_470 = arith.constant 0 : index
      %c15_471 = arith.constant 15 : index
      %430 = arith.index_cast %389 : i32 to index
      %c1_472 = arith.constant 1 : index
      %431 = vector.load %arg2[%c0_470, %c15_471, %430, %c1_472] : memref<1x24x20x10xf32, #tpu.memory_space<vmem>>, vector<1x3x1x8xf32>
      %432 = vector.shape_cast %431 : vector<1x3x1x8xf32> to vector<3x8xf32>
      %c120 = arith.constant 120 : index
      %c0_473 = arith.constant 0 : index
      %433 = vector.load %arg6[%c120, %c0_473] : memref<256x8xf32, #tpu.memory_space<vmem>>, vector<3x8xf32>
      tpu.vector_store %arg6[%c120, %c0_473], %432 {strides = array<i32>} : memref<256x8xf32, #tpu.memory_space<vmem>>, vector<3x8xf32>,
      %c0_474 = arith.constant 0 : index
      %c21_475 = arith.constant 21 : index
      %434 = arith.index_cast %389 : i32 to index
      %c1_476 = arith.constant 1 : index
      %435 = vector.load %arg2[%c0_474, %c21_475, %434, %c1_476] : memref<1x24x20x10xf32, #tpu.memory_space<vmem>>, vector<1x3x1x8xf32>
      %436 = vector.shape_cast %435 : vector<1x3x1x8xf32> to vector<3x8xf32>
      %c120_477 = arith.constant 120 : index
      %c0_478 = arith.constant 0 : index
      %437 = vector.load %arg7[%c120_477, %c0_478] : memref<256x8xf32, #tpu.memory_space<vmem>>, vector<3x8xf32>
      tpu.vector_store %arg7[%c120_477, %c0_478], %436 {strides = array<i32>} : memref<256x8xf32, #tpu.memory_space<vmem>>, vector<3x8xf32>,
      %c0_479 = arith.constant 0 : index
      %c18_480 = arith.constant 18 : index
      %438 = arith.index_cast %389 : i32 to index
      %c1_481 = arith.constant 1 : index
      %439 = vector.load %arg2[%c0_479, %c18_480, %438, %c1_481] : memref<1x24x20x10xf32, #tpu.memory_space<vmem>>, vector<1x3x1x8xf32>
      %440 = vector.shape_cast %439 : vector<1x3x1x8xf32> to vector<3x8xf32>
      %c123 = arith.constant 123 : index
      %c0_482 = arith.constant 0 : index
      %441 = vector.load %arg6[%c123, %c0_482] : memref<256x8xf32, #tpu.memory_space<vmem>>, vector<3x8xf32>
      tpu.vector_store %arg6[%c123, %c0_482], %440 {strides = array<i32>} : memref<256x8xf32, #tpu.memory_space<vmem>>, vector<3x8xf32>,
      %c0_483 = arith.constant 0 : index
      %c12_484 = arith.constant 12 : index
      %442 = arith.index_cast %389 : i32 to index
      %c2_485 = arith.constant 2 : index
      %443 = vector.load %arg2[%c0_483, %c12_484, %442, %c2_485] : memref<1x24x20x10xf32, #tpu.memory_space<vmem>>, vector<1x3x1x8xf32>
      %444 = vector.shape_cast %443 : vector<1x3x1x8xf32> to vector<3x8xf32>
      %c123_486 = arith.constant 123 : index
      %c0_487 = arith.constant 0 : index
      %445 = vector.load %arg7[%c123_486, %c0_487] : memref<256x8xf32, #tpu.memory_space<vmem>>, vector<3x8xf32>
      tpu.vector_store %arg7[%c123_486, %c0_487], %444 {strides = array<i32>} : memref<256x8xf32, #tpu.memory_space<vmem>>, vector<3x8xf32>,
      %446 = arith.addi %1, %arg9 : i32
      %c3_i32 = arith.constant 3 : i32
      %447 = arith.addi %446, %c3_i32 : i32
      %c0_488 = arith.constant 0 : index
      %c0_489 = arith.constant 0 : index
      %448 = arith.index_cast %447 : i32 to index
      %c0_490 = arith.constant 0 : index
      %449 = vector.load %arg2[%c0_488, %c0_489, %448, %c0_490] : memref<1x24x20x10xf32, #tpu.memory_space<vmem>>, vector<1x3x1x8xf32>
      %450 = vector.shape_cast %449 : vector<1x3x1x8xf32> to vector<3x8xf32>
      %c126 = arith.constant 126 : index
      %c0_491 = arith.constant 0 : index
      %451 = vector.load %arg6[%c126, %c0_491] : memref<256x8xf32, #tpu.memory_space<vmem>>, vector<3x8xf32>
      tpu.vector_store %arg6[%c126, %c0_491], %450 {strides = array<i32>} : memref<256x8xf32, #tpu.memory_space<vmem>>, vector<3x8xf32>,
      %c0_492 = arith.constant 0 : index
      %c6_493 = arith.constant 6 : index
      %452 = arith.index_cast %447 : i32 to index
      %c0_494 = arith.constant 0 : index
      %453 = vector.load %arg2[%c0_492, %c6_493, %452, %c0_494] : memref<1x24x20x10xf32, #tpu.memory_space<vmem>>, vector<1x3x1x8xf32>
      %454 = vector.shape_cast %453 : vector<1x3x1x8xf32> to vector<3x8xf32>
      %c126_495 = arith.constant 126 : index
      %c0_496 = arith.constant 0 : index
      %455 = vector.load %arg7[%c126_495, %c0_496] : memref<256x8xf32, #tpu.memory_space<vmem>>, vector<3x8xf32>
      tpu.vector_store %arg7[%c126_495, %c0_496], %454 {strides = array<i32>} : memref<256x8xf32, #tpu.memory_space<vmem>>, vector<3x8xf32>,
      %c0_497 = arith.constant 0 : index
      %c3_498 = arith.constant 3 : index
      %456 = arith.index_cast %447 : i32 to index
      %c0_499 = arith.constant 0 : index
      %457 = vector.load %arg2[%c0_497, %c3_498, %456, %c0_499] : memref<1x24x20x10xf32, #tpu.memory_space<vmem>>, vector<1x3x1x8xf32>
      %458 = vector.shape_cast %457 : vector<1x3x1x8xf32> to vector<3x8xf32>
      %c129 = arith.constant 129 : index
      %c0_500 = arith.constant 0 : index
      %459 = vector.load %arg6[%c129, %c0_500] : memref<256x8xf32, #tpu.memory_space<vmem>>, vector<3x8xf32>
      tpu.vector_store %arg6[%c129, %c0_500], %458 {strides = array<i32>} : memref<256x8xf32, #tpu.memory_space<vmem>>, vector<3x8xf32>,
      %c0_501 = arith.constant 0 : index
      %c9_502 = arith.constant 9 : index
      %460 = arith.index_cast %447 : i32 to index
      %c0_503 = arith.constant 0 : index
      %461 = vector.load %arg2[%c0_501, %c9_502, %460, %c0_503] : memref<1x24x20x10xf32, #tpu.memory_space<vmem>>, vector<1x3x1x8xf32>
      %462 = vector.shape_cast %461 : vector<1x3x1x8xf32> to vector<3x8xf32>
      %c129_504 = arith.constant 129 : index
      %c0_505 = arith.constant 0 : index
      %463 = vector.load %arg7[%c129_504, %c0_505] : memref<256x8xf32, #tpu.memory_space<vmem>>, vector<3x8xf32>
      tpu.vector_store %arg7[%c129_504, %c0_505], %462 {strides = array<i32>} : memref<256x8xf32, #tpu.memory_space<vmem>>, vector<3x8xf32>,
      %c0_506 = arith.constant 0 : index
      %c6_507 = arith.constant 6 : index
      %464 = arith.index_cast %447 : i32 to index
      %c0_508 = arith.constant 0 : index
      %465 = vector.load %arg2[%c0_506, %c6_507, %464, %c0_508] : memref<1x24x20x10xf32, #tpu.memory_space<vmem>>, vector<1x3x1x8xf32>
      %466 = vector.shape_cast %465 : vector<1x3x1x8xf32> to vector<3x8xf32>
      %c132 = arith.constant 132 : index
      %c0_509 = arith.constant 0 : index
      %467 = vector.load %arg6[%c132, %c0_509] : memref<256x8xf32, #tpu.memory_space<vmem>>, vector<3x8xf32>
      tpu.vector_store %arg6[%c132, %c0_509], %466 {strides = array<i32>} : memref<256x8xf32, #tpu.memory_space<vmem>>, vector<3x8xf32>,
      %c0_510 = arith.constant 0 : index
      %c0_511 = arith.constant 0 : index
      %468 = arith.index_cast %447 : i32 to index
      %c1_512 = arith.constant 1 : index
      %469 = vector.load %arg2[%c0_510, %c0_511, %468, %c1_512] : memref<1x24x20x10xf32, #tpu.memory_space<vmem>>, vector<1x3x1x8xf32>
      %470 = vector.shape_cast %469 : vector<1x3x1x8xf32> to vector<3x8xf32>
      %c132_513 = arith.constant 132 : index
      %c0_514 = arith.constant 0 : index
      %471 = vector.load %arg7[%c132_513, %c0_514] : memref<256x8xf32, #tpu.memory_space<vmem>>, vector<3x8xf32>
      tpu.vector_store %arg7[%c132_513, %c0_514], %470 {strides = array<i32>} : memref<256x8xf32, #tpu.memory_space<vmem>>, vector<3x8xf32>,
      %c0_515 = arith.constant 0 : index
      %c9_516 = arith.constant 9 : index
      %472 = arith.index_cast %447 : i32 to index
      %c0_517 = arith.constant 0 : index
      %473 = vector.load %arg2[%c0_515, %c9_516, %472, %c0_517] : memref<1x24x20x10xf32, #tpu.memory_space<vmem>>, vector<1x3x1x8xf32>
      %474 = vector.shape_cast %473 : vector<1x3x1x8xf32> to vector<3x8xf32>
      %c135 = arith.constant 135 : index
      %c0_518 = arith.constant 0 : index
      %475 = vector.load %arg6[%c135, %c0_518] : memref<256x8xf32, #tpu.memory_space<vmem>>, vector<3x8xf32>
      tpu.vector_store %arg6[%c135, %c0_518], %474 {strides = array<i32>} : memref<256x8xf32, #tpu.memory_space<vmem>>, vector<3x8xf32>,
      %c0_519 = arith.constant 0 : index
      %c3_520 = arith.constant 3 : index
      %476 = arith.index_cast %447 : i32 to index
      %c1_521 = arith.constant 1 : index
      %477 = vector.load %arg2[%c0_519, %c3_520, %476, %c1_521] : memref<1x24x20x10xf32, #tpu.memory_space<vmem>>, vector<1x3x1x8xf32>
      %478 = vector.shape_cast %477 : vector<1x3x1x8xf32> to vector<3x8xf32>
      %c135_522 = arith.constant 135 : index
      %c0_523 = arith.constant 0 : index
      %479 = vector.load %arg7[%c135_522, %c0_523] : memref<256x8xf32, #tpu.memory_space<vmem>>, vector<3x8xf32>
      tpu.vector_store %arg7[%c135_522, %c0_523], %478 {strides = array<i32>} : memref<256x8xf32, #tpu.memory_space<vmem>>, vector<3x8xf32>,
      %c0_524 = arith.constant 0 : index
      %c0_525 = arith.constant 0 : index
      %480 = arith.index_cast %447 : i32 to index
      %c1_526 = arith.constant 1 : index
      %481 = vector.load %arg2[%c0_524, %c0_525, %480, %c1_526] : memref<1x24x20x10xf32, #tpu.memory_space<vmem>>, vector<1x3x1x8xf32>
      %482 = vector.shape_cast %481 : vector<1x3x1x8xf32> to vector<3x8xf32>
      %c138 = arith.constant 138 : index
      %c0_527 = arith.constant 0 : index
      %483 = vector.load %arg6[%c138, %c0_527] : memref<256x8xf32, #tpu.memory_space<vmem>>, vector<3x8xf32>
      tpu.vector_store %arg6[%c138, %c0_527], %482 {strides = array<i32>} : memref<256x8xf32, #tpu.memory_space<vmem>>, vector<3x8xf32>,
      %c0_528 = arith.constant 0 : index
      %c6_529 = arith.constant 6 : index
      %484 = arith.index_cast %447 : i32 to index
      %c1_530 = arith.constant 1 : index
      %485 = vector.load %arg2[%c0_528, %c6_529, %484, %c1_530] : memref<1x24x20x10xf32, #tpu.memory_space<vmem>>, vector<1x3x1x8xf32>
      %486 = vector.shape_cast %485 : vector<1x3x1x8xf32> to vector<3x8xf32>
      %c138_531 = arith.constant 138 : index
      %c0_532 = arith.constant 0 : index
      %487 = vector.load %arg7[%c138_531, %c0_532] : memref<256x8xf32, #tpu.memory_space<vmem>>, vector<3x8xf32>
      tpu.vector_store %arg7[%c138_531, %c0_532], %486 {strides = array<i32>} : memref<256x8xf32, #tpu.memory_space<vmem>>, vector<3x8xf32>,
      %c0_533 = arith.constant 0 : index
      %c3_534 = arith.constant 3 : index
      %488 = arith.index_cast %447 : i32 to index
      %c1_535 = arith.constant 1 : index
      %489 = vector.load %arg2[%c0_533, %c3_534, %488, %c1_535] : memref<1x24x20x10xf32, #tpu.memory_space<vmem>>, vector<1x3x1x8xf32>
      %490 = vector.shape_cast %489 : vector<1x3x1x8xf32> to vector<3x8xf32>
      %c141 = arith.constant 141 : index
      %c0_536 = arith.constant 0 : index
      %491 = vector.load %arg6[%c141, %c0_536] : memref<256x8xf32, #tpu.memory_space<vmem>>, vector<3x8xf32>
      tpu.vector_store %arg6[%c141, %c0_536], %490 {strides = array<i32>} : memref<256x8xf32, #tpu.memory_space<vmem>>, vector<3x8xf32>,
      %c0_537 = arith.constant 0 : index
      %c9_538 = arith.constant 9 : index
      %492 = arith.index_cast %447 : i32 to index
      %c1_539 = arith.constant 1 : index
      %493 = vector.load %arg2[%c0_537, %c9_538, %492, %c1_539] : memref<1x24x20x10xf32, #tpu.memory_space<vmem>>, vector<1x3x1x8xf32>
      %494 = vector.shape_cast %493 : vector<1x3x1x8xf32> to vector<3x8xf32>
      %c141_540 = arith.constant 141 : index
      %c0_541 = arith.constant 0 : index
      %495 = vector.load %arg7[%c141_540, %c0_541] : memref<256x8xf32, #tpu.memory_space<vmem>>, vector<3x8xf32>
      tpu.vector_store %arg7[%c141_540, %c0_541], %494 {strides = array<i32>} : memref<256x8xf32, #tpu.memory_space<vmem>>, vector<3x8xf32>,
      %c0_542 = arith.constant 0 : index
      %c6_543 = arith.constant 6 : index
      %496 = arith.index_cast %447 : i32 to index
      %c1_544 = arith.constant 1 : index
      %497 = vector.load %arg2[%c0_542, %c6_543, %496, %c1_544] : memref<1x24x20x10xf32, #tpu.memory_space<vmem>>, vector<1x3x1x8xf32>
      %498 = vector.shape_cast %497 : vector<1x3x1x8xf32> to vector<3x8xf32>
      %c144 = arith.constant 144 : index
      %c0_545 = arith.constant 0 : index
      %499 = vector.load %arg6[%c144, %c0_545] : memref<256x8xf32, #tpu.memory_space<vmem>>, vector<3x8xf32>
      tpu.vector_store %arg6[%c144, %c0_545], %498 {strides = array<i32>} : memref<256x8xf32, #tpu.memory_space<vmem>>, vector<3x8xf32>,
      %c0_546 = arith.constant 0 : index
      %c0_547 = arith.constant 0 : index
      %500 = arith.index_cast %447 : i32 to index
      %c2_548 = arith.constant 2 : index
      %501 = vector.load %arg2[%c0_546, %c0_547, %500, %c2_548] : memref<1x24x20x10xf32, #tpu.memory_space<vmem>>, vector<1x3x1x8xf32>
      %502 = vector.shape_cast %501 : vector<1x3x1x8xf32> to vector<3x8xf32>
      %c144_549 = arith.constant 144 : index
      %c0_550 = arith.constant 0 : index
      %503 = vector.load %arg7[%c144_549, %c0_550] : memref<256x8xf32, #tpu.memory_space<vmem>>, vector<3x8xf32>
      tpu.vector_store %arg7[%c144_549, %c0_550], %502 {strides = array<i32>} : memref<256x8xf32, #tpu.memory_space<vmem>>, vector<3x8xf32>,
      %c0_551 = arith.constant 0 : index
      %c0_552 = arith.constant 0 : index
      %504 = vector.load %arg6[%c0_551, %c0_552] : memref<256x8xf32, #tpu.memory_space<vmem>>, vector<256x8xf32>
      %cst_553 = arith.constant dense<0.000000e+00> : vector<64x8xf32>
      %505 = tpu.matmul %6, %504, %cst_553 {dimension_numbers = #tpu.dot_dimension_numbers<[1], [0], [0], [1], [0, 0, 1, 1], [], []>} : vector<64x256xf32>, vector<256x8xf32>, vector<64x8xf32> -> vector<64x8xf32>
      %c0_554 = arith.constant 0 : index
      %c0_555 = arith.constant 0 : index
      %506 = vector.load %arg7[%c0_554, %c0_555] : memref<256x8xf32, #tpu.memory_space<vmem>>, vector<256x8xf32>
      %cst_556 = arith.constant dense<0.000000e+00> : vector<64x8xf32>
      %507 = tpu.matmul %6, %506, %cst_556 {dimension_numbers = #tpu.dot_dimension_numbers<[1], [0], [0], [1], [0, 0, 1, 1], [], []>} : vector<64x256xf32>, vector<256x8xf32>, vector<64x8xf32> -> vector<64x8xf32>
      %508 = vector.broadcast %7 : vector<64x1xf32> to vector<64x8xf32>
      %509 = arith.addf %505, %508 : vector<64x8xf32>
      %cst_557 = arith.constant 0.000000e+00 : f32
      %510 = vector.broadcast %cst_557 : f32 to vector<64x8xf32>
      %511 = arith.maximumf %509, %510 : vector<64x8xf32>
      %512 = vector.broadcast %7 : vector<64x1xf32> to vector<64x8xf32>
      %513 = arith.addf %507, %512 : vector<64x8xf32>
      %cst_558 = arith.constant 0.000000e+00 : f32
      %514 = vector.broadcast %cst_558 : f32 to vector<64x8xf32>
      %515 = arith.maximumf %513, %514 : vector<64x8xf32>
      %516 = vector.extract_strided_slice %515 {offsets = [0, 0], sizes = [64, 7], strides = [1, 1]} : vector<64x8xf32> to vector<64x7xf32>
      %517 = tpu.concatenate %8, %516 in 1 : vector<64x1xf32>, vector<64x7xf32> -> vector<64x8xf32>
      %518 = arith.maximumf %511, %515 : vector<64x8xf32>
      %519 = arith.maximumf %518, %517 : vector<64x8xf32>
      %520 = arith.addi %1, %arg9 : i32
      %c1_i32_559 = arith.constant 1 : i32
      %521 = arith.cmpi sge, %520, %c1_i32_559 : i32
      %cst_560 = arith.constant 0.000000e+00 : f32
      %522 = vector.broadcast %cst_560 : f32 to vector<64x8xf32>
      %523 = arith.select %521, %519, %522 : vector<64x8xf32>
      %524 = arith.index_cast %arg9 : i32 to index
      %c0_561 = arith.constant 0 : index
      %c0_562 = arith.constant 0 : index
      %525 = vector.load %arg8[%524, %c0_561, %c0_562] : memref<17x64x8xf32, #tpu.memory_space<vmem>>, vector<1x64x8xf32>
      %526 = vector.shape_cast %525 : vector<1x64x8xf32> to vector<64x8xf32>
      %527 = vector.shape_cast %523 : vector<64x8xf32> to vector<1x64x8xf32>
      tpu.vector_store %arg8[%524, %c0_561, %c0_562], %527 {strides = array<i32>} : memref<17x64x8xf32, #tpu.memory_space<vmem>>, vector<1x64x8xf32>,
    }
    %c17_i32_9 = arith.constant 17 : i32
    %c0_10 = arith.constant 0 : index
    %c0_11 = arith.constant 0 : index
    %c0_12 = arith.constant 0 : index
    %10 = vector.load %arg8[%c0_10, %c0_11, %c0_12] : memref<17x64x8xf32, #tpu.memory_space<vmem>>, vector<1x64x8xf32>
    %11 = vector.shape_cast %10 : vector<1x64x8xf32> to vector<64x8xf32>
    %c1 = arith.constant 1 : index
    %c0_13 = arith.constant 0 : index
    %c0_14 = arith.constant 0 : index
    %12 = vector.load %arg8[%c1, %c0_13, %c0_14] : memref<17x64x8xf32, #tpu.memory_space<vmem>>, vector<1x64x8xf32>
    %13 = vector.shape_cast %12 : vector<1x64x8xf32> to vector<64x8xf32>
    %14 = arith.maximumf %11, %13 : vector<64x8xf32>
    %c2 = arith.constant 2 : index
    %c0_15 = arith.constant 0 : index
    %c0_16 = arith.constant 0 : index
    %15 = vector.load %arg8[%c2, %c0_15, %c0_16] : memref<17x64x8xf32, #tpu.memory_space<vmem>>, vector<1x64x8xf32>
    %16 = vector.shape_cast %15 : vector<1x64x8xf32> to vector<64x8xf32>
    %17 = arith.maximumf %14, %16 : vector<64x8xf32>
    %c0_17 = arith.constant 0 : index
    %c0_18 = arith.constant 0 : index
    %c0_19 = arith.constant 0 : index
    %c0_20 = arith.constant 0 : index
    %18 = vector.load %arg5[%c0_17, %c0_18, %c0_19, %c0_20] : memref<1x64x8x8xf32, #tpu.memory_space<vmem>>, vector<1x64x1x8xf32>
    %19 = vector.shape_cast %18 : vector<1x64x1x8xf32> to vector<64x8xf32>
    %20 = vector.shape_cast %17 : vector<64x8xf32> to vector<1x64x1x8xf32>
    tpu.vector_store %arg5[%c0_17, %c0_18, %c0_19, %c0_20], %20 {strides = array<i32>} : memref<1x64x8x8xf32, #tpu.memory_space<vmem>>, vector<1x64x1x8xf32>,
    %c2_21 = arith.constant 2 : index
    %c0_22 = arith.constant 0 : index
    %c0_23 = arith.constant 0 : index
    %21 = vector.load %arg8[%c2_21, %c0_22, %c0_23] : memref<17x64x8xf32, #tpu.memory_space<vmem>>, vector<1x64x8xf32>
    %22 = vector.shape_cast %21 : vector<1x64x8xf32> to vector<64x8xf32>
    %c3 = arith.constant 3 : index
    %c0_24 = arith.constant 0 : index
    %c0_25 = arith.constant 0 : index
    %23 = vector.load %arg8[%c3, %c0_24, %c0_25] : memref<17x64x8xf32, #tpu.memory_space<vmem>>, vector<1x64x8xf32>
    %24 = vector.shape_cast %23 : vector<1x64x8xf32> to vector<64x8xf32>
    %25 = arith.maximumf %22, %24 : vector<64x8xf32>
    %c4 = arith.constant 4 : index
    %c0_26 = arith.constant 0 : index
    %c0_27 = arith.constant 0 : index
    %26 = vector.load %arg8[%c4, %c0_26, %c0_27] : memref<17x64x8xf32, #tpu.memory_space<vmem>>, vector<1x64x8xf32>
    %27 = vector.shape_cast %26 : vector<1x64x8xf32> to vector<64x8xf32>
    %28 = arith.maximumf %25, %27 : vector<64x8xf32>
    %c0_28 = arith.constant 0 : index
    %c0_29 = arith.constant 0 : index
    %c1_30 = arith.constant 1 : index
    %c0_31 = arith.constant 0 : index
    %29 = vector.load %arg5[%c0_28, %c0_29, %c1_30, %c0_31] : memref<1x64x8x8xf32, #tpu.memory_space<vmem>>, vector<1x64x1x8xf32>
    %30 = vector.shape_cast %29 : vector<1x64x1x8xf32> to vector<64x8xf32>
    %31 = vector.shape_cast %28 : vector<64x8xf32> to vector<1x64x1x8xf32>
    tpu.vector_store %arg5[%c0_28, %c0_29, %c1_30, %c0_31], %31 {strides = array<i32>} : memref<1x64x8x8xf32, #tpu.memory_space<vmem>>, vector<1x64x1x8xf32>,
    %c4_32 = arith.constant 4 : index
    %c0_33 = arith.constant 0 : index
    %c0_34 = arith.constant 0 : index
    %32 = vector.load %arg8[%c4_32, %c0_33, %c0_34] : memref<17x64x8xf32, #tpu.memory_space<vmem>>, vector<1x64x8xf32>
    %33 = vector.shape_cast %32 : vector<1x64x8xf32> to vector<64x8xf32>
    %c5 = arith.constant 5 : index
    %c0_35 = arith.constant 0 : index
    %c0_36 = arith.constant 0 : index
    %34 = vector.load %arg8[%c5, %c0_35, %c0_36] : memref<17x64x8xf32, #tpu.memory_space<vmem>>, vector<1x64x8xf32>
    %35 = vector.shape_cast %34 : vector<1x64x8xf32> to vector<64x8xf32>
    %36 = arith.maximumf %33, %35 : vector<64x8xf32>
    %c6 = arith.constant 6 : index
    %c0_37 = arith.constant 0 : index
    %c0_38 = arith.constant 0 : index
    %37 = vector.load %arg8[%c6, %c0_37, %c0_38] : memref<17x64x8xf32, #tpu.memory_space<vmem>>, vector<1x64x8xf32>
    %38 = vector.shape_cast %37 : vector<1x64x8xf32> to vector<64x8xf32>
    %39 = arith.maximumf %36, %38 : vector<64x8xf32>
    %c0_39 = arith.constant 0 : index
    %c0_40 = arith.constant 0 : index
    %c2_41 = arith.constant 2 : index
    %c0_42 = arith.constant 0 : index
    %40 = vector.load %arg5[%c0_39, %c0_40, %c2_41, %c0_42] : memref<1x64x8x8xf32, #tpu.memory_space<vmem>>, vector<1x64x1x8xf32>
    %41 = vector.shape_cast %40 : vector<1x64x1x8xf32> to vector<64x8xf32>
    %42 = vector.shape_cast %39 : vector<64x8xf32> to vector<1x64x1x8xf32>
    tpu.vector_store %arg5[%c0_39, %c0_40, %c2_41, %c0_42], %42 {strides = array<i32>} : memref<1x64x8x8xf32, #tpu.memory_space<vmem>>, vector<1x64x1x8xf32>,
    %c6_43 = arith.constant 6 : index
    %c0_44 = arith.constant 0 : index
    %c0_45 = arith.constant 0 : index
    %43 = vector.load %arg8[%c6_43, %c0_44, %c0_45] : memref<17x64x8xf32, #tpu.memory_space<vmem>>, vector<1x64x8xf32>
    %44 = vector.shape_cast %43 : vector<1x64x8xf32> to vector<64x8xf32>
    %c7 = arith.constant 7 : index
    %c0_46 = arith.constant 0 : index
    %c0_47 = arith.constant 0 : index
    %45 = vector.load %arg8[%c7, %c0_46, %c0_47] : memref<17x64x8xf32, #tpu.memory_space<vmem>>, vector<1x64x8xf32>
    %46 = vector.shape_cast %45 : vector<1x64x8xf32> to vector<64x8xf32>
    %47 = arith.maximumf %44, %46 : vector<64x8xf32>
    %c8 = arith.constant 8 : index
    %c0_48 = arith.constant 0 : index
    %c0_49 = arith.constant 0 : index
    %48 = vector.load %arg8[%c8, %c0_48, %c0_49] : memref<17x64x8xf32, #tpu.memory_space<vmem>>, vector<1x64x8xf32>
    %49 = vector.shape_cast %48 : vector<1x64x8xf32> to vector<64x8xf32>
    %50 = arith.maximumf %47, %49 : vector<64x8xf32>
    %c0_50 = arith.constant 0 : index
    %c0_51 = arith.constant 0 : index
    %c3_52 = arith.constant 3 : index
    %c0_53 = arith.constant 0 : index
    %51 = vector.load %arg5[%c0_50, %c0_51, %c3_52, %c0_53] : memref<1x64x8x8xf32, #tpu.memory_space<vmem>>, vector<1x64x1x8xf32>
    %52 = vector.shape_cast %51 : vector<1x64x1x8xf32> to vector<64x8xf32>
    %53 = vector.shape_cast %50 : vector<64x8xf32> to vector<1x64x1x8xf32>
    tpu.vector_store %arg5[%c0_50, %c0_51, %c3_52, %c0_53], %53 {strides = array<i32>} : memref<1x64x8x8xf32, #tpu.memory_space<vmem>>, vector<1x64x1x8xf32>,
    %c8_54 = arith.constant 8 : index
    %c0_55 = arith.constant 0 : index
    %c0_56 = arith.constant 0 : index
    %54 = vector.load %arg8[%c8_54, %c0_55, %c0_56] : memref<17x64x8xf32, #tpu.memory_space<vmem>>, vector<1x64x8xf32>
    %55 = vector.shape_cast %54 : vector<1x64x8xf32> to vector<64x8xf32>
    %c9 = arith.constant 9 : index
    %c0_57 = arith.constant 0 : index
    %c0_58 = arith.constant 0 : index
    %56 = vector.load %arg8[%c9, %c0_57, %c0_58] : memref<17x64x8xf32, #tpu.memory_space<vmem>>, vector<1x64x8xf32>
    %57 = vector.shape_cast %56 : vector<1x64x8xf32> to vector<64x8xf32>
    %58 = arith.maximumf %55, %57 : vector<64x8xf32>
    %c10 = arith.constant 10 : index
    %c0_59 = arith.constant 0 : index
    %c0_60 = arith.constant 0 : index
    %59 = vector.load %arg8[%c10, %c0_59, %c0_60] : memref<17x64x8xf32, #tpu.memory_space<vmem>>, vector<1x64x8xf32>
    %60 = vector.shape_cast %59 : vector<1x64x8xf32> to vector<64x8xf32>
    %61 = arith.maximumf %58, %60 : vector<64x8xf32>
    %c0_61 = arith.constant 0 : index
    %c0_62 = arith.constant 0 : index
    %c4_63 = arith.constant 4 : index
    %c0_64 = arith.constant 0 : index
    %62 = vector.load %arg5[%c0_61, %c0_62, %c4_63, %c0_64] : memref<1x64x8x8xf32, #tpu.memory_space<vmem>>, vector<1x64x1x8xf32>
    %63 = vector.shape_cast %62 : vector<1x64x1x8xf32> to vector<64x8xf32>
    %64 = vector.shape_cast %61 : vector<64x8xf32> to vector<1x64x1x8xf32>
    tpu.vector_store %arg5[%c0_61, %c0_62, %c4_63, %c0_64], %64 {strides = array<i32>} : memref<1x64x8x8xf32, #tpu.memory_space<vmem>>, vector<1x64x1x8xf32>,
    %c10_65 = arith.constant 10 : index
    %c0_66 = arith.constant 0 : index
    %c0_67 = arith.constant 0 : index
    %65 = vector.load %arg8[%c10_65, %c0_66, %c0_67] : memref<17x64x8xf32, #tpu.memory_space<vmem>>, vector<1x64x8xf32>
    %66 = vector.shape_cast %65 : vector<1x64x8xf32> to vector<64x8xf32>
    %c11 = arith.constant 11 : index
    %c0_68 = arith.constant 0 : index
    %c0_69 = arith.constant 0 : index
    %67 = vector.load %arg8[%c11, %c0_68, %c0_69] : memref<17x64x8xf32, #tpu.memory_space<vmem>>, vector<1x64x8xf32>
    %68 = vector.shape_cast %67 : vector<1x64x8xf32> to vector<64x8xf32>
    %69 = arith.maximumf %66, %68 : vector<64x8xf32>
    %c12 = arith.constant 12 : index
    %c0_70 = arith.constant 0 : index
    %c0_71 = arith.constant 0 : index
    %70 = vector.load %arg8[%c12, %c0_70, %c0_71] : memref<17x64x8xf32, #tpu.memory_space<vmem>>, vector<1x64x8xf32>
    %71 = vector.shape_cast %70 : vector<1x64x8xf32> to vector<64x8xf32>
    %72 = arith.maximumf %69, %71 : vector<64x8xf32>
    %c0_72 = arith.constant 0 : index
    %c0_73 = arith.constant 0 : index
    %c5_74 = arith.constant 5 : index
    %c0_75 = arith.constant 0 : index
    %73 = vector.load %arg5[%c0_72, %c0_73, %c5_74, %c0_75] : memref<1x64x8x8xf32, #tpu.memory_space<vmem>>, vector<1x64x1x8xf32>
    %74 = vector.shape_cast %73 : vector<1x64x1x8xf32> to vector<64x8xf32>
    %75 = vector.shape_cast %72 : vector<64x8xf32> to vector<1x64x1x8xf32>
    tpu.vector_store %arg5[%c0_72, %c0_73, %c5_74, %c0_75], %75 {strides = array<i32>} : memref<1x64x8x8xf32, #tpu.memory_space<vmem>>, vector<1x64x1x8xf32>,
    %c12_76 = arith.constant 12 : index
    %c0_77 = arith.constant 0 : index
    %c0_78 = arith.constant 0 : index
    %76 = vector.load %arg8[%c12_76, %c0_77, %c0_78] : memref<17x64x8xf32, #tpu.memory_space<vmem>>, vector<1x64x8xf32>
    %77 = vector.shape_cast %76 : vector<1x64x8xf32> to vector<64x8xf32>
    %c13 = arith.constant 13 : index
    %c0_79 = arith.constant 0 : index
    %c0_80 = arith.constant 0 : index
    %78 = vector.load %arg8[%c13, %c0_79, %c0_80] : memref<17x64x8xf32, #tpu.memory_space<vmem>>, vector<1x64x8xf32>
    %79 = vector.shape_cast %78 : vector<1x64x8xf32> to vector<64x8xf32>
    %80 = arith.maximumf %77, %79 : vector<64x8xf32>
    %c14 = arith.constant 14 : index
    %c0_81 = arith.constant 0 : index
    %c0_82 = arith.constant 0 : index
    %81 = vector.load %arg8[%c14, %c0_81, %c0_82] : memref<17x64x8xf32, #tpu.memory_space<vmem>>, vector<1x64x8xf32>
    %82 = vector.shape_cast %81 : vector<1x64x8xf32> to vector<64x8xf32>
    %83 = arith.maximumf %80, %82 : vector<64x8xf32>
    %c0_83 = arith.constant 0 : index
    %c0_84 = arith.constant 0 : index
    %c6_85 = arith.constant 6 : index
    %c0_86 = arith.constant 0 : index
    %84 = vector.load %arg5[%c0_83, %c0_84, %c6_85, %c0_86] : memref<1x64x8x8xf32, #tpu.memory_space<vmem>>, vector<1x64x1x8xf32>
    %85 = vector.shape_cast %84 : vector<1x64x1x8xf32> to vector<64x8xf32>
    %86 = vector.shape_cast %83 : vector<64x8xf32> to vector<1x64x1x8xf32>
    tpu.vector_store %arg5[%c0_83, %c0_84, %c6_85, %c0_86], %86 {strides = array<i32>} : memref<1x64x8x8xf32, #tpu.memory_space<vmem>>, vector<1x64x1x8xf32>,
    %c14_87 = arith.constant 14 : index
    %c0_88 = arith.constant 0 : index
    %c0_89 = arith.constant 0 : index
    %87 = vector.load %arg8[%c14_87, %c0_88, %c0_89] : memref<17x64x8xf32, #tpu.memory_space<vmem>>, vector<1x64x8xf32>
    %88 = vector.shape_cast %87 : vector<1x64x8xf32> to vector<64x8xf32>
    %c15 = arith.constant 15 : index
    %c0_90 = arith.constant 0 : index
    %c0_91 = arith.constant 0 : index
    %89 = vector.load %arg8[%c15, %c0_90, %c0_91] : memref<17x64x8xf32, #tpu.memory_space<vmem>>, vector<1x64x8xf32>
    %90 = vector.shape_cast %89 : vector<1x64x8xf32> to vector<64x8xf32>
    %91 = arith.maximumf %88, %90 : vector<64x8xf32>
    %c16 = arith.constant 16 : index
    %c0_92 = arith.constant 0 : index
    %c0_93 = arith.constant 0 : index
    %92 = vector.load %arg8[%c16, %c0_92, %c0_93] : memref<17x64x8xf32, #tpu.memory_space<vmem>>, vector<1x64x8xf32>
    %93 = vector.shape_cast %92 : vector<1x64x8xf32> to vector<64x8xf32>
    %94 = arith.maximumf %91, %93 : vector<64x8xf32>
    %c0_94 = arith.constant 0 : index
    %c0_95 = arith.constant 0 : index
    %c7_96 = arith.constant 7 : index
    %c0_97 = arith.constant 0 : index
    %95 = vector.load %arg5[%c0_94, %c0_95, %c7_96, %c0_97] : memref<1x64x8x8xf32, #tpu.memory_space<vmem>>, vector<1x64x1x8xf32>
    %96 = vector.shape_cast %95 : vector<1x64x1x8xf32> to vector<64x8xf32>
    %97 = vector.shape_cast %94 : vector<64x8xf32> to vector<1x64x1x8xf32>
    tpu.vector_store %arg5[%c0_94, %c0_95, %c7_96, %c0_97], %97 {strides = array<i32>} : memref<1x64x8x8xf32, #tpu.memory_space<vmem>>, vector<1x64x1x8xf32>,
    return
  }
  func.func @transform_0(%arg0: i32, %arg1: i32) -> (i32, i32, i32, i32) {
    %c0_i32 = arith.constant 0 : i32
    %c0_i32_0 = arith.constant 0 : i32
    %c0_i32_1 = arith.constant 0 : i32
    %c0_i32_2 = arith.constant 0 : i32
    return %arg0, %c0_i32, %c0_i32_0, %c0_i32_1 : i32, i32, i32, i32
  }
  func.func @transform_1(%arg0: i32, %arg1: i32) -> (i32, i32) {
    %c0_i32 = arith.constant 0 : i32
    %c0_i32_0 = arith.constant 0 : i32
    %c0_i32_1 = arith.constant 0 : i32
    return %c0_i32, %c0_i32_0 : i32, i32
  }
  func.func @transform_2(%arg0: i32, %arg1: i32) -> (i32, i32) {
    %c0_i32 = arith.constant 0 : i32
    %c0_i32_0 = arith.constant 0 : i32
    %c0_i32_1 = arith.constant 0 : i32
    return %c0_i32, %c0_i32_0 : i32, i32
  }
  func.func @transform_3(%arg0: i32, %arg1: i32) -> (i32, i32, i32, i32) {
    %c0_i32 = arith.constant 0 : i32
    %c0_i32_0 = arith.constant 0 : i32
    %c0_i32_1 = arith.constant 0 : i32
    return %arg0, %c0_i32, %arg1, %c0_i32_0 : i32, i32, i32, i32
  }
}

</mosaic_0001>

<llo_original>
// kernel: visible_net_resnet_forward.1
$region0: #{visible_net_resnet_forward.1}
  #allocation0 [shape = 'u32[]', space=smem, size = 0x4, offset = 0x4, fixed_abs, tag = 'smem constant byte address 0x4 - core index']
  #allocation1 [shape = 'u32[144,128]{1,0:T(1,128)}', space=vmem, size = 0x12000, scoped, tag = 'internal scratch']
  #allocation2 [shape = 'f32[256,8]{1,0:T(8,128)}', space=vmem, size = 0x20000, scoped, tag = 'scratch operand']
  #allocation3 [shape = 'f32[256,8]{1,0:T(8,128)}', space=vmem, size = 0x20000, scoped, tag = 'scratch operand']
  #allocation4 [shape = 'f32[17,64,8]{2,1,0:T(8,128)}', space=vmem, size = 0x88000, scoped, tag = 'scratch operand']
  %s0 = inlined_call_operand.vmem [shape: f32[2,24,20,10], index: 0, kind: input, shape index: {}]
  %s1 = inlined_call_operand.vmem [shape: f32[64,256], index: 1, kind: input, shape index: {}]
  %s2 = inlined_call_operand.vmem [shape: f32[64,1], index: 2, kind: input, shape index: {}]
  %s3 = inlined_call_operand.vmem [shape: f32[2,64,8,8], index: 3, kind: output, shape index: {}]
  %s4 = sld [smem:[#allocation0]]
  $region52: #{visible_net_resnet_forward.1} parent=0
    _
  %s6 = ssub.s32 1, %s4
  %s7 = scalar_select 0, %s6, %s4
  loop: start=0, step=1, limit=4
  $region2: #{visible_net_resnet_forward.1} parent=0 // loop_pre_header
    _
  $region3: #{visible_net_resnet_forward.1} parent=0 // loop_header
    %s9 = sphi 0, %s13
    %p10 = scmp.ge.s32.totalorder %s9, 4
    %s16 = sphi 0, %s28
    %s17 = sphi 0, %s24
    %s18 = sphi 0, %s16
    %s19 = sphi 0, %s17
    %s20 = sphi 0, %s18
    %s21 = sphi 0, %s19
    %s31 = sphi 0, %s33
    %s34 = sphi 0, %s31
    %s35 = sphi 0, %s34
    %s51 = sphi 0, %s35
    %s55 = sphi 0, %s55
    %s57 = sphi 0, %s55
    %s58 = sphi 0, %s57
    %s72 = sphi 0, %s58
    %s76 = sphi 0, %s76
    %s78 = sphi 0, %s76
    %s79 = sphi 0, %s78
    %s93 = sphi 0, %s79
    %s101 = sphi 0, %s103
    %s104 = sphi 0, %s101
    %s105 = sphi 0, %s104
    %s121 = sphi 0, %s105
  $region4: #{visible_net_resnet_forward.1} parent=0 // loop_header_branch
    %12 = sbr.rel (%p10) target = $region8
  $region5: #{visible_net_resnet_forward.1} parent=0 // loop_body
    %s14 = ssub.s32 %s9, 1
    %s15 = ssub.s32 %s9, 2
    %s22 = sadd.s32 1, %s17
    %p23 = scmp.ge.s32.totalorder %s22, 1
    %s24 = scalar_select %p23, 0, %s22
    %s25 = sadd.s32 1, %s16
    %s26 = scalar_select %p23, %s25, %s16
    %p27 = scmp.ge.s32.totalorder %s26, 2
    %s28 = scalar_select %p27, 0, %s26
    %s29 = ssub.s32 %s16, %s28
    %p30 = scmp.eq.s32.totalorder %s29, 0
    %s32 = sadd.s32 %s31, 1
    %s33 = scalar_select %p30, %s31, %s32
    %p36 = pneg %p30
    %p37 = scmp.eq.s32.totalorder %s9, 1
    %p38 = por %p36, %p37
    %p39 = scmp.ne.s32.totalorder %s31, %s34
    %p40 = scmp.eq.s32.totalorder %s9, 0
    %p41 = por %p39, %p40
    %p42 = scmp.ne.s32.totalorder %s31, %s34
    %p43 = scmp.eq.s32.totalorder %s14, 1
    %p44 = por %p42, %p43
    %p45 = scmp.ne.s32.totalorder %s34, %s35
    %p46 = scmp.eq.s32.totalorder %s14, 0
    %p47 = por %p45, %p46
    %p48 = scmp.ne.s32.totalorder %s34, %s35
    %p49 = scmp.eq.s32.totalorder %s15, 1
    %p50 = por %p48, %p49
    %p52 = scmp.ne.s32.totalorder %s35, %s51
    %p53 = scmp.eq.s32.totalorder %s15, 0
    %p54 = por %p52, %p53
    %s56 = sadd.s32 %s55, 1
    %p59 = scmp.eq.s32.totalorder %s9, 1
    %p60 = scmp.ne.s32.totalorder %s55, %s57
    %p61 = scmp.eq.s32.totalorder %s9, 0
    %p62 = por %p60, %p61
    %p63 = scmp.ne.s32.totalorder %s55, %s57
    %p64 = scmp.eq.s32.totalorder %s14, 1
    %p65 = por %p63, %p64
    %p66 = scmp.ne.s32.totalorder %s57, %s58
    %p67 = scmp.eq.s32.totalorder %s14, 0
    %p68 = por %p66, %p67
    %p69 = scmp.ne.s32.totalorder %s57, %s58
    %p70 = scmp.eq.s32.totalorder %s15, 1
    %p71 = por %p69, %p70
    %p73 = scmp.ne.s32.totalorder %s58, %s72
    %p74 = scmp.eq.s32.totalorder %s15, 0
    %p75 = por %p73, %p74
    %s77 = sadd.s32 %s76, 1
    %p80 = scmp.eq.s32.totalorder %s9, 1
    %p81 = scmp.ne.s32.totalorder %s76, %s78
    %p82 = scmp.eq.s32.totalorder %s9, 0
    %p83 = por %p81, %p82
    %p84 = scmp.ne.s32.totalorder %s76, %s78
    %p85 = scmp.eq.s32.totalorder %s14, 1
    %p86 = por %p84, %p85
    %p87 = scmp.ne.s32.totalorder %s78, %s79
    %p88 = scmp.eq.s32.totalorder %s14, 0
    %p89 = por %p87, %p88
    %p90 = scmp.ne.s32.totalorder %s78, %s79
    %p91 = scmp.eq.s32.totalorder %s15, 1
    %p92 = por %p90, %p91
    %p94 = scmp.ne.s32.totalorder %s79, %s93
    %p95 = scmp.eq.s32.totalorder %s15, 0
    %p96 = por %p94, %p95
    %s97 = ssub.s32 %s16, %s28
    %s98 = ssub.s32 %s17, %s24
    %s99 = sor.u32 %s97, %s98
    %p100 = scmp.eq.s32.totalorder %s99, 0
    %s102 = sadd.s32 %s101, 1
    %s103 = scalar_select %p100, %s101, %s102
    %p106 = pneg %p100
    %p107 = scmp.eq.s32.totalorder %s9, 1
    %p108 = por %p106, %p107
    %p109 = scmp.ne.s32.totalorder %s101, %s104
    %p110 = scmp.eq.s32.totalorder %s9, 0
    %p111 = por %p109, %p110
    %p112 = scmp.ne.s32.totalorder %s101, %s104
    %p113 = scmp.eq.s32.totalorder %s14, 1
    %p114 = por %p112, %p113
    %p115 = scmp.ne.s32.totalorder %s104, %s105
    %p116 = scmp.eq.s32.totalorder %s14, 0
    %p117 = por %p115, %p116
    %p118 = scmp.ne.s32.totalorder %s104, %s105
    %p119 = scmp.eq.s32.totalorder %s15, 1
    %p120 = por %p118, %p119
    %p122 = scmp.ne.s32.totalorder %s105, %s121
    %p123 = scmp.eq.s32.totalorder %s15, 0
    %p124 = por %p122, %p123
    %p125 = scmp.le.s32.totalorder 1, %s9
    %p126 = scmp.lt.s32.totalorder %s9, 3
    %p127 = pnand %p125, %p126
    %p128 = pneg %p127
    // Predicated region
    $region9: #{visible_net_resnet_forward.1} parent=5 // pred_check
      _
    $region10: #{visible_net_resnet_forward.1} parent=5 // pred_check_branch
      %130 = sbr.rel (%p127) target = $region12
    $region11: #{visible_net_resnet_forward.1} parent=5 // pred_region
      %s131 = ssub.s32 %s9, 1
      // Predicated region
      $region13: #{visible_net_resnet_forward.1} parent=11 // pred_check
        %p132 = pneg %p68
      $region14: #{visible_net_resnet_forward.1} parent=11 // pred_check_branch
        %134 = sbr.rel (%p132) target = $region16
      $region15: #{visible_net_resnet_forward.1} parent=11 // pred_region
        _
      $region16: #{visible_net_resnet_forward.1} parent=11 // pred_fallthru
        _
      // Predicated region
      $region17: #{visible_net_resnet_forward.1} parent=11 // pred_check
        %p135 = pneg %p89
      $region18: #{visible_net_resnet_forward.1} parent=11 // pred_check_branch
        %137 = sbr.rel (%p135) target = $region20
      $region19: #{visible_net_resnet_forward.1} parent=11 // pred_region
        _
      $region20: #{visible_net_resnet_forward.1} parent=11 // pred_fallthru
        _
    $region12: #{visible_net_resnet_forward.1} parent=5 // pred_fallthru
      _
    %p138 = scmp.lt.s32.totalorder %s9, 2
    // Predicated region
    $region21: #{visible_net_resnet_forward.1} parent=5 // pred_check
      %p139 = pneg %p138
    $region22: #{visible_net_resnet_forward.1} parent=5 // pred_check_branch
      %141 = sbr.rel (%p139) target = $region24
    $region23: #{visible_net_resnet_forward.1} parent=5 // pred_region
      // Predicated region
      $region25: #{visible_net_resnet_forward.1} parent=23 // pred_check
        %p142 = pneg %p41
      $region26: #{visible_net_resnet_forward.1} parent=23 // pred_check_branch
        %144 = sbr.rel (%p142) target = $region28
      $region27: #{visible_net_resnet_forward.1} parent=23 // pred_region
        %p145 = scmp.lt.s32.totalorder %s16, 1
        %s146 = scalar_select %p145, %s16, 1
        %s147 = smul.addr %s146, 72
        %s148 = smul.addr %s147, 8
        %s149 = scalar_lea.vmem %s0, %s148
      $region28: #{visible_net_resnet_forward.1} parent=23 // pred_fallthru
        _
    $region24: #{visible_net_resnet_forward.1} parent=5 // pred_fallthru
      _
    %p150 = scmp.le.s32.totalorder 1, %s9
    %p151 = scmp.lt.s32.totalorder %s9, 3
    %p152 = pnand %p150, %p151
    %p153 = pneg %p152
    // Predicated region
    $region29: #{visible_net_resnet_forward.1} parent=5 // pred_check
      _
    $region30: #{visible_net_resnet_forward.1} parent=5 // pred_check_branch
      %155 = sbr.rel (%p152) target = $region32
    $region31: #{visible_net_resnet_forward.1} parent=5 // pred_region
      %s156 = ssub.s32 %s9, 1
      %p157 = scmp.lt.s32.totalorder %s18, 1
      %s158 = scalar_select %p157, %s18, 1
      %s159 = smul.addr %s158, 72
      %s160 = smul.addr %s159, 8
      %s161 = scalar_lea.vmem %s0, %s160
      %p162 = pneg %p47
      %p163 = pneg %p44
      %p164 = pneg %p68
      %p165 = pneg %p65
      %p166 = pneg %p89
      %p167 = pneg %p86
      %p168 = pneg %p117
      %p169 = pneg %p114
      %p170 = scmp.lt.s32.totalorder %s18, 1
      %s171 = scalar_select %p170, %s18, 1
      %p172 = scmp.lt.s32.totalorder %s19, 0
      %s173 = scalar_select %p172, %s19, 0
      %s174 = smul.addr %s171, 64
      %s175 = sadd.s32 %s173, %s174
      %s176 = smul.addr %s175, 8
      %s177 = scalar_lea.vmem %s3, %s176
      %p178 = scmp.lt.s32.totalorder %s18, 1
      %s179 = scalar_select %p178, %s18, 1
      %s180 = smul.addr %s179, 72
      %s181 = smul.addr %s180, 8
      %s182 = scalar_lea.vmem %s0, %s181
      %p183 = scmp.lt.s32.totalorder %s18, 1
      %s184 = scalar_select %p183, %s18, 1
      %p185 = scmp.lt.s32.totalorder %s19, 0
      %s186 = scalar_select %p185, %s19, 0
      %s187 = smul.addr %s184, 64
      %s188 = sadd.s32 %s186, %s187
      %s189 = smul.addr %s188, 8
      %s190 = scalar_lea.vmem %s3, %s189
      %s191 = smul.u32 %s19, 16
      %vm192 = vcmask 64512
      %193 = vst.msk [vmem:[#allocation2] sm:$0xff] %vm192, 0.0
      %194 = vst.msk [vmem:[#allocation2 + $0x8] sm:$0xff] %vm192, 0.0
      %195 = vst.msk [vmem:[#allocation2 + $0x10] sm:$0xff] %vm192, 0.0
      %196 = vst.msk [vmem:[#allocation2 + $0x18] sm:$0xff] %vm192, 0.0
      %197 = vst.msk [vmem:[#allocation2 + $0x20] sm:$0xff] %vm192, 0.0
      %198 = vst.msk [vmem:[#allocation2 + $0x28] sm:$0xff] %vm192, 0.0
      %199 = vst.msk [vmem:[#allocation2 + $0x30] sm:$0xff] %vm192, 0.0
      %200 = vst.msk [vmem:[#allocation2 + $0x38] sm:$0xff] %vm192, 0.0
      %201 = vst.msk [vmem:[#allocation2 + $0x40] sm:$0xff] %vm192, 0.0
      %202 = vst.msk [vmem:[#allocation2 + $0x48] sm:$0xff] %vm192, 0.0
      %203 = vst.msk [vmem:[#allocation2 + $0x50] sm:$0xff] %vm192, 0.0
      %204 = vst.msk [vmem:[#allocation2 + $0x58] sm:$0xff] %vm192, 0.0
      %205 = vst.msk [vmem:[#allocation2 + $0x60] sm:$0xff] %vm192, 0.0
      %206 = vst.msk [vmem:[#allocation2 + $0x68] sm:$0xff] %vm192, 0.0
      %207 = vst.msk [vmem:[#allocation2 + $0x70] sm:$0xff] %vm192, 0.0
      %208 = vst.msk [vmem:[#allocation2 + $0x78] sm:$0xff] %vm192, 0.0
      %209 = vst.msk [vmem:[#allocation2 + $0x80] sm:$0xff] %vm192, 0.0
      %210 = vst.msk [vmem:[#allocation2 + $0x88] sm:$0xff] %vm192, 0.0
      %211 = vst.msk [vmem:[#allocation2 + $0x90] sm:$0xff] %vm192, 0.0
      %212 = vst.msk [vmem:[#allocation2 + $0x98] sm:$0xff] %vm192, 0.0
      %213 = vst.msk [vmem:[#allocation2 + $0xa0] sm:$0xff] %vm192, 0.0
      %214 = vst.msk [vmem:[#allocation2 + $0xa8] sm:$0xff] %vm192, 0.0
      %215 = vst.msk [vmem:[#allocation2 + $0xb0] sm:$0xff] %vm192, 0.0
      %216 = vst.msk [vmem:[#allocation2 + $0xb8] sm:$0xff] %vm192, 0.0
      %217 = vst.msk [vmem:[#allocation2 + $0xc0] sm:$0xff] %vm192, 0.0
      %218 = vst.msk [vmem:[#allocation2 + $0xc8] sm:$0xff] %vm192, 0.0
      %219 = vst.msk [vmem:[#allocation2 + $0xd0] sm:$0xff] %vm192, 0.0
      %220 = vst.msk [vmem:[#allocation2 + $0xd8] sm:$0xff] %vm192, 0.0
      %221 = vst.msk [vmem:[#allocation2 + $0xe0] sm:$0xff] %vm192, 0.0
      %222 = vst.msk [vmem:[#allocation2 + $0xe8] sm:$0xff] %vm192, 0.0
      %223 = vst.msk [vmem:[#allocation2 + $0xf0] sm:$0xff] %vm192, 0.0
      %224 = vst.msk [vmem:[#allocation2 + $0xf8] sm:$0xff] %vm192, 0.0
      %225 = vst.msk [vmem:[#allocation3] sm:$0xff] %vm192, 0.0
      %226 = vst.msk [vmem:[#allocation3 + $0x8] sm:$0xff] %vm192, 0.0
      %227 = vst.msk [vmem:[#allocation3 + $0x10] sm:$0xff] %vm192, 0.0
      %228 = vst.msk [vmem:[#allocation3 + $0x18] sm:$0xff] %vm192, 0.0
      %229 = vst.msk [vmem:[#allocation3 + $0x20] sm:$0xff] %vm192, 0.0
      %230 = vst.msk [vmem:[#allocation3 + $0x28] sm:$0xff] %vm192, 0.0
      %231 = vst.msk [vmem:[#allocation3 + $0x30] sm:$0xff] %vm192, 0.0
      %232 = vst.msk [vmem:[#allocation3 + $0x38] sm:$0xff] %vm192, 0.0
      %233 = vst.msk [vmem:[#allocation3 + $0x40] sm:$0xff] %vm192, 0.0
      %234 = vst.msk [vmem:[#allocation3 + $0x48] sm:$0xff] %vm192, 0.0
      %235 = vst.msk [vmem:[#allocation3 + $0x50] sm:$0xff] %vm192, 0.0
      %236 = vst.msk [vmem:[#allocation3 + $0x58] sm:$0xff] %vm192, 0.0
      %237 = vst.msk [vmem:[#allocation3 + $0x60] sm:$0xff] %vm192, 0.0
      %238 = vst.msk [vmem:[#allocation3 + $0x68] sm:$0xff] %vm192, 0.0
      %239 = vst.msk [vmem:[#allocation3 + $0x70] sm:$0xff] %vm192, 0.0
      %240 = vst.msk [vmem:[#allocation3 + $0x78] sm:$0xff] %vm192, 0.0
      %241 = vst.msk [vmem:[#allocation3 + $0x80] sm:$0xff] %vm192, 0.0
      %242 = vst.msk [vmem:[#allocation3 + $0x88] sm:$0xff] %vm192, 0.0
      %243 = vst.msk [vmem:[#allocation3 + $0x90] sm:$0xff] %vm192, 0.0
      %244 = vst.msk [vmem:[#allocation3 + $0x98] sm:$0xff] %vm192, 0.0
      %245 = vst.msk [vmem:[#allocation3 + $0xa0] sm:$0xff] %vm192, 0.0
      %246 = vst.msk [vmem:[#allocation3 + $0xa8] sm:$0xff] %vm192, 0.0
      %247 = vst.msk [vmem:[#allocation3 + $0xb0] sm:$0xff] %vm192, 0.0
      %248 = vst.msk [vmem:[#allocation3 + $0xb8] sm:$0xff] %vm192, 0.0
      %249 = vst.msk [vmem:[#allocation3 + $0xc0] sm:$0xff] %vm192, 0.0
      %250 = vst.msk [vmem:[#allocation3 + $0xc8] sm:$0xff] %vm192, 0.0
      %251 = vst.msk [vmem:[#allocation3 + $0xd0] sm:$0xff] %vm192, 0.0
      %252 = vst.msk [vmem:[#allocation3 + $0xd8] sm:$0xff] %vm192, 0.0
      %253 = vst.msk [vmem:[#allocation3 + $0xe0] sm:$0xff] %vm192, 0.0
      %254 = vst.msk [vmem:[#allocation3 + $0xe8] sm:$0xff] %vm192, 0.0
      %255 = vst.msk [vmem:[#allocation3 + $0xf0] sm:$0xff] %vm192, 0.0
      %256 = vst.msk [vmem:[#allocation3 + $0xf8] sm:$0xff] %vm192, 0.0
      %v257 = vld [vmem:[%s1] sm:$0xff]
      %v258 = vld [vmem:[%s1 + $0x8] sm:$0xff]
      %v259 = vld [vmem:[%s1 + $0x10] sm:$0xff]
      %v260 = vld [vmem:[%s1 + $0x18] sm:$0xff]
      %v261 = vld [vmem:[%s1 + $0x20] sm:$0xff]
      %v262 = vld [vmem:[%s1 + $0x28] sm:$0xff]
      %v263 = vld [vmem:[%s1 + $0x30] sm:$0xff]
      %v264 = vld [vmem:[%s1 + $0x38] sm:$0xff]
      %v265 = vld [vmem:[%s1 + $0x40] sm:$0xff]
      %v266 = vld [vmem:[%s1 + $0x48] sm:$0xff]
      %v267 = vld [vmem:[%s1 + $0x50] sm:$0xff]
      %v268 = vld [vmem:[%s1 + $0x58] sm:$0xff]
      %v269 = vld [vmem:[%s1 + $0x60] sm:$0xff]
      %v270 = vld [vmem:[%s1 + $0x68] sm:$0xff]
      %v271 = vld [vmem:[%s1 + $0x70] sm:$0xff]
      %v272 = vld [vmem:[%s1 + $0x78] sm:$0xff]
      %v273 = vld [vmem:[%s2] sm:$0xff]
      %v274 = vld [vmem:[%s2 + $0x8] sm:$0xff]
      %v275 = vld [vmem:[%s2 + $0x10] sm:$0xff]
      %v276 = vld [vmem:[%s2 + $0x18] sm:$0xff]
      %v277 = vld [vmem:[%s2 + $0x20] sm:$0xff]
      %v278 = vld [vmem:[%s2 + $0x28] sm:$0xff]
      %v279 = vld [vmem:[%s2 + $0x30] sm:$0xff]
      %v280 = vld [vmem:[%s2 + $0x38] sm:$0xff]
      loop: start=0, step=1, limit=17
      $region33: #{visible_net_resnet_forward.1} parent=31 // loop_pre_header
        _
      $region34: #{visible_net_resnet_forward.1} parent=31 // loop_header
        %s282 = sphi 0, %s286
        %p283 = scmp.ge.s32.totalorder %s282, 17
      $region35: #{visible_net_resnet_forward.1} parent=31 // loop_header_branch
        %285 = sbr.rel (%p283) target = $region39
      $region36: #{visible_net_resnet_forward.1} parent=31 // loop_body
        %s287 = sadd.s32 %s191, %s282
        %s288 = scalar_lea.vmem %s182, %s287
        %v289 = vld [vmem:[%s288] sm:$0x1]
        %v290 = vld [vmem:[%s288 + $0x18] sm:$0x1]
        %v291 = vld [vmem:[%s288 + $0x30] sm:$0x1]
        %v295 = vrot.slane %v290, 7
        %vm296 = vcmask 1041409
        %v297 = vsel %vm296, %v295, %v289
        %v298 = vrot.slane %v291, 6
        %vm299 = vcmask 1042434
        %v300 = vsel %vm299, %v298, %v297
        %vm302 = vcmask 59392
        %303 = vst.msk [vmem:[#allocation2] sm:$0x7] %vm302, %v300
        %s304 = sadd.s32 %s287, 144
        %s305 = scalar_lea.vmem %s182, %s304
        %v306 = vld [vmem:[%s305] sm:$0x1]
        %v307 = vld [vmem:[%s305 + $0x18] sm:$0x1]
        %v308 = vld [vmem:[%s305 + $0x30] sm:$0x1]
        %v312 = vrot.slane %v307, 7
        %v313 = vsel %vm296, %v312, %v306
        %v314 = vrot.slane %v308, 6
        %v315 = vsel %vm299, %v314, %v313
        %317 = vst.msk [vmem:[#allocation3] sm:$0x7] %vm302, %v315
        %s318 = sadd.s32 %s287, 72
        %s319 = scalar_lea.vmem %s182, %s318
        %v320 = vld [vmem:[%s319] sm:$0x1]
        %v321 = vld [vmem:[%s319 + $0x18] sm:$0x1]
        %v322 = vld [vmem:[%s319 + $0x30] sm:$0x1]
        %v326 = vrot.slane %v321, 7
        %v327 = vsel %vm296, %v326, %v320
        %v328 = vrot.slane %v322, 6
        %v329 = vsel %vm299, %v328, %v327
        %331 = vst.msk [vmem:[#allocation2 + $0x3] sm:$0x7] %vm302, %v329
        %s332 = sadd.s32 %s287, 216
        %s333 = scalar_lea.vmem %s182, %s332
        %v334 = vld [vmem:[%s333] sm:$0x1]
        %v335 = vld [vmem:[%s333 + $0x18] sm:$0x1]
        %v336 = vld [vmem:[%s333 + $0x30] sm:$0x1]
        %v340 = vrot.slane %v335, 7
        %v341 = vsel %vm296, %v340, %v334
        %v342 = vrot.slane %v336, 6
        %v343 = vsel %vm299, %v342, %v341
        %345 = vst.msk [vmem:[#allocation3 + $0x3] sm:$0x7] %vm302, %v343
        %v346 = vld [vmem:[%s305] sm:$0x1]
        %v347 = vld [vmem:[%s305 + $0x18] sm:$0x1]
        %v348 = vld [vmem:[%s305 + $0x30] sm:$0x1]
        %v352 = vrot.slane %v347, 7
        %v353 = vsel %vm296, %v352, %v346
        %v354 = vrot.slane %v348, 6
        %v355 = vsel %vm299, %v354, %v353
        %357 = vst.msk [vmem:[#allocation2 + $0x6] sm:$0x7] %vm302, %v355
        %v358 = vld [vmem:[%s288] sm:$0x1]
        %v359 = vld [vmem:[%s288 + $0x18] sm:$0x1]
        %v360 = vld [vmem:[%s288 + $0x30] sm:$0x1]
        %v364 = vrot.slane %v359, 7
        %v365 = vsel %vm296, %v364, %v358
        %v366 = vrot.slane %v360, 6
        %v367 = vsel %vm299, %v366, %v365
        %368 = vrot.lane.b32.xlu0 %v367, 127
        %v369 = vpop.permute.xlu0 %368
        %371 = vst.msk [vmem:[#allocation3 + $0x6] sm:$0x7] %vm302, %v369
        %v372 = vld [vmem:[%s333] sm:$0x1]
        %v373 = vld [vmem:[%s333 + $0x18] sm:$0x1]
        %v374 = vld [vmem:[%s333 + $0x30] sm:$0x1]
        %v378 = vrot.slane %v373, 7
        %v379 = vsel %vm296, %v378, %v372
        %v380 = vrot.slane %v374, 6
        %v381 = vsel %vm299, %v380, %v379
        %383 = vst.msk [vmem:[#allocation2 + $0x9] sm:$0x7] %vm302, %v381
        %v384 = vld [vmem:[%s319] sm:$0x1]
        %v385 = vld [vmem:[%s319 + $0x18] sm:$0x1]
        %v386 = vld [vmem:[%s319 + $0x30] sm:$0x1]
        %v390 = vrot.slane %v385, 7
        %v391 = vsel %vm296, %v390, %v384
        %v392 = vrot.slane %v386, 6
        %v393 = vsel %vm299, %v392, %v391
        %394 = vrot.lane.b32.xlu0 %v393, 127
        %v395 = vpop.permute.xlu0 %394
        %397 = vst.msk [vmem:[#allocation3 + $0x9] sm:$0x7] %vm302, %v395
        %v398 = vld [vmem:[%s288] sm:$0x1]
        %v399 = vld [vmem:[%s288 + $0x18] sm:$0x1]
        %v400 = vld [vmem:[%s288 + $0x30] sm:$0x1]
        %v404 = vrot.slane %v399, 7
        %v405 = vsel %vm296, %v404, %v398
        %v406 = vrot.slane %v400, 6
        %v407 = vsel %vm299, %v406, %v405
        %408 = vrot.lane.b32.xlu0 %v407, 127
        %v409 = vpop.permute.xlu0 %408
        %411 = vst.msk [vmem:[#allocation2 + $0xc] sm:$0x7] %vm302, %v409
        %v412 = vld [vmem:[%s305] sm:$0x1]
        %v413 = vld [vmem:[%s305 + $0x18] sm:$0x1]
        %v414 = vld [vmem:[%s305 + $0x30] sm:$0x1]
        %v418 = vrot.slane %v413, 7
        %v419 = vsel %vm296, %v418, %v412
        %v420 = vrot.slane %v414, 6
        %v421 = vsel %vm299, %v420, %v419
        %422 = vrot.lane.b32.xlu0 %v421, 127
        %v423 = vpop.permute.xlu0 %422
        %425 = vst.msk [vmem:[#allocation3 + $0xc] sm:$0x7] %vm302, %v423
        %v426 = vld [vmem:[%s319] sm:$0x1]
        %v427 = vld [vmem:[%s319 + $0x18] sm:$0x1]
        %v428 = vld [vmem:[%s319 + $0x30] sm:$0x1]
        %v432 = vrot.slane %v427, 7
        %v433 = vsel %vm296, %v432, %v426
        %v434 = vrot.slane %v428, 6
        %v435 = vsel %vm299, %v434, %v433
        %436 = vrot.lane.b32.xlu0 %v435, 127
        %v437 = vpop.permute.xlu0 %436
        %439 = vst.msk [vmem:[#allocation2 + $0xf] sm:$0x7] %vm302, %v437
        %v440 = vld [vmem:[%s333] sm:$0x1]
        %v441 = vld [vmem:[%s333 + $0x18] sm:$0x1]
        %v442 = vld [vmem:[%s333 + $0x30] sm:$0x1]
        %v446 = vrot.slane %v441, 7
        %v447 = vsel %vm296, %v446, %v440
        %v448 = vrot.slane %v442, 6
        %v449 = vsel %vm299, %v448, %v447
        %450 = vrot.lane.b32.xlu0 %v449, 127
        %v451 = vpop.permute.xlu0 %450
        %453 = vst.msk [vmem:[#allocation3 + $0xf] sm:$0x7] %vm302, %v451
        %v454 = vld [vmem:[%s305] sm:$0x1]
        %v455 = vld [vmem:[%s305 + $0x18] sm:$0x1]
        %v456 = vld [vmem:[%s305 + $0x30] sm:$0x1]
        %v460 = vrot.slane %v455, 7
        %v461 = vsel %vm296, %v460, %v454
        %v462 = vrot.slane %v456, 6
        %v463 = vsel %vm299, %v462, %v461
        %464 = vrot.lane.b32.xlu0 %v463, 127
        %v465 = vpop.permute.xlu0 %464
        %467 = vst.msk [vmem:[#allocation2 + $0x12] sm:$0x7] %vm302, %v465
        %v468 = vld [vmem:[%s288] sm:$0x1]
        %v469 = vld [vmem:[%s288 + $0x18] sm:$0x1]
        %v470 = vld [vmem:[%s288 + $0x30] sm:$0x1]
        %v474 = vrot.slane %v469, 7
        %v475 = vsel %vm296, %v474, %v468
        %v476 = vrot.slane %v470, 6
        %v477 = vsel %vm299, %v476, %v475
        %478 = vrot.lane.b32.xlu0 %v477, 126
        %v479 = vpop.permute.xlu0 %478
        %481 = vst.msk [vmem:[#allocation3 + $0x12] sm:$0x7] %vm302, %v479
        %s482 = sadd.s32 %s287, 288
        %s483 = scalar_lea.vmem %s182, %s482
        %v484 = vld [vmem:[%s483] sm:$0x1]
        %v485 = vld [vmem:[%s483 + $0x18] sm:$0x1]
        %v486 = vld [vmem:[%s483 + $0x30] sm:$0x1]
        %v490 = vrot.slane %v485, 7
        %v491 = vsel %vm296, %v490, %v484
        %v492 = vrot.slane %v486, 6
        %v493 = vsel %vm299, %v492, %v491
        %495 = vst.msk [vmem:[#allocation2 + $0x15] sm:$0x7] %vm302, %v493
        %s496 = sadd.s32 %s287, 432
        %s497 = scalar_lea.vmem %s182, %s496
        %v498 = vld [vmem:[%s497] sm:$0x1]
        %v499 = vld [vmem:[%s497 + $0x18] sm:$0x1]
        %v500 = vld [vmem:[%s497 + $0x30] sm:$0x1]
        %v504 = vrot.slane %v499, 7
        %v505 = vsel %vm296, %v504, %v498
        %v506 = vrot.slane %v500, 6
        %v507 = vsel %vm299, %v506, %v505
        %509 = vst.msk [vmem:[#allocation3 + $0x15] sm:$0x7] %vm302, %v507
        %s510 = sadd.s32 %s287, 360
        %s511 = scalar_lea.vmem %s182, %s510
        %v512 = vld [vmem:[%s511] sm:$0x1]
        %v513 = vld [vmem:[%s511 + $0x18] sm:$0x1]
        %v514 = vld [vmem:[%s511 + $0x30] sm:$0x1]
        %v518 = vrot.slane %v513, 7
        %v519 = vsel %vm296, %v518, %v512
        %v520 = vrot.slane %v514, 6
        %v521 = vsel %vm299, %v520, %v519
        %523 = vst.msk [vmem:[#allocation2 + $0x18] sm:$0x7] %vm302, %v521
        %s524 = sadd.s32 %s287, 504
        %s525 = scalar_lea.vmem %s182, %s524
        %v526 = vld [vmem:[%s525] sm:$0x1]
        %v527 = vld [vmem:[%s525 + $0x18] sm:$0x1]
        %v528 = vld [vmem:[%s525 + $0x30] sm:$0x1]
        %v532 = vrot.slane %v527, 7
        %v533 = vsel %vm296, %v532, %v526
        %v534 = vrot.slane %v528, 6
        %v535 = vsel %vm299, %v534, %v533
        %537 = vst.msk [vmem:[#allocation3 + $0x18] sm:$0x7] %vm302, %v535
        %v538 = vld [vmem:[%s497] sm:$0x1]
        %v539 = vld [vmem:[%s497 + $0x18] sm:$0x1]
        %v540 = vld [vmem:[%s497 + $0x30] sm:$0x1]
        %v544 = vrot.slane %v539, 7
        %v545 = vsel %vm296, %v544, %v538
        %v546 = vrot.slane %v540, 6
        %v547 = vsel %vm299, %v546, %v545
        %549 = vst.msk [vmem:[#allocation2 + $0x1b] sm:$0x7] %vm302, %v547
        %v550 = vld [vmem:[%s483] sm:$0x1]
        %v551 = vld [vmem:[%s483 + $0x18] sm:$0x1]
        %v552 = vld [vmem:[%s483 + $0x30] sm:$0x1]
        %v556 = vrot.slane %v551, 7
        %v557 = vsel %vm296, %v556, %v550
        %v558 = vrot.slane %v552, 6
        %v559 = vsel %vm299, %v558, %v557
        %560 = vrot.lane.b32.xlu0 %v559, 127
        %v561 = vpop.permute.xlu0 %560
        %563 = vst.msk [vmem:[#allocation3 + $0x1b] sm:$0x7] %vm302, %v561
        %v564 = vld [vmem:[%s525] sm:$0x1]
        %v565 = vld [vmem:[%s525 + $0x18] sm:$0x1]
        %v566 = vld [vmem:[%s525 + $0x30] sm:$0x1]
        %v570 = vrot.slane %v565, 7
        %v571 = vsel %vm296, %v570, %v564
        %v572 = vrot.slane %v566, 6
        %v573 = vsel %vm299, %v572, %v571
        %575 = vst.msk [vmem:[#allocation2 + $0x1e] sm:$0x7] %vm302, %v573
        %v576 = vld [vmem:[%s511] sm:$0x1]
        %v577 = vld [vmem:[%s511 + $0x18] sm:$0x1]
        %v578 = vld [vmem:[%s511 + $0x30] sm:$0x1]
        %v582 = vrot.slane %v577, 7
        %v583 = vsel %vm296, %v582, %v576
        %v584 = vrot.slane %v578, 6
        %v585 = vsel %vm299, %v584, %v583
        %586 = vrot.lane.b32.xlu0 %v585, 127
        %v587 = vpop.permute.xlu0 %586
        %589 = vst.msk [vmem:[#allocation3 + $0x1e] sm:$0x7] %vm302, %v587
        %v590 = vld [vmem:[%s483] sm:$0x1]
        %v591 = vld [vmem:[%s483 + $0x18] sm:$0x1]
        %v592 = vld [vmem:[%s483 + $0x30] sm:$0x1]
        %v596 = vrot.slane %v591, 7
        %v597 = vsel %vm296, %v596, %v590
        %v598 = vrot.slane %v592, 6
        %v599 = vsel %vm299, %v598, %v597
        %600 = vrot.lane.b32.xlu0 %v599, 127
        %v601 = vpop.permute.xlu0 %600
        %603 = vst.msk [vmem:[#allocation2 + $0x21] sm:$0x7] %vm302, %v601
        %v604 = vld [vmem:[%s497] sm:$0x1]
        %v605 = vld [vmem:[%s497 + $0x18] sm:$0x1]
        %v606 = vld [vmem:[%s497 + $0x30] sm:$0x1]
        %v610 = vrot.slane %v605, 7
        %v611 = vsel %vm296, %v610, %v604
        %v612 = vrot.slane %v606, 6
        %v613 = vsel %vm299, %v612, %v611
        %614 = vrot.lane.b32.xlu0 %v613, 127
        %v615 = vpop.permute.xlu0 %614
        %617 = vst.msk [vmem:[#allocation3 + $0x21] sm:$0x7] %vm302, %v615
        %v618 = vld [vmem:[%s511] sm:$0x1]
        %v619 = vld [vmem:[%s511 + $0x18] sm:$0x1]
        %v620 = vld [vmem:[%s511 + $0x30] sm:$0x1]
        %v624 = vrot.slane %v619, 7
        %v625 = vsel %vm296, %v624, %v618
        %v626 = vrot.slane %v620, 6
        %v627 = vsel %vm299, %v626, %v625
        %628 = vrot.lane.b32.xlu0 %v627, 127
        %v629 = vpop.permute.xlu0 %628
        %631 = vst.msk [vmem:[#allocation2 + $0x24] sm:$0x7] %vm302, %v629
        %v632 = vld [vmem:[%s525] sm:$0x1]
        %v633 = vld [vmem:[%s525 + $0x18] sm:$0x1]
        %v634 = vld [vmem:[%s525 + $0x30] sm:$0x1]
        %v638 = vrot.slane %v633, 7
        %v639 = vsel %vm296, %v638, %v632
        %v640 = vrot.slane %v634, 6
        %v641 = vsel %vm299, %v640, %v639
        %642 = vrot.lane.b32.xlu0 %v641, 127
        %v643 = vpop.permute.xlu0 %642
        %645 = vst.msk [vmem:[#allocation3 + $0x24] sm:$0x7] %vm302, %v643
        %v646 = vld [vmem:[%s497] sm:$0x1]
        %v647 = vld [vmem:[%s497 + $0x18] sm:$0x1]
        %v648 = vld [vmem:[%s497 + $0x30] sm:$0x1]
        %v652 = vrot.slane %v647, 7
        %v653 = vsel %vm296, %v652, %v646
        %v654 = vrot.slane %v648, 6
        %v655 = vsel %vm299, %v654, %v653
        %656 = vrot.lane.b32.xlu0 %v655, 127
        %v657 = vpop.permute.xlu0 %656
        %659 = vst.msk [vmem:[#allocation2 + $0x27] sm:$0x7] %vm302, %v657
        %v660 = vld [vmem:[%s483] sm:$0x1]
        %v661 = vld [vmem:[%s483 + $0x18] sm:$0x1]
        %v662 = vld [vmem:[%s483 + $0x30] sm:$0x1]
        %v666 = vrot.slane %v661, 7
        %v667 = vsel %vm296, %v666, %v660
        %v668 = vrot.slane %v662, 6
        %v669 = vsel %vm299, %v668, %v667
        %670 = vrot.lane.b32.xlu0 %v669, 126
        %v671 = vpop.permute.xlu0 %670
        %673 = vst.msk [vmem:[#allocation3 + $0x27] sm:$0x7] %vm302, %v671
        %s674 = sadd.s32 %s287, 1
        %s675 = scalar_lea.vmem %s182, %s674
        %v676 = vld [vmem:[%s675] sm:$0x1]
        %v677 = vld [vmem:[%s675 + $0x18] sm:$0x1]
        %v678 = vld [vmem:[%s675 + $0x30] sm:$0x1]
        %v682 = vrot.slane %v677, 7
        %v683 = vsel %vm296, %v682, %v676
        %v684 = vrot.slane %v678, 6
        %v685 = vsel %vm299, %v684, %v683
        %687 = vst.msk [vmem:[#allocation2 + $0x2a] sm:$0x7] %vm302, %v685
        %s688 = sadd.s32 %s674, 144
        %s689 = scalar_lea.vmem %s182, %s688
        %v690 = vld [vmem:[%s689] sm:$0x1]
        %v691 = vld [vmem:[%s689 + $0x18] sm:$0x1]
        %v692 = vld [vmem:[%s689 + $0x30] sm:$0x1]
        %v696 = vrot.slane %v691, 7
        %v697 = vsel %vm296, %v696, %v690
        %v698 = vrot.slane %v692, 6
        %v699 = vsel %vm299, %v698, %v697
        %701 = vst.msk [vmem:[#allocation3 + $0x2a] sm:$0x7] %vm302, %v699
        %s702 = sadd.s32 %s674, 72
        %s703 = scalar_lea.vmem %s182, %s702
        %v704 = vld [vmem:[%s703] sm:$0x1]
        %v705 = vld [vmem:[%s703 + $0x18] sm:$0x1]
        %v706 = vld [vmem:[%s703 + $0x30] sm:$0x1]
        %v710 = vrot.slane %v705, 7
        %v711 = vsel %vm296, %v710, %v704
        %v712 = vrot.slane %v706, 6
        %v713 = vsel %vm299, %v712, %v711
        %715 = vst.msk [vmem:[#allocation2 + $0x2d] sm:$0x7] %vm302, %v713
        %s716 = sadd.s32 %s674, 216
        %s717 = scalar_lea.vmem %s182, %s716
        %v718 = vld [vmem:[%s717] sm:$0x1]
        %v719 = vld [vmem:[%s717 + $0x18] sm:$0x1]
        %v720 = vld [vmem:[%s717 + $0x30] sm:$0x1]
        %v724 = vrot.slane %v719, 7
        %v725 = vsel %vm296, %v724, %v718
        %v726 = vrot.slane %v720, 6
        %v727 = vsel %vm299, %v726, %v725
        %729 = vst.msk [vmem:[#allocation3 + $0x2d] sm:$0x7] %vm302, %v727
        %v730 = vld [vmem:[%s689] sm:$0x1]
        %v731 = vld [vmem:[%s689 + $0x18] sm:$0x1]
        %v732 = vld [vmem:[%s689 + $0x30] sm:$0x1]
        %v736 = vrot.slane %v731, 7
        %v737 = vsel %vm296, %v736, %v730
        %v738 = vrot.slane %v732, 6
        %v739 = vsel %vm299, %v738, %v737
        %741 = vst.msk [vmem:[#allocation2 + $0x30] sm:$0x7] %vm302, %v739
        %v742 = vld [vmem:[%s675] sm:$0x1]
        %v743 = vld [vmem:[%s675 + $0x18] sm:$0x1]
        %v744 = vld [vmem:[%s675 + $0x30] sm:$0x1]
        %v748 = vrot.slane %v743, 7
        %v749 = vsel %vm296, %v748, %v742
        %v750 = vrot.slane %v744, 6
        %v751 = vsel %vm299, %v750, %v749
        %752 = vrot.lane.b32.xlu0 %v751, 127
        %v753 = vpop.permute.xlu0 %752
        %755 = vst.msk [vmem:[#allocation3 + $0x30] sm:$0x7] %vm302, %v753
        %v756 = vld [vmem:[%s717] sm:$0x1]
        %v757 = vld [vmem:[%s717 + $0x18] sm:$0x1]
        %v758 = vld [vmem:[%s717 + $0x30] sm:$0x1]
        %v762 = vrot.slane %v757, 7
        %v763 = vsel %vm296, %v762, %v756
        %v764 = vrot.slane %v758, 6
        %v765 = vsel %vm299, %v764, %v763
        %767 = vst.msk [vmem:[#allocation2 + $0x33] sm:$0x7] %vm302, %v765
        %v768 = vld [vmem:[%s703] sm:$0x1]
        %v769 = vld [vmem:[%s703 + $0x18] sm:$0x1]
        %v770 = vld [vmem:[%s703 + $0x30] sm:$0x1]
        %v774 = vrot.slane %v769, 7
        %v775 = vsel %vm296, %v774, %v768
        %v776 = vrot.slane %v770, 6
        %v777 = vsel %vm299, %v776, %v775
        %778 = vrot.lane.b32.xlu0 %v777, 127
        %v779 = vpop.permute.xlu0 %778
        %781 = vst.msk [vmem:[#allocation3 + $0x33] sm:$0x7] %vm302, %v779
        %v782 = vld [vmem:[%s675] sm:$0x1]
        %v783 = vld [vmem:[%s675 + $0x18] sm:$0x1]
        %v784 = vld [vmem:[%s675 + $0x30] sm:$0x1]
        %v788 = vrot.slane %v783, 7
        %v789 = vsel %vm296, %v788, %v782
        %v790 = vrot.slane %v784, 6
        %v791 = vsel %vm299, %v790, %v789
        %792 = vrot.lane.b32.xlu0 %v791, 127
        %v793 = vpop.permute.xlu0 %792
        %795 = vst.msk [vmem:[#allocation2 + $0x36] sm:$0x7] %vm302, %v793
        %v796 = vld [vmem:[%s689] sm:$0x1]
        %v797 = vld [vmem:[%s689 + $0x18] sm:$0x1]
        %v798 = vld [vmem:[%s689 + $0x30] sm:$0x1]
        %v802 = vrot.slane %v797, 7
        %v803 = vsel %vm296, %v802, %v796
        %v804 = vrot.slane %v798, 6
        %v805 = vsel %vm299, %v804, %v803
        %806 = vrot.lane.b32.xlu0 %v805, 127
        %v807 = vpop.permute.xlu0 %806
        %809 = vst.msk [vmem:[#allocation3 + $0x36] sm:$0x7] %vm302, %v807
        %v810 = vld [vmem:[%s703] sm:$0x1]
        %v811 = vld [vmem:[%s703 + $0x18] sm:$0x1]
        %v812 = vld [vmem:[%s703 + $0x30] sm:$0x1]
        %v816 = vrot.slane %v811, 7
        %v817 = vsel %vm296, %v816, %v810
        %v818 = vrot.slane %v812, 6
        %v819 = vsel %vm299, %v818, %v817
        %820 = vrot.lane.b32.xlu0 %v819, 127
        %v821 = vpop.permute.xlu0 %820
        %823 = vst.msk [vmem:[#allocation2 + $0x39] sm:$0x7] %vm302, %v821
        %v824 = vld [vmem:[%s717] sm:$0x1]
        %v825 = vld [vmem:[%s717 + $0x18] sm:$0x1]
        %v826 = vld [vmem:[%s717 + $0x30] sm:$0x1]
        %v830 = vrot.slane %v825, 7
        %v831 = vsel %vm296, %v830, %v824
        %v832 = vrot.slane %v826, 6
        %v833 = vsel %vm299, %v832, %v831
        %834 = vrot.lane.b32.xlu0 %v833, 127
        %v835 = vpop.permute.xlu0 %834
        %837 = vst.msk [vmem:[#allocation3 + $0x39] sm:$0x7] %vm302, %v835
        %v838 = vld [vmem:[%s689] sm:$0x1]
        %v839 = vld [vmem:[%s689 + $0x18] sm:$0x1]
        %v840 = vld [vmem:[%s689 + $0x30] sm:$0x1]
        %v844 = vrot.slane %v839, 7
        %v845 = vsel %vm296, %v844, %v838
        %v846 = vrot.slane %v840, 6
        %v847 = vsel %vm299, %v846, %v845
        %848 = vrot.lane.b32.xlu0 %v847, 127
        %v849 = vpop.permute.xlu0 %848
        %851 = vst.msk [vmem:[#allocation2 + $0x3c] sm:$0x7] %vm302, %v849
        %v852 = vld [vmem:[%s675] sm:$0x1]
        %v853 = vld [vmem:[%s675 + $0x18] sm:$0x1]
        %v854 = vld [vmem:[%s675 + $0x30] sm:$0x1]
        %v858 = vrot.slane %v853, 7
        %v859 = vsel %vm296, %v858, %v852
        %v860 = vrot.slane %v854, 6
        %v861 = vsel %vm299, %v860, %v859
        %862 = vrot.lane.b32.xlu0 %v861, 126
        %v863 = vpop.permute.xlu0 %862
        %865 = vst.msk [vmem:[#allocation3 + $0x3c] sm:$0x7] %vm302, %v863
        %s866 = sadd.s32 %s674, 288
        %s867 = scalar_lea.vmem %s182, %s866
        %v868 = vld [vmem:[%s867] sm:$0x1]
        %v869 = vld [vmem:[%s867 + $0x18] sm:$0x1]
        %v870 = vld [vmem:[%s867 + $0x30] sm:$0x1]
        %v874 = vrot.slane %v869, 7
        %v875 = vsel %vm296, %v874, %v868
        %v876 = vrot.slane %v870, 6
        %v877 = vsel %vm299, %v876, %v875
        %879 = vst.msk [vmem:[#allocation2 + $0x3f] sm:$0x7] %vm302, %v877
        %s880 = sadd.s32 %s674, 432
        %s881 = scalar_lea.vmem %s182, %s880
        %v882 = vld [vmem:[%s881] sm:$0x1]
        %v883 = vld [vmem:[%s881 + $0x18] sm:$0x1]
        %v884 = vld [vmem:[%s881 + $0x30] sm:$0x1]
        %v888 = vrot.slane %v883, 7
        %v889 = vsel %vm296, %v888, %v882
        %v890 = vrot.slane %v884, 6
        %v891 = vsel %vm299, %v890, %v889
        %893 = vst.msk [vmem:[#allocation3 + $0x3f] sm:$0x7] %vm302, %v891
        %s894 = sadd.s32 %s674, 360
        %s895 = scalar_lea.vmem %s182, %s894
        %v896 = vld [vmem:[%s895] sm:$0x1]
        %v897 = vld [vmem:[%s895 + $0x18] sm:$0x1]
        %v898 = vld [vmem:[%s895 + $0x30] sm:$0x1]
        %v902 = vrot.slane %v897, 7
        %v903 = vsel %vm296, %v902, %v896
        %v904 = vrot.slane %v898, 6
        %v905 = vsel %vm299, %v904, %v903
        %907 = vst.msk [vmem:[#allocation2 + $0x42] sm:$0x7] %vm302, %v905
        %s908 = sadd.s32 %s674, 504
        %s909 = scalar_lea.vmem %s182, %s908
        %v910 = vld [vmem:[%s909] sm:$0x1]
        %v911 = vld [vmem:[%s909 + $0x18] sm:$0x1]
        %v912 = vld [vmem:[%s909 + $0x30] sm:$0x1]
        %v916 = vrot.slane %v911, 7
        %v917 = vsel %vm296, %v916, %v910
        %v918 = vrot.slane %v912, 6
        %v919 = vsel %vm299, %v918, %v917
        %921 = vst.msk [vmem:[#allocation3 + $0x42] sm:$0x7] %vm302, %v919
        %v922 = vld [vmem:[%s881] sm:$0x1]
        %v923 = vld [vmem:[%s881 + $0x18] sm:$0x1]
        %v924 = vld [vmem:[%s881 + $0x30] sm:$0x1]
        %v928 = vrot.slane %v923, 7
        %v929 = vsel %vm296, %v928, %v922
        %v930 = vrot.slane %v924, 6
        %v931 = vsel %vm299, %v930, %v929
        %933 = vst.msk [vmem:[#allocation2 + $0x45] sm:$0x7] %vm302, %v931
        %v934 = vld [vmem:[%s867] sm:$0x1]
        %v935 = vld [vmem:[%s867 + $0x18] sm:$0x1]
        %v936 = vld [vmem:[%s867 + $0x30] sm:$0x1]
        %v940 = vrot.slane %v935, 7
        %v941 = vsel %vm296, %v940, %v934
        %v942 = vrot.slane %v936, 6
        %v943 = vsel %vm299, %v942, %v941
        %944 = vrot.lane.b32.xlu0 %v943, 127
        %v945 = vpop.permute.xlu0 %944
        %947 = vst.msk [vmem:[#allocation3 + $0x45] sm:$0x7] %vm302, %v945
        %v948 = vld [vmem:[%s909] sm:$0x1]
        %v949 = vld [vmem:[%s909 + $0x18] sm:$0x1]
        %v950 = vld [vmem:[%s909 + $0x30] sm:$0x1]
        %v954 = vrot.slane %v949, 7
        %v955 = vsel %vm296, %v954, %v948
        %v956 = vrot.slane %v950, 6
        %v957 = vsel %vm299, %v956, %v955
        %959 = vst.msk [vmem:[#allocation2 + $0x48] sm:$0x7] %vm302, %v957
        %v960 = vld [vmem:[%s895] sm:$0x1]
        %v961 = vld [vmem:[%s895 + $0x18] sm:$0x1]
        %v962 = vld [vmem:[%s895 + $0x30] sm:$0x1]
        %v966 = vrot.slane %v961, 7
        %v967 = vsel %vm296, %v966, %v960
        %v968 = vrot.slane %v962, 6
        %v969 = vsel %vm299, %v968, %v967
        %970 = vrot.lane.b32.xlu0 %v969, 127
        %v971 = vpop.permute.xlu0 %970
        %973 = vst.msk [vmem:[#allocation3 + $0x48] sm:$0x7] %vm302, %v971
        %v974 = vld [vmem:[%s867] sm:$0x1]
        %v975 = vld [vmem:[%s867 + $0x18] sm:$0x1]
        %v976 = vld [vmem:[%s867 + $0x30] sm:$0x1]
        %v980 = vrot.slane %v975, 7
        %v981 = vsel %vm296, %v980, %v974
        %v982 = vrot.slane %v976, 6
        %v983 = vsel %vm299, %v982, %v981
        %984 = vrot.lane.b32.xlu0 %v983, 127
        %v985 = vpop.permute.xlu0 %984
        %987 = vst.msk [vmem:[#allocation2 + $0x4b] sm:$0x7] %vm302, %v985
        %v988 = vld [vmem:[%s881] sm:$0x1]
        %v989 = vld [vmem:[%s881 + $0x18] sm:$0x1]
        %v990 = vld [vmem:[%s881 + $0x30] sm:$0x1]
        %v994 = vrot.slane %v989, 7
        %v995 = vsel %vm296, %v994, %v988
        %v996 = vrot.slane %v990, 6
        %v997 = vsel %vm299, %v996, %v995
        %998 = vrot.lane.b32.xlu0 %v997, 127
        %v999 = vpop.permute.xlu0 %998
        %1001 = vst.msk [vmem:[#allocation3 + $0x4b] sm:$0x7] %vm302, %v999
        %v1002 = vld [vmem:[%s895] sm:$0x1]
        %v1003 = vld [vmem:[%s895 + $0x18] sm:$0x1]
        %v1004 = vld [vmem:[%s895 + $0x30] sm:$0x1]
        %v1008 = vrot.slane %v1003, 7
        %v1009 = vsel %vm296, %v1008, %v1002
        %v1010 = vrot.slane %v1004, 6
        %v1011 = vsel %vm299, %v1010, %v1009
        %1012 = vrot.lane.b32.xlu0 %v1011, 127
        %v1013 = vpop.permute.xlu0 %1012
        %1015 = vst.msk [vmem:[#allocation2 + $0x4e] sm:$0x7] %vm302, %v1013
        %v1016 = vld [vmem:[%s909] sm:$0x1]
        %v1017 = vld [vmem:[%s909 + $0x18] sm:$0x1]
        %v1018 = vld [vmem:[%s909 + $0x30] sm:$0x1]
        %v1022 = vrot.slane %v1017, 7
        %v1023 = vsel %vm296, %v1022, %v1016
        %v1024 = vrot.slane %v1018, 6
        %v1025 = vsel %vm299, %v1024, %v1023
        %1026 = vrot.lane.b32.xlu0 %v1025, 127
        %v1027 = vpop.permute.xlu0 %1026
        %1029 = vst.msk [vmem:[#allocation3 + $0x4e] sm:$0x7] %vm302, %v1027
        %v1030 = vld [vmem:[%s881] sm:$0x1]
        %v1031 = vld [vmem:[%s881 + $0x18] sm:$0x1]
        %v1032 = vld [vmem:[%s881 + $0x30] sm:$0x1]
        %v1036 = vrot.slane %v1031, 7
        %v1037 = vsel %vm296, %v1036, %v1030
        %v1038 = vrot.slane %v1032, 6
        %v1039 = vsel %vm299, %v1038, %v1037
        %1040 = vrot.lane.b32.xlu0 %v1039, 127
        %v1041 = vpop.permute.xlu0 %1040
        %1043 = vst.msk [vmem:[#allocation2 + $0x51] sm:$0x7] %vm302, %v1041
        %v1044 = vld [vmem:[%s867] sm:$0x1]
        %v1045 = vld [vmem:[%s867 + $0x18] sm:$0x1]
        %v1046 = vld [vmem:[%s867 + $0x30] sm:$0x1]
        %v1050 = vrot.slane %v1045, 7
        %v1051 = vsel %vm296, %v1050, %v1044
        %v1052 = vrot.slane %v1046, 6
        %v1053 = vsel %vm299, %v1052, %v1051
        %1054 = vrot.lane.b32.xlu0 %v1053, 126
        %v1055 = vpop.permute.xlu0 %1054
        %1057 = vst.msk [vmem:[#allocation3 + $0x51] sm:$0x7] %vm302, %v1055
        %s1058 = sadd.s32 %s287, 2
        %s1059 = scalar_lea.vmem %s182, %s1058
        %v1060 = vld [vmem:[%s1059] sm:$0x1]
        %v1061 = vld [vmem:[%s1059 + $0x18] sm:$0x1]
        %v1062 = vld [vmem:[%s1059 + $0x30] sm:$0x1]
        %v1066 = vrot.slane %v1061, 7
        %v1067 = vsel %vm296, %v1066, %v1060
        %v1068 = vrot.slane %v1062, 6
        %v1069 = vsel %vm299, %v1068, %v1067
        %1071 = vst.msk [vmem:[#allocation2 + $0x54] sm:$0x7] %vm302, %v1069
        %s1072 = sadd.s32 %s1058, 144
        %s1073 = scalar_lea.vmem %s182, %s1072
        %v1074 = vld [vmem:[%s1073] sm:$0x1]
        %v1075 = vld [vmem:[%s1073 + $0x18] sm:$0x1]
        %v1076 = vld [vmem:[%s1073 + $0x30] sm:$0x1]
        %v1080 = vrot.slane %v1075, 7
        %v1081 = vsel %vm296, %v1080, %v1074
        %v1082 = vrot.slane %v1076, 6
        %v1083 = vsel %vm299, %v1082, %v1081
        %1085 = vst.msk [vmem:[#allocation3 + $0x54] sm:$0x7] %vm302, %v1083
        %s1086 = sadd.s32 %s1058, 72
        %s1087 = scalar_lea.vmem %s182, %s1086
        %v1088 = vld [vmem:[%s1087] sm:$0x1]
        %v1089 = vld [vmem:[%s1087 + $0x18] sm:$0x1]
        %v1090 = vld [vmem:[%s1087 + $0x30] sm:$0x1]
        %v1094 = vrot.slane %v1089, 7
        %v1095 = vsel %vm296, %v1094, %v1088
        %v1096 = vrot.slane %v1090, 6
        %v1097 = vsel %vm299, %v1096, %v1095
        %1099 = vst.msk [vmem:[#allocation2 + $0x57] sm:$0x7] %vm302, %v1097
        %s1100 = sadd.s32 %s1058, 216
        %s1101 = scalar_lea.vmem %s182, %s1100
        %v1102 = vld [vmem:[%s1101] sm:$0x1]
        %v1103 = vld [vmem:[%s1101 + $0x18] sm:$0x1]
        %v1104 = vld [vmem:[%s1101 + $0x30] sm:$0x1]
        %v1108 = vrot.slane %v1103, 7
        %v1109 = vsel %vm296, %v1108, %v1102
        %v1110 = vrot.slane %v1104, 6
        %v1111 = vsel %vm299, %v1110, %v1109
        %1113 = vst.msk [vmem:[#allocation3 + $0x57] sm:$0x7] %vm302, %v1111
        %v1114 = vld [vmem:[%s1073] sm:$0x1]
        %v1115 = vld [vmem:[%s1073 + $0x18] sm:$0x1]
        %v1116 = vld [vmem:[%s1073 + $0x30] sm:$0x1]
        %v1120 = vrot.slane %v1115, 7
        %v1121 = vsel %vm296, %v1120, %v1114
        %v1122 = vrot.slane %v1116, 6
        %v1123 = vsel %vm299, %v1122, %v1121
        %1125 = vst.msk [vmem:[#allocation2 + $0x5a] sm:$0x7] %vm302, %v1123
        %v1126 = vld [vmem:[%s1059] sm:$0x1]
        %v1127 = vld [vmem:[%s1059 + $0x18] sm:$0x1]
        %v1128 = vld [vmem:[%s1059 + $0x30] sm:$0x1]
        %v1132 = vrot.slane %v1127, 7
        %v1133 = vsel %vm296, %v1132, %v1126
        %v1134 = vrot.slane %v1128, 6
        %v1135 = vsel %vm299, %v1134, %v1133
        %1136 = vrot.lane.b32.xlu0 %v1135, 127
        %v1137 = vpop.permute.xlu0 %1136
        %1139 = vst.msk [vmem:[#allocation3 + $0x5a] sm:$0x7] %vm302, %v1137
        %v1140 = vld [vmem:[%s1101] sm:$0x1]
        %v1141 = vld [vmem:[%s1101 + $0x18] sm:$0x1]
        %v1142 = vld [vmem:[%s1101 + $0x30] sm:$0x1]
        %v1146 = vrot.slane %v1141, 7
        %v1147 = vsel %vm296, %v1146, %v1140
        %v1148 = vrot.slane %v1142, 6
        %v1149 = vsel %vm299, %v1148, %v1147
        %1151 = vst.msk [vmem:[#allocation2 + $0x5d] sm:$0x7] %vm302, %v1149
        %v1152 = vld [vmem:[%s1087] sm:$0x1]
        %v1153 = vld [vmem:[%s1087 + $0x18] sm:$0x1]
        %v1154 = vld [vmem:[%s1087 + $0x30] sm:$0x1]
        %v1158 = vrot.slane %v1153, 7
        %v1159 = vsel %vm296, %v1158, %v1152
        %v1160 = vrot.slane %v1154, 6
        %v1161 = vsel %vm299, %v1160, %v1159
        %1162 = vrot.lane.b32.xlu0 %v1161, 127
        %v1163 = vpop.permute.xlu0 %1162
        %1165 = vst.msk [vmem:[#allocation3 + $0x5d] sm:$0x7] %vm302, %v1163
        %v1166 = vld [vmem:[%s1059] sm:$0x1]
        %v1167 = vld [vmem:[%s1059 + $0x18] sm:$0x1]
        %v1168 = vld [vmem:[%s1059 + $0x30] sm:$0x1]
        %v1172 = vrot.slane %v1167, 7
        %v1173 = vsel %vm296, %v1172, %v1166
        %v1174 = vrot.slane %v1168, 6
        %v1175 = vsel %vm299, %v1174, %v1173
        %1176 = vrot.lane.b32.xlu0 %v1175, 127
        %v1177 = vpop.permute.xlu0 %1176
        %1179 = vst.msk [vmem:[#allocation2 + $0x60] sm:$0x7] %vm302, %v1177
        %v1180 = vld [vmem:[%s1073] sm:$0x1]
        %v1181 = vld [vmem:[%s1073 + $0x18] sm:$0x1]
        %v1182 = vld [vmem:[%s1073 + $0x30] sm:$0x1]
        %v1186 = vrot.slane %v1181, 7
        %v1187 = vsel %vm296, %v1186, %v1180
        %v1188 = vrot.slane %v1182, 6
        %v1189 = vsel %vm299, %v1188, %v1187
        %1190 = vrot.lane.b32.xlu0 %v1189, 127
        %v1191 = vpop.permute.xlu0 %1190
        %1193 = vst.msk [vmem:[#allocation3 + $0x60] sm:$0x7] %vm302, %v1191
        %v1194 = vld [vmem:[%s1087] sm:$0x1]
        %v1195 = vld [vmem:[%s1087 + $0x18] sm:$0x1]
        %v1196 = vld [vmem:[%s1087 + $0x30] sm:$0x1]
        %v1200 = vrot.slane %v1195, 7
        %v1201 = vsel %vm296, %v1200, %v1194
        %v1202 = vrot.slane %v1196, 6
        %v1203 = vsel %vm299, %v1202, %v1201
        %1204 = vrot.lane.b32.xlu0 %v1203, 127
        %v1205 = vpop.permute.xlu0 %1204
        %1207 = vst.msk [vmem:[#allocation2 + $0x63] sm:$0x7] %vm302, %v1205
        %v1208 = vld [vmem:[%s1101] sm:$0x1]
        %v1209 = vld [vmem:[%s1101 + $0x18] sm:$0x1]
        %v1210 = vld [vmem:[%s1101 + $0x30] sm:$0x1]
        %v1214 = vrot.slane %v1209, 7
        %v1215 = vsel %vm296, %v1214, %v1208
        %v1216 = vrot.slane %v1210, 6
        %v1217 = vsel %vm299, %v1216, %v1215
        %1218 = vrot.lane.b32.xlu0 %v1217, 127
        %v1219 = vpop.permute.xlu0 %1218
        %1221 = vst.msk [vmem:[#allocation3 + $0x63] sm:$0x7] %vm302, %v1219
        %v1222 = vld [vmem:[%s1073] sm:$0x1]
        %v1223 = vld [vmem:[%s1073 + $0x18] sm:$0x1]
        %v1224 = vld [vmem:[%s1073 + $0x30] sm:$0x1]
        %v1228 = vrot.slane %v1223, 7
        %v1229 = vsel %vm296, %v1228, %v1222
        %v1230 = vrot.slane %v1224, 6
        %v1231 = vsel %vm299, %v1230, %v1229
        %1232 = vrot.lane.b32.xlu0 %v1231, 127
        %v1233 = vpop.permute.xlu0 %1232
        %1235 = vst.msk [vmem:[#allocation2 + $0x66] sm:$0x7] %vm302, %v1233
        %v1236 = vld [vmem:[%s1059] sm:$0x1]
        %v1237 = vld [vmem:[%s1059 + $0x18] sm:$0x1]
        %v1238 = vld [vmem:[%s1059 + $0x30] sm:$0x1]
        %v1242 = vrot.slane %v1237, 7
        %v1243 = vsel %vm296, %v1242, %v1236
        %v1244 = vrot.slane %v1238, 6
        %v1245 = vsel %vm299, %v1244, %v1243
        %1246 = vrot.lane.b32.xlu0 %v1245, 126
        %v1247 = vpop.permute.xlu0 %1246
        %1249 = vst.msk [vmem:[#allocation3 + $0x66] sm:$0x7] %vm302, %v1247
        %s1250 = sadd.s32 %s1058, 288
        %s1251 = scalar_lea.vmem %s182, %s1250
        %v1252 = vld [vmem:[%s1251] sm:$0x1]
        %v1253 = vld [vmem:[%s1251 + $0x18] sm:$0x1]
        %v1254 = vld [vmem:[%s1251 + $0x30] sm:$0x1]
        %v1258 = vrot.slane %v1253, 7
        %v1259 = vsel %vm296, %v1258, %v1252
        %v1260 = vrot.slane %v1254, 6
        %v1261 = vsel %vm299, %v1260, %v1259
        %1263 = vst.msk [vmem:[#allocation2 + $0x69] sm:$0x7] %vm302, %v1261
        %s1264 = sadd.s32 %s1058, 432
        %s1265 = scalar_lea.vmem %s182, %s1264
        %v1266 = vld [vmem:[%s1265] sm:$0x1]
        %v1267 = vld [vmem:[%s1265 + $0x18] sm:$0x1]
        %v1268 = vld [vmem:[%s1265 + $0x30] sm:$0x1]
        %v1272 = vrot.slane %v1267, 7
        %v1273 = vsel %vm296, %v1272, %v1266
        %v1274 = vrot.slane %v1268, 6
        %v1275 = vsel %vm299, %v1274, %v1273
        %1277 = vst.msk [vmem:[#allocation3 + $0x69] sm:$0x7] %vm302, %v1275
        %s1278 = sadd.s32 %s1058, 360
        %s1279 = scalar_lea.vmem %s182, %s1278
        %v1280 = vld [vmem:[%s1279] sm:$0x1]
        %v1281 = vld [vmem:[%s1279 + $0x18] sm:$0x1]
        %v1282 = vld [vmem:[%s1279 + $0x30] sm:$0x1]
        %v1286 = vrot.slane %v1281, 7
        %v1287 = vsel %vm296, %v1286, %v1280
        %v1288 = vrot.slane %v1282, 6
        %v1289 = vsel %vm299, %v1288, %v1287
        %1291 = vst.msk [vmem:[#allocation2 + $0x6c] sm:$0x7] %vm302, %v1289
        %s1292 = sadd.s32 %s1058, 504
        %s1293 = scalar_lea.vmem %s182, %s1292
        %v1294 = vld [vmem:[%s1293] sm:$0x1]
        %v1295 = vld [vmem:[%s1293 + $0x18] sm:$0x1]
        %v1296 = vld [vmem:[%s1293 + $0x30] sm:$0x1]
        %v1300 = vrot.slane %v1295, 7
        %v1301 = vsel %vm296, %v1300, %v1294
        %v1302 = vrot.slane %v1296, 6
        %v1303 = vsel %vm299, %v1302, %v1301
        %1305 = vst.msk [vmem:[#allocation3 + $0x6c] sm:$0x7] %vm302, %v1303
        %v1306 = vld [vmem:[%s1265] sm:$0x1]
        %v1307 = vld [vmem:[%s1265 + $0x18] sm:$0x1]
        %v1308 = vld [vmem:[%s1265 + $0x30] sm:$0x1]
        %v1312 = vrot.slane %v1307, 7
        %v1313 = vsel %vm296, %v1312, %v1306
        %v1314 = vrot.slane %v1308, 6
        %v1315 = vsel %vm299, %v1314, %v1313
        %1317 = vst.msk [vmem:[#allocation2 + $0x6f] sm:$0x7] %vm302, %v1315
        %v1318 = vld [vmem:[%s1251] sm:$0x1]
        %v1319 = vld [vmem:[%s1251 + $0x18] sm:$0x1]
        %v1320 = vld [vmem:[%s1251 + $0x30] sm:$0x1]
        %v1324 = vrot.slane %v1319, 7
        %v1325 = vsel %vm296, %v1324, %v1318
        %v1326 = vrot.slane %v1320, 6
        %v1327 = vsel %vm299, %v1326, %v1325
        %1328 = vrot.lane.b32.xlu0 %v1327, 127
        %v1329 = vpop.permute.xlu0 %1328
        %1331 = vst.msk [vmem:[#allocation3 + $0x6f] sm:$0x7] %vm302, %v1329
        %v1332 = vld [vmem:[%s1293] sm:$0x1]
        %v1333 = vld [vmem:[%s1293 + $0x18] sm:$0x1]
        %v1334 = vld [vmem:[%s1293 + $0x30] sm:$0x1]
        %v1338 = vrot.slane %v1333, 7
        %v1339 = vsel %vm296, %v1338, %v1332
        %v1340 = vrot.slane %v1334, 6
        %v1341 = vsel %vm299, %v1340, %v1339
        %1343 = vst.msk [vmem:[#allocation2 + $0x72] sm:$0x7] %vm302, %v1341
        %v1344 = vld [vmem:[%s1279] sm:$0x1]
        %v1345 = vld [vmem:[%s1279 + $0x18] sm:$0x1]
        %v1346 = vld [vmem:[%s1279 + $0x30] sm:$0x1]
        %v1350 = vrot.slane %v1345, 7
        %v1351 = vsel %vm296, %v1350, %v1344
        %v1352 = vrot.slane %v1346, 6
        %v1353 = vsel %vm299, %v1352, %v1351
        %1354 = vrot.lane.b32.xlu0 %v1353, 127
        %v1355 = vpop.permute.xlu0 %1354
        %1357 = vst.msk [vmem:[#allocation3 + $0x72] sm:$0x7] %vm302, %v1355
        %v1358 = vld [vmem:[%s1251] sm:$0x1]
        %v1359 = vld [vmem:[%s1251 + $0x18] sm:$0x1]
        %v1360 = vld [vmem:[%s1251 + $0x30] sm:$0x1]
        %v1364 = vrot.slane %v1359, 7
        %v1365 = vsel %vm296, %v1364, %v1358
        %v1366 = vrot.slane %v1360, 6
        %v1367 = vsel %vm299, %v1366, %v1365
        %1368 = vrot.lane.b32.xlu0 %v1367, 127
        %v1369 = vpop.permute.xlu0 %1368
        %1371 = vst.msk [vmem:[#allocation2 + $0x75] sm:$0x7] %vm302, %v1369
        %v1372 = vld [vmem:[%s1265] sm:$0x1]
        %v1373 = vld [vmem:[%s1265 + $0x18] sm:$0x1]
        %v1374 = vld [vmem:[%s1265 + $0x30] sm:$0x1]
        %v1378 = vrot.slane %v1373, 7
        %v1379 = vsel %vm296, %v1378, %v1372
        %v1380 = vrot.slane %v1374, 6
        %v1381 = vsel %vm299, %v1380, %v1379
        %1382 = vrot.lane.b32.xlu0 %v1381, 127
        %v1383 = vpop.permute.xlu0 %1382
        %1385 = vst.msk [vmem:[#allocation3 + $0x75] sm:$0x7] %vm302, %v1383
        %v1386 = vld [vmem:[%s1279] sm:$0x1]
        %v1387 = vld [vmem:[%s1279 + $0x18] sm:$0x1]
        %v1388 = vld [vmem:[%s1279 + $0x30] sm:$0x1]
        %v1392 = vrot.slane %v1387, 7
        %v1393 = vsel %vm296, %v1392, %v1386
        %v1394 = vrot.slane %v1388, 6
        %v1395 = vsel %vm299, %v1394, %v1393
        %1396 = vrot.lane.b32.xlu0 %v1395, 127
        %v1397 = vpop.permute.xlu0 %1396
        %1399 = vst.msk [vmem:[#allocation2 + $0x78] sm:$0x7] %vm302, %v1397
        %v1400 = vld [vmem:[%s1293] sm:$0x1]
        %v1401 = vld [vmem:[%s1293 + $0x18] sm:$0x1]
        %v1402 = vld [vmem:[%s1293 + $0x30] sm:$0x1]
        %v1406 = vrot.slane %v1401, 7
        %v1407 = vsel %vm296, %v1406, %v1400
        %v1408 = vrot.slane %v1402, 6
        %v1409 = vsel %vm299, %v1408, %v1407
        %1410 = vrot.lane.b32.xlu0 %v1409, 127
        %v1411 = vpop.permute.xlu0 %1410
        %1413 = vst.msk [vmem:[#allocation3 + $0x78] sm:$0x7] %vm302, %v1411
        %v1414 = vld [vmem:[%s1265] sm:$0x1]
        %v1415 = vld [vmem:[%s1265 + $0x18] sm:$0x1]
        %v1416 = vld [vmem:[%s1265 + $0x30] sm:$0x1]
        %v1420 = vrot.slane %v1415, 7
        %v1421 = vsel %vm296, %v1420, %v1414
        %v1422 = vrot.slane %v1416, 6
        %v1423 = vsel %vm299, %v1422, %v1421
        %1424 = vrot.lane.b32.xlu0 %v1423, 127
        %v1425 = vpop.permute.xlu0 %1424
        %1427 = vst.msk [vmem:[#allocation2 + $0x7b] sm:$0x7] %vm302, %v1425
        %v1428 = vld [vmem:[%s1251] sm:$0x1]
        %v1429 = vld [vmem:[%s1251 + $0x18] sm:$0x1]
        %v1430 = vld [vmem:[%s1251 + $0x30] sm:$0x1]
        %v1434 = vrot.slane %v1429, 7
        %v1435 = vsel %vm296, %v1434, %v1428
        %v1436 = vrot.slane %v1430, 6
        %v1437 = vsel %vm299, %v1436, %v1435
        %1438 = vrot.lane.b32.xlu0 %v1437, 126
        %v1439 = vpop.permute.xlu0 %1438
        %1441 = vst.msk [vmem:[#allocation3 + $0x7b] sm:$0x7] %vm302, %v1439
        %s1442 = sadd.s32 %s287, 3
        %s1443 = scalar_lea.vmem %s182, %s1442
        %v1444 = vld [vmem:[%s1443] sm:$0x1]
        %v1445 = vld [vmem:[%s1443 + $0x18] sm:$0x1]
        %v1446 = vld [vmem:[%s1443 + $0x30] sm:$0x1]
        %v1450 = vrot.slane %v1445, 7
        %v1451 = vsel %vm296, %v1450, %v1444
        %v1452 = vrot.slane %v1446, 6
        %v1453 = vsel %vm299, %v1452, %v1451
        %1455 = vst.msk [vmem:[#allocation2 + $0x7e] sm:$0x7] %vm302, %v1453
        %s1456 = sadd.s32 %s1442, 144
        %s1457 = scalar_lea.vmem %s182, %s1456
        %v1458 = vld [vmem:[%s1457] sm:$0x1]
        %v1459 = vld [vmem:[%s1457 + $0x18] sm:$0x1]
        %v1460 = vld [vmem:[%s1457 + $0x30] sm:$0x1]
        %v1464 = vrot.slane %v1459, 7
        %v1465 = vsel %vm296, %v1464, %v1458
        %v1466 = vrot.slane %v1460, 6
        %v1467 = vsel %vm299, %v1466, %v1465
        %1469 = vst.msk [vmem:[#allocation3 + $0x7e] sm:$0x7] %vm302, %v1467
        %s1470 = sadd.s32 %s1442, 72
        %s1471 = scalar_lea.vmem %s182, %s1470
        %v1472 = vld [vmem:[%s1471] sm:$0x1]
        %v1473 = vld [vmem:[%s1471 + $0x18] sm:$0x1]
        %v1474 = vld [vmem:[%s1471 + $0x30] sm:$0x1]
        %v1478 = vrot.slane %v1473, 7
        %v1479 = vsel %vm296, %v1478, %v1472
        %v1480 = vrot.slane %v1474, 6
        %v1481 = vsel %vm299, %v1480, %v1479
        %1483 = vst.msk [vmem:[#allocation2 + $0x81] sm:$0x7] %vm302, %v1481
        %s1484 = sadd.s32 %s1442, 216
        %s1485 = scalar_lea.vmem %s182, %s1484
        %v1486 = vld [vmem:[%s1485] sm:$0x1]
        %v1487 = vld [vmem:[%s1485 + $0x18] sm:$0x1]
        %v1488 = vld [vmem:[%s1485 + $0x30] sm:$0x1]
        %v1492 = vrot.slane %v1487, 7
        %v1493 = vsel %vm296, %v1492, %v1486
        %v1494 = vrot.slane %v1488, 6
        %v1495 = vsel %vm299, %v1494, %v1493
        %1497 = vst.msk [vmem:[#allocation3 + $0x81] sm:$0x7] %vm302, %v1495
        %v1498 = vld [vmem:[%s1457] sm:$0x1]
        %v1499 = vld [vmem:[%s1457 + $0x18] sm:$0x1]
        %v1500 = vld [vmem:[%s1457 + $0x30] sm:$0x1]
        %v1504 = vrot.slane %v1499, 7
        %v1505 = vsel %vm296, %v1504, %v1498
        %v1506 = vrot.slane %v1500, 6
        %v1507 = vsel %vm299, %v1506, %v1505
        %1509 = vst.msk [vmem:[#allocation2 + $0x84] sm:$0x7] %vm302, %v1507
        %v1510 = vld [vmem:[%s1443] sm:$0x1]
        %v1511 = vld [vmem:[%s1443 + $0x18] sm:$0x1]
        %v1512 = vld [vmem:[%s1443 + $0x30] sm:$0x1]
        %v1516 = vrot.slane %v1511, 7
        %v1517 = vsel %vm296, %v1516, %v1510
        %v1518 = vrot.slane %v1512, 6
        %v1519 = vsel %vm299, %v1518, %v1517
        %1520 = vrot.lane.b32.xlu0 %v1519, 127
        %v1521 = vpop.permute.xlu0 %1520
        %1523 = vst.msk [vmem:[#allocation3 + $0x84] sm:$0x7] %vm302, %v1521
        %v1524 = vld [vmem:[%s1485] sm:$0x1]
        %v1525 = vld [vmem:[%s1485 + $0x18] sm:$0x1]
        %v1526 = vld [vmem:[%s1485 + $0x30] sm:$0x1]
        %v1530 = vrot.slane %v1525, 7
        %v1531 = vsel %vm296, %v1530, %v1524
        %v1532 = vrot.slane %v1526, 6
        %v1533 = vsel %vm299, %v1532, %v1531
        %1535 = vst.msk [vmem:[#allocation2 + $0x87] sm:$0x7] %vm302, %v1533
        %v1536 = vld [vmem:[%s1471] sm:$0x1]
        %v1537 = vld [vmem:[%s1471 + $0x18] sm:$0x1]
        %v1538 = vld [vmem:[%s1471 + $0x30] sm:$0x1]
        %v1542 = vrot.slane %v1537, 7
        %v1543 = vsel %vm296, %v1542, %v1536
        %v1544 = vrot.slane %v1538, 6
        %v1545 = vsel %vm299, %v1544, %v1543
        %1546 = vrot.lane.b32.xlu0 %v1545, 127
        %v1547 = vpop.permute.xlu0 %1546
        %1549 = vst.msk [vmem:[#allocation3 + $0x87] sm:$0x7] %vm302, %v1547
        %v1550 = vld [vmem:[%s1443] sm:$0x1]
        %v1551 = vld [vmem:[%s1443 + $0x18] sm:$0x1]
        %v1552 = vld [vmem:[%s1443 + $0x30] sm:$0x1]
        %v1556 = vrot.slane %v1551, 7
        %v1557 = vsel %vm296, %v1556, %v1550
        %v1558 = vrot.slane %v1552, 6
        %v1559 = vsel %vm299, %v1558, %v1557
        %1560 = vrot.lane.b32.xlu0 %v1559, 127
        %v1561 = vpop.permute.xlu0 %1560
        %1563 = vst.msk [vmem:[#allocation2 + $0x8a] sm:$0x7] %vm302, %v1561
        %v1564 = vld [vmem:[%s1457] sm:$0x1]
        %v1565 = vld [vmem:[%s1457 + $0x18] sm:$0x1]
        %v1566 = vld [vmem:[%s1457 + $0x30] sm:$0x1]
        %v1570 = vrot.slane %v1565, 7
        %v1571 = vsel %vm296, %v1570, %v1564
        %v1572 = vrot.slane %v1566, 6
        %v1573 = vsel %vm299, %v1572, %v1571
        %1574 = vrot.lane.b32.xlu0 %v1573, 127
        %v1575 = vpop.permute.xlu0 %1574
        %1577 = vst.msk [vmem:[#allocation3 + $0x8a] sm:$0x7] %vm302, %v1575
        %v1578 = vld [vmem:[%s1471] sm:$0x1]
        %v1579 = vld [vmem:[%s1471 + $0x18] sm:$0x1]
        %v1580 = vld [vmem:[%s1471 + $0x30] sm:$0x1]
        %v1584 = vrot.slane %v1579, 7
        %v1585 = vsel %vm296, %v1584, %v1578
        %v1586 = vrot.slane %v1580, 6
        %v1587 = vsel %vm299, %v1586, %v1585
        %1588 = vrot.lane.b32.xlu0 %v1587, 127
        %v1589 = vpop.permute.xlu0 %1588
        %1591 = vst.msk [vmem:[#allocation2 + $0x8d] sm:$0x7] %vm302, %v1589
        %v1592 = vld [vmem:[%s1485] sm:$0x1]
        %v1593 = vld [vmem:[%s1485 + $0x18] sm:$0x1]
        %v1594 = vld [vmem:[%s1485 + $0x30] sm:$0x1]
        %v1598 = vrot.slane %v1593, 7
        %v1599 = vsel %vm296, %v1598, %v1592
        %v1600 = vrot.slane %v1594, 6
        %v1601 = vsel %vm299, %v1600, %v1599
        %1602 = vrot.lane.b32.xlu0 %v1601, 127
        %v1603 = vpop.permute.xlu0 %1602
        %1605 = vst.msk [vmem:[#allocation3 + $0x8d] sm:$0x7] %vm302, %v1603
        %v1606 = vld [vmem:[%s1457] sm:$0x1]
        %v1607 = vld [vmem:[%s1457 + $0x18] sm:$0x1]
        %v1608 = vld [vmem:[%s1457 + $0x30] sm:$0x1]
        %v1612 = vrot.slane %v1607, 7
        %v1613 = vsel %vm296, %v1612, %v1606
        %v1614 = vrot.slane %v1608, 6
        %v1615 = vsel %vm299, %v1614, %v1613
        %1616 = vrot.lane.b32.xlu0 %v1615, 127
        %v1617 = vpop.permute.xlu0 %1616
        %1619 = vst.msk [vmem:[#allocation2 + $0x90] sm:$0x7] %vm302, %v1617
        %v1620 = vld [vmem:[%s1443] sm:$0x1]
        %v1621 = vld [vmem:[%s1443 + $0x18] sm:$0x1]
        %v1622 = vld [vmem:[%s1443 + $0x30] sm:$0x1]
        %v1626 = vrot.slane %v1621, 7
        %v1627 = vsel %vm296, %v1626, %v1620
        %v1628 = vrot.slane %v1622, 6
        %v1629 = vsel %vm299, %v1628, %v1627
        %1630 = vrot.lane.b32.xlu0 %v1629, 126
        %v1631 = vpop.permute.xlu0 %1630
        %1633 = vst.msk [vmem:[#allocation3 + $0x90] sm:$0x7] %vm302, %v1631
        %v1634 = vld [vmem:[#allocation2] sm:$0xff]
        %v1635 = vld [vmem:[#allocation2 + $0x8] sm:$0xff]
        %v1636 = vld [vmem:[#allocation2 + $0x10] sm:$0xff]
        %v1637 = vld [vmem:[#allocation2 + $0x18] sm:$0xff]
        %v1638 = vld [vmem:[#allocation2 + $0x20] sm:$0xff]
        %v1639 = vld [vmem:[#allocation2 + $0x28] sm:$0xff]
        %v1640 = vld [vmem:[#allocation2 + $0x30] sm:$0xff]
        %v1641 = vld [vmem:[#allocation2 + $0x38] sm:$0xff]
        %v1642 = vld [vmem:[#allocation2 + $0x40] sm:$0xff]
        %v1643 = vld [vmem:[#allocation2 + $0x48] sm:$0xff]
        %v1644 = vld [vmem:[#allocation2 + $0x50] sm:$0xff]
        %v1645 = vld [vmem:[#allocation2 + $0x58] sm:$0xff]
        %v1646 = vld [vmem:[#allocation2 + $0x60] sm:$0xff]
        %v1647 = vld [vmem:[#allocation2 + $0x68] sm:$0xff]
        %v1648 = vld [vmem:[#allocation2 + $0x70] sm:$0xff]
        %v1649 = vld [vmem:[#allocation2 + $0x78] sm:$0xff]
        %v1650 = vld [vmem:[#allocation2 + $0x80] sm:$0xff]
        %v1651 = vld [vmem:[#allocation2 + $0x88] sm:$0xff]
        %v1652 = vld [vmem:[#allocation2 + $0x90] sm:$0xff]
        %v1653 = vld [vmem:[#allocation2 + $0x98] sm:$0xff]
        %v1654 = vld [vmem:[#allocation2 + $0xa0] sm:$0xff]
        %v1655 = vld [vmem:[#allocation2 + $0xa8] sm:$0xff]
        %v1656 = vld [vmem:[#allocation2 + $0xb0] sm:$0xff]
        %v1657 = vld [vmem:[#allocation2 + $0xb8] sm:$0xff]
        %v1658 = vld [vmem:[#allocation2 + $0xc0] sm:$0xff]
        %v1659 = vld [vmem:[#allocation2 + $0xc8] sm:$0xff]
        %v1660 = vld [vmem:[#allocation2 + $0xd0] sm:$0xff]
        %v1661 = vld [vmem:[#allocation2 + $0xd8] sm:$0xff]
        %v1662 = vld [vmem:[#allocation2 + $0xe0] sm:$0xff]
        %v1663 = vld [vmem:[#allocation2 + $0xe8] sm:$0xff]
        %v1664 = vld [vmem:[#allocation2 + $0xf0] sm:$0xff]
        %v1665 = vld [vmem:[#allocation2 + $0xf8] sm:$0xff]
        %v1666 = vld [vmem:[#allocation3] sm:$0xff]
        %v1667 = vld [vmem:[#allocation3 + $0x8] sm:$0xff]
        %v1668 = vld [vmem:[#allocation3 + $0x10] sm:$0xff]
        %v1669 = vld [vmem:[#allocation3 + $0x18] sm:$0xff]
        %v1670 = vld [vmem:[#allocation3 + $0x20] sm:$0xff]
        %v1671 = vld [vmem:[#allocation3 + $0x28] sm:$0xff]
        %v1672 = vld [vmem:[#allocation3 + $0x30] sm:$0xff]
        %v1673 = vld [vmem:[#allocation3 + $0x38] sm:$0xff]
        %v1674 = vld [vmem:[#allocation3 + $0x40] sm:$0xff]
        %v1675 = vld [vmem:[#allocation3 + $0x48] sm:$0xff]
        %v1676 = vld [vmem:[#allocation3 + $0x50] sm:$0xff]
        %v1677 = vld [vmem:[#allocation3 + $0x58] sm:$0xff]
        %v1678 = vld [vmem:[#allocation3 + $0x60] sm:$0xff]
        %v1679 = vld [vmem:[#allocation3 + $0x68] sm:$0xff]
        %v1680 = vld [vmem:[#allocation3 + $0x70] sm:$0xff]
        %v1681 = vld [vmem:[#allocation3 + $0x78] sm:$0xff]
        %v1682 = vld [vmem:[#allocation3 + $0x80] sm:$0xff]
        %v1683 = vld [vmem:[#allocation3 + $0x88] sm:$0xff]
        %v1684 = vld [vmem:[#allocation3 + $0x90] sm:$0xff]
        %v1685 = vld [vmem:[#allocation3 + $0x98] sm:$0xff]
        %v1686 = vld [vmem:[#allocation3 + $0xa0] sm:$0xff]
        %v1687 = vld [vmem:[#allocation3 + $0xa8] sm:$0xff]
        %v1688 = vld [vmem:[#allocation3 + $0xb0] sm:$0xff]
        %v1689 = vld [vmem:[#allocation3 + $0xb8] sm:$0xff]
        %v1690 = vld [vmem:[#allocation3 + $0xc0] sm:$0xff]
        %v1691 = vld [vmem:[#allocation3 + $0xc8] sm:$0xff]
        %v1692 = vld [vmem:[#allocation3 + $0xd0] sm:$0xff]
        %v1693 = vld [vmem:[#allocation3 + $0xd8] sm:$0xff]
        %v1694 = vld [vmem:[#allocation3 + $0xe0] sm:$0xff]
        %v1695 = vld [vmem:[#allocation3 + $0xe8] sm:$0xff]
        %v1696 = vld [vmem:[#allocation3 + $0xf0] sm:$0xff]
        %v1697 = vld [vmem:[#allocation3 + $0xf8] sm:$0xff]
        %1699 = vset.pattern.permute.xlu0 0
        %1700 = vperm.xlu0 %1699, %v273
        %v1701 = vpop.permute.xlu0 %1700
        %1704 = vset.pattern.permute.xlu0 0
        %1705 = vperm.xlu0 %1704, %v274
        %v1706 = vpop.permute.xlu0 %1705
        %1709 = vset.pattern.permute.xlu0 0
        %1710 = vperm.xlu0 %1709, %v275
        %v1711 = vpop.permute.xlu0 %1710
        %1714 = vset.pattern.permute.xlu0 0
        %1715 = vperm.xlu0 %1714, %v276
        %v1716 = vpop.permute.xlu0 %1715
        %1719 = vset.pattern.permute.xlu0 0
        %1720 = vperm.xlu0 %1719, %v277
        %v1721 = vpop.permute.xlu0 %1720
        %1724 = vset.pattern.permute.xlu0 0
        %1725 = vperm.xlu0 %1724, %v278
        %v1726 = vpop.permute.xlu0 %1725
        %1729 = vset.pattern.permute.xlu0 0
        %1730 = vperm.xlu0 %1729, %v279
        %v1731 = vpop.permute.xlu0 %1730
        %1734 = vset.pattern.permute.xlu0 0
        %1735 = vperm.xlu0 %1734, %v280
        %v1736 = vpop.permute.xlu0 %1735
        %1738 = vmatprep.subr.mxu0 0.0
        %1739 = vmatpush1.msra.mxu0 %v1634
        %1740 = vmatprep.subr.mxu0 0.0
        %1741 = vmatpush1.msra.mxu0 %v1635
        %1742 = vmatprep.subr.mxu0 0.0
        %1743 = vmatpush1.msra.mxu0 %v1636
        %1744 = vmatprep.subr.mxu0 0.0
        %1745 = vmatpush1.msra.mxu0 %v1637
        %1746 = vmatprep.subr.mxu0 0.0
        %1747 = vmatpush1.msra.mxu0 %v1638
        %1748 = vmatprep.subr.mxu0 0.0
        %1749 = vmatpush1.msra.mxu0 %v1639
        %1750 = vmatprep.subr.mxu0 0.0
        %1751 = vmatpush1.msra.mxu0 %v1640
        %1752 = vmatprep.subr.mxu0 0.0
        %1753 = vmatpush1.msra.mxu0 %v1641
        %1754 = vmatprep.subr.mxu0 0.0
        %1755 = vmatpush1.msra.mxu0 %v1642
        %1756 = vmatprep.subr.mxu0 0.0
        %1757 = vmatpush1.msra.mxu0 %v1643
        %1758 = vmatprep.subr.mxu0 0.0
        %1759 = vmatpush1.msra.mxu0 %v1644
        %1760 = vmatprep.subr.mxu0 0.0
        %1761 = vmatpush1.msra.mxu0 %v1645
        %1762 = vmatprep.subr.mxu0 0.0
        %1763 = vmatpush1.msra.mxu0 %v1646
        %1764 = vmatprep.subr.mxu0 0.0
        %1765 = vmatpush1.msra.mxu0 %v1647
        %1766 = vmatprep.subr.mxu0 0.0
        %1767 = vmatpush1.msra.mxu0 %v1648
        %1768 = vmatprep.subr.mxu0 0.0
        %1769 = vmatpush1.msra.mxu0 %v1649
        %1770 = vmatprep.subr.mxu0 0.0
        %1771 = vmatpush1.msra.mxu0 %v1650
        %1772 = vmatprep.subr.mxu0 0.0
        %1773 = vmatpush1.msra.mxu0 %v1651
        %1774 = vmatprep.subr.mxu0 0.0
        %1775 = vmatpush1.msra.mxu0 %v1652
        %1776 = vmatprep.subr.mxu0 0.0
        %1777 = vmatpush1.msra.mxu0 %v1653
        %1778 = vmatprep.subr.mxu0 0.0
        %1779 = vmatpush1.msra.mxu0 %v1654
        %1780 = vmatprep.subr.mxu0 0.0
        %1781 = vmatpush1.msra.mxu0 %v1655
        %1782 = vmatprep.subr.mxu0 0.0
        %1783 = vmatpush1.msra.mxu0 %v1656
        %1784 = vmatprep.subr.mxu0 0.0
        %1785 = vmatpush1.msra.mxu0 %v1657
        %1786 = vmatprep.subr.mxu0 0.0
        %1787 = vmatpush1.msra.mxu0 %v1658
        %1788 = vmatprep.subr.mxu0 0.0
        %1789 = vmatpush1.msra.mxu0 %v1659
        %1790 = vmatprep.subr.mxu0 0.0
        %1791 = vmatpush1.msra.mxu0 %v1660
        %1792 = vmatprep.subr.mxu0 0.0
        %1793 = vmatpush1.msra.mxu0 %v1661
        %1794 = vmatprep.subr.mxu0 0.0
        %1795 = vmatpush1.msra.mxu0 %v1662
        %1796 = vmatprep.subr.mxu0 0.0
        %1797 = vmatpush1.msra.mxu0 %v1663
        %1798 = vmatprep.subr.mxu0 0.0
        %1799 = vmatpush1.msra.mxu0 %v1664
        %1800 = vmatprep.subr.mxu0 0.0
        %1801 = vmatpush1.msra.mxu0 %v1665
        %1802 = vmatprep.mubr.f32.mxu0 %v258
        %1803 = vmatmul.mubr.f32.gmra.mrb[0].mxu0 %v257
        %v1804 = vpop.f32.mrb[0].mxu0
        %v1805 = vadd.f32 %v1701, %v1804
        %v1806 = vpop.f32.mrb[0].mxu0
        %1807 = vmatprep.mubr.f32.mxu0 %v260
        %1808 = vmatmul.mubr.f32.gmra.mrb[0].mxu0 %v259
        %v1809 = vpop.f32.mrb[0].mxu0
        %v1810 = vadd.f32 %v1706, %v1809
        %v1811 = vpop.f32.mrb[0].mxu0
        %1812 = vmatprep.mubr.f32.mxu0 %v262
        %1813 = vmatmul.mubr.f32.gmra.mrb[0].mxu0 %v261
        %v1814 = vpop.f32.mrb[0].mxu0
        %v1815 = vadd.f32 %v1711, %v1814
        %v1816 = vpop.f32.mrb[0].mxu0
        %1817 = vmatprep.mubr.f32.mxu0 %v264
        %1818 = vmatmul.mubr.f32.gmra.mrb[0].mxu0 %v263
        %v1819 = vpop.f32.mrb[0].mxu0
        %v1820 = vadd.f32 %v1716, %v1819
        %v1821 = vpop.f32.mrb[0].mxu0
        %1822 = vmatprep.mubr.f32.mxu0 %v266
        %1823 = vmatmul.mubr.f32.gmra.mrb[0].mxu0 %v265
        %v1824 = vpop.f32.mrb[0].mxu0
        %v1825 = vadd.f32 %v1721, %v1824
        %v1826 = vpop.f32.mrb[0].mxu0
        %1827 = vmatprep.mubr.f32.mxu0 %v268
        %1828 = vmatmul.mubr.f32.gmra.mrb[0].mxu0 %v267
        %v1829 = vpop.f32.mrb[0].mxu0
        %v1830 = vadd.f32 %v1726, %v1829
        %v1831 = vpop.f32.mrb[0].mxu0
        %1832 = vmatprep.mubr.f32.mxu0 %v270
        %1833 = vmatmul.mubr.f32.gmra.mrb[0].mxu0 %v269
        %v1834 = vpop.f32.mrb[0].mxu0
        %v1835 = vadd.f32 %v1731, %v1834
        %v1836 = vpop.f32.mrb[0].mxu0
        %1837 = vmatprep.mubr.f32.mxu0 %v272
        %1838 = vmatmul.mubr.f32.gmra.mrb[0].mxu0 %v271
        %v1839 = vpop.f32.mrb[0].mxu0
        %v1840 = vadd.f32 %v1736, %v1839
        %v1841 = vpop.f32.mrb[0].mxu0
        %1842 = vdwg.mxu0
        %v1843 = vmax.f32 %v1805, 0.0
        %v1844 = vmax.f32 %v1810, 0.0
        %v1845 = vmax.f32 %v1815, 0.0
        %v1846 = vmax.f32 %v1820, 0.0
        %v1847 = vmax.f32 %v1825, 0.0
        %v1848 = vmax.f32 %v1830, 0.0
        %v1849 = vmax.f32 %v1835, 0.0
        %v1850 = vmax.f32 %v1840, 0.0
        %1851 = vmatprep.subr.mxu0 0.0
        %1852 = vmatpush1.msra.mxu0 %v1666
        %1853 = vmatprep.subr.mxu0 0.0
        %1854 = vmatpush1.msra.mxu0 %v1667
        %1855 = vmatprep.subr.mxu0 0.0
        %1856 = vmatpush1.msra.mxu0 %v1668
        %1857 = vmatprep.subr.mxu0 0.0
        %1858 = vmatpush1.msra.mxu0 %v1669
        %1859 = vmatprep.subr.mxu0 0.0
        %1860 = vmatpush1.msra.mxu0 %v1670
        %1861 = vmatprep.subr.mxu0 0.0
        %1862 = vmatpush1.msra.mxu0 %v1671
        %1863 = vmatprep.subr.mxu0 0.0
        %1864 = vmatpush1.msra.mxu0 %v1672
        %1865 = vmatprep.subr.mxu0 0.0
        %1866 = vmatpush1.msra.mxu0 %v1673
        %1867 = vmatprep.subr.mxu0 0.0
        %1868 = vmatpush1.msra.mxu0 %v1674
        %1869 = vmatprep.subr.mxu0 0.0
        %1870 = vmatpush1.msra.mxu0 %v1675
        %1871 = vmatprep.subr.mxu0 0.0
        %1872 = vmatpush1.msra.mxu0 %v1676
        %1873 = vmatprep.subr.mxu0 0.0
        %1874 = vmatpush1.msra.mxu0 %v1677
        %1875 = vmatprep.subr.mxu0 0.0
        %1876 = vmatpush1.msra.mxu0 %v1678
        %1877 = vmatprep.subr.mxu0 0.0
        %1878 = vmatpush1.msra.mxu0 %v1679
        %1879 = vmatprep.subr.mxu0 0.0
        %1880 = vmatpush1.msra.mxu0 %v1680
        %1881 = vmatprep.subr.mxu0 0.0
        %1882 = vmatpush1.msra.mxu0 %v1681
        %1883 = vmatprep.subr.mxu0 0.0
        %1884 = vmatpush1.msra.mxu0 %v1682
        %1885 = vmatprep.subr.mxu0 0.0
        %1886 = vmatpush1.msra.mxu0 %v1683
        %1887 = vmatprep.subr.mxu0 0.0
        %1888 = vmatpush1.msra.mxu0 %v1684
        %1889 = vmatprep.subr.mxu0 0.0
        %1890 = vmatpush1.msra.mxu0 %v1685
        %1891 = vmatprep.subr.mxu0 0.0
        %1892 = vmatpush1.msra.mxu0 %v1686
        %1893 = vmatprep.subr.mxu0 0.0
        %1894 = vmatpush1.msra.mxu0 %v1687
        %1895 = vmatprep.subr.mxu0 0.0
        %1896 = vmatpush1.msra.mxu0 %v1688
        %1897 = vmatprep.subr.mxu0 0.0
        %1898 = vmatpush1.msra.mxu0 %v1689
        %1899 = vmatprep.subr.mxu0 0.0
        %1900 = vmatpush1.msra.mxu0 %v1690
        %1901 = vmatprep.subr.mxu0 0.0
        %1902 = vmatpush1.msra.mxu0 %v1691
        %1903 = vmatprep.subr.mxu0 0.0
        %1904 = vmatpush1.msra.mxu0 %v1692
        %1905 = vmatprep.subr.mxu0 0.0
        %1906 = vmatpush1.msra.mxu0 %v1693
        %1907 = vmatprep.subr.mxu0 0.0
        %1908 = vmatpush1.msra.mxu0 %v1694
        %1909 = vmatprep.subr.mxu0 0.0
        %1910 = vmatpush1.msra.mxu0 %v1695
        %1911 = vmatprep.subr.mxu0 0.0
        %1912 = vmatpush1.msra.mxu0 %v1696
        %1913 = vmatprep.subr.mxu0 0.0
        %1914 = vmatpush1.msra.mxu0 %v1697
        %1915 = vmatprep.mubr.f32.mxu0 %v258
        %1916 = vmatmul.mubr.f32.gmra.mrb[0].mxu0 %v257
        %v1917 = vpop.f32.mrb[0].mxu0
        %v1918 = vadd.f32 %v1701, %v1917
        %v1919 = vpop.f32.mrb[0].mxu0
        %1920 = vmatprep.mubr.f32.mxu0 %v260
        %1921 = vmatmul.mubr.f32.gmra.mrb[0].mxu0 %v259
        %v1922 = vpop.f32.mrb[0].mxu0
        %v1923 = vadd.f32 %v1706, %v1922
        %v1924 = vpop.f32.mrb[0].mxu0
        %1925 = vmatprep.mubr.f32.mxu0 %v262
        %1926 = vmatmul.mubr.f32.gmra.mrb[0].mxu0 %v261
        %v1927 = vpop.f32.mrb[0].mxu0
        %v1928 = vadd.f32 %v1711, %v1927
        %v1929 = vpop.f32.mrb[0].mxu0
        %1930 = vmatprep.mubr.f32.mxu0 %v264
        %1931 = vmatmul.mubr.f32.gmra.mrb[0].mxu0 %v263
        %v1932 = vpop.f32.mrb[0].mxu0
        %v1933 = vadd.f32 %v1716, %v1932
        %v1934 = vpop.f32.mrb[0].mxu0
        %1935 = vmatprep.mubr.f32.mxu0 %v266
        %1936 = vmatmul.mubr.f32.gmra.mrb[0].mxu0 %v265
        %v1937 = vpop.f32.mrb[0].mxu0
        %v1938 = vadd.f32 %v1721, %v1937
        %v1939 = vpop.f32.mrb[0].mxu0
        %1940 = vmatprep.mubr.f32.mxu0 %v268
        %1941 = vmatmul.mubr.f32.gmra.mrb[0].mxu0 %v267
        %v1942 = vpop.f32.mrb[0].mxu0
        %v1943 = vadd.f32 %v1726, %v1942
        %v1944 = vpop.f32.mrb[0].mxu0
        %1945 = vmatprep.mubr.f32.mxu0 %v270
        %1946 = vmatmul.mubr.f32.gmra.mrb[0].mxu0 %v269
        %v1947 = vpop.f32.mrb[0].mxu0
        %v1948 = vadd.f32 %v1731, %v1947
        %v1949 = vpop.f32.mrb[0].mxu0
        %1950 = vmatprep.mubr.f32.mxu0 %v272
        %1951 = vmatmul.mubr.f32.gmra.mrb[0].mxu0 %v271
        %v1952 = vpop.f32.mrb[0].mxu0
        %v1953 = vadd.f32 %v1736, %v1952
        %v1954 = vpop.f32.mrb[0].mxu0
        %1955 = vdwg.mxu0
        %v1956 = vmax.f32 %v1918, 0.0
        %v1957 = vmax.f32 %v1923, 0.0
        %v1958 = vmax.f32 %v1928, 0.0
        %v1959 = vmax.f32 %v1933, 0.0
        %v1960 = vmax.f32 %v1938, 0.0
        %v1961 = vmax.f32 %v1943, 0.0
        %v1962 = vmax.f32 %v1948, 0.0
        %v1963 = vmax.f32 %v1953, 0.0
        %1972 = vrot.lane.b32.xlu0 %v1956, 1
        %v1973 = vpop.permute.xlu0 %1972
        %1974 = vrot.lane.b32.xlu0 %v1957, 1
        %v1975 = vpop.permute.xlu0 %1974
        %1976 = vrot.lane.b32.xlu0 %v1958, 1
        %v1977 = vpop.permute.xlu0 %1976
        %1978 = vrot.lane.b32.xlu0 %v1959, 1
        %v1979 = vpop.permute.xlu0 %1978
        %1980 = vrot.lane.b32.xlu0 %v1960, 1
        %v1981 = vpop.permute.xlu0 %1980
        %1982 = vrot.lane.b32.xlu0 %v1961, 1
        %v1983 = vpop.permute.xlu0 %1982
        %1984 = vrot.lane.b32.xlu0 %v1962, 1
        %v1985 = vpop.permute.xlu0 %1984
        %1986 = vrot.lane.b32.xlu0 %v1963, 1
        %v1987 = vpop.permute.xlu0 %1986
        %vm1996 = vcmask 7168
        %v1997 = vsel %vm1996, 0.0, %v1973
        %v1998 = vsel %vm1996, 0.0, %v1975
        %v1999 = vsel %vm1996, 0.0, %v1977
        %v2000 = vsel %vm1996, 0.0, %v1979
        %v2001 = vsel %vm1996, 0.0, %v1981
        %v2002 = vsel %vm1996, 0.0, %v1983
        %v2003 = vsel %vm1996, 0.0, %v1985
        %v2004 = vsel %vm1996, 0.0, %v1987
        %v2005 = vmax.f32 %v1843, %v1956
        %v2006 = vmax.f32 %v1844, %v1957
        %v2007 = vmax.f32 %v1845, %v1958
        %v2008 = vmax.f32 %v1846, %v1959
        %v2009 = vmax.f32 %v1847, %v1960
        %v2010 = vmax.f32 %v1848, %v1961
        %v2011 = vmax.f32 %v1849, %v1962
        %v2012 = vmax.f32 %v1850, %v1963
        %v2013 = vmax.f32 %v2005, %v1997
        %v2014 = vmax.f32 %v2006, %v1998
        %v2015 = vmax.f32 %v2007, %v1999
        %v2016 = vmax.f32 %v2008, %v2000
        %v2017 = vmax.f32 %v2009, %v2001
        %v2018 = vmax.f32 %v2010, %v2002
        %v2019 = vmax.f32 %v2011, %v2003
        %v2020 = vmax.f32 %v2012, %v2004
        %p2021 = scmp.ge.s32.totalorder %s287, 1
        %s2022 = scalar_select %p2021, 1, 0
        %v2023 = vstv %s2022
        %vm2024 = vcmp.eq.s32.totalorder %v2023, 1
        %v2025 = vsel %vm2024, %v2013, 0.0
        %v2026 = vsel %vm2024, %v2014, 0.0
        %v2027 = vsel %vm2024, %v2015, 0.0
        %v2028 = vsel %vm2024, %v2016, 0.0
        %v2029 = vsel %vm2024, %v2017, 0.0
        %v2030 = vsel %vm2024, %v2018, 0.0
        %v2031 = vsel %vm2024, %v2019, 0.0
        %v2032 = vsel %vm2024, %v2020, 0.0
        %s2033 = smul.u32 %s282, 64
        %s2034 = scalar_lea.vmem [#allocation4], %s2033
        %2035 = vst.msk [vmem:[%s2034] sm:$0xff] %vm192, %v2025
        %2036 = vst.msk [vmem:[%s2034 + $0x8] sm:$0xff] %vm192, %v2026
        %2037 = vst.msk [vmem:[%s2034 + $0x10] sm:$0xff] %vm192, %v2027
        %2038 = vst.msk [vmem:[%s2034 + $0x18] sm:$0xff] %vm192, %v2028
        %2039 = vst.msk [vmem:[%s2034 + $0x20] sm:$0xff] %vm192, %v2029
        %2040 = vst.msk [vmem:[%s2034 + $0x28] sm:$0xff] %vm192, %v2030
        %2041 = vst.msk [vmem:[%s2034 + $0x30] sm:$0xff] %vm192, %v2031
        %2042 = vst.msk [vmem:[%s2034 + $0x38] sm:$0xff] %vm192, %v2032
      $region37: #{visible_net_resnet_forward.1} parent=31 // loop_footer
        %s286 = sadd.s32 1, %s282
      $region38: #{visible_net_resnet_forward.1} parent=31 // loop_footer_branch
        %281 = sbr.rel target = $region34
      $region39: #{visible_net_resnet_forward.1} parent=31 // loop_exit
        _
      %v2043 = vld [vmem:[#allocation4] sm:$0xff]
      %v2044 = vld [vmem:[#allocation4 + $0x8] sm:$0xff]
      %v2045 = vld [vmem:[#allocation4 + $0x10] sm:$0xff]
      %v2046 = vld [vmem:[#allocation4 + $0x18] sm:$0xff]
      %v2047 = vld [vmem:[#allocation4 + $0x20] sm:$0xff]
      %v2048 = vld [vmem:[#allocation4 + $0x28] sm:$0xff]
      %v2049 = vld [vmem:[#allocation4 + $0x30] sm:$0xff]
      %v2050 = vld [vmem:[#allocation4 + $0x38] sm:$0xff]
      %s2051 = scalar_lea.vmem [#allocation4], 64
      %v2052 = vld [vmem:[%s2051] sm:$0xff]
      %v2053 = vld [vmem:[%s2051 + $0x8] sm:$0xff]
      %v2054 = vld [vmem:[%s2051 + $0x10] sm:$0xff]
      %v2055 = vld [vmem:[%s2051 + $0x18] sm:$0xff]
      %v2056 = vld [vmem:[%s2051 + $0x20] sm:$0xff]
      %v2057 = vld [vmem:[%s2051 + $0x28] sm:$0xff]
      %v2058 = vld [vmem:[%s2051 + $0x30] sm:$0xff]
      %v2059 = vld [vmem:[%s2051 + $0x38] sm:$0xff]
      %v2060 = vmax.f32 %v2043, %v2052
      %v2061 = vmax.f32 %v2044, %v2053
      %v2062 = vmax.f32 %v2045, %v2054
      %v2063 = vmax.f32 %v2046, %v2055
      %v2064 = vmax.f32 %v2047, %v2056
      %v2065 = vmax.f32 %v2048, %v2057
      %v2066 = vmax.f32 %v2049, %v2058
      %v2067 = vmax.f32 %v2050, %v2059
      %s2068 = scalar_lea.vmem [#allocation4], 128
      %v2069 = vld [vmem:[%s2068] sm:$0xff]
      %v2070 = vld [vmem:[%s2068 + $0x8] sm:$0xff]
      %v2071 = vld [vmem:[%s2068 + $0x10] sm:$0xff]
      %v2072 = vld [vmem:[%s2068 + $0x18] sm:$0xff]
      %v2073 = vld [vmem:[%s2068 + $0x20] sm:$0xff]
      %v2074 = vld [vmem:[%s2068 + $0x28] sm:$0xff]
      %v2075 = vld [vmem:[%s2068 + $0x30] sm:$0xff]
      %v2076 = vld [vmem:[%s2068 + $0x38] sm:$0xff]
      %v2077 = vmax.f32 %v2060, %v2069
      %v2078 = vmax.f32 %v2061, %v2070
      %v2079 = vmax.f32 %v2062, %v2071
      %v2080 = vmax.f32 %v2063, %v2072
      %v2081 = vmax.f32 %v2064, %v2073
      %v2082 = vmax.f32 %v2065, %v2074
      %v2083 = vmax.f32 %v2066, %v2075
      %v2084 = vmax.f32 %v2067, %v2076
      %v2093 = vcombine.high %v2077, %v2077
      %v2095 = vunpack.c.l.s4 1966171168
      %v2096 = vunpack.c.0.s8 %v2095
      %v2097 = vlaneseq
      %v2098 = vshrl.u32 %v2097, 7
      %v2099 = vsub.s32 %v2096, %v2098
      %v2100 = vrot.slane %v2077, %v2099
      %v2102 = vunpack.c.l.s4 1966171168
      %v2103 = vunpack.c.0.s8 %v2102
      %v2104 = vlaneseq
      %v2105 = vshrl.u32 %v2104, 7
      %v2106 = vsub.s32 %v2103, %v2105
      %v2107 = vrot.slane %v2093, %v2106
      %v2108 = vcombine.high %v2100, %v2100
      %v2109 = vcombine.high %v2107, %v2107
      %v2111 = vunpack.c.l.s4 1966171168
      %v2112 = vunpack.c.0.s8 %v2111
      %v2113 = vlaneseq
      %v2114 = vshrl.u32 %v2113, 7
      %v2115 = vsub.s32 %v2112, %v2114
      %v2116 = vrot.slane %v2100, %v2115
      %v2118 = vunpack.c.l.s4 1966171168
      %v2119 = vunpack.c.0.s8 %v2118
      %v2120 = vlaneseq
      %v2121 = vshrl.u32 %v2120, 7
      %v2122 = vsub.s32 %v2119, %v2121
      %v2123 = vrot.slane %v2107, %v2122
      %v2125 = vunpack.c.l.s4 1966171168
      %v2126 = vunpack.c.0.s8 %v2125
      %v2127 = vlaneseq
      %v2128 = vshrl.u32 %v2127, 7
      %v2129 = vsub.s32 %v2126, %v2128
      %v2130 = vrot.slane %v2108, %v2129
      %v2132 = vunpack.c.l.s4 1966171168
      %v2133 = vunpack.c.0.s8 %v2132
      %v2134 = vlaneseq
      %v2135 = vshrl.u32 %v2134, 7
      %v2136 = vsub.s32 %v2133, %v2135
      %v2137 = vrot.slane %v2109, %v2136
      %v2138 = vcombine.high %v2116, %v2116
      %v2139 = vcombine.high %v2123, %v2123
      %v2140 = vcombine.high %v2130, %v2130
      %v2141 = vcombine.high %v2137, %v2137
      %v2142 = vcombine.high %v2078, %v2078
      %v2144 = vunpack.c.l.s4 1966171168
      %v2145 = vunpack.c.0.s8 %v2144
      %v2146 = vlaneseq
      %v2147 = vshrl.u32 %v2146, 7
      %v2148 = vsub.s32 %v2145, %v2147
      %v2149 = vrot.slane %v2078, %v2148
      %v2151 = vunpack.c.l.s4 1966171168
      %v2152 = vunpack.c.0.s8 %v2151
      %v2153 = vlaneseq
      %v2154 = vshrl.u32 %v2153, 7
      %v2155 = vsub.s32 %v2152, %v2154
      %v2156 = vrot.slane %v2142, %v2155
      %v2157 = vcombine.high %v2149, %v2149
      %v2158 = vcombine.high %v2156, %v2156
      %v2160 = vunpack.c.l.s4 1966171168
      %v2161 = vunpack.c.0.s8 %v2160
      %v2162 = vlaneseq
      %v2163 = vshrl.u32 %v2162, 7
      %v2164 = vsub.s32 %v2161, %v2163
      %v2165 = vrot.slane %v2149, %v2164
      %v2167 = vunpack.c.l.s4 1966171168
      %v2168 = vunpack.c.0.s8 %v2167
      %v2169 = vlaneseq
      %v2170 = vshrl.u32 %v2169, 7
      %v2171 = vsub.s32 %v2168, %v2170
      %v2172 = vrot.slane %v2156, %v2171
      %v2174 = vunpack.c.l.s4 1966171168
      %v2175 = vunpack.c.0.s8 %v2174
      %v2176 = vlaneseq
      %v2177 = vshrl.u32 %v2176, 7
      %v2178 = vsub.s32 %v2175, %v2177
      %v2179 = vrot.slane %v2157, %v2178
      %v2181 = vunpack.c.l.s4 1966171168
      %v2182 = vunpack.c.0.s8 %v2181
      %v2183 = vlaneseq
      %v2184 = vshrl.u32 %v2183, 7
      %v2185 = vsub.s32 %v2182, %v2184
      %v2186 = vrot.slane %v2158, %v2185
      %v2187 = vcombine.high %v2165, %v2165
      %v2188 = vcombine.high %v2172, %v2172
      %v2189 = vcombine.high %v2179, %v2179
      %v2190 = vcombine.high %v2186, %v2186
      %v2191 = vcombine.high %v2079, %v2079
      %v2193 = vunpack.c.l.s4 1966171168
      %v2194 = vunpack.c.0.s8 %v2193
      %v2195 = vlaneseq
      %v2196 = vshrl.u32 %v2195, 7
      %v2197 = vsub.s32 %v2194, %v2196
      %v2198 = vrot.slane %v2079, %v2197
      %v2200 = vunpack.c.l.s4 1966171168
      %v2201 = vunpack.c.0.s8 %v2200
      %v2202 = vlaneseq
      %v2203 = vshrl.u32 %v2202, 7
      %v2204 = vsub.s32 %v2201, %v2203
      %v2205 = vrot.slane %v2191, %v2204
      %v2206 = vcombine.high %v2198, %v2198
      %v2207 = vcombine.high %v2205, %v2205
      %v2209 = vunpack.c.l.s4 1966171168
      %v2210 = vunpack.c.0.s8 %v2209
      %v2211 = vlaneseq
      %v2212 = vshrl.u32 %v2211, 7
      %v2213 = vsub.s32 %v2210, %v2212
      %v2214 = vrot.slane %v2198, %v2213
      %v2216 = vunpack.c.l.s4 1966171168
      %v2217 = vunpack.c.0.s8 %v2216
      %v2218 = vlaneseq
      %v2219 = vshrl.u32 %v2218, 7
      %v2220 = vsub.s32 %v2217, %v2219
      %v2221 = vrot.slane %v2205, %v2220
      %v2223 = vunpack.c.l.s4 1966171168
      %v2224 = vunpack.c.0.s8 %v2223
      %v2225 = vlaneseq
      %v2226 = vshrl.u32 %v2225, 7
      %v2227 = vsub.s32 %v2224, %v2226
      %v2228 = vrot.slane %v2206, %v2227
      %v2230 = vunpack.c.l.s4 1966171168
      %v2231 = vunpack.c.0.s8 %v2230
      %v2232 = vlaneseq
      %v2233 = vshrl.u32 %v2232, 7
      %v2234 = vsub.s32 %v2231, %v2233
      %v2235 = vrot.slane %v2207, %v2234
      %v2236 = vcombine.high %v2214, %v2214
      %v2237 = vcombine.high %v2221, %v2221
      %v2238 = vcombine.high %v2228, %v2228
      %v2239 = vcombine.high %v2235, %v2235
      %v2240 = vcombine.high %v2080, %v2080
      %v2242 = vunpack.c.l.s4 1966171168
      %v2243 = vunpack.c.0.s8 %v2242
      %v2244 = vlaneseq
      %v2245 = vshrl.u32 %v2244, 7
      %v2246 = vsub.s32 %v2243, %v2245
      %v2247 = vrot.slane %v2080, %v2246
      %v2249 = vunpack.c.l.s4 1966171168
      %v2250 = vunpack.c.0.s8 %v2249
      %v2251 = vlaneseq
      %v2252 = vshrl.u32 %v2251, 7
      %v2253 = vsub.s32 %v2250, %v2252
      %v2254 = vrot.slane %v2240, %v2253
      %v2255 = vcombine.high %v2247, %v2247
      %v2256 = vcombine.high %v2254, %v2254
      %v2258 = vunpack.c.l.s4 1966171168
      %v2259 = vunpack.c.0.s8 %v2258
      %v2260 = vlaneseq
      %v2261 = vshrl.u32 %v2260, 7
      %v2262 = vsub.s32 %v2259, %v2261
      %v2263 = vrot.slane %v2247, %v2262
      %v2265 = vunpack.c.l.s4 1966171168
      %v2266 = vunpack.c.0.s8 %v2265
      %v2267 = vlaneseq
      %v2268 = vshrl.u32 %v2267, 7
      %v2269 = vsub.s32 %v2266, %v2268
      %v2270 = vrot.slane %v2254, %v2269
      %v2272 = vunpack.c.l.s4 1966171168
      %v2273 = vunpack.c.0.s8 %v2272
      %v2274 = vlaneseq
      %v2275 = vshrl.u32 %v2274, 7
      %v2276 = vsub.s32 %v2273, %v2275
      %v2277 = vrot.slane %v2255, %v2276
      %v2279 = vunpack.c.l.s4 1966171168
      %v2280 = vunpack.c.0.s8 %v2279
      %v2281 = vlaneseq
      %v2282 = vshrl.u32 %v2281, 7
      %v2283 = vsub.s32 %v2280, %v2282
      %v2284 = vrot.slane %v2256, %v2283
      %v2285 = vcombine.high %v2263, %v2263
      %v2286 = vcombine.high %v2270, %v2270
      %v2287 = vcombine.high %v2277, %v2277
      %v2288 = vcombine.high %v2284, %v2284
      %v2289 = vcombine.high %v2081, %v2081
      %v2291 = vunpack.c.l.s4 1966171168
      %v2292 = vunpack.c.0.s8 %v2291
      %v2293 = vlaneseq
      %v2294 = vshrl.u32 %v2293, 7
      %v2295 = vsub.s32 %v2292, %v2294
      %v2296 = vrot.slane %v2081, %v2295
      %v2298 = vunpack.c.l.s4 1966171168
      %v2299 = vunpack.c.0.s8 %v2298
      %v2300 = vlaneseq
      %v2301 = vshrl.u32 %v2300, 7
      %v2302 = vsub.s32 %v2299, %v2301
      %v2303 = vrot.slane %v2289, %v2302
      %v2304 = vcombine.high %v2296, %v2296
      %v2305 = vcombine.high %v2303, %v2303
      %v2307 = vunpack.c.l.s4 1966171168
      %v2308 = vunpack.c.0.s8 %v2307
      %v2309 = vlaneseq
      %v2310 = vshrl.u32 %v2309, 7
      %v2311 = vsub.s32 %v2308, %v2310
      %v2312 = vrot.slane %v2296, %v2311
      %v2314 = vunpack.c.l.s4 1966171168
      %v2315 = vunpack.c.0.s8 %v2314
      %v2316 = vlaneseq
      %v2317 = vshrl.u32 %v2316, 7
      %v2318 = vsub.s32 %v2315, %v2317
      %v2319 = vrot.slane %v2303, %v2318
      %v2321 = vunpack.c.l.s4 1966171168
      %v2322 = vunpack.c.0.s8 %v2321
      %v2323 = vlaneseq
      %v2324 = vshrl.u32 %v2323, 7
      %v2325 = vsub.s32 %v2322, %v2324
      %v2326 = vrot.slane %v2304, %v2325
      %v2328 = vunpack.c.l.s4 1966171168
      %v2329 = vunpack.c.0.s8 %v2328
      %v2330 = vlaneseq
      %v2331 = vshrl.u32 %v2330, 7
      %v2332 = vsub.s32 %v2329, %v2331
      %v2333 = vrot.slane %v2305, %v2332
      %v2334 = vcombine.high %v2312, %v2312
      %v2335 = vcombine.high %v2319, %v2319
      %v2336 = vcombine.high %v2326, %v2326
      %v2337 = vcombine.high %v2333, %v2333
      %v2338 = vcombine.high %v2082, %v2082
      %v2340 = vunpack.c.l.s4 1966171168
      %v2341 = vunpack.c.0.s8 %v2340
      %v2342 = vlaneseq
      %v2343 = vshrl.u32 %v2342, 7
      %v2344 = vsub.s32 %v2341, %v2343
      %v2345 = vrot.slane %v2082, %v2344
      %v2347 = vunpack.c.l.s4 1966171168
      %v2348 = vunpack.c.0.s8 %v2347
      %v2349 = vlaneseq
      %v2350 = vshrl.u32 %v2349, 7
      %v2351 = vsub.s32 %v2348, %v2350
      %v2352 = vrot.slane %v2338, %v2351
      %v2353 = vcombine.high %v2345, %v2345
      %v2354 = vcombine.high %v2352, %v2352
      %v2356 = vunpack.c.l.s4 1966171168
      %v2357 = vunpack.c.0.s8 %v2356
      %v2358 = vlaneseq
      %v2359 = vshrl.u32 %v2358, 7
      %v2360 = vsub.s32 %v2357, %v2359
      %v2361 = vrot.slane %v2345, %v2360
      %v2363 = vunpack.c.l.s4 1966171168
      %v2364 = vunpack.c.0.s8 %v2363
      %v2365 = vlaneseq
      %v2366 = vshrl.u32 %v2365, 7
      %v2367 = vsub.s32 %v2364, %v2366
      %v2368 = vrot.slane %v2352, %v2367
      %v2370 = vunpack.c.l.s4 1966171168
      %v2371 = vunpack.c.0.s8 %v2370
      %v2372 = vlaneseq
      %v2373 = vshrl.u32 %v2372, 7
      %v2374 = vsub.s32 %v2371, %v2373
      %v2375 = vrot.slane %v2353, %v2374
      %v2377 = vunpack.c.l.s4 1966171168
      %v2378 = vunpack.c.0.s8 %v2377
      %v2379 = vlaneseq
      %v2380 = vshrl.u32 %v2379, 7
      %v2381 = vsub.s32 %v2378, %v2380
      %v2382 = vrot.slane %v2354, %v2381
      %v2383 = vcombine.high %v2361, %v2361
      %v2384 = vcombine.high %v2368, %v2368
      %v2385 = vcombine.high %v2375, %v2375
      %v2386 = vcombine.high %v2382, %v2382
      %v2387 = vcombine.high %v2083, %v2083
      %v2389 = vunpack.c.l.s4 1966171168
      %v2390 = vunpack.c.0.s8 %v2389
      %v2391 = vlaneseq
      %v2392 = vshrl.u32 %v2391, 7
      %v2393 = vsub.s32 %v2390, %v2392
      %v2394 = vrot.slane %v2083, %v2393
      %v2396 = vunpack.c.l.s4 1966171168
      %v2397 = vunpack.c.0.s8 %v2396
      %v2398 = vlaneseq
      %v2399 = vshrl.u32 %v2398, 7
      %v2400 = vsub.s32 %v2397, %v2399
      %v2401 = vrot.slane %v2387, %v2400
      %v2402 = vcombine.high %v2394, %v2394
      %v2403 = vcombine.high %v2401, %v2401
      %v2405 = vunpack.c.l.s4 1966171168
      %v2406 = vunpack.c.0.s8 %v2405
      %v2407 = vlaneseq
      %v2408 = vshrl.u32 %v2407, 7
      %v2409 = vsub.s32 %v2406, %v2408
      %v2410 = vrot.slane %v2394, %v2409
      %v2412 = vunpack.c.l.s4 1966171168
      %v2413 = vunpack.c.0.s8 %v2412
      %v2414 = vlaneseq
      %v2415 = vshrl.u32 %v2414, 7
      %v2416 = vsub.s32 %v2413, %v2415
      %v2417 = vrot.slane %v2401, %v2416
      %v2419 = vunpack.c.l.s4 1966171168
      %v2420 = vunpack.c.0.s8 %v2419
      %v2421 = vlaneseq
      %v2422 = vshrl.u32 %v2421, 7
      %v2423 = vsub.s32 %v2420, %v2422
      %v2424 = vrot.slane %v2402, %v2423
      %v2426 = vunpack.c.l.s4 1966171168
      %v2427 = vunpack.c.0.s8 %v2426
      %v2428 = vlaneseq
      %v2429 = vshrl.u32 %v2428, 7
      %v2430 = vsub.s32 %v2427, %v2429
      %v2431 = vrot.slane %v2403, %v2430
      %v2432 = vcombine.high %v2410, %v2410
      %v2433 = vcombine.high %v2417, %v2417
      %v2434 = vcombine.high %v2424, %v2424
      %v2435 = vcombine.high %v2431, %v2431
      %v2436 = vcombine.high %v2084, %v2084
      %v2438 = vunpack.c.l.s4 1966171168
      %v2439 = vunpack.c.0.s8 %v2438
      %v2440 = vlaneseq
      %v2441 = vshrl.u32 %v2440, 7
      %v2442 = vsub.s32 %v2439, %v2441
      %v2443 = vrot.slane %v2084, %v2442
      %v2445 = vunpack.c.l.s4 1966171168
      %v2446 = vunpack.c.0.s8 %v2445
      %v2447 = vlaneseq
      %v2448 = vshrl.u32 %v2447, 7
      %v2449 = vsub.s32 %v2446, %v2448
      %v2450 = vrot.slane %v2436, %v2449
      %v2451 = vcombine.high %v2443, %v2443
      %v2452 = vcombine.high %v2450, %v2450
      %v2454 = vunpack.c.l.s4 1966171168
      %v2455 = vunpack.c.0.s8 %v2454
      %v2456 = vlaneseq
      %v2457 = vshrl.u32 %v2456, 7
      %v2458 = vsub.s32 %v2455, %v2457
      %v2459 = vrot.slane %v2443, %v2458
      %v2461 = vunpack.c.l.s4 1966171168
      %v2462 = vunpack.c.0.s8 %v2461
      %v2463 = vlaneseq
      %v2464 = vshrl.u32 %v2463, 7
      %v2465 = vsub.s32 %v2462, %v2464
      %v2466 = vrot.slane %v2450, %v2465
      %v2468 = vunpack.c.l.s4 1966171168
      %v2469 = vunpack.c.0.s8 %v2468
      %v2470 = vlaneseq
      %v2471 = vshrl.u32 %v2470, 7
      %v2472 = vsub.s32 %v2469, %v2471
      %v2473 = vrot.slane %v2451, %v2472
      %v2475 = vunpack.c.l.s4 1966171168
      %v2476 = vunpack.c.0.s8 %v2475
      %v2477 = vlaneseq
      %v2478 = vshrl.u32 %v2477, 7
      %v2479 = vsub.s32 %v2476, %v2478
      %v2480 = vrot.slane %v2452, %v2479
      %v2481 = vcombine.high %v2459, %v2459
      %v2482 = vcombine.high %v2466, %v2466
      %v2483 = vcombine.high %v2473, %v2473
      %v2484 = vcombine.high %v2480, %v2480
      %vm2549 = vcmask 57344
      %2550 = vst.msk [vmem:[%s190] sm:$0x1] %vm2549, %v2116
      %2551 = vst.msk [vmem:[%s190 + $0x8] sm:$0x1] %vm2549, %v2130
      %2552 = vst.msk [vmem:[%s190 + $0x10] sm:$0x1] %vm2549, %v2138
      %2553 = vst.msk [vmem:[%s190 + $0x18] sm:$0x1] %vm2549, %v2140
      %2554 = vst.msk [vmem:[%s190 + $0x20] sm:$0x1] %vm2549, %v2123
      %2555 = vst.msk [vmem:[%s190 + $0x28] sm:$0x1] %vm2549, %v2137
      %2556 = vst.msk [vmem:[%s190 + $0x30] sm:$0x1] %vm2549, %v2139
      %2557 = vst.msk [vmem:[%s190 + $0x38] sm:$0x1] %vm2549, %v2141
      %2558 = vst.msk [vmem:[%s190 + $0x40] sm:$0x1] %vm2549, %v2165
      %2559 = vst.msk [vmem:[%s190 + $0x48] sm:$0x1] %vm2549, %v2179
      %2560 = vst.msk [vmem:[%s190 + $0x50] sm:$0x1] %vm2549, %v2187
      %2561 = vst.msk [vmem:[%s190 + $0x58] sm:$0x1] %vm2549, %v2189
      %2562 = vst.msk [vmem:[%s190 + $0x60] sm:$0x1] %vm2549, %v2172
      %2563 = vst.msk [vmem:[%s190 + $0x68] sm:$0x1] %vm2549, %v2186
      %2564 = vst.msk [vmem:[%s190 + $0x70] sm:$0x1] %vm2549, %v2188
      %2565 = vst.msk [vmem:[%s190 + $0x78] sm:$0x1] %vm2549, %v2190
      %2566 = vst.msk [vmem:[%s190 + $0x80] sm:$0x1] %vm2549, %v2214
      %2567 = vst.msk [vmem:[%s190 + $0x88] sm:$0x1] %vm2549, %v2228
      %2568 = vst.msk [vmem:[%s190 + $0x90] sm:$0x1] %vm2549, %v2236
      %2569 = vst.msk [vmem:[%s190 + $0x98] sm:$0x1] %vm2549, %v2238
      %2570 = vst.msk [vmem:[%s190 + $0xa0] sm:$0x1] %vm2549, %v2221
      %2571 = vst.msk [vmem:[%s190 + $0xa8] sm:$0x1] %vm2549, %v2235
      %2572 = vst.msk [vmem:[%s190 + $0xb0] sm:$0x1] %vm2549, %v2237
      %2573 = vst.msk [vmem:[%s190 + $0xb8] sm:$0x1] %vm2549, %v2239
      %2574 = vst.msk [vmem:[%s190 + $0xc0] sm:$0x1] %vm2549, %v2263
      %2575 = vst.msk [vmem:[%s190 + $0xc8] sm:$0x1] %vm2549, %v2277
      %2576 = vst.msk [vmem:[%s190 + $0xd0] sm:$0x1] %vm2549, %v2285
      %2577 = vst.msk [vmem:[%s190 + $0xd8] sm:$0x1] %vm2549, %v2287
      %2578 = vst.msk [vmem:[%s190 + $0xe0] sm:$0x1] %vm2549, %v2270
      %2579 = vst.msk [vmem:[%s190 + $0xe8] sm:$0x1] %vm2549, %v2284
      %2580 = vst.msk [vmem:[%s190 + $0xf0] sm:$0x1] %vm2549, %v2286
      %2581 = vst.msk [vmem:[%s190 + $0xf8] sm:$0x1] %vm2549, %v2288
      %2582 = vst.msk [vmem:[%s190 + $0x100] sm:$0x1] %vm2549, %v2312
      %2583 = vst.msk [vmem:[%s190 + $0x108] sm:$0x1] %vm2549, %v2326
      %2584 = vst.msk [vmem:[%s190 + $0x110] sm:$0x1] %vm2549, %v2334
      %2585 = vst.msk [vmem:[%s190 + $0x118] sm:$0x1] %vm2549, %v2336
      %2586 = vst.msk [vmem:[%s190 + $0x120] sm:$0x1] %vm2549, %v2319
      %2587 = vst.msk [vmem:[%s190 + $0x128] sm:$0x1] %vm2549, %v2333
      %2588 = vst.msk [vmem:[%s190 + $0x130] sm:$0x1] %vm2549, %v2335
      %2589 = vst.msk [vmem:[%s190 + $0x138] sm:$0x1] %vm2549, %v2337
      %2590 = vst.msk [vmem:[%s190 + $0x140] sm:$0x1] %vm2549, %v2361
      %2591 = vst.msk [vmem:[%s190 + $0x148] sm:$0x1] %vm2549, %v2375
      %2592 = vst.msk [vmem:[%s190 + $0x150] sm:$0x1] %vm2549, %v2383
      %2593 = vst.msk [vmem:[%s190 + $0x158] sm:$0x1] %vm2549, %v2385
      %2594 = vst.msk [vmem:[%s190 + $0x160] sm:$0x1] %vm2549, %v2368
      %2595 = vst.msk [vmem:[%s190 + $0x168] sm:$0x1] %vm2549, %v2382
      %2596 = vst.msk [vmem:[%s190 + $0x170] sm:$0x1] %vm2549, %v2384
      %2597 = vst.msk [vmem:[%s190 + $0x178] sm:$0x1] %vm2549, %v2386
      %2598 = vst.msk [vmem:[%s190 + $0x180] sm:$0x1] %vm2549, %v2410
      %2599 = vst.msk [vmem:[%s190 + $0x188] sm:$0x1] %vm2549, %v2424
      %2600 = vst.msk [vmem:[%s190 + $0x190] sm:$0x1] %vm2549, %v2432
      %2601 = vst.msk [vmem:[%s190 + $0x198] sm:$0x1] %vm2549, %v2434
      %2602 = vst.msk [vmem:[%s190 + $0x1a0] sm:$0x1] %vm2549, %v2417
      %2603 = vst.msk [vmem:[%s190 + $0x1a8] sm:$0x1] %vm2549, %v2431
      %2604 = vst.msk [vmem:[%s190 + $0x1b0] sm:$0x1] %vm2549, %v2433
      %2605 = vst.msk [vmem:[%s190 + $0x1b8] sm:$0x1] %vm2549, %v2435
      %2606 = vst.msk [vmem:[%s190 + $0x1c0] sm:$0x1] %vm2549, %v2459
      %2607 = vst.msk [vmem:[%s190 + $0x1c8] sm:$0x1] %vm2549, %v2473
      %2608 = vst.msk [vmem:[%s190 + $0x1d0] sm:$0x1] %vm2549, %v2481
      %2609 = vst.msk [vmem:[%s190 + $0x1d8] sm:$0x1] %vm2549, %v2483
      %2610 = vst.msk [vmem:[%s190 + $0x1e0] sm:$0x1] %vm2549, %v2466
      %2611 = vst.msk [vmem:[%s190 + $0x1e8] sm:$0x1] %vm2549, %v2480
      %2612 = vst.msk [vmem:[%s190 + $0x1f0] sm:$0x1] %vm2549, %v2482
      %2613 = vst.msk [vmem:[%s190 + $0x1f8] sm:$0x1] %vm2549, %v2484
      %v2614 = vld [vmem:[%s2068] sm:$0xff]
      %v2615 = vld [vmem:[%s2068 + $0x8] sm:$0xff]
      %v2616 = vld [vmem:[%s2068 + $0x10] sm:$0xff]
      %v2617 = vld [vmem:[%s2068 + $0x18] sm:$0xff]
      %v2618 = vld [vmem:[%s2068 + $0x20] sm:$0xff]
      %v2619 = vld [vmem:[%s2068 + $0x28] sm:$0xff]
      %v2620 = vld [vmem:[%s2068 + $0x30] sm:$0xff]
      %v2621 = vld [vmem:[%s2068 + $0x38] sm:$0xff]
      %s2622 = scalar_lea.vmem [#allocation4], 192
      %v2623 = vld [vmem:[%s2622] sm:$0xff]
      %v2624 = vld [vmem:[%s2622 + $0x8] sm:$0xff]
      %v2625 = vld [vmem:[%s2622 + $0x10] sm:$0xff]
      %v2626 = vld [vmem:[%s2622 + $0x18] sm:$0xff]
      %v2627 = vld [vmem:[%s2622 + $0x20] sm:$0xff]
      %v2628 = vld [vmem:[%s2622 + $0x28] sm:$0xff]
      %v2629 = vld [vmem:[%s2622 + $0x30] sm:$0xff]
      %v2630 = vld [vmem:[%s2622 + $0x38] sm:$0xff]
      %v2631 = vmax.f32 %v2614, %v2623
      %v2632 = vmax.f32 %v2615, %v2624
      %v2633 = vmax.f32 %v2616, %v2625
      %v2634 = vmax.f32 %v2617, %v2626
      %v2635 = vmax.f32 %v2618, %v2627
      %v2636 = vmax.f32 %v2619, %v2628
      %v2637 = vmax.f32 %v2620, %v2629
      %v2638 = vmax.f32 %v2621, %v2630
      %s2639 = scalar_lea.vmem [#allocation4], 256
      %v2640 = vld [vmem:[%s2639] sm:$0xff]
      %v2641 = vld [vmem:[%s2639 + $0x8] sm:$0xff]
      %v2642 = vld [vmem:[%s2639 + $0x10] sm:$0xff]
      %v2643 = vld [vmem:[%s2639 + $0x18] sm:$0xff]
      %v2644 = vld [vmem:[%s2639 + $0x20] sm:$0xff]
      %v2645 = vld [vmem:[%s2639 + $0x28] sm:$0xff]
      %v2646 = vld [vmem:[%s2639 + $0x30] sm:$0xff]
      %v2647 = vld [vmem:[%s2639 + $0x38] sm:$0xff]
      %v2648 = vmax.f32 %v2631, %v2640
      %v2649 = vmax.f32 %v2632, %v2641
      %v2650 = vmax.f32 %v2633, %v2642
      %v2651 = vmax.f32 %v2634, %v2643
      %v2652 = vmax.f32 %v2635, %v2644
      %v2653 = vmax.f32 %v2636, %v2645
      %v2654 = vmax.f32 %v2637, %v2646
      %v2655 = vmax.f32 %v2638, %v2647
      %v2664 = vcombine.high %v2648, %v2648
      %v2666 = vunpack.c.l.s4 1966171168
      %v2667 = vunpack.c.0.s8 %v2666
      %v2668 = vlaneseq
      %v2669 = vshrl.u32 %v2668, 7
      %v2670 = vsub.s32 %v2667, %v2669
      %v2671 = vrot.slane %v2648, %v2670
      %v2673 = vunpack.c.l.s4 1966171168
      %v2674 = vunpack.c.0.s8 %v2673
      %v2675 = vlaneseq
      %v2676 = vshrl.u32 %v2675, 7
      %v2677 = vsub.s32 %v2674, %v2676
      %v2678 = vrot.slane %v2664, %v2677
      %v2679 = vcombine.high %v2671, %v2671
      %v2680 = vcombine.high %v2678, %v2678
      %v2682 = vunpack.c.l.s4 1966171168
      %v2683 = vunpack.c.0.s8 %v2682
      %v2684 = vlaneseq
      %v2685 = vshrl.u32 %v2684, 7
      %v2686 = vsub.s32 %v2683, %v2685
      %v2687 = vrot.slane %v2671, %v2686
      %v2689 = vunpack.c.l.s4 1966171168
      %v2690 = vunpack.c.0.s8 %v2689
      %v2691 = vlaneseq
      %v2692 = vshrl.u32 %v2691, 7
      %v2693 = vsub.s32 %v2690, %v2692
      %v2694 = vrot.slane %v2678, %v2693
      %v2696 = vunpack.c.l.s4 1966171168
      %v2697 = vunpack.c.0.s8 %v2696
      %v2698 = vlaneseq
      %v2699 = vshrl.u32 %v2698, 7
      %v2700 = vsub.s32 %v2697, %v2699
      %v2701 = vrot.slane %v2679, %v2700
      %v2703 = vunpack.c.l.s4 1966171168
      %v2704 = vunpack.c.0.s8 %v2703
      %v2705 = vlaneseq
      %v2706 = vshrl.u32 %v2705, 7
      %v2707 = vsub.s32 %v2704, %v2706
      %v2708 = vrot.slane %v2680, %v2707
      %v2709 = vcombine.high %v2687, %v2687
      %v2710 = vcombine.high %v2694, %v2694
      %v2711 = vcombine.high %v2701, %v2701
      %v2712 = vcombine.high %v2708, %v2708
      %v2713 = vcombine.high %v2649, %v2649
      %v2715 = vunpack.c.l.s4 1966171168
      %v2716 = vunpack.c.0.s8 %v2715
      %v2717 = vlaneseq
      %v2718 = vshrl.u32 %v2717, 7
      %v2719 = vsub.s32 %v2716, %v2718
      %v2720 = vrot.slane %v2649, %v2719
      %v2722 = vunpack.c.l.s4 1966171168
      %v2723 = vunpack.c.0.s8 %v2722
      %v2724 = vlaneseq
      %v2725 = vshrl.u32 %v2724, 7
      %v2726 = vsub.s32 %v2723, %v2725
      %v2727 = vrot.slane %v2713, %v2726
      %v2728 = vcombine.high %v2720, %v2720
      %v2729 = vcombine.high %v2727, %v2727
      %v2731 = vunpack.c.l.s4 1966171168
      %v2732 = vunpack.c.0.s8 %v2731
      %v2733 = vlaneseq
      %v2734 = vshrl.u32 %v2733, 7
      %v2735 = vsub.s32 %v2732, %v2734
      %v2736 = vrot.slane %v2720, %v2735
      %v2738 = vunpack.c.l.s4 1966171168
      %v2739 = vunpack.c.0.s8 %v2738
      %v2740 = vlaneseq
      %v2741 = vshrl.u32 %v2740, 7
      %v2742 = vsub.s32 %v2739, %v2741
      %v2743 = vrot.slane %v2727, %v2742
      %v2745 = vunpack.c.l.s4 1966171168
      %v2746 = vunpack.c.0.s8 %v2745
      %v2747 = vlaneseq
      %v2748 = vshrl.u32 %v2747, 7
      %v2749 = vsub.s32 %v2746, %v2748
      %v2750 = vrot.slane %v2728, %v2749
      %v2752 = vunpack.c.l.s4 1966171168
      %v2753 = vunpack.c.0.s8 %v2752
      %v2754 = vlaneseq
      %v2755 = vshrl.u32 %v2754, 7
      %v2756 = vsub.s32 %v2753, %v2755
      %v2757 = vrot.slane %v2729, %v2756
      %v2758 = vcombine.high %v2736, %v2736
      %v2759 = vcombine.high %v2743, %v2743
      %v2760 = vcombine.high %v2750, %v2750
      %v2761 = vcombine.high %v2757, %v2757
      %v2762 = vcombine.high %v2650, %v2650
      %v2764 = vunpack.c.l.s4 1966171168
      %v2765 = vunpack.c.0.s8 %v2764
      %v2766 = vlaneseq
      %v2767 = vshrl.u32 %v2766, 7
      %v2768 = vsub.s32 %v2765, %v2767
      %v2769 = vrot.slane %v2650, %v2768
      %v2771 = vunpack.c.l.s4 1966171168
      %v2772 = vunpack.c.0.s8 %v2771
      %v2773 = vlaneseq
      %v2774 = vshrl.u32 %v2773, 7
      %v2775 = vsub.s32 %v2772, %v2774
      %v2776 = vrot.slane %v2762, %v2775
      %v2777 = vcombine.high %v2769, %v2769
      %v2778 = vcombine.high %v2776, %v2776
      %v2780 = vunpack.c.l.s4 1966171168
      %v2781 = vunpack.c.0.s8 %v2780
      %v2782 = vlaneseq
      %v2783 = vshrl.u32 %v2782, 7
      %v2784 = vsub.s32 %v2781, %v2783
      %v2785 = vrot.slane %v2769, %v2784
      %v2787 = vunpack.c.l.s4 1966171168
      %v2788 = vunpack.c.0.s8 %v2787
      %v2789 = vlaneseq
      %v2790 = vshrl.u32 %v2789, 7
      %v2791 = vsub.s32 %v2788, %v2790
      %v2792 = vrot.slane %v2776, %v2791
      %v2794 = vunpack.c.l.s4 1966171168
      %v2795 = vunpack.c.0.s8 %v2794
      %v2796 = vlaneseq
      %v2797 = vshrl.u32 %v2796, 7
      %v2798 = vsub.s32 %v2795, %v2797
      %v2799 = vrot.slane %v2777, %v2798
      %v2801 = vunpack.c.l.s4 1966171168
      %v2802 = vunpack.c.0.s8 %v2801
      %v2803 = vlaneseq
      %v2804 = vshrl.u32 %v2803, 7
      %v2805 = vsub.s32 %v2802, %v2804
      %v2806 = vrot.slane %v2778, %v2805
      %v2807 = vcombine.high %v2785, %v2785
      %v2808 = vcombine.high %v2792, %v2792
      %v2809 = vcombine.high %v2799, %v2799
      %v2810 = vcombine.high %v2806, %v2806
      %v2811 = vcombine.high %v2651, %v2651
      %v2813 = vunpack.c.l.s4 1966171168
      %v2814 = vunpack.c.0.s8 %v2813
      %v2815 = vlaneseq
      %v2816 = vshrl.u32 %v2815, 7
      %v2817 = vsub.s32 %v2814, %v2816
      %v2818 = vrot.slane %v2651, %v2817
      %v2820 = vunpack.c.l.s4 1966171168
      %v2821 = vunpack.c.0.s8 %v2820
      %v2822 = vlaneseq
      %v2823 = vshrl.u32 %v2822, 7
      %v2824 = vsub.s32 %v2821, %v2823
      %v2825 = vrot.slane %v2811, %v2824
      %v2826 = vcombine.high %v2818, %v2818
      %v2827 = vcombine.high %v2825, %v2825
      %v2829 = vunpack.c.l.s4 1966171168
      %v2830 = vunpack.c.0.s8 %v2829
      %v2831 = vlaneseq
      %v2832 = vshrl.u32 %v2831, 7
      %v2833 = vsub.s32 %v2830, %v2832
      %v2834 = vrot.slane %v2818, %v2833
      %v2836 = vunpack.c.l.s4 1966171168
      %v2837 = vunpack.c.0.s8 %v2836
      %v2838 = vlaneseq
      %v2839 = vshrl.u32 %v2838, 7
      %v2840 = vsub.s32 %v2837, %v2839
      %v2841 = vrot.slane %v2825, %v2840
      %v2843 = vunpack.c.l.s4 1966171168
      %v2844 = vunpack.c.0.s8 %v2843
      %v2845 = vlaneseq
      %v2846 = vshrl.u32 %v2845, 7
      %v2847 = vsub.s32 %v2844, %v2846
      %v2848 = vrot.slane %v2826, %v2847
      %v2850 = vunpack.c.l.s4 1966171168
      %v2851 = vunpack.c.0.s8 %v2850
      %v2852 = vlaneseq
      %v2853 = vshrl.u32 %v2852, 7
      %v2854 = vsub.s32 %v2851, %v2853
      %v2855 = vrot.slane %v2827, %v2854
      %v2856 = vcombine.high %v2834, %v2834
      %v2857 = vcombine.high %v2841, %v2841
      %v2858 = vcombine.high %v2848, %v2848
      %v2859 = vcombine.high %v2855, %v2855
      %v2860 = vcombine.high %v2652, %v2652
      %v2862 = vunpack.c.l.s4 1966171168
      %v2863 = vunpack.c.0.s8 %v2862
      %v2864 = vlaneseq
      %v2865 = vshrl.u32 %v2864, 7
      %v2866 = vsub.s32 %v2863, %v2865
      %v2867 = vrot.slane %v2652, %v2866
      %v2869 = vunpack.c.l.s4 1966171168
      %v2870 = vunpack.c.0.s8 %v2869
      %v2871 = vlaneseq
      %v2872 = vshrl.u32 %v2871, 7
      %v2873 = vsub.s32 %v2870, %v2872
      %v2874 = vrot.slane %v2860, %v2873
      %v2875 = vcombine.high %v2867, %v2867
      %v2876 = vcombine.high %v2874, %v2874
      %v2878 = vunpack.c.l.s4 1966171168
      %v2879 = vunpack.c.0.s8 %v2878
      %v2880 = vlaneseq
      %v2881 = vshrl.u32 %v2880, 7
      %v2882 = vsub.s32 %v2879, %v2881
      %v2883 = vrot.slane %v2867, %v2882
      %v2885 = vunpack.c.l.s4 1966171168
      %v2886 = vunpack.c.0.s8 %v2885
      %v2887 = vlaneseq
      %v2888 = vshrl.u32 %v2887, 7
      %v2889 = vsub.s32 %v2886, %v2888
      %v2890 = vrot.slane %v2874, %v2889
      %v2892 = vunpack.c.l.s4 1966171168
      %v2893 = vunpack.c.0.s8 %v2892
      %v2894 = vlaneseq
      %v2895 = vshrl.u32 %v2894, 7
      %v2896 = vsub.s32 %v2893, %v2895
      %v2897 = vrot.slane %v2875, %v2896
      %v2899 = vunpack.c.l.s4 1966171168
      %v2900 = vunpack.c.0.s8 %v2899
      %v2901 = vlaneseq
      %v2902 = vshrl.u32 %v2901, 7
      %v2903 = vsub.s32 %v2900, %v2902
      %v2904 = vrot.slane %v2876, %v2903
      %v2905 = vcombine.high %v2883, %v2883
      %v2906 = vcombine.high %v2890, %v2890
      %v2907 = vcombine.high %v2897, %v2897
      %v2908 = vcombine.high %v2904, %v2904
      %v2909 = vcombine.high %v2653, %v2653
      %v2911 = vunpack.c.l.s4 1966171168
      %v2912 = vunpack.c.0.s8 %v2911
      %v2913 = vlaneseq
      %v2914 = vshrl.u32 %v2913, 7
      %v2915 = vsub.s32 %v2912, %v2914
      %v2916 = vrot.slane %v2653, %v2915
      %v2918 = vunpack.c.l.s4 1966171168
      %v2919 = vunpack.c.0.s8 %v2918
      %v2920 = vlaneseq
      %v2921 = vshrl.u32 %v2920, 7
      %v2922 = vsub.s32 %v2919, %v2921
      %v2923 = vrot.slane %v2909, %v2922
      %v2924 = vcombine.high %v2916, %v2916
      %v2925 = vcombine.high %v2923, %v2923
      %v2927 = vunpack.c.l.s4 1966171168
      %v2928 = vunpack.c.0.s8 %v2927
      %v2929 = vlaneseq
      %v2930 = vshrl.u32 %v2929, 7
      %v2931 = vsub.s32 %v2928, %v2930
      %v2932 = vrot.slane %v2916, %v2931
      %v2934 = vunpack.c.l.s4 1966171168
      %v2935 = vunpack.c.0.s8 %v2934
      %v2936 = vlaneseq
      %v2937 = vshrl.u32 %v2936, 7
      %v2938 = vsub.s32 %v2935, %v2937
      %v2939 = vrot.slane %v2923, %v2938
      %v2941 = vunpack.c.l.s4 1966171168
      %v2942 = vunpack.c.0.s8 %v2941
      %v2943 = vlaneseq
      %v2944 = vshrl.u32 %v2943, 7
      %v2945 = vsub.s32 %v2942, %v2944
      %v2946 = vrot.slane %v2924, %v2945
      %v2948 = vunpack.c.l.s4 1966171168
      %v2949 = vunpack.c.0.s8 %v2948
      %v2950 = vlaneseq
      %v2951 = vshrl.u32 %v2950, 7
      %v2952 = vsub.s32 %v2949, %v2951
      %v2953 = vrot.slane %v2925, %v2952
      %v2954 = vcombine.high %v2932, %v2932
      %v2955 = vcombine.high %v2939, %v2939
      %v2956 = vcombine.high %v2946, %v2946
      %v2957 = vcombine.high %v2953, %v2953
      %v2958 = vcombine.high %v2654, %v2654
      %v2960 = vunpack.c.l.s4 1966171168
      %v2961 = vunpack.c.0.s8 %v2960
      %v2962 = vlaneseq
      %v2963 = vshrl.u32 %v2962, 7
      %v2964 = vsub.s32 %v2961, %v2963
      %v2965 = vrot.slane %v2654, %v2964
      %v2967 = vunpack.c.l.s4 1966171168
      %v2968 = vunpack.c.0.s8 %v2967
      %v2969 = vlaneseq
      %v2970 = vshrl.u32 %v2969, 7
      %v2971 = vsub.s32 %v2968, %v2970
      %v2972 = vrot.slane %v2958, %v2971
      %v2973 = vcombine.high %v2965, %v2965
      %v2974 = vcombine.high %v2972, %v2972
      %v2976 = vunpack.c.l.s4 1966171168
      %v2977 = vunpack.c.0.s8 %v2976
      %v2978 = vlaneseq
      %v2979 = vshrl.u32 %v2978, 7
      %v2980 = vsub.s32 %v2977, %v2979
      %v2981 = vrot.slane %v2965, %v2980
      %v2983 = vunpack.c.l.s4 1966171168
      %v2984 = vunpack.c.0.s8 %v2983
      %v2985 = vlaneseq
      %v2986 = vshrl.u32 %v2985, 7
      %v2987 = vsub.s32 %v2984, %v2986
      %v2988 = vrot.slane %v2972, %v2987
      %v2990 = vunpack.c.l.s4 1966171168
      %v2991 = vunpack.c.0.s8 %v2990
      %v2992 = vlaneseq
      %v2993 = vshrl.u32 %v2992, 7
      %v2994 = vsub.s32 %v2991, %v2993
      %v2995 = vrot.slane %v2973, %v2994
      %v2997 = vunpack.c.l.s4 1966171168
      %v2998 = vunpack.c.0.s8 %v2997
      %v2999 = vlaneseq
      %v3000 = vshrl.u32 %v2999, 7
      %v3001 = vsub.s32 %v2998, %v3000
      %v3002 = vrot.slane %v2974, %v3001
      %v3003 = vcombine.high %v2981, %v2981
      %v3004 = vcombine.high %v2988, %v2988
      %v3005 = vcombine.high %v2995, %v2995
      %v3006 = vcombine.high %v3002, %v3002
      %v3007 = vcombine.high %v2655, %v2655
      %v3009 = vunpack.c.l.s4 1966171168
      %v3010 = vunpack.c.0.s8 %v3009
      %v3011 = vlaneseq
      %v3012 = vshrl.u32 %v3011, 7
      %v3013 = vsub.s32 %v3010, %v3012
      %v3014 = vrot.slane %v2655, %v3013
      %v3016 = vunpack.c.l.s4 1966171168
      %v3017 = vunpack.c.0.s8 %v3016
      %v3018 = vlaneseq
      %v3019 = vshrl.u32 %v3018, 7
      %v3020 = vsub.s32 %v3017, %v3019
      %v3021 = vrot.slane %v3007, %v3020
      %v3022 = vcombine.high %v3014, %v3014
      %v3023 = vcombine.high %v3021, %v3021
      %v3025 = vunpack.c.l.s4 1966171168
      %v3026 = vunpack.c.0.s8 %v3025
      %v3027 = vlaneseq
      %v3028 = vshrl.u32 %v3027, 7
      %v3029 = vsub.s32 %v3026, %v3028
      %v3030 = vrot.slane %v3014, %v3029
      %v3032 = vunpack.c.l.s4 1966171168
      %v3033 = vunpack.c.0.s8 %v3032
      %v3034 = vlaneseq
      %v3035 = vshrl.u32 %v3034, 7
      %v3036 = vsub.s32 %v3033, %v3035
      %v3037 = vrot.slane %v3021, %v3036
      %v3039 = vunpack.c.l.s4 1966171168
      %v3040 = vunpack.c.0.s8 %v3039
      %v3041 = vlaneseq
      %v3042 = vshrl.u32 %v3041, 7
      %v3043 = vsub.s32 %v3040, %v3042
      %v3044 = vrot.slane %v3022, %v3043
      %v3046 = vunpack.c.l.s4 1966171168
      %v3047 = vunpack.c.0.s8 %v3046
      %v3048 = vlaneseq
      %v3049 = vshrl.u32 %v3048, 7
      %v3050 = vsub.s32 %v3047, %v3049
      %v3051 = vrot.slane %v3023, %v3050
      %v3052 = vcombine.high %v3030, %v3030
      %v3053 = vcombine.high %v3037, %v3037
      %v3054 = vcombine.high %v3044, %v3044
      %v3055 = vcombine.high %v3051, %v3051
      %3120 = vst.msk [vmem:[%s190 + $0x1] sm:$0x1] %vm2549, %v2687
      %3121 = vst.msk [vmem:[%s190 + $0x9] sm:$0x1] %vm2549, %v2701
      %3122 = vst.msk [vmem:[%s190 + $0x11] sm:$0x1] %vm2549, %v2709
      %3123 = vst.msk [vmem:[%s190 + $0x19] sm:$0x1] %vm2549, %v2711
      %3124 = vst.msk [vmem:[%s190 + $0x21] sm:$0x1] %vm2549, %v2694
      %3125 = vst.msk [vmem:[%s190 + $0x29] sm:$0x1] %vm2549, %v2708
      %3126 = vst.msk [vmem:[%s190 + $0x31] sm:$0x1] %vm2549, %v2710
      %3127 = vst.msk [vmem:[%s190 + $0x39] sm:$0x1] %vm2549, %v2712
      %3128 = vst.msk [vmem:[%s190 + $0x41] sm:$0x1] %vm2549, %v2736
      %3129 = vst.msk [vmem:[%s190 + $0x49] sm:$0x1] %vm2549, %v2750
      %3130 = vst.msk [vmem:[%s190 + $0x51] sm:$0x1] %vm2549, %v2758
      %3131 = vst.msk [vmem:[%s190 + $0x59] sm:$0x1] %vm2549, %v2760
      %3132 = vst.msk [vmem:[%s190 + $0x61] sm:$0x1] %vm2549, %v2743
      %3133 = vst.msk [vmem:[%s190 + $0x69] sm:$0x1] %vm2549, %v2757
      %3134 = vst.msk [vmem:[%s190 + $0x71] sm:$0x1] %vm2549, %v2759
      %3135 = vst.msk [vmem:[%s190 + $0x79] sm:$0x1] %vm2549, %v2761
      %3136 = vst.msk [vmem:[%s190 + $0x81] sm:$0x1] %vm2549, %v2785
      %3137 = vst.msk [vmem:[%s190 + $0x89] sm:$0x1] %vm2549, %v2799
      %3138 = vst.msk [vmem:[%s190 + $0x91] sm:$0x1] %vm2549, %v2807
      %3139 = vst.msk [vmem:[%s190 + $0x99] sm:$0x1] %vm2549, %v2809
      %3140 = vst.msk [vmem:[%s190 + $0xa1] sm:$0x1] %vm2549, %v2792
      %3141 = vst.msk [vmem:[%s190 + $0xa9] sm:$0x1] %vm2549, %v2806
      %3142 = vst.msk [vmem:[%s190 + $0xb1] sm:$0x1] %vm2549, %v2808
      %3143 = vst.msk [vmem:[%s190 + $0xb9] sm:$0x1] %vm2549, %v2810
      %3144 = vst.msk [vmem:[%s190 + $0xc1] sm:$0x1] %vm2549, %v2834
      %3145 = vst.msk [vmem:[%s190 + $0xc9] sm:$0x1] %vm2549, %v2848
      %3146 = vst.msk [vmem:[%s190 + $0xd1] sm:$0x1] %vm2549, %v2856
      %3147 = vst.msk [vmem:[%s190 + $0xd9] sm:$0x1] %vm2549, %v2858
      %3148 = vst.msk [vmem:[%s190 + $0xe1] sm:$0x1] %vm2549, %v2841
      %3149 = vst.msk [vmem:[%s190 + $0xe9] sm:$0x1] %vm2549, %v2855
      %3150 = vst.msk [vmem:[%s190 + $0xf1] sm:$0x1] %vm2549, %v2857
      %3151 = vst.msk [vmem:[%s190 + $0xf9] sm:$0x1] %vm2549, %v2859
      %3152 = vst.msk [vmem:[%s190 + $0x101] sm:$0x1] %vm2549, %v2883
      %3153 = vst.msk [vmem:[%s190 + $0x109] sm:$0x1] %vm2549, %v2897
      %3154 = vst.msk [vmem:[%s190 + $0x111] sm:$0x1] %vm2549, %v2905
      %3155 = vst.msk [vmem:[%s190 + $0x119] sm:$0x1] %vm2549, %v2907
      %3156 = vst.msk [vmem:[%s190 + $0x121] sm:$0x1] %vm2549, %v2890
      %3157 = vst.msk [vmem:[%s190 + $0x129] sm:$0x1] %vm2549, %v2904
      %3158 = vst.msk [vmem:[%s190 + $0x131] sm:$0x1] %vm2549, %v2906
      %3159 = vst.msk [vmem:[%s190 + $0x139] sm:$0x1] %vm2549, %v2908
      %3160 = vst.msk [vmem:[%s190 + $0x141] sm:$0x1] %vm2549, %v2932
      %3161 = vst.msk [vmem:[%s190 + $0x149] sm:$0x1] %vm2549, %v2946
      %3162 = vst.msk [vmem:[%s190 + $0x151] sm:$0x1] %vm2549, %v2954
      %3163 = vst.msk [vmem:[%s190 + $0x159] sm:$0x1] %vm2549, %v2956
      %3164 = vst.msk [vmem:[%s190 + $0x161] sm:$0x1] %vm2549, %v2939
      %3165 = vst.msk [vmem:[%s190 + $0x169] sm:$0x1] %vm2549, %v2953
      %3166 = vst.msk [vmem:[%s190 + $0x171] sm:$0x1] %vm2549, %v2955
      %3167 = vst.msk [vmem:[%s190 + $0x179] sm:$0x1] %vm2549, %v2957
      %3168 = vst.msk [vmem:[%s190 + $0x181] sm:$0x1] %vm2549, %v2981
      %3169 = vst.msk [vmem:[%s190 + $0x189] sm:$0x1] %vm2549, %v2995
      %3170 = vst.msk [vmem:[%s190 + $0x191] sm:$0x1] %vm2549, %v3003
      %3171 = vst.msk [vmem:[%s190 + $0x199] sm:$0x1] %vm2549, %v3005
      %3172 = vst.msk [vmem:[%s190 + $0x1a1] sm:$0x1] %vm2549, %v2988
      %3173 = vst.msk [vmem:[%s190 + $0x1a9] sm:$0x1] %vm2549, %v3002
      %3174 = vst.msk [vmem:[%s190 + $0x1b1] sm:$0x1] %vm2549, %v3004
      %3175 = vst.msk [vmem:[%s190 + $0x1b9] sm:$0x1] %vm2549, %v3006
      %3176 = vst.msk [vmem:[%s190 + $0x1c1] sm:$0x1] %vm2549, %v3030
      %3177 = vst.msk [vmem:[%s190 + $0x1c9] sm:$0x1] %vm2549, %v3044
      %3178 = vst.msk [vmem:[%s190 + $0x1d1] sm:$0x1] %vm2549, %v3052
      %3179 = vst.msk [vmem:[%s190 + $0x1d9] sm:$0x1] %vm2549, %v3054
      %3180 = vst.msk [vmem:[%s190 + $0x1e1] sm:$0x1] %vm2549, %v3037
      %3181 = vst.msk [vmem:[%s190 + $0x1e9] sm:$0x1] %vm2549, %v3051
      %3182 = vst.msk [vmem:[%s190 + $0x1f1] sm:$0x1] %vm2549, %v3053
      %3183 = vst.msk [vmem:[%s190 + $0x1f9] sm:$0x1] %vm2549, %v3055
      %v3184 = vld [vmem:[%s2639] sm:$0xff]
      %v3185 = vld [vmem:[%s2639 + $0x8] sm:$0xff]
      %v3186 = vld [vmem:[%s2639 + $0x10] sm:$0xff]
      %v3187 = vld [vmem:[%s2639 + $0x18] sm:$0xff]
      %v3188 = vld [vmem:[%s2639 + $0x20] sm:$0xff]
      %v3189 = vld [vmem:[%s2639 + $0x28] sm:$0xff]
      %v3190 = vld [vmem:[%s2639 + $0x30] sm:$0xff]
      %v3191 = vld [vmem:[%s2639 + $0x38] sm:$0xff]
      %s3192 = scalar_lea.vmem [#allocation4], 320
      %v3193 = vld [vmem:[%s3192] sm:$0xff]
      %v3194 = vld [vmem:[%s3192 + $0x8] sm:$0xff]
      %v3195 = vld [vmem:[%s3192 + $0x10] sm:$0xff]
      %v3196 = vld [vmem:[%s3192 + $0x18] sm:$0xff]
      %v3197 = vld [vmem:[%s3192 + $0x20] sm:$0xff]
      %v3198 = vld [vmem:[%s3192 + $0x28] sm:$0xff]
      %v3199 = vld [vmem:[%s3192 + $0x30] sm:$0xff]
      %v3200 = vld [vmem:[%s3192 + $0x38] sm:$0xff]
      %v3201 = vmax.f32 %v3184, %v3193
      %v3202 = vmax.f32 %v3185, %v3194
      %v3203 = vmax.f32 %v3186, %v3195
      %v3204 = vmax.f32 %v3187, %v3196
      %v3205 = vmax.f32 %v3188, %v3197
      %v3206 = vmax.f32 %v3189, %v3198
      %v3207 = vmax.f32 %v3190, %v3199
      %v3208 = vmax.f32 %v3191, %v3200
      %s3209 = scalar_lea.vmem [#allocation4], 384
      %v3210 = vld [vmem:[%s3209] sm:$0xff]
      %v3211 = vld [vmem:[%s3209 + $0x8] sm:$0xff]
      %v3212 = vld [vmem:[%s3209 + $0x10] sm:$0xff]
      %v3213 = vld [vmem:[%s3209 + $0x18] sm:$0xff]
      %v3214 = vld [vmem:[%s3209 + $0x20] sm:$0xff]
      %v3215 = vld [vmem:[%s3209 + $0x28] sm:$0xff]
      %v3216 = vld [vmem:[%s3209 + $0x30] sm:$0xff]
      %v3217 = vld [vmem:[%s3209 + $0x38] sm:$0xff]
      %v3218 = vmax.f32 %v3201, %v3210
      %v3219 = vmax.f32 %v3202, %v3211
      %v3220 = vmax.f32 %v3203, %v3212
      %v3221 = vmax.f32 %v3204, %v3213
      %v3222 = vmax.f32 %v3205, %v3214
      %v3223 = vmax.f32 %v3206, %v3215
      %v3224 = vmax.f32 %v3207, %v3216
      %v3225 = vmax.f32 %v3208, %v3217
      %v3234 = vcombine.high %v3218, %v3218
      %v3236 = vunpack.c.l.s4 1966171168
      %v3237 = vunpack.c.0.s8 %v3236
      %v3238 = vlaneseq
      %v3239 = vshrl.u32 %v3238, 7
      %v3240 = vsub.s32 %v3237, %v3239
      %v3241 = vrot.slane %v3218, %v3240
      %v3243 = vunpack.c.l.s4 1966171168
      %v3244 = vunpack.c.0.s8 %v3243
      %v3245 = vlaneseq
      %v3246 = vshrl.u32 %v3245, 7
      %v3247 = vsub.s32 %v3244, %v3246
      %v3248 = vrot.slane %v3234, %v3247
      %v3249 = vcombine.high %v3241, %v3241
      %v3250 = vcombine.high %v3248, %v3248
      %v3252 = vunpack.c.l.s4 1966171168
      %v3253 = vunpack.c.0.s8 %v3252
      %v3254 = vlaneseq
      %v3255 = vshrl.u32 %v3254, 7
      %v3256 = vsub.s32 %v3253, %v3255
      %v3257 = vrot.slane %v3241, %v3256
      %v3259 = vunpack.c.l.s4 1966171168
      %v3260 = vunpack.c.0.s8 %v3259
      %v3261 = vlaneseq
      %v3262 = vshrl.u32 %v3261, 7
      %v3263 = vsub.s32 %v3260, %v3262
      %v3264 = vrot.slane %v3248, %v3263
      %v3266 = vunpack.c.l.s4 1966171168
      %v3267 = vunpack.c.0.s8 %v3266
      %v3268 = vlaneseq
      %v3269 = vshrl.u32 %v3268, 7
      %v3270 = vsub.s32 %v3267, %v3269
      %v3271 = vrot.slane %v3249, %v3270
      %v3273 = vunpack.c.l.s4 1966171168
      %v3274 = vunpack.c.0.s8 %v3273
      %v3275 = vlaneseq
      %v3276 = vshrl.u32 %v3275, 7
      %v3277 = vsub.s32 %v3274, %v3276
      %v3278 = vrot.slane %v3250, %v3277
      %v3279 = vcombine.high %v3257, %v3257
      %v3280 = vcombine.high %v3264, %v3264
      %v3281 = vcombine.high %v3271, %v3271
      %v3282 = vcombine.high %v3278, %v3278
      %v3283 = vcombine.high %v3219, %v3219
      %v3285 = vunpack.c.l.s4 1966171168
      %v3286 = vunpack.c.0.s8 %v3285
      %v3287 = vlaneseq
      %v3288 = vshrl.u32 %v3287, 7
      %v3289 = vsub.s32 %v3286, %v3288
      %v3290 = vrot.slane %v3219, %v3289
      %v3292 = vunpack.c.l.s4 1966171168
      %v3293 = vunpack.c.0.s8 %v3292
      %v3294 = vlaneseq
      %v3295 = vshrl.u32 %v3294, 7
      %v3296 = vsub.s32 %v3293, %v3295
      %v3297 = vrot.slane %v3283, %v3296
      %v3298 = vcombine.high %v3290, %v3290
      %v3299 = vcombine.high %v3297, %v3297
      %v3301 = vunpack.c.l.s4 1966171168
      %v3302 = vunpack.c.0.s8 %v3301
      %v3303 = vlaneseq
      %v3304 = vshrl.u32 %v3303, 7
      %v3305 = vsub.s32 %v3302, %v3304
      %v3306 = vrot.slane %v3290, %v3305
      %v3308 = vunpack.c.l.s4 1966171168
      %v3309 = vunpack.c.0.s8 %v3308
      %v3310 = vlaneseq
      %v3311 = vshrl.u32 %v3310, 7
      %v3312 = vsub.s32 %v3309, %v3311
      %v3313 = vrot.slane %v3297, %v3312
      %v3315 = vunpack.c.l.s4 1966171168
      %v3316 = vunpack.c.0.s8 %v3315
      %v3317 = vlaneseq
      %v3318 = vshrl.u32 %v3317, 7
      %v3319 = vsub.s32 %v3316, %v3318
      %v3320 = vrot.slane %v3298, %v3319
      %v3322 = vunpack.c.l.s4 1966171168
      %v3323 = vunpack.c.0.s8 %v3322
      %v3324 = vlaneseq
      %v3325 = vshrl.u32 %v3324, 7
      %v3326 = vsub.s32 %v3323, %v3325
      %v3327 = vrot.slane %v3299, %v3326
      %v3328 = vcombine.high %v3306, %v3306
      %v3329 = vcombine.high %v3313, %v3313
      %v3330 = vcombine.high %v3320, %v3320
      %v3331 = vcombine.high %v3327, %v3327
      %v3332 = vcombine.high %v3220, %v3220
      %v3334 = vunpack.c.l.s4 1966171168
      %v3335 = vunpack.c.0.s8 %v3334
      %v3336 = vlaneseq
      %v3337 = vshrl.u32 %v3336, 7
      %v3338 = vsub.s32 %v3335, %v3337
      %v3339 = vrot.slane %v3220, %v3338
      %v3341 = vunpack.c.l.s4 1966171168
      %v3342 = vunpack.c.0.s8 %v3341
      %v3343 = vlaneseq
      %v3344 = vshrl.u32 %v3343, 7
      %v3345 = vsub.s32 %v3342, %v3344
      %v3346 = vrot.slane %v3332, %v3345
      %v3347 = vcombine.high %v3339, %v3339
      %v3348 = vcombine.high %v3346, %v3346
      %v3350 = vunpack.c.l.s4 1966171168
      %v3351 = vunpack.c.0.s8 %v3350
      %v3352 = vlaneseq
      %v3353 = vshrl.u32 %v3352, 7
      %v3354 = vsub.s32 %v3351, %v3353
      %v3355 = vrot.slane %v3339, %v3354
      %v3357 = vunpack.c.l.s4 1966171168
      %v3358 = vunpack.c.0.s8 %v3357
      %v3359 = vlaneseq
      %v3360 = vshrl.u32 %v3359, 7
      %v3361 = vsub.s32 %v3358, %v3360
      %v3362 = vrot.slane %v3346, %v3361
      %v3364 = vunpack.c.l.s4 1966171168
      %v3365 = vunpack.c.0.s8 %v3364
      %v3366 = vlaneseq
      %v3367 = vshrl.u32 %v3366, 7
      %v3368 = vsub.s32 %v3365, %v3367
      %v3369 = vrot.slane %v3347, %v3368
      %v3371 = vunpack.c.l.s4 1966171168
      %v3372 = vunpack.c.0.s8 %v3371
      %v3373 = vlaneseq
      %v3374 = vshrl.u32 %v3373, 7
      %v3375 = vsub.s32 %v3372, %v3374
      %v3376 = vrot.slane %v3348, %v3375
      %v3377 = vcombine.high %v3355, %v3355
      %v3378 = vcombine.high %v3362, %v3362
      %v3379 = vcombine.high %v3369, %v3369
      %v3380 = vcombine.high %v3376, %v3376
      %v3381 = vcombine.high %v3221, %v3221
      %v3383 = vunpack.c.l.s4 1966171168
      %v3384 = vunpack.c.0.s8 %v3383
      %v3385 = vlaneseq
      %v3386 = vshrl.u32 %v3385, 7
      %v3387 = vsub.s32 %v3384, %v3386
      %v3388 = vrot.slane %v3221, %v3387
      %v3390 = vunpack.c.l.s4 1966171168
      %v3391 = vunpack.c.0.s8 %v3390
      %v3392 = vlaneseq
      %v3393 = vshrl.u32 %v3392, 7
      %v3394 = vsub.s32 %v3391, %v3393
      %v3395 = vrot.slane %v3381, %v3394
      %v3396 = vcombine.high %v3388, %v3388
      %v3397 = vcombine.high %v3395, %v3395
      %v3399 = vunpack.c.l.s4 1966171168
      %v3400 = vunpack.c.0.s8 %v3399
      %v3401 = vlaneseq
      %v3402 = vshrl.u32 %v3401, 7
      %v3403 = vsub.s32 %v3400, %v3402
      %v3404 = vrot.slane %v3388, %v3403
      %v3406 = vunpack.c.l.s4 1966171168
      %v3407 = vunpack.c.0.s8 %v3406
      %v3408 = vlaneseq
      %v3409 = vshrl.u32 %v3408, 7
      %v3410 = vsub.s32 %v3407, %v3409
      %v3411 = vrot.slane %v3395, %v3410
      %v3413 = vunpack.c.l.s4 1966171168
      %v3414 = vunpack.c.0.s8 %v3413
      %v3415 = vlaneseq
      %v3416 = vshrl.u32 %v3415, 7
      %v3417 = vsub.s32 %v3414, %v3416
      %v3418 = vrot.slane %v3396, %v3417
      %v3420 = vunpack.c.l.s4 1966171168
      %v3421 = vunpack.c.0.s8 %v3420
      %v3422 = vlaneseq
      %v3423 = vshrl.u32 %v3422, 7
      %v3424 = vsub.s32 %v3421, %v3423
      %v3425 = vrot.slane %v3397, %v3424
      %v3426 = vcombine.high %v3404, %v3404
      %v3427 = vcombine.high %v3411, %v3411
      %v3428 = vcombine.high %v3418, %v3418
      %v3429 = vcombine.high %v3425, %v3425
      %v3430 = vcombine.high %v3222, %v3222
      %v3432 = vunpack.c.l.s4 1966171168
      %v3433 = vunpack.c.0.s8 %v3432
      %v3434 = vlaneseq
      %v3435 = vshrl.u32 %v3434, 7
      %v3436 = vsub.s32 %v3433, %v3435
      %v3437 = vrot.slane %v3222, %v3436
      %v3439 = vunpack.c.l.s4 1966171168
      %v3440 = vunpack.c.0.s8 %v3439
      %v3441 = vlaneseq
      %v3442 = vshrl.u32 %v3441, 7
      %v3443 = vsub.s32 %v3440, %v3442
      %v3444 = vrot.slane %v3430, %v3443
      %v3445 = vcombine.high %v3437, %v3437
      %v3446 = vcombine.high %v3444, %v3444
      %v3448 = vunpack.c.l.s4 1966171168
      %v3449 = vunpack.c.0.s8 %v3448
      %v3450 = vlaneseq
      %v3451 = vshrl.u32 %v3450, 7
      %v3452 = vsub.s32 %v3449, %v3451
      %v3453 = vrot.slane %v3437, %v3452
      %v3455 = vunpack.c.l.s4 1966171168
      %v3456 = vunpack.c.0.s8 %v3455
      %v3457 = vlaneseq
      %v3458 = vshrl.u32 %v3457, 7
      %v3459 = vsub.s32 %v3456, %v3458
      %v3460 = vrot.slane %v3444, %v3459
      %v3462 = vunpack.c.l.s4 1966171168
      %v3463 = vunpack.c.0.s8 %v3462
      %v3464 = vlaneseq
      %v3465 = vshrl.u32 %v3464, 7
      %v3466 = vsub.s32 %v3463, %v3465
      %v3467 = vrot.slane %v3445, %v3466
      %v3469 = vunpack.c.l.s4 1966171168
      %v3470 = vunpack.c.0.s8 %v3469
      %v3471 = vlaneseq
      %v3472 = vshrl.u32 %v3471, 7
      %v3473 = vsub.s32 %v3470, %v3472
      %v3474 = vrot.slane %v3446, %v3473
      %v3475 = vcombine.high %v3453, %v3453
      %v3476 = vcombine.high %v3460, %v3460
      %v3477 = vcombine.high %v3467, %v3467
      %v3478 = vcombine.high %v3474, %v3474
      %v3479 = vcombine.high %v3223, %v3223
      %v3481 = vunpack.c.l.s4 1966171168
      %v3482 = vunpack.c.0.s8 %v3481
      %v3483 = vlaneseq
      %v3484 = vshrl.u32 %v3483, 7
      %v3485 = vsub.s32 %v3482, %v3484
      %v3486 = vrot.slane %v3223, %v3485
      %v3488 = vunpack.c.l.s4 1966171168
      %v3489 = vunpack.c.0.s8 %v3488
      %v3490 = vlaneseq
      %v3491 = vshrl.u32 %v3490, 7
      %v3492 = vsub.s32 %v3489, %v3491
      %v3493 = vrot.slane %v3479, %v3492
      %v3494 = vcombine.high %v3486, %v3486
      %v3495 = vcombine.high %v3493, %v3493
      %v3497 = vunpack.c.l.s4 1966171168
      %v3498 = vunpack.c.0.s8 %v3497
      %v3499 = vlaneseq
      %v3500 = vshrl.u32 %v3499, 7
      %v3501 = vsub.s32 %v3498, %v3500
      %v3502 = vrot.slane %v3486, %v3501
      %v3504 = vunpack.c.l.s4 1966171168
      %v3505 = vunpack.c.0.s8 %v3504
      %v3506 = vlaneseq
      %v3507 = vshrl.u32 %v3506, 7
      %v3508 = vsub.s32 %v3505, %v3507
      %v3509 = vrot.slane %v3493, %v3508
      %v3511 = vunpack.c.l.s4 1966171168
      %v3512 = vunpack.c.0.s8 %v3511
      %v3513 = vlaneseq
      %v3514 = vshrl.u32 %v3513, 7
      %v3515 = vsub.s32 %v3512, %v3514
      %v3516 = vrot.slane %v3494, %v3515
      %v3518 = vunpack.c.l.s4 1966171168
      %v3519 = vunpack.c.0.s8 %v3518
      %v3520 = vlaneseq
      %v3521 = vshrl.u32 %v3520, 7
      %v3522 = vsub.s32 %v3519, %v3521
      %v3523 = vrot.slane %v3495, %v3522
      %v3524 = vcombine.high %v3502, %v3502
      %v3525 = vcombine.high %v3509, %v3509
      %v3526 = vcombine.high %v3516, %v3516
      %v3527 = vcombine.high %v3523, %v3523
      %v3528 = vcombine.high %v3224, %v3224
      %v3530 = vunpack.c.l.s4 1966171168
      %v3531 = vunpack.c.0.s8 %v3530
      %v3532 = vlaneseq
      %v3533 = vshrl.u32 %v3532, 7
      %v3534 = vsub.s32 %v3531, %v3533
      %v3535 = vrot.slane %v3224, %v3534
      %v3537 = vunpack.c.l.s4 1966171168
      %v3538 = vunpack.c.0.s8 %v3537
      %v3539 = vlaneseq
      %v3540 = vshrl.u32 %v3539, 7
      %v3541 = vsub.s32 %v3538, %v3540
      %v3542 = vrot.slane %v3528, %v3541
      %v3543 = vcombine.high %v3535, %v3535
      %v3544 = vcombine.high %v3542, %v3542
      %v3546 = vunpack.c.l.s4 1966171168
      %v3547 = vunpack.c.0.s8 %v3546
      %v3548 = vlaneseq
      %v3549 = vshrl.u32 %v3548, 7
      %v3550 = vsub.s32 %v3547, %v3549
      %v3551 = vrot.slane %v3535, %v3550
      %v3553 = vunpack.c.l.s4 1966171168
      %v3554 = vunpack.c.0.s8 %v3553
      %v3555 = vlaneseq
      %v3556 = vshrl.u32 %v3555, 7
      %v3557 = vsub.s32 %v3554, %v3556
      %v3558 = vrot.slane %v3542, %v3557
      %v3560 = vunpack.c.l.s4 1966171168
      %v3561 = vunpack.c.0.s8 %v3560
      %v3562 = vlaneseq
      %v3563 = vshrl.u32 %v3562, 7
      %v3564 = vsub.s32 %v3561, %v3563
      %v3565 = vrot.slane %v3543, %v3564
      %v3567 = vunpack.c.l.s4 1966171168
      %v3568 = vunpack.c.0.s8 %v3567
      %v3569 = vlaneseq
      %v3570 = vshrl.u32 %v3569, 7
      %v3571 = vsub.s32 %v3568, %v3570
      %v3572 = vrot.slane %v3544, %v3571
      %v3573 = vcombine.high %v3551, %v3551
      %v3574 = vcombine.high %v3558, %v3558
      %v3575 = vcombine.high %v3565, %v3565
      %v3576 = vcombine.high %v3572, %v3572
      %v3577 = vcombine.high %v3225, %v3225
      %v3579 = vunpack.c.l.s4 1966171168
      %v3580 = vunpack.c.0.s8 %v3579
      %v3581 = vlaneseq
      %v3582 = vshrl.u32 %v3581, 7
      %v3583 = vsub.s32 %v3580, %v3582
      %v3584 = vrot.slane %v3225, %v3583
      %v3586 = vunpack.c.l.s4 1966171168
      %v3587 = vunpack.c.0.s8 %v3586
      %v3588 = vlaneseq
      %v3589 = vshrl.u32 %v3588, 7
      %v3590 = vsub.s32 %v3587, %v3589
      %v3591 = vrot.slane %v3577, %v3590
      %v3592 = vcombine.high %v3584, %v3584
      %v3593 = vcombine.high %v3591, %v3591
      %v3595 = vunpack.c.l.s4 1966171168
      %v3596 = vunpack.c.0.s8 %v3595
      %v3597 = vlaneseq
      %v3598 = vshrl.u32 %v3597, 7
      %v3599 = vsub.s32 %v3596, %v3598
      %v3600 = vrot.slane %v3584, %v3599
      %v3602 = vunpack.c.l.s4 1966171168
      %v3603 = vunpack.c.0.s8 %v3602
      %v3604 = vlaneseq
      %v3605 = vshrl.u32 %v3604, 7
      %v3606 = vsub.s32 %v3603, %v3605
      %v3607 = vrot.slane %v3591, %v3606
      %v3609 = vunpack.c.l.s4 1966171168
      %v3610 = vunpack.c.0.s8 %v3609
      %v3611 = vlaneseq
      %v3612 = vshrl.u32 %v3611, 7
      %v3613 = vsub.s32 %v3610, %v3612
      %v3614 = vrot.slane %v3592, %v3613
      %v3616 = vunpack.c.l.s4 1966171168
      %v3617 = vunpack.c.0.s8 %v3616
      %v3618 = vlaneseq
      %v3619 = vshrl.u32 %v3618, 7
      %v3620 = vsub.s32 %v3617, %v3619
      %v3621 = vrot.slane %v3593, %v3620
      %v3622 = vcombine.high %v3600, %v3600
      %v3623 = vcombine.high %v3607, %v3607
      %v3624 = vcombine.high %v3614, %v3614
      %v3625 = vcombine.high %v3621, %v3621
      %3690 = vst.msk [vmem:[%s190 + $0x2] sm:$0x1] %vm2549, %v3257
      %3691 = vst.msk [vmem:[%s190 + $0xa] sm:$0x1] %vm2549, %v3271
      %3692 = vst.msk [vmem:[%s190 + $0x12] sm:$0x1] %vm2549, %v3279
      %3693 = vst.msk [vmem:[%s190 + $0x1a] sm:$0x1] %vm2549, %v3281
      %3694 = vst.msk [vmem:[%s190 + $0x22] sm:$0x1] %vm2549, %v3264
      %3695 = vst.msk [vmem:[%s190 + $0x2a] sm:$0x1] %vm2549, %v3278
      %3696 = vst.msk [vmem:[%s190 + $0x32] sm:$0x1] %vm2549, %v3280
      %3697 = vst.msk [vmem:[%s190 + $0x3a] sm:$0x1] %vm2549, %v3282
      %3698 = vst.msk [vmem:[%s190 + $0x42] sm:$0x1] %vm2549, %v3306
      %3699 = vst.msk [vmem:[%s190 + $0x4a] sm:$0x1] %vm2549, %v3320
      %3700 = vst.msk [vmem:[%s190 + $0x52] sm:$0x1] %vm2549, %v3328
      %3701 = vst.msk [vmem:[%s190 + $0x5a] sm:$0x1] %vm2549, %v3330
      %3702 = vst.msk [vmem:[%s190 + $0x62] sm:$0x1] %vm2549, %v3313
      %3703 = vst.msk [vmem:[%s190 + $0x6a] sm:$0x1] %vm2549, %v3327
      %3704 = vst.msk [vmem:[%s190 + $0x72] sm:$0x1] %vm2549, %v3329
      %3705 = vst.msk [vmem:[%s190 + $0x7a] sm:$0x1] %vm2549, %v3331
      %3706 = vst.msk [vmem:[%s190 + $0x82] sm:$0x1] %vm2549, %v3355
      %3707 = vst.msk [vmem:[%s190 + $0x8a] sm:$0x1] %vm2549, %v3369
      %3708 = vst.msk [vmem:[%s190 + $0x92] sm:$0x1] %vm2549, %v3377
      %3709 = vst.msk [vmem:[%s190 + $0x9a] sm:$0x1] %vm2549, %v3379
      %3710 = vst.msk [vmem:[%s190 + $0xa2] sm:$0x1] %vm2549, %v3362
      %3711 = vst.msk [vmem:[%s190 + $0xaa] sm:$0x1] %vm2549, %v3376
      %3712 = vst.msk [vmem:[%s190 + $0xb2] sm:$0x1] %vm2549, %v3378
      %3713 = vst.msk [vmem:[%s190 + $0xba] sm:$0x1] %vm2549, %v3380
      %3714 = vst.msk [vmem:[%s190 + $0xc2] sm:$0x1] %vm2549, %v3404
      %3715 = vst.msk [vmem:[%s190 + $0xca] sm:$0x1] %vm2549, %v3418
      %3716 = vst.msk [vmem:[%s190 + $0xd2] sm:$0x1] %vm2549, %v3426
      %3717 = vst.msk [vmem:[%s190 + $0xda] sm:$0x1] %vm2549, %v3428
      %3718 = vst.msk [vmem:[%s190 + $0xe2] sm:$0x1] %vm2549, %v3411
      %3719 = vst.msk [vmem:[%s190 + $0xea] sm:$0x1] %vm2549, %v3425
      %3720 = vst.msk [vmem:[%s190 + $0xf2] sm:$0x1] %vm2549, %v3427
      %3721 = vst.msk [vmem:[%s190 + $0xfa] sm:$0x1] %vm2549, %v3429
      %3722 = vst.msk [vmem:[%s190 + $0x102] sm:$0x1] %vm2549, %v3453
      %3723 = vst.msk [vmem:[%s190 + $0x10a] sm:$0x1] %vm2549, %v3467
      %3724 = vst.msk [vmem:[%s190 + $0x112] sm:$0x1] %vm2549, %v3475
      %3725 = vst.msk [vmem:[%s190 + $0x11a] sm:$0x1] %vm2549, %v3477
      %3726 = vst.msk [vmem:[%s190 + $0x122] sm:$0x1] %vm2549, %v3460
      %3727 = vst.msk [vmem:[%s190 + $0x12a] sm:$0x1] %vm2549, %v3474
      %3728 = vst.msk [vmem:[%s190 + $0x132] sm:$0x1] %vm2549, %v3476
      %3729 = vst.msk [vmem:[%s190 + $0x13a] sm:$0x1] %vm2549, %v3478
      %3730 = vst.msk [vmem:[%s190 + $0x142] sm:$0x1] %vm2549, %v3502
      %3731 = vst.msk [vmem:[%s190 + $0x14a] sm:$0x1] %vm2549, %v3516
      %3732 = vst.msk [vmem:[%s190 + $0x152] sm:$0x1] %vm2549, %v3524
      %3733 = vst.msk [vmem:[%s190 + $0x15a] sm:$0x1] %vm2549, %v3526
      %3734 = vst.msk [vmem:[%s190 + $0x162] sm:$0x1] %vm2549, %v3509
      %3735 = vst.msk [vmem:[%s190 + $0x16a] sm:$0x1] %vm2549, %v3523
      %3736 = vst.msk [vmem:[%s190 + $0x172] sm:$0x1] %vm2549, %v3525
      %3737 = vst.msk [vmem:[%s190 + $0x17a] sm:$0x1] %vm2549, %v3527
      %3738 = vst.msk [vmem:[%s190 + $0x182] sm:$0x1] %vm2549, %v3551
      %3739 = vst.msk [vmem:[%s190 + $0x18a] sm:$0x1] %vm2549, %v3565
      %3740 = vst.msk [vmem:[%s190 + $0x192] sm:$0x1] %vm2549, %v3573
      %3741 = vst.msk [vmem:[%s190 + $0x19a] sm:$0x1] %vm2549, %v3575
      %3742 = vst.msk [vmem:[%s190 + $0x1a2] sm:$0x1] %vm2549, %v3558
      %3743 = vst.msk [vmem:[%s190 + $0x1aa] sm:$0x1] %vm2549, %v3572
      %3744 = vst.msk [vmem:[%s190 + $0x1b2] sm:$0x1] %vm2549, %v3574
      %3745 = vst.msk [vmem:[%s190 + $0x1ba] sm:$0x1] %vm2549, %v3576
      %3746 = vst.msk [vmem:[%s190 + $0x1c2] sm:$0x1] %vm2549, %v3600
      %3747 = vst.msk [vmem:[%s190 + $0x1ca] sm:$0x1] %vm2549, %v3614
      %3748 = vst.msk [vmem:[%s190 + $0x1d2] sm:$0x1] %vm2549, %v3622
      %3749 = vst.msk [vmem:[%s190 + $0x1da] sm:$0x1] %vm2549, %v3624
      %3750 = vst.msk [vmem:[%s190 + $0x1e2] sm:$0x1] %vm2549, %v3607
      %3751 = vst.msk [vmem:[%s190 + $0x1ea] sm:$0x1] %vm2549, %v3621
      %3752 = vst.msk [vmem:[%s190 + $0x1f2] sm:$0x1] %vm2549, %v3623
      %3753 = vst.msk [vmem:[%s190 + $0x1fa] sm:$0x1] %vm2549, %v3625
      %v3754 = vld [vmem:[%s3209] sm:$0xff]
      %v3755 = vld [vmem:[%s3209 + $0x8] sm:$0xff]
      %v3756 = vld [vmem:[%s3209 + $0x10] sm:$0xff]
      %v3757 = vld [vmem:[%s3209 + $0x18] sm:$0xff]
      %v3758 = vld [vmem:[%s3209 + $0x20] sm:$0xff]
      %v3759 = vld [vmem:[%s3209 + $0x28] sm:$0xff]
      %v3760 = vld [vmem:[%s3209 + $0x30] sm:$0xff]
      %v3761 = vld [vmem:[%s3209 + $0x38] sm:$0xff]
      %s3762 = scalar_lea.vmem [#allocation4], 448
      %v3763 = vld [vmem:[%s3762] sm:$0xff]
      %v3764 = vld [vmem:[%s3762 + $0x8] sm:$0xff]
      %v3765 = vld [vmem:[%s3762 + $0x10] sm:$0xff]
      %v3766 = vld [vmem:[%s3762 + $0x18] sm:$0xff]
      %v3767 = vld [vmem:[%s3762 + $0x20] sm:$0xff]
      %v3768 = vld [vmem:[%s3762 + $0x28] sm:$0xff]
      %v3769 = vld [vmem:[%s3762 + $0x30] sm:$0xff]
      %v3770 = vld [vmem:[%s3762 + $0x38] sm:$0xff]
      %v3771 = vmax.f32 %v3754, %v3763
      %v3772 = vmax.f32 %v3755, %v3764
      %v3773 = vmax.f32 %v3756, %v3765
      %v3774 = vmax.f32 %v3757, %v3766
      %v3775 = vmax.f32 %v3758, %v3767
      %v3776 = vmax.f32 %v3759, %v3768
      %v3777 = vmax.f32 %v3760, %v3769
      %v3778 = vmax.f32 %v3761, %v3770
      %s3779 = scalar_lea.vmem [#allocation4], 512
      %v3780 = vld [vmem:[%s3779] sm:$0xff]
      %v3781 = vld [vmem:[%s3779 + $0x8] sm:$0xff]
      %v3782 = vld [vmem:[%s3779 + $0x10] sm:$0xff]
      %v3783 = vld [vmem:[%s3779 + $0x18] sm:$0xff]
      %v3784 = vld [vmem:[%s3779 + $0x20] sm:$0xff]
      %v3785 = vld [vmem:[%s3779 + $0x28] sm:$0xff]
      %v3786 = vld [vmem:[%s3779 + $0x30] sm:$0xff]
      %v3787 = vld [vmem:[%s3779 + $0x38] sm:$0xff]
      %v3788 = vmax.f32 %v3771, %v3780
      %v3789 = vmax.f32 %v3772, %v3781
      %v3790 = vmax.f32 %v3773, %v3782
      %v3791 = vmax.f32 %v3774, %v3783
      %v3792 = vmax.f32 %v3775, %v3784
      %v3793 = vmax.f32 %v3776, %v3785
      %v3794 = vmax.f32 %v3777, %v3786
      %v3795 = vmax.f32 %v3778, %v3787
      %v3804 = vcombine.high %v3788, %v3788
      %v3806 = vunpack.c.l.s4 1966171168
      %v3807 = vunpack.c.0.s8 %v3806
      %v3808 = vlaneseq
      %v3809 = vshrl.u32 %v3808, 7
      %v3810 = vsub.s32 %v3807, %v3809
      %v3811 = vrot.slane %v3788, %v3810
      %v3813 = vunpack.c.l.s4 1966171168
      %v3814 = vunpack.c.0.s8 %v3813
      %v3815 = vlaneseq
      %v3816 = vshrl.u32 %v3815, 7
      %v3817 = vsub.s32 %v3814, %v3816
      %v3818 = vrot.slane %v3804, %v3817
      %v3819 = vcombine.high %v3811, %v3811
      %v3820 = vcombine.high %v3818, %v3818
      %v3822 = vunpack.c.l.s4 1966171168
      %v3823 = vunpack.c.0.s8 %v3822
      %v3824 = vlaneseq
      %v3825 = vshrl.u32 %v3824, 7
      %v3826 = vsub.s32 %v3823, %v3825
      %v3827 = vrot.slane %v3811, %v3826
      %v3829 = vunpack.c.l.s4 1966171168
      %v3830 = vunpack.c.0.s8 %v3829
      %v3831 = vlaneseq
      %v3832 = vshrl.u32 %v3831, 7
      %v3833 = vsub.s32 %v3830, %v3832
      %v3834 = vrot.slane %v3818, %v3833
      %v3836 = vunpack.c.l.s4 1966171168
      %v3837 = vunpack.c.0.s8 %v3836
      %v3838 = vlaneseq
      %v3839 = vshrl.u32 %v3838, 7
      %v3840 = vsub.s32 %v3837, %v3839
      %v3841 = vrot.slane %v3819, %v3840
      %v3843 = vunpack.c.l.s4 1966171168
      %v3844 = vunpack.c.0.s8 %v3843
      %v3845 = vlaneseq
      %v3846 = vshrl.u32 %v3845, 7
      %v3847 = vsub.s32 %v3844, %v3846
      %v3848 = vrot.slane %v3820, %v3847
      %v3849 = vcombine.high %v3827, %v3827
      %v3850 = vcombine.high %v3834, %v3834
      %v3851 = vcombine.high %v3841, %v3841
      %v3852 = vcombine.high %v3848, %v3848
      %v3853 = vcombine.high %v3789, %v3789
      %v3855 = vunpack.c.l.s4 1966171168
      %v3856 = vunpack.c.0.s8 %v3855
      %v3857 = vlaneseq
      %v3858 = vshrl.u32 %v3857, 7
      %v3859 = vsub.s32 %v3856, %v3858
      %v3860 = vrot.slane %v3789, %v3859
      %v3862 = vunpack.c.l.s4 1966171168
      %v3863 = vunpack.c.0.s8 %v3862
      %v3864 = vlaneseq
      %v3865 = vshrl.u32 %v3864, 7
      %v3866 = vsub.s32 %v3863, %v3865
      %v3867 = vrot.slane %v3853, %v3866
      %v3868 = vcombine.high %v3860, %v3860
      %v3869 = vcombine.high %v3867, %v3867
      %v3871 = vunpack.c.l.s4 1966171168
      %v3872 = vunpack.c.0.s8 %v3871
      %v3873 = vlaneseq
      %v3874 = vshrl.u32 %v3873, 7
      %v3875 = vsub.s32 %v3872, %v3874
      %v3876 = vrot.slane %v3860, %v3875
      %v3878 = vunpack.c.l.s4 1966171168
      %v3879 = vunpack.c.0.s8 %v3878
      %v3880 = vlaneseq
      %v3881 = vshrl.u32 %v3880, 7
      %v3882 = vsub.s32 %v3879, %v3881
      %v3883 = vrot.slane %v3867, %v3882
      %v3885 = vunpack.c.l.s4 1966171168
      %v3886 = vunpack.c.0.s8 %v3885
      %v3887 = vlaneseq
      %v3888 = vshrl.u32 %v3887, 7
      %v3889 = vsub.s32 %v3886, %v3888
      %v3890 = vrot.slane %v3868, %v3889
      %v3892 = vunpack.c.l.s4 1966171168
      %v3893 = vunpack.c.0.s8 %v3892
      %v3894 = vlaneseq
      %v3895 = vshrl.u32 %v3894, 7
      %v3896 = vsub.s32 %v3893, %v3895
      %v3897 = vrot.slane %v3869, %v3896
      %v3898 = vcombine.high %v3876, %v3876
      %v3899 = vcombine.high %v3883, %v3883
      %v3900 = vcombine.high %v3890, %v3890
      %v3901 = vcombine.high %v3897, %v3897
      %v3902 = vcombine.high %v3790, %v3790
      %v3904 = vunpack.c.l.s4 1966171168
      %v3905 = vunpack.c.0.s8 %v3904
      %v3906 = vlaneseq
      %v3907 = vshrl.u32 %v3906, 7
      %v3908 = vsub.s32 %v3905, %v3907
      %v3909 = vrot.slane %v3790, %v3908
      %v3911 = vunpack.c.l.s4 1966171168
      %v3912 = vunpack.c.0.s8 %v3911
      %v3913 = vlaneseq
      %v3914 = vshrl.u32 %v3913, 7
      %v3915 = vsub.s32 %v3912, %v3914
      %v3916 = vrot.slane %v3902, %v3915
      %v3917 = vcombine.high %v3909, %v3909
      %v3918 = vcombine.high %v3916, %v3916
      %v3920 = vunpack.c.l.s4 1966171168
      %v3921 = vunpack.c.0.s8 %v3920
      %v3922 = vlaneseq
      %v3923 = vshrl.u32 %v3922, 7
      %v3924 = vsub.s32 %v3921, %v3923
      %v3925 = vrot.slane %v3909, %v3924
      %v3927 = vunpack.c.l.s4 1966171168
      %v3928 = vunpack.c.0.s8 %v3927
      %v3929 = vlaneseq
      %v3930 = vshrl.u32 %v3929, 7
      %v3931 = vsub.s32 %v3928, %v3930
      %v3932 = vrot.slane %v3916, %v3931
      %v3934 = vunpack.c.l.s4 1966171168
      %v3935 = vunpack.c.0.s8 %v3934
      %v3936 = vlaneseq
      %v3937 = vshrl.u32 %v3936, 7
      %v3938 = vsub.s32 %v3935, %v3937
      %v3939 = vrot.slane %v3917, %v3938
      %v3941 = vunpack.c.l.s4 1966171168
      %v3942 = vunpack.c.0.s8 %v3941
      %v3943 = vlaneseq
      %v3944 = vshrl.u32 %v3943, 7
      %v3945 = vsub.s32 %v3942, %v3944
      %v3946 = vrot.slane %v3918, %v3945
      %v3947 = vcombine.high %v3925, %v3925
      %v3948 = vcombine.high %v3932, %v3932
      %v3949 = vcombine.high %v3939, %v3939
      %v3950 = vcombine.high %v3946, %v3946
      %v3951 = vcombine.high %v3791, %v3791
      %v3953 = vunpack.c.l.s4 1966171168
      %v3954 = vunpack.c.0.s8 %v3953
      %v3955 = vlaneseq
      %v3956 = vshrl.u32 %v3955, 7
      %v3957 = vsub.s32 %v3954, %v3956
      %v3958 = vrot.slane %v3791, %v3957
      %v3960 = vunpack.c.l.s4 1966171168
      %v3961 = vunpack.c.0.s8 %v3960
      %v3962 = vlaneseq
      %v3963 = vshrl.u32 %v3962, 7
      %v3964 = vsub.s32 %v3961, %v3963
      %v3965 = vrot.slane %v3951, %v3964
      %v3966 = vcombine.high %v3958, %v3958
      %v3967 = vcombine.high %v3965, %v3965
      %v3969 = vunpack.c.l.s4 1966171168
      %v3970 = vunpack.c.0.s8 %v3969
      %v3971 = vlaneseq
      %v3972 = vshrl.u32 %v3971, 7
      %v3973 = vsub.s32 %v3970, %v3972
      %v3974 = vrot.slane %v3958, %v3973
      %v3976 = vunpack.c.l.s4 1966171168
      %v3977 = vunpack.c.0.s8 %v3976
      %v3978 = vlaneseq
      %v3979 = vshrl.u32 %v3978, 7
      %v3980 = vsub.s32 %v3977, %v3979
      %v3981 = vrot.slane %v3965, %v3980
      %v3983 = vunpack.c.l.s4 1966171168
      %v3984 = vunpack.c.0.s8 %v3983
      %v3985 = vlaneseq
      %v3986 = vshrl.u32 %v3985, 7
      %v3987 = vsub.s32 %v3984, %v3986
      %v3988 = vrot.slane %v3966, %v3987
      %v3990 = vunpack.c.l.s4 1966171168
      %v3991 = vunpack.c.0.s8 %v3990
      %v3992 = vlaneseq
      %v3993 = vshrl.u32 %v3992, 7
      %v3994 = vsub.s32 %v3991, %v3993
      %v3995 = vrot.slane %v3967, %v3994
      %v3996 = vcombine.high %v3974, %v3974
      %v3997 = vcombine.high %v3981, %v3981
      %v3998 = vcombine.high %v3988, %v3988
      %v3999 = vcombine.high %v3995, %v3995
      %v4000 = vcombine.high %v3792, %v3792
      %v4002 = vunpack.c.l.s4 1966171168
      %v4003 = vunpack.c.0.s8 %v4002
      %v4004 = vlaneseq
      %v4005 = vshrl.u32 %v4004, 7
      %v4006 = vsub.s32 %v4003, %v4005
      %v4007 = vrot.slane %v3792, %v4006
      %v4009 = vunpack.c.l.s4 1966171168
      %v4010 = vunpack.c.0.s8 %v4009
      %v4011 = vlaneseq
      %v4012 = vshrl.u32 %v4011, 7
      %v4013 = vsub.s32 %v4010, %v4012
      %v4014 = vrot.slane %v4000, %v4013
      %v4015 = vcombine.high %v4007, %v4007
      %v4016 = vcombine.high %v4014, %v4014
      %v4018 = vunpack.c.l.s4 1966171168
      %v4019 = vunpack.c.0.s8 %v4018
      %v4020 = vlaneseq
      %v4021 = vshrl.u32 %v4020, 7
      %v4022 = vsub.s32 %v4019, %v4021
      %v4023 = vrot.slane %v4007, %v4022
      %v4025 = vunpack.c.l.s4 1966171168
      %v4026 = vunpack.c.0.s8 %v4025
      %v4027 = vlaneseq
      %v4028 = vshrl.u32 %v4027, 7
      %v4029 = vsub.s32 %v4026, %v4028
      %v4030 = vrot.slane %v4014, %v4029
      %v4032 = vunpack.c.l.s4 1966171168
      %v4033 = vunpack.c.0.s8 %v4032
      %v4034 = vlaneseq
      %v4035 = vshrl.u32 %v4034, 7
      %v4036 = vsub.s32 %v4033, %v4035
      %v4037 = vrot.slane %v4015, %v4036
      %v4039 = vunpack.c.l.s4 1966171168
      %v4040 = vunpack.c.0.s8 %v4039
      %v4041 = vlaneseq
      %v4042 = vshrl.u32 %v4041, 7
      %v4043 = vsub.s32 %v4040, %v4042
      %v4044 = vrot.slane %v4016, %v4043
      %v4045 = vcombine.high %v4023, %v4023
      %v4046 = vcombine.high %v4030, %v4030
      %v4047 = vcombine.high %v4037, %v4037
      %v4048 = vcombine.high %v4044, %v4044
      %v4049 = vcombine.high %v3793, %v3793
      %v4051 = vunpack.c.l.s4 1966171168
      %v4052 = vunpack.c.0.s8 %v4051
      %v4053 = vlaneseq
      %v4054 = vshrl.u32 %v4053, 7
      %v4055 = vsub.s32 %v4052, %v4054
      %v4056 = vrot.slane %v3793, %v4055
      %v4058 = vunpack.c.l.s4 1966171168
      %v4059 = vunpack.c.0.s8 %v4058
      %v4060 = vlaneseq
      %v4061 = vshrl.u32 %v4060, 7
      %v4062 = vsub.s32 %v4059, %v4061
      %v4063 = vrot.slane %v4049, %v4062
      %v4064 = vcombine.high %v4056, %v4056
      %v4065 = vcombine.high %v4063, %v4063
      %v4067 = vunpack.c.l.s4 1966171168
      %v4068 = vunpack.c.0.s8 %v4067
      %v4069 = vlaneseq
      %v4070 = vshrl.u32 %v4069, 7
      %v4071 = vsub.s32 %v4068, %v4070
      %v4072 = vrot.slane %v4056, %v4071
      %v4074 = vunpack.c.l.s4 1966171168
      %v4075 = vunpack.c.0.s8 %v4074
      %v4076 = vlaneseq
      %v4077 = vshrl.u32 %v4076, 7
      %v4078 = vsub.s32 %v4075, %v4077
      %v4079 = vrot.slane %v4063, %v4078
      %v4081 = vunpack.c.l.s4 1966171168
      %v4082 = vunpack.c.0.s8 %v4081
      %v4083 = vlaneseq
      %v4084 = vshrl.u32 %v4083, 7
      %v4085 = vsub.s32 %v4082, %v4084
      %v4086 = vrot.slane %v4064, %v4085
      %v4088 = vunpack.c.l.s4 1966171168
      %v4089 = vunpack.c.0.s8 %v4088
      %v4090 = vlaneseq
      %v4091 = vshrl.u32 %v4090, 7
      %v4092 = vsub.s32 %v4089, %v4091
      %v4093 = vrot.slane %v4065, %v4092
      %v4094 = vcombine.high %v4072, %v4072
      %v4095 = vcombine.high %v4079, %v4079
      %v4096 = vcombine.high %v4086, %v4086
      %v4097 = vcombine.high %v4093, %v4093
      %v4098 = vcombine.high %v3794, %v3794
      %v4100 = vunpack.c.l.s4 1966171168
      %v4101 = vunpack.c.0.s8 %v4100
      %v4102 = vlaneseq
      %v4103 = vshrl.u32 %v4102, 7
      %v4104 = vsub.s32 %v4101, %v4103
      %v4105 = vrot.slane %v3794, %v4104
      %v4107 = vunpack.c.l.s4 1966171168
      %v4108 = vunpack.c.0.s8 %v4107
      %v4109 = vlaneseq
      %v4110 = vshrl.u32 %v4109, 7
      %v4111 = vsub.s32 %v4108, %v4110
      %v4112 = vrot.slane %v4098, %v4111
      %v4113 = vcombine.high %v4105, %v4105
      %v4114 = vcombine.high %v4112, %v4112
      %v4116 = vunpack.c.l.s4 1966171168
      %v4117 = vunpack.c.0.s8 %v4116
      %v4118 = vlaneseq
      %v4119 = vshrl.u32 %v4118, 7
      %v4120 = vsub.s32 %v4117, %v4119
      %v4121 = vrot.slane %v4105, %v4120
      %v4123 = vunpack.c.l.s4 1966171168
      %v4124 = vunpack.c.0.s8 %v4123
      %v4125 = vlaneseq
      %v4126 = vshrl.u32 %v4125, 7
      %v4127 = vsub.s32 %v4124, %v4126
      %v4128 = vrot.slane %v4112, %v4127
      %v4130 = vunpack.c.l.s4 1966171168
      %v4131 = vunpack.c.0.s8 %v4130
      %v4132 = vlaneseq
      %v4133 = vshrl.u32 %v4132, 7
      %v4134 = vsub.s32 %v4131, %v4133
      %v4135 = vrot.slane %v4113, %v4134
      %v4137 = vunpack.c.l.s4 1966171168
      %v4138 = vunpack.c.0.s8 %v4137
      %v4139 = vlaneseq
      %v4140 = vshrl.u32 %v4139, 7
      %v4141 = vsub.s32 %v4138, %v4140
      %v4142 = vrot.slane %v4114, %v4141
      %v4143 = vcombine.high %v4121, %v4121
      %v4144 = vcombine.high %v4128, %v4128
      %v4145 = vcombine.high %v4135, %v4135
      %v4146 = vcombine.high %v4142, %v4142
      %v4147 = vcombine.high %v3795, %v3795
      %v4149 = vunpack.c.l.s4 1966171168
      %v4150 = vunpack.c.0.s8 %v4149
      %v4151 = vlaneseq
      %v4152 = vshrl.u32 %v4151, 7
      %v4153 = vsub.s32 %v4150, %v4152
      %v4154 = vrot.slane %v3795, %v4153
      %v4156 = vunpack.c.l.s4 1966171168
      %v4157 = vunpack.c.0.s8 %v4156
      %v4158 = vlaneseq
      %v4159 = vshrl.u32 %v4158, 7
      %v4160 = vsub.s32 %v4157, %v4159
      %v4161 = vrot.slane %v4147, %v4160
      %v4162 = vcombine.high %v4154, %v4154
      %v4163 = vcombine.high %v4161, %v4161
      %v4165 = vunpack.c.l.s4 1966171168
      %v4166 = vunpack.c.0.s8 %v4165
      %v4167 = vlaneseq
      %v4168 = vshrl.u32 %v4167, 7
      %v4169 = vsub.s32 %v4166, %v4168
      %v4170 = vrot.slane %v4154, %v4169
      %v4172 = vunpack.c.l.s4 1966171168
      %v4173 = vunpack.c.0.s8 %v4172
      %v4174 = vlaneseq
      %v4175 = vshrl.u32 %v4174, 7
      %v4176 = vsub.s32 %v4173, %v4175
      %v4177 = vrot.slane %v4161, %v4176
      %v4179 = vunpack.c.l.s4 1966171168
      %v4180 = vunpack.c.0.s8 %v4179
      %v4181 = vlaneseq
      %v4182 = vshrl.u32 %v4181, 7
      %v4183 = vsub.s32 %v4180, %v4182
      %v4184 = vrot.slane %v4162, %v4183
      %v4186 = vunpack.c.l.s4 1966171168
      %v4187 = vunpack.c.0.s8 %v4186
      %v4188 = vlaneseq
      %v4189 = vshrl.u32 %v4188, 7
      %v4190 = vsub.s32 %v4187, %v4189
      %v4191 = vrot.slane %v4163, %v4190
      %v4192 = vcombine.high %v4170, %v4170
      %v4193 = vcombine.high %v4177, %v4177
      %v4194 = vcombine.high %v4184, %v4184
      %v4195 = vcombine.high %v4191, %v4191
      %4260 = vst.msk [vmem:[%s190 + $0x3] sm:$0x1] %vm2549, %v3827
      %4261 = vst.msk [vmem:[%s190 + $0xb] sm:$0x1] %vm2549, %v3841
      %4262 = vst.msk [vmem:[%s190 + $0x13] sm:$0x1] %vm2549, %v3849
      %4263 = vst.msk [vmem:[%s190 + $0x1b] sm:$0x1] %vm2549, %v3851
      %4264 = vst.msk [vmem:[%s190 + $0x23] sm:$0x1] %vm2549, %v3834
      %4265 = vst.msk [vmem:[%s190 + $0x2b] sm:$0x1] %vm2549, %v3848
      %4266 = vst.msk [vmem:[%s190 + $0x33] sm:$0x1] %vm2549, %v3850
      %4267 = vst.msk [vmem:[%s190 + $0x3b] sm:$0x1] %vm2549, %v3852
      %4268 = vst.msk [vmem:[%s190 + $0x43] sm:$0x1] %vm2549, %v3876
      %4269 = vst.msk [vmem:[%s190 + $0x4b] sm:$0x1] %vm2549, %v3890
      %4270 = vst.msk [vmem:[%s190 + $0x53] sm:$0x1] %vm2549, %v3898
      %4271 = vst.msk [vmem:[%s190 + $0x5b] sm:$0x1] %vm2549, %v3900
      %4272 = vst.msk [vmem:[%s190 + $0x63] sm:$0x1] %vm2549, %v3883
      %4273 = vst.msk [vmem:[%s190 + $0x6b] sm:$0x1] %vm2549, %v3897
      %4274 = vst.msk [vmem:[%s190 + $0x73] sm:$0x1] %vm2549, %v3899
      %4275 = vst.msk [vmem:[%s190 + $0x7b] sm:$0x1] %vm2549, %v3901
      %4276 = vst.msk [vmem:[%s190 + $0x83] sm:$0x1] %vm2549, %v3925
      %4277 = vst.msk [vmem:[%s190 + $0x8b] sm:$0x1] %vm2549, %v3939
      %4278 = vst.msk [vmem:[%s190 + $0x93] sm:$0x1] %vm2549, %v3947
      %4279 = vst.msk [vmem:[%s190 + $0x9b] sm:$0x1] %vm2549, %v3949
      %4280 = vst.msk [vmem:[%s190 + $0xa3] sm:$0x1] %vm2549, %v3932
      %4281 = vst.msk [vmem:[%s190 + $0xab] sm:$0x1] %vm2549, %v3946
      %4282 = vst.msk [vmem:[%s190 + $0xb3] sm:$0x1] %vm2549, %v3948
      %4283 = vst.msk [vmem:[%s190 + $0xbb] sm:$0x1] %vm2549, %v3950
      %4284 = vst.msk [vmem:[%s190 + $0xc3] sm:$0x1] %vm2549, %v3974
      %4285 = vst.msk [vmem:[%s190 + $0xcb] sm:$0x1] %vm2549, %v3988
      %4286 = vst.msk [vmem:[%s190 + $0xd3] sm:$0x1] %vm2549, %v3996
      %4287 = vst.msk [vmem:[%s190 + $0xdb] sm:$0x1] %vm2549, %v3998
      %4288 = vst.msk [vmem:[%s190 + $0xe3] sm:$0x1] %vm2549, %v3981
      %4289 = vst.msk [vmem:[%s190 + $0xeb] sm:$0x1] %vm2549, %v3995
      %4290 = vst.msk [vmem:[%s190 + $0xf3] sm:$0x1] %vm2549, %v3997
      %4291 = vst.msk [vmem:[%s190 + $0xfb] sm:$0x1] %vm2549, %v3999
      %4292 = vst.msk [vmem:[%s190 + $0x103] sm:$0x1] %vm2549, %v4023
      %4293 = vst.msk [vmem:[%s190 + $0x10b] sm:$0x1] %vm2549, %v4037
      %4294 = vst.msk [vmem:[%s190 + $0x113] sm:$0x1] %vm2549, %v4045
      %4295 = vst.msk [vmem:[%s190 + $0x11b] sm:$0x1] %vm2549, %v4047
      %4296 = vst.msk [vmem:[%s190 + $0x123] sm:$0x1] %vm2549, %v4030
      %4297 = vst.msk [vmem:[%s190 + $0x12b] sm:$0x1] %vm2549, %v4044
      %4298 = vst.msk [vmem:[%s190 + $0x133] sm:$0x1] %vm2549, %v4046
      %4299 = vst.msk [vmem:[%s190 + $0x13b] sm:$0x1] %vm2549, %v4048
      %4300 = vst.msk [vmem:[%s190 + $0x143] sm:$0x1] %vm2549, %v4072
      %4301 = vst.msk [vmem:[%s190 + $0x14b] sm:$0x1] %vm2549, %v4086
      %4302 = vst.msk [vmem:[%s190 + $0x153] sm:$0x1] %vm2549, %v4094
      %4303 = vst.msk [vmem:[%s190 + $0x15b] sm:$0x1] %vm2549, %v4096
      %4304 = vst.msk [vmem:[%s190 + $0x163] sm:$0x1] %vm2549, %v4079
      %4305 = vst.msk [vmem:[%s190 + $0x16b] sm:$0x1] %vm2549, %v4093
      %4306 = vst.msk [vmem:[%s190 + $0x173] sm:$0x1] %vm2549, %v4095
      %4307 = vst.msk [vmem:[%s190 + $0x17b] sm:$0x1] %vm2549, %v4097
      %4308 = vst.msk [vmem:[%s190 + $0x183] sm:$0x1] %vm2549, %v4121
      %4309 = vst.msk [vmem:[%s190 + $0x18b] sm:$0x1] %vm2549, %v4135
      %4310 = vst.msk [vmem:[%s190 + $0x193] sm:$0x1] %vm2549, %v4143
      %4311 = vst.msk [vmem:[%s190 + $0x19b] sm:$0x1] %vm2549, %v4145
      %4312 = vst.msk [vmem:[%s190 + $0x1a3] sm:$0x1] %vm2549, %v4128
      %4313 = vst.msk [vmem:[%s190 + $0x1ab] sm:$0x1] %vm2549, %v4142
      %4314 = vst.msk [vmem:[%s190 + $0x1b3] sm:$0x1] %vm2549, %v4144
      %4315 = vst.msk [vmem:[%s190 + $0x1bb] sm:$0x1] %vm2549, %v4146
      %4316 = vst.msk [vmem:[%s190 + $0x1c3] sm:$0x1] %vm2549, %v4170
      %4317 = vst.msk [vmem:[%s190 + $0x1cb] sm:$0x1] %vm2549, %v4184
      %4318 = vst.msk [vmem:[%s190 + $0x1d3] sm:$0x1] %vm2549, %v4192
      %4319 = vst.msk [vmem:[%s190 + $0x1db] sm:$0x1] %vm2549, %v4194
      %4320 = vst.msk [vmem:[%s190 + $0x1e3] sm:$0x1] %vm2549, %v4177
      %4321 = vst.msk [vmem:[%s190 + $0x1eb] sm:$0x1] %vm2549, %v4191
      %4322 = vst.msk [vmem:[%s190 + $0x1f3] sm:$0x1] %vm2549, %v4193
      %4323 = vst.msk [vmem:[%s190 + $0x1fb] sm:$0x1] %vm2549, %v4195
      %v4324 = vld [vmem:[%s3779] sm:$0xff]
      %v4325 = vld [vmem:[%s3779 + $0x8] sm:$0xff]
      %v4326 = vld [vmem:[%s3779 + $0x10] sm:$0xff]
      %v4327 = vld [vmem:[%s3779 + $0x18] sm:$0xff]
      %v4328 = vld [vmem:[%s3779 + $0x20] sm:$0xff]
      %v4329 = vld [vmem:[%s3779 + $0x28] sm:$0xff]
      %v4330 = vld [vmem:[%s3779 + $0x30] sm:$0xff]
      %v4331 = vld [vmem:[%s3779 + $0x38] sm:$0xff]
      %s4332 = scalar_lea.vmem [#allocation4], 576
      %v4333 = vld [vmem:[%s4332] sm:$0xff]
      %v4334 = vld [vmem:[%s4332 + $0x8] sm:$0xff]
      %v4335 = vld [vmem:[%s4332 + $0x10] sm:$0xff]
      %v4336 = vld [vmem:[%s4332 + $0x18] sm:$0xff]
      %v4337 = vld [vmem:[%s4332 + $0x20] sm:$0xff]
      %v4338 = vld [vmem:[%s4332 + $0x28] sm:$0xff]
      %v4339 = vld [vmem:[%s4332 + $0x30] sm:$0xff]
      %v4340 = vld [vmem:[%s4332 + $0x38] sm:$0xff]
      %v4341 = vmax.f32 %v4324, %v4333
      %v4342 = vmax.f32 %v4325, %v4334
      %v4343 = vmax.f32 %v4326, %v4335
      %v4344 = vmax.f32 %v4327, %v4336
      %v4345 = vmax.f32 %v4328, %v4337
      %v4346 = vmax.f32 %v4329, %v4338
      %v4347 = vmax.f32 %v4330, %v4339
      %v4348 = vmax.f32 %v4331, %v4340
      %s4349 = scalar_lea.vmem [#allocation4], 640
      %v4350 = vld [vmem:[%s4349] sm:$0xff]
      %v4351 = vld [vmem:[%s4349 + $0x8] sm:$0xff]
      %v4352 = vld [vmem:[%s4349 + $0x10] sm:$0xff]
      %v4353 = vld [vmem:[%s4349 + $0x18] sm:$0xff]
      %v4354 = vld [vmem:[%s4349 + $0x20] sm:$0xff]
      %v4355 = vld [vmem:[%s4349 + $0x28] sm:$0xff]
      %v4356 = vld [vmem:[%s4349 + $0x30] sm:$0xff]
      %v4357 = vld [vmem:[%s4349 + $0x38] sm:$0xff]
      %v4358 = vmax.f32 %v4341, %v4350
      %v4359 = vmax.f32 %v4342, %v4351
      %v4360 = vmax.f32 %v4343, %v4352
      %v4361 = vmax.f32 %v4344, %v4353
      %v4362 = vmax.f32 %v4345, %v4354
      %v4363 = vmax.f32 %v4346, %v4355
      %v4364 = vmax.f32 %v4347, %v4356
      %v4365 = vmax.f32 %v4348, %v4357
      %v4374 = vcombine.high %v4358, %v4358
      %v4376 = vunpack.c.l.s4 1966171168
      %v4377 = vunpack.c.0.s8 %v4376
      %v4378 = vlaneseq
      %v4379 = vshrl.u32 %v4378, 7
      %v4380 = vsub.s32 %v4377, %v4379
      %v4381 = vrot.slane %v4358, %v4380
      %v4383 = vunpack.c.l.s4 1966171168
      %v4384 = vunpack.c.0.s8 %v4383
      %v4385 = vlaneseq
      %v4386 = vshrl.u32 %v4385, 7
      %v4387 = vsub.s32 %v4384, %v4386
      %v4388 = vrot.slane %v4374, %v4387
      %v4389 = vcombine.high %v4381, %v4381
      %v4390 = vcombine.high %v4388, %v4388
      %v4392 = vunpack.c.l.s4 1966171168
      %v4393 = vunpack.c.0.s8 %v4392
      %v4394 = vlaneseq
      %v4395 = vshrl.u32 %v4394, 7
      %v4396 = vsub.s32 %v4393, %v4395
      %v4397 = vrot.slane %v4381, %v4396
      %v4399 = vunpack.c.l.s4 1966171168
      %v4400 = vunpack.c.0.s8 %v4399
      %v4401 = vlaneseq
      %v4402 = vshrl.u32 %v4401, 7
      %v4403 = vsub.s32 %v4400, %v4402
      %v4404 = vrot.slane %v4388, %v4403
      %v4406 = vunpack.c.l.s4 1966171168
      %v4407 = vunpack.c.0.s8 %v4406
      %v4408 = vlaneseq
      %v4409 = vshrl.u32 %v4408, 7
      %v4410 = vsub.s32 %v4407, %v4409
      %v4411 = vrot.slane %v4389, %v4410
      %v4413 = vunpack.c.l.s4 1966171168
      %v4414 = vunpack.c.0.s8 %v4413
      %v4415 = vlaneseq
      %v4416 = vshrl.u32 %v4415, 7
      %v4417 = vsub.s32 %v4414, %v4416
      %v4418 = vrot.slane %v4390, %v4417
      %v4419 = vcombine.high %v4397, %v4397
      %v4420 = vcombine.high %v4404, %v4404
      %v4421 = vcombine.high %v4411, %v4411
      %v4422 = vcombine.high %v4418, %v4418
      %v4423 = vcombine.high %v4359, %v4359
      %v4425 = vunpack.c.l.s4 1966171168
      %v4426 = vunpack.c.0.s8 %v4425
      %v4427 = vlaneseq
      %v4428 = vshrl.u32 %v4427, 7
      %v4429 = vsub.s32 %v4426, %v4428
      %v4430 = vrot.slane %v4359, %v4429
      %v4432 = vunpack.c.l.s4 1966171168
      %v4433 = vunpack.c.0.s8 %v4432
      %v4434 = vlaneseq
      %v4435 = vshrl.u32 %v4434, 7
      %v4436 = vsub.s32 %v4433, %v4435
      %v4437 = vrot.slane %v4423, %v4436
      %v4438 = vcombine.high %v4430, %v4430
      %v4439 = vcombine.high %v4437, %v4437
      %v4441 = vunpack.c.l.s4 1966171168
      %v4442 = vunpack.c.0.s8 %v4441
      %v4443 = vlaneseq
      %v4444 = vshrl.u32 %v4443, 7
      %v4445 = vsub.s32 %v4442, %v4444
      %v4446 = vrot.slane %v4430, %v4445
      %v4448 = vunpack.c.l.s4 1966171168
      %v4449 = vunpack.c.0.s8 %v4448
      %v4450 = vlaneseq
      %v4451 = vshrl.u32 %v4450, 7
      %v4452 = vsub.s32 %v4449, %v4451
      %v4453 = vrot.slane %v4437, %v4452
      %v4455 = vunpack.c.l.s4 1966171168
      %v4456 = vunpack.c.0.s8 %v4455
      %v4457 = vlaneseq
      %v4458 = vshrl.u32 %v4457, 7
      %v4459 = vsub.s32 %v4456, %v4458
      %v4460 = vrot.slane %v4438, %v4459
      %v4462 = vunpack.c.l.s4 1966171168
      %v4463 = vunpack.c.0.s8 %v4462
      %v4464 = vlaneseq
      %v4465 = vshrl.u32 %v4464, 7
      %v4466 = vsub.s32 %v4463, %v4465
      %v4467 = vrot.slane %v4439, %v4466
      %v4468 = vcombine.high %v4446, %v4446
      %v4469 = vcombine.high %v4453, %v4453
      %v4470 = vcombine.high %v4460, %v4460
      %v4471 = vcombine.high %v4467, %v4467
      %v4472 = vcombine.high %v4360, %v4360
      %v4474 = vunpack.c.l.s4 1966171168
      %v4475 = vunpack.c.0.s8 %v4474
      %v4476 = vlaneseq
      %v4477 = vshrl.u32 %v4476, 7
      %v4478 = vsub.s32 %v4475, %v4477
      %v4479 = vrot.slane %v4360, %v4478
      %v4481 = vunpack.c.l.s4 1966171168
      %v4482 = vunpack.c.0.s8 %v4481
      %v4483 = vlaneseq
      %v4484 = vshrl.u32 %v4483, 7
      %v4485 = vsub.s32 %v4482, %v4484
      %v4486 = vrot.slane %v4472, %v4485
      %v4487 = vcombine.high %v4479, %v4479
      %v4488 = vcombine.high %v4486, %v4486
      %v4490 = vunpack.c.l.s4 1966171168
      %v4491 = vunpack.c.0.s8 %v4490
      %v4492 = vlaneseq
      %v4493 = vshrl.u32 %v4492, 7
      %v4494 = vsub.s32 %v4491, %v4493
      %v4495 = vrot.slane %v4479, %v4494
      %v4497 = vunpack.c.l.s4 1966171168
      %v4498 = vunpack.c.0.s8 %v4497
      %v4499 = vlaneseq
      %v4500 = vshrl.u32 %v4499, 7
      %v4501 = vsub.s32 %v4498, %v4500
      %v4502 = vrot.slane %v4486, %v4501
      %v4504 = vunpack.c.l.s4 1966171168
      %v4505 = vunpack.c.0.s8 %v4504
      %v4506 = vlaneseq
      %v4507 = vshrl.u32 %v4506, 7
      %v4508 = vsub.s32 %v4505, %v4507
      %v4509 = vrot.slane %v4487, %v4508
      %v4511 = vunpack.c.l.s4 1966171168
      %v4512 = vunpack.c.0.s8 %v4511
      %v4513 = vlaneseq
      %v4514 = vshrl.u32 %v4513, 7
      %v4515 = vsub.s32 %v4512, %v4514
      %v4516 = vrot.slane %v4488, %v4515
      %v4517 = vcombine.high %v4495, %v4495
      %v4518 = vcombine.high %v4502, %v4502
      %v4519 = vcombine.high %v4509, %v4509
      %v4520 = vcombine.high %v4516, %v4516
      %v4521 = vcombine.high %v4361, %v4361
      %v4523 = vunpack.c.l.s4 1966171168
      %v4524 = vunpack.c.0.s8 %v4523
      %v4525 = vlaneseq
      %v4526 = vshrl.u32 %v4525, 7
      %v4527 = vsub.s32 %v4524, %v4526
      %v4528 = vrot.slane %v4361, %v4527
      %v4530 = vunpack.c.l.s4 1966171168
      %v4531 = vunpack.c.0.s8 %v4530
      %v4532 = vlaneseq
      %v4533 = vshrl.u32 %v4532, 7
      %v4534 = vsub.s32 %v4531, %v4533
      %v4535 = vrot.slane %v4521, %v4534
      %v4536 = vcombine.high %v4528, %v4528
      %v4537 = vcombine.high %v4535, %v4535
      %v4539 = vunpack.c.l.s4 1966171168
      %v4540 = vunpack.c.0.s8 %v4539
      %v4541 = vlaneseq
      %v4542 = vshrl.u32 %v4541, 7
      %v4543 = vsub.s32 %v4540, %v4542
      %v4544 = vrot.slane %v4528, %v4543
      %v4546 = vunpack.c.l.s4 1966171168
      %v4547 = vunpack.c.0.s8 %v4546
      %v4548 = vlaneseq
      %v4549 = vshrl.u32 %v4548, 7
      %v4550 = vsub.s32 %v4547, %v4549
      %v4551 = vrot.slane %v4535, %v4550
      %v4553 = vunpack.c.l.s4 1966171168
      %v4554 = vunpack.c.0.s8 %v4553
      %v4555 = vlaneseq
      %v4556 = vshrl.u32 %v4555, 7
      %v4557 = vsub.s32 %v4554, %v4556
      %v4558 = vrot.slane %v4536, %v4557
      %v4560 = vunpack.c.l.s4 1966171168
      %v4561 = vunpack.c.0.s8 %v4560
      %v4562 = vlaneseq
      %v4563 = vshrl.u32 %v4562, 7
      %v4564 = vsub.s32 %v4561, %v4563
      %v4565 = vrot.slane %v4537, %v4564
      %v4566 = vcombine.high %v4544, %v4544
      %v4567 = vcombine.high %v4551, %v4551
      %v4568 = vcombine.high %v4558, %v4558
      %v4569 = vcombine.high %v4565, %v4565
      %v4570 = vcombine.high %v4362, %v4362
      %v4572 = vunpack.c.l.s4 1966171168
      %v4573 = vunpack.c.0.s8 %v4572
      %v4574 = vlaneseq
      %v4575 = vshrl.u32 %v4574, 7
      %v4576 = vsub.s32 %v4573, %v4575
      %v4577 = vrot.slane %v4362, %v4576
      %v4579 = vunpack.c.l.s4 1966171168
      %v4580 = vunpack.c.0.s8 %v4579
      %v4581 = vlaneseq
      %v4582 = vshrl.u32 %v4581, 7
      %v4583 = vsub.s32 %v4580, %v4582
      %v4584 = vrot.slane %v4570, %v4583
      %v4585 = vcombine.high %v4577, %v4577
      %v4586 = vcombine.high %v4584, %v4584
      %v4588 = vunpack.c.l.s4 1966171168
      %v4589 = vunpack.c.0.s8 %v4588
      %v4590 = vlaneseq
      %v4591 = vshrl.u32 %v4590, 7
      %v4592 = vsub.s32 %v4589, %v4591
      %v4593 = vrot.slane %v4577, %v4592
      %v4595 = vunpack.c.l.s4 1966171168
      %v4596 = vunpack.c.0.s8 %v4595
      %v4597 = vlaneseq
      %v4598 = vshrl.u32 %v4597, 7
      %v4599 = vsub.s32 %v4596, %v4598
      %v4600 = vrot.slane %v4584, %v4599
      %v4602 = vunpack.c.l.s4 1966171168
      %v4603 = vunpack.c.0.s8 %v4602
      %v4604 = vlaneseq
      %v4605 = vshrl.u32 %v4604, 7
      %v4606 = vsub.s32 %v4603, %v4605
      %v4607 = vrot.slane %v4585, %v4606
      %v4609 = vunpack.c.l.s4 1966171168
      %v4610 = vunpack.c.0.s8 %v4609
      %v4611 = vlaneseq
      %v4612 = vshrl.u32 %v4611, 7
      %v4613 = vsub.s32 %v4610, %v4612
      %v4614 = vrot.slane %v4586, %v4613
      %v4615 = vcombine.high %v4593, %v4593
      %v4616 = vcombine.high %v4600, %v4600
      %v4617 = vcombine.high %v4607, %v4607
      %v4618 = vcombine.high %v4614, %v4614
      %v4619 = vcombine.high %v4363, %v4363
      %v4621 = vunpack.c.l.s4 1966171168
      %v4622 = vunpack.c.0.s8 %v4621
      %v4623 = vlaneseq
      %v4624 = vshrl.u32 %v4623, 7
      %v4625 = vsub.s32 %v4622, %v4624
      %v4626 = vrot.slane %v4363, %v4625
      %v4628 = vunpack.c.l.s4 1966171168
      %v4629 = vunpack.c.0.s8 %v4628
      %v4630 = vlaneseq
      %v4631 = vshrl.u32 %v4630, 7
      %v4632 = vsub.s32 %v4629, %v4631
      %v4633 = vrot.slane %v4619, %v4632
      %v4634 = vcombine.high %v4626, %v4626
      %v4635 = vcombine.high %v4633, %v4633
      %v4637 = vunpack.c.l.s4 1966171168
      %v4638 = vunpack.c.0.s8 %v4637
      %v4639 = vlaneseq
      %v4640 = vshrl.u32 %v4639, 7
      %v4641 = vsub.s32 %v4638, %v4640
      %v4642 = vrot.slane %v4626, %v4641
      %v4644 = vunpack.c.l.s4 1966171168
      %v4645 = vunpack.c.0.s8 %v4644
      %v4646 = vlaneseq
      %v4647 = vshrl.u32 %v4646, 7
      %v4648 = vsub.s32 %v4645, %v4647
      %v4649 = vrot.slane %v4633, %v4648
      %v4651 = vunpack.c.l.s4 1966171168
      %v4652 = vunpack.c.0.s8 %v4651
      %v4653 = vlaneseq
      %v4654 = vshrl.u32 %v4653, 7
      %v4655 = vsub.s32 %v4652, %v4654
      %v4656 = vrot.slane %v4634, %v4655
      %v4658 = vunpack.c.l.s4 1966171168
      %v4659 = vunpack.c.0.s8 %v4658
      %v4660 = vlaneseq
      %v4661 = vshrl.u32 %v4660, 7
      %v4662 = vsub.s32 %v4659, %v4661
      %v4663 = vrot.slane %v4635, %v4662
      %v4664 = vcombine.high %v4642, %v4642
      %v4665 = vcombine.high %v4649, %v4649
      %v4666 = vcombine.high %v4656, %v4656
      %v4667 = vcombine.high %v4663, %v4663
      %v4668 = vcombine.high %v4364, %v4364
      %v4670 = vunpack.c.l.s4 1966171168
      %v4671 = vunpack.c.0.s8 %v4670
      %v4672 = vlaneseq
      %v4673 = vshrl.u32 %v4672, 7
      %v4674 = vsub.s32 %v4671, %v4673
      %v4675 = vrot.slane %v4364, %v4674
      %v4677 = vunpack.c.l.s4 1966171168
      %v4678 = vunpack.c.0.s8 %v4677
      %v4679 = vlaneseq
      %v4680 = vshrl.u32 %v4679, 7
      %v4681 = vsub.s32 %v4678, %v4680
      %v4682 = vrot.slane %v4668, %v4681
      %v4683 = vcombine.high %v4675, %v4675
      %v4684 = vcombine.high %v4682, %v4682
      %v4686 = vunpack.c.l.s4 1966171168
      %v4687 = vunpack.c.0.s8 %v4686
      %v4688 = vlaneseq
      %v4689 = vshrl.u32 %v4688, 7
      %v4690 = vsub.s32 %v4687, %v4689
      %v4691 = vrot.slane %v4675, %v4690
      %v4693 = vunpack.c.l.s4 1966171168
      %v4694 = vunpack.c.0.s8 %v4693
      %v4695 = vlaneseq
      %v4696 = vshrl.u32 %v4695, 7
      %v4697 = vsub.s32 %v4694, %v4696
      %v4698 = vrot.slane %v4682, %v4697
      %v4700 = vunpack.c.l.s4 1966171168
      %v4701 = vunpack.c.0.s8 %v4700
      %v4702 = vlaneseq
      %v4703 = vshrl.u32 %v4702, 7
      %v4704 = vsub.s32 %v4701, %v4703
      %v4705 = vrot.slane %v4683, %v4704
      %v4707 = vunpack.c.l.s4 1966171168
      %v4708 = vunpack.c.0.s8 %v4707
      %v4709 = vlaneseq
      %v4710 = vshrl.u32 %v4709, 7
      %v4711 = vsub.s32 %v4708, %v4710
      %v4712 = vrot.slane %v4684, %v4711
      %v4713 = vcombine.high %v4691, %v4691
      %v4714 = vcombine.high %v4698, %v4698
      %v4715 = vcombine.high %v4705, %v4705
      %v4716 = vcombine.high %v4712, %v4712
      %v4717 = vcombine.high %v4365, %v4365
      %v4719 = vunpack.c.l.s4 1966171168
      %v4720 = vunpack.c.0.s8 %v4719
      %v4721 = vlaneseq
      %v4722 = vshrl.u32 %v4721, 7
      %v4723 = vsub.s32 %v4720, %v4722
      %v4724 = vrot.slane %v4365, %v4723
      %v4726 = vunpack.c.l.s4 1966171168
      %v4727 = vunpack.c.0.s8 %v4726
      %v4728 = vlaneseq
      %v4729 = vshrl.u32 %v4728, 7
      %v4730 = vsub.s32 %v4727, %v4729
      %v4731 = vrot.slane %v4717, %v4730
      %v4732 = vcombine.high %v4724, %v4724
      %v4733 = vcombine.high %v4731, %v4731
      %v4735 = vunpack.c.l.s4 1966171168
      %v4736 = vunpack.c.0.s8 %v4735
      %v4737 = vlaneseq
      %v4738 = vshrl.u32 %v4737, 7
      %v4739 = vsub.s32 %v4736, %v4738
      %v4740 = vrot.slane %v4724, %v4739
      %v4742 = vunpack.c.l.s4 1966171168
      %v4743 = vunpack.c.0.s8 %v4742
      %v4744 = vlaneseq
      %v4745 = vshrl.u32 %v4744, 7
      %v4746 = vsub.s32 %v4743, %v4745
      %v4747 = vrot.slane %v4731, %v4746
      %v4749 = vunpack.c.l.s4 1966171168
      %v4750 = vunpack.c.0.s8 %v4749
      %v4751 = vlaneseq
      %v4752 = vshrl.u32 %v4751, 7
      %v4753 = vsub.s32 %v4750, %v4752
      %v4754 = vrot.slane %v4732, %v4753
      %v4756 = vunpack.c.l.s4 1966171168
      %v4757 = vunpack.c.0.s8 %v4756
      %v4758 = vlaneseq
      %v4759 = vshrl.u32 %v4758, 7
      %v4760 = vsub.s32 %v4757, %v4759
      %v4761 = vrot.slane %v4733, %v4760
      %v4762 = vcombine.high %v4740, %v4740
      %v4763 = vcombine.high %v4747, %v4747
      %v4764 = vcombine.high %v4754, %v4754
      %v4765 = vcombine.high %v4761, %v4761
      %4830 = vst.msk [vmem:[%s190 + $0x4] sm:$0x1] %vm2549, %v4397
      %4831 = vst.msk [vmem:[%s190 + $0xc] sm:$0x1] %vm2549, %v4411
      %4832 = vst.msk [vmem:[%s190 + $0x14] sm:$0x1] %vm2549, %v4419
      %4833 = vst.msk [vmem:[%s190 + $0x1c] sm:$0x1] %vm2549, %v4421
      %4834 = vst.msk [vmem:[%s190 + $0x24] sm:$0x1] %vm2549, %v4404
      %4835 = vst.msk [vmem:[%s190 + $0x2c] sm:$0x1] %vm2549, %v4418
      %4836 = vst.msk [vmem:[%s190 + $0x34] sm:$0x1] %vm2549, %v4420
      %4837 = vst.msk [vmem:[%s190 + $0x3c] sm:$0x1] %vm2549, %v4422
      %4838 = vst.msk [vmem:[%s190 + $0x44] sm:$0x1] %vm2549, %v4446
      %4839 = vst.msk [vmem:[%s190 + $0x4c] sm:$0x1] %vm2549, %v4460
      %4840 = vst.msk [vmem:[%s190 + $0x54] sm:$0x1] %vm2549, %v4468
      %4841 = vst.msk [vmem:[%s190 + $0x5c] sm:$0x1] %vm2549, %v4470
      %4842 = vst.msk [vmem:[%s190 + $0x64] sm:$0x1] %vm2549, %v4453
      %4843 = vst.msk [vmem:[%s190 + $0x6c] sm:$0x1] %vm2549, %v4467
      %4844 = vst.msk [vmem:[%s190 + $0x74] sm:$0x1] %vm2549, %v4469
      %4845 = vst.msk [vmem:[%s190 + $0x7c] sm:$0x1] %vm2549, %v4471
      %4846 = vst.msk [vmem:[%s190 + $0x84] sm:$0x1] %vm2549, %v4495
      %4847 = vst.msk [vmem:[%s190 + $0x8c] sm:$0x1] %vm2549, %v4509
      %4848 = vst.msk [vmem:[%s190 + $0x94] sm:$0x1] %vm2549, %v4517
      %4849 = vst.msk [vmem:[%s190 + $0x9c] sm:$0x1] %vm2549, %v4519
      %4850 = vst.msk [vmem:[%s190 + $0xa4] sm:$0x1] %vm2549, %v4502
      %4851 = vst.msk [vmem:[%s190 + $0xac] sm:$0x1] %vm2549, %v4516
      %4852 = vst.msk [vmem:[%s190 + $0xb4] sm:$0x1] %vm2549, %v4518
      %4853 = vst.msk [vmem:[%s190 + $0xbc] sm:$0x1] %vm2549, %v4520
      %4854 = vst.msk [vmem:[%s190 + $0xc4] sm:$0x1] %vm2549, %v4544
      %4855 = vst.msk [vmem:[%s190 + $0xcc] sm:$0x1] %vm2549, %v4558
      %4856 = vst.msk [vmem:[%s190 + $0xd4] sm:$0x1] %vm2549, %v4566
      %4857 = vst.msk [vmem:[%s190 + $0xdc] sm:$0x1] %vm2549, %v4568
      %4858 = vst.msk [vmem:[%s190 + $0xe4] sm:$0x1] %vm2549, %v4551
      %4859 = vst.msk [vmem:[%s190 + $0xec] sm:$0x1] %vm2549, %v4565
      %4860 = vst.msk [vmem:[%s190 + $0xf4] sm:$0x1] %vm2549, %v4567
      %4861 = vst.msk [vmem:[%s190 + $0xfc] sm:$0x1] %vm2549, %v4569
      %4862 = vst.msk [vmem:[%s190 + $0x104] sm:$0x1] %vm2549, %v4593
      %4863 = vst.msk [vmem:[%s190 + $0x10c] sm:$0x1] %vm2549, %v4607
      %4864 = vst.msk [vmem:[%s190 + $0x114] sm:$0x1] %vm2549, %v4615
      %4865 = vst.msk [vmem:[%s190 + $0x11c] sm:$0x1] %vm2549, %v4617
      %4866 = vst.msk [vmem:[%s190 + $0x124] sm:$0x1] %vm2549, %v4600
      %4867 = vst.msk [vmem:[%s190 + $0x12c] sm:$0x1] %vm2549, %v4614
      %4868 = vst.msk [vmem:[%s190 + $0x134] sm:$0x1] %vm2549, %v4616
      %4869 = vst.msk [vmem:[%s190 + $0x13c] sm:$0x1] %vm2549, %v4618
      %4870 = vst.msk [vmem:[%s190 + $0x144] sm:$0x1] %vm2549, %v4642
      %4871 = vst.msk [vmem:[%s190 + $0x14c] sm:$0x1] %vm2549, %v4656
      %4872 = vst.msk [vmem:[%s190 + $0x154] sm:$0x1] %vm2549, %v4664
      %4873 = vst.msk [vmem:[%s190 + $0x15c] sm:$0x1] %vm2549, %v4666
      %4874 = vst.msk [vmem:[%s190 + $0x164] sm:$0x1] %vm2549, %v4649
      %4875 = vst.msk [vmem:[%s190 + $0x16c] sm:$0x1] %vm2549, %v4663
      %4876 = vst.msk [vmem:[%s190 + $0x174] sm:$0x1] %vm2549, %v4665
      %4877 = vst.msk [vmem:[%s190 + $0x17c] sm:$0x1] %vm2549, %v4667
      %4878 = vst.msk [vmem:[%s190 + $0x184] sm:$0x1] %vm2549, %v4691
      %4879 = vst.msk [vmem:[%s190 + $0x18c] sm:$0x1] %vm2549, %v4705
      %4880 = vst.msk [vmem:[%s190 + $0x194] sm:$0x1] %vm2549, %v4713
      %4881 = vst.msk [vmem:[%s190 + $0x19c] sm:$0x1] %vm2549, %v4715
      %4882 = vst.msk [vmem:[%s190 + $0x1a4] sm:$0x1] %vm2549, %v4698
      %4883 = vst.msk [vmem:[%s190 + $0x1ac] sm:$0x1] %vm2549, %v4712
      %4884 = vst.msk [vmem:[%s190 + $0x1b4] sm:$0x1] %vm2549, %v4714
      %4885 = vst.msk [vmem:[%s190 + $0x1bc] sm:$0x1] %vm2549, %v4716
      %4886 = vst.msk [vmem:[%s190 + $0x1c4] sm:$0x1] %vm2549, %v4740
      %4887 = vst.msk [vmem:[%s190 + $0x1cc] sm:$0x1] %vm2549, %v4754
      %4888 = vst.msk [vmem:[%s190 + $0x1d4] sm:$0x1] %vm2549, %v4762
      %4889 = vst.msk [vmem:[%s190 + $0x1dc] sm:$0x1] %vm2549, %v4764
      %4890 = vst.msk [vmem:[%s190 + $0x1e4] sm:$0x1] %vm2549, %v4747
      %4891 = vst.msk [vmem:[%s190 + $0x1ec] sm:$0x1] %vm2549, %v4761
      %4892 = vst.msk [vmem:[%s190 + $0x1f4] sm:$0x1] %vm2549, %v4763
      %4893 = vst.msk [vmem:[%s190 + $0x1fc] sm:$0x1] %vm2549, %v4765
      %v4894 = vld [vmem:[%s4349] sm:$0xff]
      %v4895 = vld [vmem:[%s4349 + $0x8] sm:$0xff]
      %v4896 = vld [vmem:[%s4349 + $0x10] sm:$0xff]
      %v4897 = vld [vmem:[%s4349 + $0x18] sm:$0xff]
      %v4898 = vld [vmem:[%s4349 + $0x20] sm:$0xff]
      %v4899 = vld [vmem:[%s4349 + $0x28] sm:$0xff]
      %v4900 = vld [vmem:[%s4349 + $0x30] sm:$0xff]
      %v4901 = vld [vmem:[%s4349 + $0x38] sm:$0xff]
      %s4902 = scalar_lea.vmem [#allocation4], 704
      %v4903 = vld [vmem:[%s4902] sm:$0xff]
      %v4904 = vld [vmem:[%s4902 + $0x8] sm:$0xff]
      %v4905 = vld [vmem:[%s4902 + $0x10] sm:$0xff]
      %v4906 = vld [vmem:[%s4902 + $0x18] sm:$0xff]
      %v4907 = vld [vmem:[%s4902 + $0x20] sm:$0xff]
      %v4908 = vld [vmem:[%s4902 + $0x28] sm:$0xff]
      %v4909 = vld [vmem:[%s4902 + $0x30] sm:$0xff]
      %v4910 = vld [vmem:[%s4902 + $0x38] sm:$0xff]
      %v4911 = vmax.f32 %v4894, %v4903
      %v4912 = vmax.f32 %v4895, %v4904
      %v4913 = vmax.f32 %v4896, %v4905
      %v4914 = vmax.f32 %v4897, %v4906
      %v4915 = vmax.f32 %v4898, %v4907
      %v4916 = vmax.f32 %v4899, %v4908
      %v4917 = vmax.f32 %v4900, %v4909
      %v4918 = vmax.f32 %v4901, %v4910
      %s4919 = scalar_lea.vmem [#allocation4], 768
      %v4920 = vld [vmem:[%s4919] sm:$0xff]
      %v4921 = vld [vmem:[%s4919 + $0x8] sm:$0xff]
      %v4922 = vld [vmem:[%s4919 + $0x10] sm:$0xff]
      %v4923 = vld [vmem:[%s4919 + $0x18] sm:$0xff]
      %v4924 = vld [vmem:[%s4919 + $0x20] sm:$0xff]
      %v4925 = vld [vmem:[%s4919 + $0x28] sm:$0xff]
      %v4926 = vld [vmem:[%s4919 + $0x30] sm:$0xff]
      %v4927 = vld [vmem:[%s4919 + $0x38] sm:$0xff]
      %v4928 = vmax.f32 %v4911, %v4920
      %v4929 = vmax.f32 %v4912, %v4921
      %v4930 = vmax.f32 %v4913, %v4922
      %v4931 = vmax.f32 %v4914, %v4923
      %v4932 = vmax.f32 %v4915, %v4924
      %v4933 = vmax.f32 %v4916, %v4925
      %v4934 = vmax.f32 %v4917, %v4926
      %v4935 = vmax.f32 %v4918, %v4927
      %v4944 = vcombine.high %v4928, %v4928
      %v4946 = vunpack.c.l.s4 1966171168
      %v4947 = vunpack.c.0.s8 %v4946
      %v4948 = vlaneseq
      %v4949 = vshrl.u32 %v4948, 7
      %v4950 = vsub.s32 %v4947, %v4949
      %v4951 = vrot.slane %v4928, %v4950
      %v4953 = vunpack.c.l.s4 1966171168
      %v4954 = vunpack.c.0.s8 %v4953
      %v4955 = vlaneseq
      %v4956 = vshrl.u32 %v4955, 7
      %v4957 = vsub.s32 %v4954, %v4956
      %v4958 = vrot.slane %v4944, %v4957
      %v4959 = vcombine.high %v4951, %v4951
      %v4960 = vcombine.high %v4958, %v4958
      %v4962 = vunpack.c.l.s4 1966171168
      %v4963 = vunpack.c.0.s8 %v4962
      %v4964 = vlaneseq
      %v4965 = vshrl.u32 %v4964, 7
      %v4966 = vsub.s32 %v4963, %v4965
      %v4967 = vrot.slane %v4951, %v4966
      %v4969 = vunpack.c.l.s4 1966171168
      %v4970 = vunpack.c.0.s8 %v4969
      %v4971 = vlaneseq
      %v4972 = vshrl.u32 %v4971, 7
      %v4973 = vsub.s32 %v4970, %v4972
      %v4974 = vrot.slane %v4958, %v4973
      %v4976 = vunpack.c.l.s4 1966171168
      %v4977 = vunpack.c.0.s8 %v4976
      %v4978 = vlaneseq
      %v4979 = vshrl.u32 %v4978, 7
      %v4980 = vsub.s32 %v4977, %v4979
      %v4981 = vrot.slane %v4959, %v4980
      %v4983 = vunpack.c.l.s4 1966171168
      %v4984 = vunpack.c.0.s8 %v4983
      %v4985 = vlaneseq
      %v4986 = vshrl.u32 %v4985, 7
      %v4987 = vsub.s32 %v4984, %v4986
      %v4988 = vrot.slane %v4960, %v4987
      %v4989 = vcombine.high %v4967, %v4967
      %v4990 = vcombine.high %v4974, %v4974
      %v4991 = vcombine.high %v4981, %v4981
      %v4992 = vcombine.high %v4988, %v4988
      %v4993 = vcombine.high %v4929, %v4929
      %v4995 = vunpack.c.l.s4 1966171168
      %v4996 = vunpack.c.0.s8 %v4995
      %v4997 = vlaneseq
      %v4998 = vshrl.u32 %v4997, 7
      %v4999 = vsub.s32 %v4996, %v4998
      %v5000 = vrot.slane %v4929, %v4999
      %v5002 = vunpack.c.l.s4 1966171168
      %v5003 = vunpack.c.0.s8 %v5002
      %v5004 = vlaneseq
      %v5005 = vshrl.u32 %v5004, 7
      %v5006 = vsub.s32 %v5003, %v5005
      %v5007 = vrot.slane %v4993, %v5006
      %v5008 = vcombine.high %v5000, %v5000
      %v5009 = vcombine.high %v5007, %v5007
      %v5011 = vunpack.c.l.s4 1966171168
      %v5012 = vunpack.c.0.s8 %v5011
      %v5013 = vlaneseq
      %v5014 = vshrl.u32 %v5013, 7
      %v5015 = vsub.s32 %v5012, %v5014
      %v5016 = vrot.slane %v5000, %v5015
      %v5018 = vunpack.c.l.s4 1966171168
      %v5019 = vunpack.c.0.s8 %v5018
      %v5020 = vlaneseq
      %v5021 = vshrl.u32 %v5020, 7
      %v5022 = vsub.s32 %v5019, %v5021
      %v5023 = vrot.slane %v5007, %v5022
      %v5025 = vunpack.c.l.s4 1966171168
      %v5026 = vunpack.c.0.s8 %v5025
      %v5027 = vlaneseq
      %v5028 = vshrl.u32 %v5027, 7
      %v5029 = vsub.s32 %v5026, %v5028
      %v5030 = vrot.slane %v5008, %v5029
      %v5032 = vunpack.c.l.s4 1966171168
      %v5033 = vunpack.c.0.s8 %v5032
      %v5034 = vlaneseq
      %v5035 = vshrl.u32 %v5034, 7
      %v5036 = vsub.s32 %v5033, %v5035
      %v5037 = vrot.slane %v5009, %v5036
      %v5038 = vcombine.high %v5016, %v5016
      %v5039 = vcombine.high %v5023, %v5023
      %v5040 = vcombine.high %v5030, %v5030
      %v5041 = vcombine.high %v5037, %v5037
      %v5042 = vcombine.high %v4930, %v4930
      %v5044 = vunpack.c.l.s4 1966171168
      %v5045 = vunpack.c.0.s8 %v5044
      %v5046 = vlaneseq
      %v5047 = vshrl.u32 %v5046, 7
      %v5048 = vsub.s32 %v5045, %v5047
      %v5049 = vrot.slane %v4930, %v5048
      %v5051 = vunpack.c.l.s4 1966171168
      %v5052 = vunpack.c.0.s8 %v5051
      %v5053 = vlaneseq
      %v5054 = vshrl.u32 %v5053, 7
      %v5055 = vsub.s32 %v5052, %v5054
      %v5056 = vrot.slane %v5042, %v5055
      %v5057 = vcombine.high %v5049, %v5049
      %v5058 = vcombine.high %v5056, %v5056
      %v5060 = vunpack.c.l.s4 1966171168
      %v5061 = vunpack.c.0.s8 %v5060
      %v5062 = vlaneseq
      %v5063 = vshrl.u32 %v5062, 7
      %v5064 = vsub.s32 %v5061, %v5063
      %v5065 = vrot.slane %v5049, %v5064
      %v5067 = vunpack.c.l.s4 1966171168
      %v5068 = vunpack.c.0.s8 %v5067
      %v5069 = vlaneseq
      %v5070 = vshrl.u32 %v5069, 7
      %v5071 = vsub.s32 %v5068, %v5070
      %v5072 = vrot.slane %v5056, %v5071
      %v5074 = vunpack.c.l.s4 1966171168
      %v5075 = vunpack.c.0.s8 %v5074
      %v5076 = vlaneseq
      %v5077 = vshrl.u32 %v5076, 7
      %v5078 = vsub.s32 %v5075, %v5077
      %v5079 = vrot.slane %v5057, %v5078
      %v5081 = vunpack.c.l.s4 1966171168
      %v5082 = vunpack.c.0.s8 %v5081
      %v5083 = vlaneseq
      %v5084 = vshrl.u32 %v5083, 7
      %v5085 = vsub.s32 %v5082, %v5084
      %v5086 = vrot.slane %v5058, %v5085
      %v5087 = vcombine.high %v5065, %v5065
      %v5088 = vcombine.high %v5072, %v5072
      %v5089 = vcombine.high %v5079, %v5079
      %v5090 = vcombine.high %v5086, %v5086
      %v5091 = vcombine.high %v4931, %v4931
      %v5093 = vunpack.c.l.s4 1966171168
      %v5094 = vunpack.c.0.s8 %v5093
      %v5095 = vlaneseq
      %v5096 = vshrl.u32 %v5095, 7
      %v5097 = vsub.s32 %v5094, %v5096
      %v5098 = vrot.slane %v4931, %v5097
      %v5100 = vunpack.c.l.s4 1966171168
      %v5101 = vunpack.c.0.s8 %v5100
      %v5102 = vlaneseq
      %v5103 = vshrl.u32 %v5102, 7
      %v5104 = vsub.s32 %v5101, %v5103
      %v5105 = vrot.slane %v5091, %v5104
      %v5106 = vcombine.high %v5098, %v5098
      %v5107 = vcombine.high %v5105, %v5105
      %v5109 = vunpack.c.l.s4 1966171168
      %v5110 = vunpack.c.0.s8 %v5109
      %v5111 = vlaneseq
      %v5112 = vshrl.u32 %v5111, 7
      %v5113 = vsub.s32 %v5110, %v5112
      %v5114 = vrot.slane %v5098, %v5113
      %v5116 = vunpack.c.l.s4 1966171168
      %v5117 = vunpack.c.0.s8 %v5116
      %v5118 = vlaneseq
      %v5119 = vshrl.u32 %v5118, 7
      %v5120 = vsub.s32 %v5117, %v5119
      %v5121 = vrot.slane %v5105, %v5120
      %v5123 = vunpack.c.l.s4 1966171168
      %v5124 = vunpack.c.0.s8 %v5123
      %v5125 = vlaneseq
      %v5126 = vshrl.u32 %v5125, 7
      %v5127 = vsub.s32 %v5124, %v5126
      %v5128 = vrot.slane %v5106, %v5127
      %v5130 = vunpack.c.l.s4 1966171168
      %v5131 = vunpack.c.0.s8 %v5130
      %v5132 = vlaneseq
      %v5133 = vshrl.u32 %v5132, 7
      %v5134 = vsub.s32 %v5131, %v5133
      %v5135 = vrot.slane %v5107, %v5134
      %v5136 = vcombine.high %v5114, %v5114
      %v5137 = vcombine.high %v5121, %v5121
      %v5138 = vcombine.high %v5128, %v5128
      %v5139 = vcombine.high %v5135, %v5135
      %v5140 = vcombine.high %v4932, %v4932
      %v5142 = vunpack.c.l.s4 1966171168
      %v5143 = vunpack.c.0.s8 %v5142
      %v5144 = vlaneseq
      %v5145 = vshrl.u32 %v5144, 7
      %v5146 = vsub.s32 %v5143, %v5145
      %v5147 = vrot.slane %v4932, %v5146
      %v5149 = vunpack.c.l.s4 1966171168
      %v5150 = vunpack.c.0.s8 %v5149
      %v5151 = vlaneseq
      %v5152 = vshrl.u32 %v5151, 7
      %v5153 = vsub.s32 %v5150, %v5152
      %v5154 = vrot.slane %v5140, %v5153
      %v5155 = vcombine.high %v5147, %v5147
      %v5156 = vcombine.high %v5154, %v5154
      %v5158 = vunpack.c.l.s4 1966171168
      %v5159 = vunpack.c.0.s8 %v5158
      %v5160 = vlaneseq
      %v5161 = vshrl.u32 %v5160, 7
      %v5162 = vsub.s32 %v5159, %v5161
      %v5163 = vrot.slane %v5147, %v5162
      %v5165 = vunpack.c.l.s4 1966171168
      %v5166 = vunpack.c.0.s8 %v5165
      %v5167 = vlaneseq
      %v5168 = vshrl.u32 %v5167, 7
      %v5169 = vsub.s32 %v5166, %v5168
      %v5170 = vrot.slane %v5154, %v5169
      %v5172 = vunpack.c.l.s4 1966171168
      %v5173 = vunpack.c.0.s8 %v5172
      %v5174 = vlaneseq
      %v5175 = vshrl.u32 %v5174, 7
      %v5176 = vsub.s32 %v5173, %v5175
      %v5177 = vrot.slane %v5155, %v5176
      %v5179 = vunpack.c.l.s4 1966171168
      %v5180 = vunpack.c.0.s8 %v5179
      %v5181 = vlaneseq
      %v5182 = vshrl.u32 %v5181, 7
      %v5183 = vsub.s32 %v5180, %v5182
      %v5184 = vrot.slane %v5156, %v5183
      %v5185 = vcombine.high %v5163, %v5163
      %v5186 = vcombine.high %v5170, %v5170
      %v5187 = vcombine.high %v5177, %v5177
      %v5188 = vcombine.high %v5184, %v5184
      %v5189 = vcombine.high %v4933, %v4933
      %v5191 = vunpack.c.l.s4 1966171168
      %v5192 = vunpack.c.0.s8 %v5191
      %v5193 = vlaneseq
      %v5194 = vshrl.u32 %v5193, 7
      %v5195 = vsub.s32 %v5192, %v5194
      %v5196 = vrot.slane %v4933, %v5195
      %v5198 = vunpack.c.l.s4 1966171168
      %v5199 = vunpack.c.0.s8 %v5198
      %v5200 = vlaneseq
      %v5201 = vshrl.u32 %v5200, 7
      %v5202 = vsub.s32 %v5199, %v5201
      %v5203 = vrot.slane %v5189, %v5202
      %v5204 = vcombine.high %v5196, %v5196
      %v5205 = vcombine.high %v5203, %v5203
      %v5207 = vunpack.c.l.s4 1966171168
      %v5208 = vunpack.c.0.s8 %v5207
      %v5209 = vlaneseq
      %v5210 = vshrl.u32 %v5209, 7
      %v5211 = vsub.s32 %v5208, %v5210
      %v5212 = vrot.slane %v5196, %v5211
      %v5214 = vunpack.c.l.s4 1966171168
      %v5215 = vunpack.c.0.s8 %v5214
      %v5216 = vlaneseq
      %v5217 = vshrl.u32 %v5216, 7
      %v5218 = vsub.s32 %v5215, %v5217
      %v5219 = vrot.slane %v5203, %v5218
      %v5221 = vunpack.c.l.s4 1966171168
      %v5222 = vunpack.c.0.s8 %v5221
      %v5223 = vlaneseq
      %v5224 = vshrl.u32 %v5223, 7
      %v5225 = vsub.s32 %v5222, %v5224
      %v5226 = vrot.slane %v5204, %v5225
      %v5228 = vunpack.c.l.s4 1966171168
      %v5229 = vunpack.c.0.s8 %v5228
      %v5230 = vlaneseq
      %v5231 = vshrl.u32 %v5230, 7
      %v5232 = vsub.s32 %v5229, %v5231
      %v5233 = vrot.slane %v5205, %v5232
      %v5234 = vcombine.high %v5212, %v5212
      %v5235 = vcombine.high %v5219, %v5219
      %v5236 = vcombine.high %v5226, %v5226
      %v5237 = vcombine.high %v5233, %v5233
      %v5238 = vcombine.high %v4934, %v4934
      %v5240 = vunpack.c.l.s4 1966171168
      %v5241 = vunpack.c.0.s8 %v5240
      %v5242 = vlaneseq
      %v5243 = vshrl.u32 %v5242, 7
      %v5244 = vsub.s32 %v5241, %v5243
      %v5245 = vrot.slane %v4934, %v5244
      %v5247 = vunpack.c.l.s4 1966171168
      %v5248 = vunpack.c.0.s8 %v5247
      %v5249 = vlaneseq
      %v5250 = vshrl.u32 %v5249, 7
      %v5251 = vsub.s32 %v5248, %v5250
      %v5252 = vrot.slane %v5238, %v5251
      %v5253 = vcombine.high %v5245, %v5245
      %v5254 = vcombine.high %v5252, %v5252
      %v5256 = vunpack.c.l.s4 1966171168
      %v5257 = vunpack.c.0.s8 %v5256
      %v5258 = vlaneseq
      %v5259 = vshrl.u32 %v5258, 7
      %v5260 = vsub.s32 %v5257, %v5259
      %v5261 = vrot.slane %v5245, %v5260
      %v5263 = vunpack.c.l.s4 1966171168
      %v5264 = vunpack.c.0.s8 %v5263
      %v5265 = vlaneseq
      %v5266 = vshrl.u32 %v5265, 7
      %v5267 = vsub.s32 %v5264, %v5266
      %v5268 = vrot.slane %v5252, %v5267
      %v5270 = vunpack.c.l.s4 1966171168
      %v5271 = vunpack.c.0.s8 %v5270
      %v5272 = vlaneseq
      %v5273 = vshrl.u32 %v5272, 7
      %v5274 = vsub.s32 %v5271, %v5273
      %v5275 = vrot.slane %v5253, %v5274
      %v5277 = vunpack.c.l.s4 1966171168
      %v5278 = vunpack.c.0.s8 %v5277
      %v5279 = vlaneseq
      %v5280 = vshrl.u32 %v5279, 7
      %v5281 = vsub.s32 %v5278, %v5280
      %v5282 = vrot.slane %v5254, %v5281
      %v5283 = vcombine.high %v5261, %v5261
      %v5284 = vcombine.high %v5268, %v5268
      %v5285 = vcombine.high %v5275, %v5275
      %v5286 = vcombine.high %v5282, %v5282
      %v5287 = vcombine.high %v4935, %v4935
      %v5289 = vunpack.c.l.s4 1966171168
      %v5290 = vunpack.c.0.s8 %v5289
      %v5291 = vlaneseq
      %v5292 = vshrl.u32 %v5291, 7
      %v5293 = vsub.s32 %v5290, %v5292
      %v5294 = vrot.slane %v4935, %v5293
      %v5296 = vunpack.c.l.s4 1966171168
      %v5297 = vunpack.c.0.s8 %v5296
      %v5298 = vlaneseq
      %v5299 = vshrl.u32 %v5298, 7
      %v5300 = vsub.s32 %v5297, %v5299
      %v5301 = vrot.slane %v5287, %v5300
      %v5302 = vcombine.high %v5294, %v5294
      %v5303 = vcombine.high %v5301, %v5301
      %v5305 = vunpack.c.l.s4 1966171168
      %v5306 = vunpack.c.0.s8 %v5305
      %v5307 = vlaneseq
      %v5308 = vshrl.u32 %v5307, 7
      %v5309 = vsub.s32 %v5306, %v5308
      %v5310 = vrot.slane %v5294, %v5309
      %v5312 = vunpack.c.l.s4 1966171168
      %v5313 = vunpack.c.0.s8 %v5312
      %v5314 = vlaneseq
      %v5315 = vshrl.u32 %v5314, 7
      %v5316 = vsub.s32 %v5313, %v5315
      %v5317 = vrot.slane %v5301, %v5316
      %v5319 = vunpack.c.l.s4 1966171168
      %v5320 = vunpack.c.0.s8 %v5319
      %v5321 = vlaneseq
      %v5322 = vshrl.u32 %v5321, 7
      %v5323 = vsub.s32 %v5320, %v5322
      %v5324 = vrot.slane %v5302, %v5323
      %v5326 = vunpack.c.l.s4 1966171168
      %v5327 = vunpack.c.0.s8 %v5326
      %v5328 = vlaneseq
      %v5329 = vshrl.u32 %v5328, 7
      %v5330 = vsub.s32 %v5327, %v5329
      %v5331 = vrot.slane %v5303, %v5330
      %v5332 = vcombine.high %v5310, %v5310
      %v5333 = vcombine.high %v5317, %v5317
      %v5334 = vcombine.high %v5324, %v5324
      %v5335 = vcombine.high %v5331, %v5331
      %5400 = vst.msk [vmem:[%s190 + $0x5] sm:$0x1] %vm2549, %v4967
      %5401 = vst.msk [vmem:[%s190 + $0xd] sm:$0x1] %vm2549, %v4981
      %5402 = vst.msk [vmem:[%s190 + $0x15] sm:$0x1] %vm2549, %v4989
      %5403 = vst.msk [vmem:[%s190 + $0x1d] sm:$0x1] %vm2549, %v4991
      %5404 = vst.msk [vmem:[%s190 + $0x25] sm:$0x1] %vm2549, %v4974
      %5405 = vst.msk [vmem:[%s190 + $0x2d] sm:$0x1] %vm2549, %v4988
      %5406 = vst.msk [vmem:[%s190 + $0x35] sm:$0x1] %vm2549, %v4990
      %5407 = vst.msk [vmem:[%s190 + $0x3d] sm:$0x1] %vm2549, %v4992
      %5408 = vst.msk [vmem:[%s190 + $0x45] sm:$0x1] %vm2549, %v5016
      %5409 = vst.msk [vmem:[%s190 + $0x4d] sm:$0x1] %vm2549, %v5030
      %5410 = vst.msk [vmem:[%s190 + $0x55] sm:$0x1] %vm2549, %v5038
      %5411 = vst.msk [vmem:[%s190 + $0x5d] sm:$0x1] %vm2549, %v5040
      %5412 = vst.msk [vmem:[%s190 + $0x65] sm:$0x1] %vm2549, %v5023
      %5413 = vst.msk [vmem:[%s190 + $0x6d] sm:$0x1] %vm2549, %v5037
      %5414 = vst.msk [vmem:[%s190 + $0x75] sm:$0x1] %vm2549, %v5039
      %5415 = vst.msk [vmem:[%s190 + $0x7d] sm:$0x1] %vm2549, %v5041
      %5416 = vst.msk [vmem:[%s190 + $0x85] sm:$0x1] %vm2549, %v5065
      %5417 = vst.msk [vmem:[%s190 + $0x8d] sm:$0x1] %vm2549, %v5079
      %5418 = vst.msk [vmem:[%s190 + $0x95] sm:$0x1] %vm2549, %v5087
      %5419 = vst.msk [vmem:[%s190 + $0x9d] sm:$0x1] %vm2549, %v5089
      %5420 = vst.msk [vmem:[%s190 + $0xa5] sm:$0x1] %vm2549, %v5072
      %5421 = vst.msk [vmem:[%s190 + $0xad] sm:$0x1] %vm2549, %v5086
      %5422 = vst.msk [vmem:[%s190 + $0xb5] sm:$0x1] %vm2549, %v5088
      %5423 = vst.msk [vmem:[%s190 + $0xbd] sm:$0x1] %vm2549, %v5090
      %5424 = vst.msk [vmem:[%s190 + $0xc5] sm:$0x1] %vm2549, %v5114
      %5425 = vst.msk [vmem:[%s190 + $0xcd] sm:$0x1] %vm2549, %v5128
      %5426 = vst.msk [vmem:[%s190 + $0xd5] sm:$0x1] %vm2549, %v5136
      %5427 = vst.msk [vmem:[%s190 + $0xdd] sm:$0x1] %vm2549, %v5138
      %5428 = vst.msk [vmem:[%s190 + $0xe5] sm:$0x1] %vm2549, %v5121
      %5429 = vst.msk [vmem:[%s190 + $0xed] sm:$0x1] %vm2549, %v5135
      %5430 = vst.msk [vmem:[%s190 + $0xf5] sm:$0x1] %vm2549, %v5137
      %5431 = vst.msk [vmem:[%s190 + $0xfd] sm:$0x1] %vm2549, %v5139
      %5432 = vst.msk [vmem:[%s190 + $0x105] sm:$0x1] %vm2549, %v5163
      %5433 = vst.msk [vmem:[%s190 + $0x10d] sm:$0x1] %vm2549, %v5177
      %5434 = vst.msk [vmem:[%s190 + $0x115] sm:$0x1] %vm2549, %v5185
      %5435 = vst.msk [vmem:[%s190 + $0x11d] sm:$0x1] %vm2549, %v5187
      %5436 = vst.msk [vmem:[%s190 + $0x125] sm:$0x1] %vm2549, %v5170
      %5437 = vst.msk [vmem:[%s190 + $0x12d] sm:$0x1] %vm2549, %v5184
      %5438 = vst.msk [vmem:[%s190 + $0x135] sm:$0x1] %vm2549, %v5186
      %5439 = vst.msk [vmem:[%s190 + $0x13d] sm:$0x1] %vm2549, %v5188
      %5440 = vst.msk [vmem:[%s190 + $0x145] sm:$0x1] %vm2549, %v5212
      %5441 = vst.msk [vmem:[%s190 + $0x14d] sm:$0x1] %vm2549, %v5226
      %5442 = vst.msk [vmem:[%s190 + $0x155] sm:$0x1] %vm2549, %v5234
      %5443 = vst.msk [vmem:[%s190 + $0x15d] sm:$0x1] %vm2549, %v5236
      %5444 = vst.msk [vmem:[%s190 + $0x165] sm:$0x1] %vm2549, %v5219
      %5445 = vst.msk [vmem:[%s190 + $0x16d] sm:$0x1] %vm2549, %v5233
      %5446 = vst.msk [vmem:[%s190 + $0x175] sm:$0x1] %vm2549, %v5235
      %5447 = vst.msk [vmem:[%s190 + $0x17d] sm:$0x1] %vm2549, %v5237
      %5448 = vst.msk [vmem:[%s190 + $0x185] sm:$0x1] %vm2549, %v5261
      %5449 = vst.msk [vmem:[%s190 + $0x18d] sm:$0x1] %vm2549, %v5275
      %5450 = vst.msk [vmem:[%s190 + $0x195] sm:$0x1] %vm2549, %v5283
      %5451 = vst.msk [vmem:[%s190 + $0x19d] sm:$0x1] %vm2549, %v5285
      %5452 = vst.msk [vmem:[%s190 + $0x1a5] sm:$0x1] %vm2549, %v5268
      %5453 = vst.msk [vmem:[%s190 + $0x1ad] sm:$0x1] %vm2549, %v5282
      %5454 = vst.msk [vmem:[%s190 + $0x1b5] sm:$0x1] %vm2549, %v5284
      %5455 = vst.msk [vmem:[%s190 + $0x1bd] sm:$0x1] %vm2549, %v5286
      %5456 = vst.msk [vmem:[%s190 + $0x1c5] sm:$0x1] %vm2549, %v5310
      %5457 = vst.msk [vmem:[%s190 + $0x1cd] sm:$0x1] %vm2549, %v5324
      %5458 = vst.msk [vmem:[%s190 + $0x1d5] sm:$0x1] %vm2549, %v5332
      %5459 = vst.msk [vmem:[%s190 + $0x1dd] sm:$0x1] %vm2549, %v5334
      %5460 = vst.msk [vmem:[%s190 + $0x1e5] sm:$0x1] %vm2549, %v5317
      %5461 = vst.msk [vmem:[%s190 + $0x1ed] sm:$0x1] %vm2549, %v5331
      %5462 = vst.msk [vmem:[%s190 + $0x1f5] sm:$0x1] %vm2549, %v5333
      %5463 = vst.msk [vmem:[%s190 + $0x1fd] sm:$0x1] %vm2549, %v5335
      %v5464 = vld [vmem:[%s4919] sm:$0xff]
      %v5465 = vld [vmem:[%s4919 + $0x8] sm:$0xff]
      %v5466 = vld [vmem:[%s4919 + $0x10] sm:$0xff]
      %v5467 = vld [vmem:[%s4919 + $0x18] sm:$0xff]
      %v5468 = vld [vmem:[%s4919 + $0x20] sm:$0xff]
      %v5469 = vld [vmem:[%s4919 + $0x28] sm:$0xff]
      %v5470 = vld [vmem:[%s4919 + $0x30] sm:$0xff]
      %v5471 = vld [vmem:[%s4919 + $0x38] sm:$0xff]
      %s5472 = scalar_lea.vmem [#allocation4], 832
      %v5473 = vld [vmem:[%s5472] sm:$0xff]
      %v5474 = vld [vmem:[%s5472 + $0x8] sm:$0xff]
      %v5475 = vld [vmem:[%s5472 + $0x10] sm:$0xff]
      %v5476 = vld [vmem:[%s5472 + $0x18] sm:$0xff]
      %v5477 = vld [vmem:[%s5472 + $0x20] sm:$0xff]
      %v5478 = vld [vmem:[%s5472 + $0x28] sm:$0xff]
      %v5479 = vld [vmem:[%s5472 + $0x30] sm:$0xff]
      %v5480 = vld [vmem:[%s5472 + $0x38] sm:$0xff]
      %v5481 = vmax.f32 %v5464, %v5473
      %v5482 = vmax.f32 %v5465, %v5474
      %v5483 = vmax.f32 %v5466, %v5475
      %v5484 = vmax.f32 %v5467, %v5476
      %v5485 = vmax.f32 %v5468, %v5477
      %v5486 = vmax.f32 %v5469, %v5478
      %v5487 = vmax.f32 %v5470, %v5479
      %v5488 = vmax.f32 %v5471, %v5480
      %s5489 = scalar_lea.vmem [#allocation4], 896
      %v5490 = vld [vmem:[%s5489] sm:$0xff]
      %v5491 = vld [vmem:[%s5489 + $0x8] sm:$0xff]
      %v5492 = vld [vmem:[%s5489 + $0x10] sm:$0xff]
      %v5493 = vld [vmem:[%s5489 + $0x18] sm:$0xff]
      %v5494 = vld [vmem:[%s5489 + $0x20] sm:$0xff]
      %v5495 = vld [vmem:[%s5489 + $0x28] sm:$0xff]
      %v5496 = vld [vmem:[%s5489 + $0x30] sm:$0xff]
      %v5497 = vld [vmem:[%s5489 + $0x38] sm:$0xff]
      %v5498 = vmax.f32 %v5481, %v5490
      %v5499 = vmax.f32 %v5482, %v5491
      %v5500 = vmax.f32 %v5483, %v5492
      %v5501 = vmax.f32 %v5484, %v5493
      %v5502 = vmax.f32 %v5485, %v5494
      %v5503 = vmax.f32 %v5486, %v5495
      %v5504 = vmax.f32 %v5487, %v5496
      %v5505 = vmax.f32 %v5488, %v5497
      %v5514 = vcombine.high %v5498, %v5498
      %v5516 = vunpack.c.l.s4 1966171168
      %v5517 = vunpack.c.0.s8 %v5516
      %v5518 = vlaneseq
      %v5519 = vshrl.u32 %v5518, 7
      %v5520 = vsub.s32 %v5517, %v5519
      %v5521 = vrot.slane %v5498, %v5520
      %v5523 = vunpack.c.l.s4 1966171168
      %v5524 = vunpack.c.0.s8 %v5523
      %v5525 = vlaneseq
      %v5526 = vshrl.u32 %v5525, 7
      %v5527 = vsub.s32 %v5524, %v5526
      %v5528 = vrot.slane %v5514, %v5527
      %v5529 = vcombine.high %v5521, %v5521
      %v5530 = vcombine.high %v5528, %v5528
      %v5532 = vunpack.c.l.s4 1966171168
      %v5533 = vunpack.c.0.s8 %v5532
      %v5534 = vlaneseq
      %v5535 = vshrl.u32 %v5534, 7
      %v5536 = vsub.s32 %v5533, %v5535
      %v5537 = vrot.slane %v5521, %v5536
      %v5539 = vunpack.c.l.s4 1966171168
      %v5540 = vunpack.c.0.s8 %v5539
      %v5541 = vlaneseq
      %v5542 = vshrl.u32 %v5541, 7
      %v5543 = vsub.s32 %v5540, %v5542
      %v5544 = vrot.slane %v5528, %v5543
      %v5546 = vunpack.c.l.s4 1966171168
      %v5547 = vunpack.c.0.s8 %v5546
      %v5548 = vlaneseq
      %v5549 = vshrl.u32 %v5548, 7
      %v5550 = vsub.s32 %v5547, %v5549
      %v5551 = vrot.slane %v5529, %v5550
      %v5553 = vunpack.c.l.s4 1966171168
      %v5554 = vunpack.c.0.s8 %v5553
      %v5555 = vlaneseq
      %v5556 = vshrl.u32 %v5555, 7
      %v5557 = vsub.s32 %v5554, %v5556
      %v5558 = vrot.slane %v5530, %v5557
      %v5559 = vcombine.high %v5537, %v5537
      %v5560 = vcombine.high %v5544, %v5544
      %v5561 = vcombine.high %v5551, %v5551
      %v5562 = vcombine.high %v5558, %v5558
      %v5563 = vcombine.high %v5499, %v5499
      %v5565 = vunpack.c.l.s4 1966171168
      %v5566 = vunpack.c.0.s8 %v5565
      %v5567 = vlaneseq
      %v5568 = vshrl.u32 %v5567, 7
      %v5569 = vsub.s32 %v5566, %v5568
      %v5570 = vrot.slane %v5499, %v5569
      %v5572 = vunpack.c.l.s4 1966171168
      %v5573 = vunpack.c.0.s8 %v5572
      %v5574 = vlaneseq
      %v5575 = vshrl.u32 %v5574, 7
      %v5576 = vsub.s32 %v5573, %v5575
      %v5577 = vrot.slane %v5563, %v5576
      %v5578 = vcombine.high %v5570, %v5570
      %v5579 = vcombine.high %v5577, %v5577
      %v5581 = vunpack.c.l.s4 1966171168
      %v5582 = vunpack.c.0.s8 %v5581
      %v5583 = vlaneseq
      %v5584 = vshrl.u32 %v5583, 7
      %v5585 = vsub.s32 %v5582, %v5584
      %v5586 = vrot.slane %v5570, %v5585
      %v5588 = vunpack.c.l.s4 1966171168
      %v5589 = vunpack.c.0.s8 %v5588
      %v5590 = vlaneseq
      %v5591 = vshrl.u32 %v5590, 7
      %v5592 = vsub.s32 %v5589, %v5591
      %v5593 = vrot.slane %v5577, %v5592
      %v5595 = vunpack.c.l.s4 1966171168
      %v5596 = vunpack.c.0.s8 %v5595
      %v5597 = vlaneseq
      %v5598 = vshrl.u32 %v5597, 7
      %v5599 = vsub.s32 %v5596, %v5598
      %v5600 = vrot.slane %v5578, %v5599
      %v5602 = vunpack.c.l.s4 1966171168
      %v5603 = vunpack.c.0.s8 %v5602
      %v5604 = vlaneseq
      %v5605 = vshrl.u32 %v5604, 7
      %v5606 = vsub.s32 %v5603, %v5605
      %v5607 = vrot.slane %v5579, %v5606
      %v5608 = vcombine.high %v5586, %v5586
      %v5609 = vcombine.high %v5593, %v5593
      %v5610 = vcombine.high %v5600, %v5600
      %v5611 = vcombine.high %v5607, %v5607
      %v5612 = vcombine.high %v5500, %v5500
      %v5614 = vunpack.c.l.s4 1966171168
      %v5615 = vunpack.c.0.s8 %v5614
      %v5616 = vlaneseq
      %v5617 = vshrl.u32 %v5616, 7
      %v5618 = vsub.s32 %v5615, %v5617
      %v5619 = vrot.slane %v5500, %v5618
      %v5621 = vunpack.c.l.s4 1966171168
      %v5622 = vunpack.c.0.s8 %v5621
      %v5623 = vlaneseq
      %v5624 = vshrl.u32 %v5623, 7
      %v5625 = vsub.s32 %v5622, %v5624
      %v5626 = vrot.slane %v5612, %v5625
      %v5627 = vcombine.high %v5619, %v5619
      %v5628 = vcombine.high %v5626, %v5626
      %v5630 = vunpack.c.l.s4 1966171168
      %v5631 = vunpack.c.0.s8 %v5630
      %v5632 = vlaneseq
      %v5633 = vshrl.u32 %v5632, 7
      %v5634 = vsub.s32 %v5631, %v5633
      %v5635 = vrot.slane %v5619, %v5634
      %v5637 = vunpack.c.l.s4 1966171168
      %v5638 = vunpack.c.0.s8 %v5637
      %v5639 = vlaneseq
      %v5640 = vshrl.u32 %v5639, 7
      %v5641 = vsub.s32 %v5638, %v5640
      %v5642 = vrot.slane %v5626, %v5641
      %v5644 = vunpack.c.l.s4 1966171168
      %v5645 = vunpack.c.0.s8 %v5644
      %v5646 = vlaneseq
      %v5647 = vshrl.u32 %v5646, 7
      %v5648 = vsub.s32 %v5645, %v5647
      %v5649 = vrot.slane %v5627, %v5648
      %v5651 = vunpack.c.l.s4 1966171168
      %v5652 = vunpack.c.0.s8 %v5651
      %v5653 = vlaneseq
      %v5654 = vshrl.u32 %v5653, 7
      %v5655 = vsub.s32 %v5652, %v5654
      %v5656 = vrot.slane %v5628, %v5655
      %v5657 = vcombine.high %v5635, %v5635
      %v5658 = vcombine.high %v5642, %v5642
      %v5659 = vcombine.high %v5649, %v5649
      %v5660 = vcombine.high %v5656, %v5656
      %v5661 = vcombine.high %v5501, %v5501
      %v5663 = vunpack.c.l.s4 1966171168
      %v5664 = vunpack.c.0.s8 %v5663
      %v5665 = vlaneseq
      %v5666 = vshrl.u32 %v5665, 7
      %v5667 = vsub.s32 %v5664, %v5666
      %v5668 = vrot.slane %v5501, %v5667
      %v5670 = vunpack.c.l.s4 1966171168
      %v5671 = vunpack.c.0.s8 %v5670
      %v5672 = vlaneseq
      %v5673 = vshrl.u32 %v5672, 7
      %v5674 = vsub.s32 %v5671, %v5673
      %v5675 = vrot.slane %v5661, %v5674
      %v5676 = vcombine.high %v5668, %v5668
      %v5677 = vcombine.high %v5675, %v5675
      %v5679 = vunpack.c.l.s4 1966171168
      %v5680 = vunpack.c.0.s8 %v5679
      %v5681 = vlaneseq
      %v5682 = vshrl.u32 %v5681, 7
      %v5683 = vsub.s32 %v5680, %v5682
      %v5684 = vrot.slane %v5668, %v5683
      %v5686 = vunpack.c.l.s4 1966171168
      %v5687 = vunpack.c.0.s8 %v5686
      %v5688 = vlaneseq
      %v5689 = vshrl.u32 %v5688, 7
      %v5690 = vsub.s32 %v5687, %v5689
      %v5691 = vrot.slane %v5675, %v5690
      %v5693 = vunpack.c.l.s4 1966171168
      %v5694 = vunpack.c.0.s8 %v5693
      %v5695 = vlaneseq
      %v5696 = vshrl.u32 %v5695, 7
      %v5697 = vsub.s32 %v5694, %v5696
      %v5698 = vrot.slane %v5676, %v5697
      %v5700 = vunpack.c.l.s4 1966171168
      %v5701 = vunpack.c.0.s8 %v5700
      %v5702 = vlaneseq
      %v5703 = vshrl.u32 %v5702, 7
      %v5704 = vsub.s32 %v5701, %v5703
      %v5705 = vrot.slane %v5677, %v5704
      %v5706 = vcombine.high %v5684, %v5684
      %v5707 = vcombine.high %v5691, %v5691
      %v5708 = vcombine.high %v5698, %v5698
      %v5709 = vcombine.high %v5705, %v5705
      %v5710 = vcombine.high %v5502, %v5502
      %v5712 = vunpack.c.l.s4 1966171168
      %v5713 = vunpack.c.0.s8 %v5712
      %v5714 = vlaneseq
      %v5715 = vshrl.u32 %v5714, 7
      %v5716 = vsub.s32 %v5713, %v5715
      %v5717 = vrot.slane %v5502, %v5716
      %v5719 = vunpack.c.l.s4 1966171168
      %v5720 = vunpack.c.0.s8 %v5719
      %v5721 = vlaneseq
      %v5722 = vshrl.u32 %v5721, 7
      %v5723 = vsub.s32 %v5720, %v5722
      %v5724 = vrot.slane %v5710, %v5723
      %v5725 = vcombine.high %v5717, %v5717
      %v5726 = vcombine.high %v5724, %v5724
      %v5728 = vunpack.c.l.s4 1966171168
      %v5729 = vunpack.c.0.s8 %v5728
      %v5730 = vlaneseq
      %v5731 = vshrl.u32 %v5730, 7
      %v5732 = vsub.s32 %v5729, %v5731
      %v5733 = vrot.slane %v5717, %v5732
      %v5735 = vunpack.c.l.s4 1966171168
      %v5736 = vunpack.c.0.s8 %v5735
      %v5737 = vlaneseq
      %v5738 = vshrl.u32 %v5737, 7
      %v5739 = vsub.s32 %v5736, %v5738
      %v5740 = vrot.slane %v5724, %v5739
      %v5742 = vunpack.c.l.s4 1966171168
      %v5743 = vunpack.c.0.s8 %v5742
      %v5744 = vlaneseq
      %v5745 = vshrl.u32 %v5744, 7
      %v5746 = vsub.s32 %v5743, %v5745
      %v5747 = vrot.slane %v5725, %v5746
      %v5749 = vunpack.c.l.s4 1966171168
      %v5750 = vunpack.c.0.s8 %v5749
      %v5751 = vlaneseq
      %v5752 = vshrl.u32 %v5751, 7
      %v5753 = vsub.s32 %v5750, %v5752
      %v5754 = vrot.slane %v5726, %v5753
      %v5755 = vcombine.high %v5733, %v5733
      %v5756 = vcombine.high %v5740, %v5740
      %v5757 = vcombine.high %v5747, %v5747
      %v5758 = vcombine.high %v5754, %v5754
      %v5759 = vcombine.high %v5503, %v5503
      %v5761 = vunpack.c.l.s4 1966171168
      %v5762 = vunpack.c.0.s8 %v5761
      %v5763 = vlaneseq
      %v5764 = vshrl.u32 %v5763, 7
      %v5765 = vsub.s32 %v5762, %v5764
      %v5766 = vrot.slane %v5503, %v5765
      %v5768 = vunpack.c.l.s4 1966171168
      %v5769 = vunpack.c.0.s8 %v5768
      %v5770 = vlaneseq
      %v5771 = vshrl.u32 %v5770, 7
      %v5772 = vsub.s32 %v5769, %v5771
      %v5773 = vrot.slane %v5759, %v5772
      %v5774 = vcombine.high %v5766, %v5766
      %v5775 = vcombine.high %v5773, %v5773
      %v5777 = vunpack.c.l.s4 1966171168
      %v5778 = vunpack.c.0.s8 %v5777
      %v5779 = vlaneseq
      %v5780 = vshrl.u32 %v5779, 7
      %v5781 = vsub.s32 %v5778, %v5780
      %v5782 = vrot.slane %v5766, %v5781
      %v5784 = vunpack.c.l.s4 1966171168
      %v5785 = vunpack.c.0.s8 %v5784
      %v5786 = vlaneseq
      %v5787 = vshrl.u32 %v5786, 7
      %v5788 = vsub.s32 %v5785, %v5787
      %v5789 = vrot.slane %v5773, %v5788
      %v5791 = vunpack.c.l.s4 1966171168
      %v5792 = vunpack.c.0.s8 %v5791
      %v5793 = vlaneseq
      %v5794 = vshrl.u32 %v5793, 7
      %v5795 = vsub.s32 %v5792, %v5794
      %v5796 = vrot.slane %v5774, %v5795
      %v5798 = vunpack.c.l.s4 1966171168
      %v5799 = vunpack.c.0.s8 %v5798
      %v5800 = vlaneseq
      %v5801 = vshrl.u32 %v5800, 7
      %v5802 = vsub.s32 %v5799, %v5801
      %v5803 = vrot.slane %v5775, %v5802
      %v5804 = vcombine.high %v5782, %v5782
      %v5805 = vcombine.high %v5789, %v5789
      %v5806 = vcombine.high %v5796, %v5796
      %v5807 = vcombine.high %v5803, %v5803
      %v5808 = vcombine.high %v5504, %v5504
      %v5810 = vunpack.c.l.s4 1966171168
      %v5811 = vunpack.c.0.s8 %v5810
      %v5812 = vlaneseq
      %v5813 = vshrl.u32 %v5812, 7
      %v5814 = vsub.s32 %v5811, %v5813
      %v5815 = vrot.slane %v5504, %v5814
      %v5817 = vunpack.c.l.s4 1966171168
      %v5818 = vunpack.c.0.s8 %v5817
      %v5819 = vlaneseq
      %v5820 = vshrl.u32 %v5819, 7
      %v5821 = vsub.s32 %v5818, %v5820
      %v5822 = vrot.slane %v5808, %v5821
      %v5823 = vcombine.high %v5815, %v5815
      %v5824 = vcombine.high %v5822, %v5822
      %v5826 = vunpack.c.l.s4 1966171168
      %v5827 = vunpack.c.0.s8 %v5826
      %v5828 = vlaneseq
      %v5829 = vshrl.u32 %v5828, 7
      %v5830 = vsub.s32 %v5827, %v5829
      %v5831 = vrot.slane %v5815, %v5830
      %v5833 = vunpack.c.l.s4 1966171168
      %v5834 = vunpack.c.0.s8 %v5833
      %v5835 = vlaneseq
      %v5836 = vshrl.u32 %v5835, 7
      %v5837 = vsub.s32 %v5834, %v5836
      %v5838 = vrot.slane %v5822, %v5837
      %v5840 = vunpack.c.l.s4 1966171168
      %v5841 = vunpack.c.0.s8 %v5840
      %v5842 = vlaneseq
      %v5843 = vshrl.u32 %v5842, 7
      %v5844 = vsub.s32 %v5841, %v5843
      %v5845 = vrot.slane %v5823, %v5844
      %v5847 = vunpack.c.l.s4 1966171168
      %v5848 = vunpack.c.0.s8 %v5847
      %v5849 = vlaneseq
      %v5850 = vshrl.u32 %v5849, 7
      %v5851 = vsub.s32 %v5848, %v5850
      %v5852 = vrot.slane %v5824, %v5851
      %v5853 = vcombine.high %v5831, %v5831
      %v5854 = vcombine.high %v5838, %v5838
      %v5855 = vcombine.high %v5845, %v5845
      %v5856 = vcombine.high %v5852, %v5852
      %v5857 = vcombine.high %v5505, %v5505
      %v5859 = vunpack.c.l.s4 1966171168
      %v5860 = vunpack.c.0.s8 %v5859
      %v5861 = vlaneseq
      %v5862 = vshrl.u32 %v5861, 7
      %v5863 = vsub.s32 %v5860, %v5862
      %v5864 = vrot.slane %v5505, %v5863
      %v5866 = vunpack.c.l.s4 1966171168
      %v5867 = vunpack.c.0.s8 %v5866
      %v5868 = vlaneseq
      %v5869 = vshrl.u32 %v5868, 7
      %v5870 = vsub.s32 %v5867, %v5869
      %v5871 = vrot.slane %v5857, %v5870
      %v5872 = vcombine.high %v5864, %v5864
      %v5873 = vcombine.high %v5871, %v5871
      %v5875 = vunpack.c.l.s4 1966171168
      %v5876 = vunpack.c.0.s8 %v5875
      %v5877 = vlaneseq
      %v5878 = vshrl.u32 %v5877, 7
      %v5879 = vsub.s32 %v5876, %v5878
      %v5880 = vrot.slane %v5864, %v5879
      %v5882 = vunpack.c.l.s4 1966171168
      %v5883 = vunpack.c.0.s8 %v5882
      %v5884 = vlaneseq
      %v5885 = vshrl.u32 %v5884, 7
      %v5886 = vsub.s32 %v5883, %v5885
      %v5887 = vrot.slane %v5871, %v5886
      %v5889 = vunpack.c.l.s4 1966171168
      %v5890 = vunpack.c.0.s8 %v5889
      %v5891 = vlaneseq
      %v5892 = vshrl.u32 %v5891, 7
      %v5893 = vsub.s32 %v5890, %v5892
      %v5894 = vrot.slane %v5872, %v5893
      %v5896 = vunpack.c.l.s4 1966171168
      %v5897 = vunpack.c.0.s8 %v5896
      %v5898 = vlaneseq
      %v5899 = vshrl.u32 %v5898, 7
      %v5900 = vsub.s32 %v5897, %v5899
      %v5901 = vrot.slane %v5873, %v5900
      %v5902 = vcombine.high %v5880, %v5880
      %v5903 = vcombine.high %v5887, %v5887
      %v5904 = vcombine.high %v5894, %v5894
      %v5905 = vcombine.high %v5901, %v5901
      %5970 = vst.msk [vmem:[%s190 + $0x6] sm:$0x1] %vm2549, %v5537
      %5971 = vst.msk [vmem:[%s190 + $0xe] sm:$0x1] %vm2549, %v5551
      %5972 = vst.msk [vmem:[%s190 + $0x16] sm:$0x1] %vm2549, %v5559
      %5973 = vst.msk [vmem:[%s190 + $0x1e] sm:$0x1] %vm2549, %v5561
      %5974 = vst.msk [vmem:[%s190 + $0x26] sm:$0x1] %vm2549, %v5544
      %5975 = vst.msk [vmem:[%s190 + $0x2e] sm:$0x1] %vm2549, %v5558
      %5976 = vst.msk [vmem:[%s190 + $0x36] sm:$0x1] %vm2549, %v5560
      %5977 = vst.msk [vmem:[%s190 + $0x3e] sm:$0x1] %vm2549, %v5562
      %5978 = vst.msk [vmem:[%s190 + $0x46] sm:$0x1] %vm2549, %v5586
      %5979 = vst.msk [vmem:[%s190 + $0x4e] sm:$0x1] %vm2549, %v5600
      %5980 = vst.msk [vmem:[%s190 + $0x56] sm:$0x1] %vm2549, %v5608
      %5981 = vst.msk [vmem:[%s190 + $0x5e] sm:$0x1] %vm2549, %v5610
      %5982 = vst.msk [vmem:[%s190 + $0x66] sm:$0x1] %vm2549, %v5593
      %5983 = vst.msk [vmem:[%s190 + $0x6e] sm:$0x1] %vm2549, %v5607
      %5984 = vst.msk [vmem:[%s190 + $0x76] sm:$0x1] %vm2549, %v5609
      %5985 = vst.msk [vmem:[%s190 + $0x7e] sm:$0x1] %vm2549, %v5611
      %5986 = vst.msk [vmem:[%s190 + $0x86] sm:$0x1] %vm2549, %v5635
      %5987 = vst.msk [vmem:[%s190 + $0x8e] sm:$0x1] %vm2549, %v5649
      %5988 = vst.msk [vmem:[%s190 + $0x96] sm:$0x1] %vm2549, %v5657
      %5989 = vst.msk [vmem:[%s190 + $0x9e] sm:$0x1] %vm2549, %v5659
      %5990 = vst.msk [vmem:[%s190 + $0xa6] sm:$0x1] %vm2549, %v5642
      %5991 = vst.msk [vmem:[%s190 + $0xae] sm:$0x1] %vm2549, %v5656
      %5992 = vst.msk [vmem:[%s190 + $0xb6] sm:$0x1] %vm2549, %v5658
      %5993 = vst.msk [vmem:[%s190 + $0xbe] sm:$0x1] %vm2549, %v5660
      %5994 = vst.msk [vmem:[%s190 + $0xc6] sm:$0x1] %vm2549, %v5684
      %5995 = vst.msk [vmem:[%s190 + $0xce] sm:$0x1] %vm2549, %v5698
      %5996 = vst.msk [vmem:[%s190 + $0xd6] sm:$0x1] %vm2549, %v5706
      %5997 = vst.msk [vmem:[%s190 + $0xde] sm:$0x1] %vm2549, %v5708
      %5998 = vst.msk [vmem:[%s190 + $0xe6] sm:$0x1] %vm2549, %v5691
      %5999 = vst.msk [vmem:[%s190 + $0xee] sm:$0x1] %vm2549, %v5705
      %6000 = vst.msk [vmem:[%s190 + $0xf6] sm:$0x1] %vm2549, %v5707
      %6001 = vst.msk [vmem:[%s190 + $0xfe] sm:$0x1] %vm2549, %v5709
      %6002 = vst.msk [vmem:[%s190 + $0x106] sm:$0x1] %vm2549, %v5733
      %6003 = vst.msk [vmem:[%s190 + $0x10e] sm:$0x1] %vm2549, %v5747
      %6004 = vst.msk [vmem:[%s190 + $0x116] sm:$0x1] %vm2549, %v5755
      %6005 = vst.msk [vmem:[%s190 + $0x11e] sm:$0x1] %vm2549, %v5757
      %6006 = vst.msk [vmem:[%s190 + $0x126] sm:$0x1] %vm2549, %v5740
      %6007 = vst.msk [vmem:[%s190 + $0x12e] sm:$0x1] %vm2549, %v5754
      %6008 = vst.msk [vmem:[%s190 + $0x136] sm:$0x1] %vm2549, %v5756
      %6009 = vst.msk [vmem:[%s190 + $0x13e] sm:$0x1] %vm2549, %v5758
      %6010 = vst.msk [vmem:[%s190 + $0x146] sm:$0x1] %vm2549, %v5782
      %6011 = vst.msk [vmem:[%s190 + $0x14e] sm:$0x1] %vm2549, %v5796
      %6012 = vst.msk [vmem:[%s190 + $0x156] sm:$0x1] %vm2549, %v5804
      %6013 = vst.msk [vmem:[%s190 + $0x15e] sm:$0x1] %vm2549, %v5806
      %6014 = vst.msk [vmem:[%s190 + $0x166] sm:$0x1] %vm2549, %v5789
      %6015 = vst.msk [vmem:[%s190 + $0x16e] sm:$0x1] %vm2549, %v5803
      %6016 = vst.msk [vmem:[%s190 + $0x176] sm:$0x1] %vm2549, %v5805
      %6017 = vst.msk [vmem:[%s190 + $0x17e] sm:$0x1] %vm2549, %v5807
      %6018 = vst.msk [vmem:[%s190 + $0x186] sm:$0x1] %vm2549, %v5831
      %6019 = vst.msk [vmem:[%s190 + $0x18e] sm:$0x1] %vm2549, %v5845
      %6020 = vst.msk [vmem:[%s190 + $0x196] sm:$0x1] %vm2549, %v5853
      %6021 = vst.msk [vmem:[%s190 + $0x19e] sm:$0x1] %vm2549, %v5855
      %6022 = vst.msk [vmem:[%s190 + $0x1a6] sm:$0x1] %vm2549, %v5838
      %6023 = vst.msk [vmem:[%s190 + $0x1ae] sm:$0x1] %vm2549, %v5852
      %6024 = vst.msk [vmem:[%s190 + $0x1b6] sm:$0x1] %vm2549, %v5854
      %6025 = vst.msk [vmem:[%s190 + $0x1be] sm:$0x1] %vm2549, %v5856
      %6026 = vst.msk [vmem:[%s190 + $0x1c6] sm:$0x1] %vm2549, %v5880
      %6027 = vst.msk [vmem:[%s190 + $0x1ce] sm:$0x1] %vm2549, %v5894
      %6028 = vst.msk [vmem:[%s190 + $0x1d6] sm:$0x1] %vm2549, %v5902
      %6029 = vst.msk [vmem:[%s190 + $0x1de] sm:$0x1] %vm2549, %v5904
      %6030 = vst.msk [vmem:[%s190 + $0x1e6] sm:$0x1] %vm2549, %v5887
      %6031 = vst.msk [vmem:[%s190 + $0x1ee] sm:$0x1] %vm2549, %v5901
      %6032 = vst.msk [vmem:[%s190 + $0x1f6] sm:$0x1] %vm2549, %v5903
      %6033 = vst.msk [vmem:[%s190 + $0x1fe] sm:$0x1] %vm2549, %v5905
      %v6034 = vld [vmem:[%s5489] sm:$0xff]
      %v6035 = vld [vmem:[%s5489 + $0x8] sm:$0xff]
      %v6036 = vld [vmem:[%s5489 + $0x10] sm:$0xff]
      %v6037 = vld [vmem:[%s5489 + $0x18] sm:$0xff]
      %v6038 = vld [vmem:[%s5489 + $0x20] sm:$0xff]
      %v6039 = vld [vmem:[%s5489 + $0x28] sm:$0xff]
      %v6040 = vld [vmem:[%s5489 + $0x30] sm:$0xff]
      %v6041 = vld [vmem:[%s5489 + $0x38] sm:$0xff]
      %s6042 = scalar_lea.vmem [#allocation4], 960
      %v6043 = vld [vmem:[%s6042] sm:$0xff]
      %v6044 = vld [vmem:[%s6042 + $0x8] sm:$0xff]
      %v6045 = vld [vmem:[%s6042 + $0x10] sm:$0xff]
      %v6046 = vld [vmem:[%s6042 + $0x18] sm:$0xff]
      %v6047 = vld [vmem:[%s6042 + $0x20] sm:$0xff]
      %v6048 = vld [vmem:[%s6042 + $0x28] sm:$0xff]
      %v6049 = vld [vmem:[%s6042 + $0x30] sm:$0xff]
      %v6050 = vld [vmem:[%s6042 + $0x38] sm:$0xff]
      %v6051 = vmax.f32 %v6034, %v6043
      %v6052 = vmax.f32 %v6035, %v6044
      %v6053 = vmax.f32 %v6036, %v6045
      %v6054 = vmax.f32 %v6037, %v6046
      %v6055 = vmax.f32 %v6038, %v6047
      %v6056 = vmax.f32 %v6039, %v6048
      %v6057 = vmax.f32 %v6040, %v6049
      %v6058 = vmax.f32 %v6041, %v6050
      %s6059 = scalar_lea.vmem [#allocation4], 1024
      %v6060 = vld [vmem:[%s6059] sm:$0xff]
      %v6061 = vld [vmem:[%s6059 + $0x8] sm:$0xff]
      %v6062 = vld [vmem:[%s6059 + $0x10] sm:$0xff]
      %v6063 = vld [vmem:[%s6059 + $0x18] sm:$0xff]
      %v6064 = vld [vmem:[%s6059 + $0x20] sm:$0xff]
      %v6065 = vld [vmem:[%s6059 + $0x28] sm:$0xff]
      %v6066 = vld [vmem:[%s6059 + $0x30] sm:$0xff]
      %v6067 = vld [vmem:[%s6059 + $0x38] sm:$0xff]
      %v6068 = vmax.f32 %v6051, %v6060
      %v6069 = vmax.f32 %v6052, %v6061
      %v6070 = vmax.f32 %v6053, %v6062
      %v6071 = vmax.f32 %v6054, %v6063
      %v6072 = vmax.f32 %v6055, %v6064
      %v6073 = vmax.f32 %v6056, %v6065
      %v6074 = vmax.f32 %v6057, %v6066
      %v6075 = vmax.f32 %v6058, %v6067
      %v6084 = vcombine.high %v6068, %v6068
      %v6086 = vunpack.c.l.s4 1966171168
      %v6087 = vunpack.c.0.s8 %v6086
      %v6088 = vlaneseq
      %v6089 = vshrl.u32 %v6088, 7
      %v6090 = vsub.s32 %v6087, %v6089
      %v6091 = vrot.slane %v6068, %v6090
      %v6093 = vunpack.c.l.s4 1966171168
      %v6094 = vunpack.c.0.s8 %v6093
      %v6095 = vlaneseq
      %v6096 = vshrl.u32 %v6095, 7
      %v6097 = vsub.s32 %v6094, %v6096
      %v6098 = vrot.slane %v6084, %v6097
      %v6099 = vcombine.high %v6091, %v6091
      %v6100 = vcombine.high %v6098, %v6098
      %v6102 = vunpack.c.l.s4 1966171168
      %v6103 = vunpack.c.0.s8 %v6102
      %v6104 = vlaneseq
      %v6105 = vshrl.u32 %v6104, 7
      %v6106 = vsub.s32 %v6103, %v6105
      %v6107 = vrot.slane %v6091, %v6106
      %v6109 = vunpack.c.l.s4 1966171168
      %v6110 = vunpack.c.0.s8 %v6109
      %v6111 = vlaneseq
      %v6112 = vshrl.u32 %v6111, 7
      %v6113 = vsub.s32 %v6110, %v6112
      %v6114 = vrot.slane %v6098, %v6113
      %v6116 = vunpack.c.l.s4 1966171168
      %v6117 = vunpack.c.0.s8 %v6116
      %v6118 = vlaneseq
      %v6119 = vshrl.u32 %v6118, 7
      %v6120 = vsub.s32 %v6117, %v6119
      %v6121 = vrot.slane %v6099, %v6120
      %v6123 = vunpack.c.l.s4 1966171168
      %v6124 = vunpack.c.0.s8 %v6123
      %v6125 = vlaneseq
      %v6126 = vshrl.u32 %v6125, 7
      %v6127 = vsub.s32 %v6124, %v6126
      %v6128 = vrot.slane %v6100, %v6127
      %v6129 = vcombine.high %v6107, %v6107
      %v6130 = vcombine.high %v6114, %v6114
      %v6131 = vcombine.high %v6121, %v6121
      %v6132 = vcombine.high %v6128, %v6128
      %v6133 = vcombine.high %v6069, %v6069
      %v6135 = vunpack.c.l.s4 1966171168
      %v6136 = vunpack.c.0.s8 %v6135
      %v6137 = vlaneseq
      %v6138 = vshrl.u32 %v6137, 7
      %v6139 = vsub.s32 %v6136, %v6138
      %v6140 = vrot.slane %v6069, %v6139
      %v6142 = vunpack.c.l.s4 1966171168
      %v6143 = vunpack.c.0.s8 %v6142
      %v6144 = vlaneseq
      %v6145 = vshrl.u32 %v6144, 7
      %v6146 = vsub.s32 %v6143, %v6145
      %v6147 = vrot.slane %v6133, %v6146
      %v6148 = vcombine.high %v6140, %v6140
      %v6149 = vcombine.high %v6147, %v6147
      %v6151 = vunpack.c.l.s4 1966171168
      %v6152 = vunpack.c.0.s8 %v6151
      %v6153 = vlaneseq
      %v6154 = vshrl.u32 %v6153, 7
      %v6155 = vsub.s32 %v6152, %v6154
      %v6156 = vrot.slane %v6140, %v6155
      %v6158 = vunpack.c.l.s4 1966171168
      %v6159 = vunpack.c.0.s8 %v6158
      %v6160 = vlaneseq
      %v6161 = vshrl.u32 %v6160, 7
      %v6162 = vsub.s32 %v6159, %v6161
      %v6163 = vrot.slane %v6147, %v6162
      %v6165 = vunpack.c.l.s4 1966171168
      %v6166 = vunpack.c.0.s8 %v6165
      %v6167 = vlaneseq
      %v6168 = vshrl.u32 %v6167, 7
      %v6169 = vsub.s32 %v6166, %v6168
      %v6170 = vrot.slane %v6148, %v6169
      %v6172 = vunpack.c.l.s4 1966171168
      %v6173 = vunpack.c.0.s8 %v6172
      %v6174 = vlaneseq
      %v6175 = vshrl.u32 %v6174, 7
      %v6176 = vsub.s32 %v6173, %v6175
      %v6177 = vrot.slane %v6149, %v6176
      %v6178 = vcombine.high %v6156, %v6156
      %v6179 = vcombine.high %v6163, %v6163
      %v6180 = vcombine.high %v6170, %v6170
      %v6181 = vcombine.high %v6177, %v6177
      %v6182 = vcombine.high %v6070, %v6070
      %v6184 = vunpack.c.l.s4 1966171168
      %v6185 = vunpack.c.0.s8 %v6184
      %v6186 = vlaneseq
      %v6187 = vshrl.u32 %v6186, 7
      %v6188 = vsub.s32 %v6185, %v6187
      %v6189 = vrot.slane %v6070, %v6188
      %v6191 = vunpack.c.l.s4 1966171168
      %v6192 = vunpack.c.0.s8 %v6191
      %v6193 = vlaneseq
      %v6194 = vshrl.u32 %v6193, 7
      %v6195 = vsub.s32 %v6192, %v6194
      %v6196 = vrot.slane %v6182, %v6195
      %v6197 = vcombine.high %v6189, %v6189
      %v6198 = vcombine.high %v6196, %v6196
      %v6200 = vunpack.c.l.s4 1966171168
      %v6201 = vunpack.c.0.s8 %v6200
      %v6202 = vlaneseq
      %v6203 = vshrl.u32 %v6202, 7
      %v6204 = vsub.s32 %v6201, %v6203
      %v6205 = vrot.slane %v6189, %v6204
      %v6207 = vunpack.c.l.s4 1966171168
      %v6208 = vunpack.c.0.s8 %v6207
      %v6209 = vlaneseq
      %v6210 = vshrl.u32 %v6209, 7
      %v6211 = vsub.s32 %v6208, %v6210
      %v6212 = vrot.slane %v6196, %v6211
      %v6214 = vunpack.c.l.s4 1966171168
      %v6215 = vunpack.c.0.s8 %v6214
      %v6216 = vlaneseq
      %v6217 = vshrl.u32 %v6216, 7
      %v6218 = vsub.s32 %v6215, %v6217
      %v6219 = vrot.slane %v6197, %v6218
      %v6221 = vunpack.c.l.s4 1966171168
      %v6222 = vunpack.c.0.s8 %v6221
      %v6223 = vlaneseq
      %v6224 = vshrl.u32 %v6223, 7
      %v6225 = vsub.s32 %v6222, %v6224
      %v6226 = vrot.slane %v6198, %v6225
      %v6227 = vcombine.high %v6205, %v6205
      %v6228 = vcombine.high %v6212, %v6212
      %v6229 = vcombine.high %v6219, %v6219
      %v6230 = vcombine.high %v6226, %v6226
      %v6231 = vcombine.high %v6071, %v6071
      %v6233 = vunpack.c.l.s4 1966171168
      %v6234 = vunpack.c.0.s8 %v6233
      %v6235 = vlaneseq
      %v6236 = vshrl.u32 %v6235, 7
      %v6237 = vsub.s32 %v6234, %v6236
      %v6238 = vrot.slane %v6071, %v6237
      %v6240 = vunpack.c.l.s4 1966171168
      %v6241 = vunpack.c.0.s8 %v6240
      %v6242 = vlaneseq
      %v6243 = vshrl.u32 %v6242, 7
      %v6244 = vsub.s32 %v6241, %v6243
      %v6245 = vrot.slane %v6231, %v6244
      %v6246 = vcombine.high %v6238, %v6238
      %v6247 = vcombine.high %v6245, %v6245
      %v6249 = vunpack.c.l.s4 1966171168
      %v6250 = vunpack.c.0.s8 %v6249
      %v6251 = vlaneseq
      %v6252 = vshrl.u32 %v6251, 7
      %v6253 = vsub.s32 %v6250, %v6252
      %v6254 = vrot.slane %v6238, %v6253
      %v6256 = vunpack.c.l.s4 1966171168
      %v6257 = vunpack.c.0.s8 %v6256
      %v6258 = vlaneseq
      %v6259 = vshrl.u32 %v6258, 7
      %v6260 = vsub.s32 %v6257, %v6259
      %v6261 = vrot.slane %v6245, %v6260
      %v6263 = vunpack.c.l.s4 1966171168
      %v6264 = vunpack.c.0.s8 %v6263
      %v6265 = vlaneseq
      %v6266 = vshrl.u32 %v6265, 7
      %v6267 = vsub.s32 %v6264, %v6266
      %v6268 = vrot.slane %v6246, %v6267
      %v6270 = vunpack.c.l.s4 1966171168
      %v6271 = vunpack.c.0.s8 %v6270
      %v6272 = vlaneseq
      %v6273 = vshrl.u32 %v6272, 7
      %v6274 = vsub.s32 %v6271, %v6273
      %v6275 = vrot.slane %v6247, %v6274
      %v6276 = vcombine.high %v6254, %v6254
      %v6277 = vcombine.high %v6261, %v6261
      %v6278 = vcombine.high %v6268, %v6268
      %v6279 = vcombine.high %v6275, %v6275
      %v6280 = vcombine.high %v6072, %v6072
      %v6282 = vunpack.c.l.s4 1966171168
      %v6283 = vunpack.c.0.s8 %v6282
      %v6284 = vlaneseq
      %v6285 = vshrl.u32 %v6284, 7
      %v6286 = vsub.s32 %v6283, %v6285
      %v6287 = vrot.slane %v6072, %v6286
      %v6289 = vunpack.c.l.s4 1966171168
      %v6290 = vunpack.c.0.s8 %v6289
      %v6291 = vlaneseq
      %v6292 = vshrl.u32 %v6291, 7
      %v6293 = vsub.s32 %v6290, %v6292
      %v6294 = vrot.slane %v6280, %v6293
      %v6295 = vcombine.high %v6287, %v6287
      %v6296 = vcombine.high %v6294, %v6294
      %v6298 = vunpack.c.l.s4 1966171168
      %v6299 = vunpack.c.0.s8 %v6298
      %v6300 = vlaneseq
      %v6301 = vshrl.u32 %v6300, 7
      %v6302 = vsub.s32 %v6299, %v6301
      %v6303 = vrot.slane %v6287, %v6302
      %v6305 = vunpack.c.l.s4 1966171168
      %v6306 = vunpack.c.0.s8 %v6305
      %v6307 = vlaneseq
      %v6308 = vshrl.u32 %v6307, 7
      %v6309 = vsub.s32 %v6306, %v6308
      %v6310 = vrot.slane %v6294, %v6309
      %v6312 = vunpack.c.l.s4 1966171168
      %v6313 = vunpack.c.0.s8 %v6312
      %v6314 = vlaneseq
      %v6315 = vshrl.u32 %v6314, 7
      %v6316 = vsub.s32 %v6313, %v6315
      %v6317 = vrot.slane %v6295, %v6316
      %v6319 = vunpack.c.l.s4 1966171168
      %v6320 = vunpack.c.0.s8 %v6319
      %v6321 = vlaneseq
      %v6322 = vshrl.u32 %v6321, 7
      %v6323 = vsub.s32 %v6320, %v6322
      %v6324 = vrot.slane %v6296, %v6323
      %v6325 = vcombine.high %v6303, %v6303
      %v6326 = vcombine.high %v6310, %v6310
      %v6327 = vcombine.high %v6317, %v6317
      %v6328 = vcombine.high %v6324, %v6324
      %v6329 = vcombine.high %v6073, %v6073
      %v6331 = vunpack.c.l.s4 1966171168
      %v6332 = vunpack.c.0.s8 %v6331
      %v6333 = vlaneseq
      %v6334 = vshrl.u32 %v6333, 7
      %v6335 = vsub.s32 %v6332, %v6334
      %v6336 = vrot.slane %v6073, %v6335
      %v6338 = vunpack.c.l.s4 1966171168
      %v6339 = vunpack.c.0.s8 %v6338
      %v6340 = vlaneseq
      %v6341 = vshrl.u32 %v6340, 7
      %v6342 = vsub.s32 %v6339, %v6341
      %v6343 = vrot.slane %v6329, %v6342
      %v6344 = vcombine.high %v6336, %v6336
      %v6345 = vcombine.high %v6343, %v6343
      %v6347 = vunpack.c.l.s4 1966171168
      %v6348 = vunpack.c.0.s8 %v6347
      %v6349 = vlaneseq
      %v6350 = vshrl.u32 %v6349, 7
      %v6351 = vsub.s32 %v6348, %v6350
      %v6352 = vrot.slane %v6336, %v6351
      %v6354 = vunpack.c.l.s4 1966171168
      %v6355 = vunpack.c.0.s8 %v6354
      %v6356 = vlaneseq
      %v6357 = vshrl.u32 %v6356, 7
      %v6358 = vsub.s32 %v6355, %v6357
      %v6359 = vrot.slane %v6343, %v6358
      %v6361 = vunpack.c.l.s4 1966171168
      %v6362 = vunpack.c.0.s8 %v6361
      %v6363 = vlaneseq
      %v6364 = vshrl.u32 %v6363, 7
      %v6365 = vsub.s32 %v6362, %v6364
      %v6366 = vrot.slane %v6344, %v6365
      %v6368 = vunpack.c.l.s4 1966171168
      %v6369 = vunpack.c.0.s8 %v6368
      %v6370 = vlaneseq
      %v6371 = vshrl.u32 %v6370, 7
      %v6372 = vsub.s32 %v6369, %v6371
      %v6373 = vrot.slane %v6345, %v6372
      %v6374 = vcombine.high %v6352, %v6352
      %v6375 = vcombine.high %v6359, %v6359
      %v6376 = vcombine.high %v6366, %v6366
      %v6377 = vcombine.high %v6373, %v6373
      %v6378 = vcombine.high %v6074, %v6074
      %v6380 = vunpack.c.l.s4 1966171168
      %v6381 = vunpack.c.0.s8 %v6380
      %v6382 = vlaneseq
      %v6383 = vshrl.u32 %v6382, 7
      %v6384 = vsub.s32 %v6381, %v6383
      %v6385 = vrot.slane %v6074, %v6384
      %v6387 = vunpack.c.l.s4 1966171168
      %v6388 = vunpack.c.0.s8 %v6387
      %v6389 = vlaneseq
      %v6390 = vshrl.u32 %v6389, 7
      %v6391 = vsub.s32 %v6388, %v6390
      %v6392 = vrot.slane %v6378, %v6391
      %v6393 = vcombine.high %v6385, %v6385
      %v6394 = vcombine.high %v6392, %v6392
      %v6396 = vunpack.c.l.s4 1966171168
      %v6397 = vunpack.c.0.s8 %v6396
      %v6398 = vlaneseq
      %v6399 = vshrl.u32 %v6398, 7
      %v6400 = vsub.s32 %v6397, %v6399
      %v6401 = vrot.slane %v6385, %v6400
      %v6403 = vunpack.c.l.s4 1966171168
      %v6404 = vunpack.c.0.s8 %v6403
      %v6405 = vlaneseq
      %v6406 = vshrl.u32 %v6405, 7
      %v6407 = vsub.s32 %v6404, %v6406
      %v6408 = vrot.slane %v6392, %v6407
      %v6410 = vunpack.c.l.s4 1966171168
      %v6411 = vunpack.c.0.s8 %v6410
      %v6412 = vlaneseq
      %v6413 = vshrl.u32 %v6412, 7
      %v6414 = vsub.s32 %v6411, %v6413
      %v6415 = vrot.slane %v6393, %v6414
      %v6417 = vunpack.c.l.s4 1966171168
      %v6418 = vunpack.c.0.s8 %v6417
      %v6419 = vlaneseq
      %v6420 = vshrl.u32 %v6419, 7
      %v6421 = vsub.s32 %v6418, %v6420
      %v6422 = vrot.slane %v6394, %v6421
      %v6423 = vcombine.high %v6401, %v6401
      %v6424 = vcombine.high %v6408, %v6408
      %v6425 = vcombine.high %v6415, %v6415
      %v6426 = vcombine.high %v6422, %v6422
      %v6427 = vcombine.high %v6075, %v6075
      %v6429 = vunpack.c.l.s4 1966171168
      %v6430 = vunpack.c.0.s8 %v6429
      %v6431 = vlaneseq
      %v6432 = vshrl.u32 %v6431, 7
      %v6433 = vsub.s32 %v6430, %v6432
      %v6434 = vrot.slane %v6075, %v6433
      %v6436 = vunpack.c.l.s4 1966171168
      %v6437 = vunpack.c.0.s8 %v6436
      %v6438 = vlaneseq
      %v6439 = vshrl.u32 %v6438, 7
      %v6440 = vsub.s32 %v6437, %v6439
      %v6441 = vrot.slane %v6427, %v6440
      %v6442 = vcombine.high %v6434, %v6434
      %v6443 = vcombine.high %v6441, %v6441
      %v6445 = vunpack.c.l.s4 1966171168
      %v6446 = vunpack.c.0.s8 %v6445
      %v6447 = vlaneseq
      %v6448 = vshrl.u32 %v6447, 7
      %v6449 = vsub.s32 %v6446, %v6448
      %v6450 = vrot.slane %v6434, %v6449
      %v6452 = vunpack.c.l.s4 1966171168
      %v6453 = vunpack.c.0.s8 %v6452
      %v6454 = vlaneseq
      %v6455 = vshrl.u32 %v6454, 7
      %v6456 = vsub.s32 %v6453, %v6455
      %v6457 = vrot.slane %v6441, %v6456
      %v6459 = vunpack.c.l.s4 1966171168
      %v6460 = vunpack.c.0.s8 %v6459
      %v6461 = vlaneseq
      %v6462 = vshrl.u32 %v6461, 7
      %v6463 = vsub.s32 %v6460, %v6462
      %v6464 = vrot.slane %v6442, %v6463
      %v6466 = vunpack.c.l.s4 1966171168
      %v6467 = vunpack.c.0.s8 %v6466
      %v6468 = vlaneseq
      %v6469 = vshrl.u32 %v6468, 7
      %v6470 = vsub.s32 %v6467, %v6469
      %v6471 = vrot.slane %v6443, %v6470
      %v6472 = vcombine.high %v6450, %v6450
      %v6473 = vcombine.high %v6457, %v6457
      %v6474 = vcombine.high %v6464, %v6464
      %v6475 = vcombine.high %v6471, %v6471
      %6540 = vst.msk [vmem:[%s190 + $0x7] sm:$0x1] %vm2549, %v6107
      %6541 = vst.msk [vmem:[%s190 + $0xf] sm:$0x1] %vm2549, %v6121
      %6542 = vst.msk [vmem:[%s190 + $0x17] sm:$0x1] %vm2549, %v6129
      %6543 = vst.msk [vmem:[%s190 + $0x1f] sm:$0x1] %vm2549, %v6131
      %6544 = vst.msk [vmem:[%s190 + $0x27] sm:$0x1] %vm2549, %v6114
      %6545 = vst.msk [vmem:[%s190 + $0x2f] sm:$0x1] %vm2549, %v6128
      %6546 = vst.msk [vmem:[%s190 + $0x37] sm:$0x1] %vm2549, %v6130
      %6547 = vst.msk [vmem:[%s190 + $0x3f] sm:$0x1] %vm2549, %v6132
      %6548 = vst.msk [vmem:[%s190 + $0x47] sm:$0x1] %vm2549, %v6156
      %6549 = vst.msk [vmem:[%s190 + $0x4f] sm:$0x1] %vm2549, %v6170
      %6550 = vst.msk [vmem:[%s190 + $0x57] sm:$0x1] %vm2549, %v6178
      %6551 = vst.msk [vmem:[%s190 + $0x5f] sm:$0x1] %vm2549, %v6180
      %6552 = vst.msk [vmem:[%s190 + $0x67] sm:$0x1] %vm2549, %v6163
      %6553 = vst.msk [vmem:[%s190 + $0x6f] sm:$0x1] %vm2549, %v6177
      %6554 = vst.msk [vmem:[%s190 + $0x77] sm:$0x1] %vm2549, %v6179
      %6555 = vst.msk [vmem:[%s190 + $0x7f] sm:$0x1] %vm2549, %v6181
      %6556 = vst.msk [vmem:[%s190 + $0x87] sm:$0x1] %vm2549, %v6205
      %6557 = vst.msk [vmem:[%s190 + $0x8f] sm:$0x1] %vm2549, %v6219
      %6558 = vst.msk [vmem:[%s190 + $0x97] sm:$0x1] %vm2549, %v6227
      %6559 = vst.msk [vmem:[%s190 + $0x9f] sm:$0x1] %vm2549, %v6229
      %6560 = vst.msk [vmem:[%s190 + $0xa7] sm:$0x1] %vm2549, %v6212
      %6561 = vst.msk [vmem:[%s190 + $0xaf] sm:$0x1] %vm2549, %v6226
      %6562 = vst.msk [vmem:[%s190 + $0xb7] sm:$0x1] %vm2549, %v6228
      %6563 = vst.msk [vmem:[%s190 + $0xbf] sm:$0x1] %vm2549, %v6230
      %6564 = vst.msk [vmem:[%s190 + $0xc7] sm:$0x1] %vm2549, %v6254
      %6565 = vst.msk [vmem:[%s190 + $0xcf] sm:$0x1] %vm2549, %v6268
      %6566 = vst.msk [vmem:[%s190 + $0xd7] sm:$0x1] %vm2549, %v6276
      %6567 = vst.msk [vmem:[%s190 + $0xdf] sm:$0x1] %vm2549, %v6278
      %6568 = vst.msk [vmem:[%s190 + $0xe7] sm:$0x1] %vm2549, %v6261
      %6569 = vst.msk [vmem:[%s190 + $0xef] sm:$0x1] %vm2549, %v6275
      %6570 = vst.msk [vmem:[%s190 + $0xf7] sm:$0x1] %vm2549, %v6277
      %6571 = vst.msk [vmem:[%s190 + $0xff] sm:$0x1] %vm2549, %v6279
      %6572 = vst.msk [vmem:[%s190 + $0x107] sm:$0x1] %vm2549, %v6303
      %6573 = vst.msk [vmem:[%s190 + $0x10f] sm:$0x1] %vm2549, %v6317
      %6574 = vst.msk [vmem:[%s190 + $0x117] sm:$0x1] %vm2549, %v6325
      %6575 = vst.msk [vmem:[%s190 + $0x11f] sm:$0x1] %vm2549, %v6327
      %6576 = vst.msk [vmem:[%s190 + $0x127] sm:$0x1] %vm2549, %v6310
      %6577 = vst.msk [vmem:[%s190 + $0x12f] sm:$0x1] %vm2549, %v6324
      %6578 = vst.msk [vmem:[%s190 + $0x137] sm:$0x1] %vm2549, %v6326
      %6579 = vst.msk [vmem:[%s190 + $0x13f] sm:$0x1] %vm2549, %v6328
      %6580 = vst.msk [vmem:[%s190 + $0x147] sm:$0x1] %vm2549, %v6352
      %6581 = vst.msk [vmem:[%s190 + $0x14f] sm:$0x1] %vm2549, %v6366
      %6582 = vst.msk [vmem:[%s190 + $0x157] sm:$0x1] %vm2549, %v6374
      %6583 = vst.msk [vmem:[%s190 + $0x15f] sm:$0x1] %vm2549, %v6376
      %6584 = vst.msk [vmem:[%s190 + $0x167] sm:$0x1] %vm2549, %v6359
      %6585 = vst.msk [vmem:[%s190 + $0x16f] sm:$0x1] %vm2549, %v6373
      %6586 = vst.msk [vmem:[%s190 + $0x177] sm:$0x1] %vm2549, %v6375
      %6587 = vst.msk [vmem:[%s190 + $0x17f] sm:$0x1] %vm2549, %v6377
      %6588 = vst.msk [vmem:[%s190 + $0x187] sm:$0x1] %vm2549, %v6401
      %6589 = vst.msk [vmem:[%s190 + $0x18f] sm:$0x1] %vm2549, %v6415
      %6590 = vst.msk [vmem:[%s190 + $0x197] sm:$0x1] %vm2549, %v6423
      %6591 = vst.msk [vmem:[%s190 + $0x19f] sm:$0x1] %vm2549, %v6425
      %6592 = vst.msk [vmem:[%s190 + $0x1a7] sm:$0x1] %vm2549, %v6408
      %6593 = vst.msk [vmem:[%s190 + $0x1af] sm:$0x1] %vm2549, %v6422
      %6594 = vst.msk [vmem:[%s190 + $0x1b7] sm:$0x1] %vm2549, %v6424
      %6595 = vst.msk [vmem:[%s190 + $0x1bf] sm:$0x1] %vm2549, %v6426
      %6596 = vst.msk [vmem:[%s190 + $0x1c7] sm:$0x1] %vm2549, %v6450
      %6597 = vst.msk [vmem:[%s190 + $0x1cf] sm:$0x1] %vm2549, %v6464
      %6598 = vst.msk [vmem:[%s190 + $0x1d7] sm:$0x1] %vm2549, %v6472
      %6599 = vst.msk [vmem:[%s190 + $0x1df] sm:$0x1] %vm2549, %v6474
      %6600 = vst.msk [vmem:[%s190 + $0x1e7] sm:$0x1] %vm2549, %v6457
      %6601 = vst.msk [vmem:[%s190 + $0x1ef] sm:$0x1] %vm2549, %v6471
      %6602 = vst.msk [vmem:[%s190 + $0x1f7] sm:$0x1] %vm2549, %v6473
      %6603 = vst.msk [vmem:[%s190 + $0x1ff] sm:$0x1] %vm2549, %v6475
      %p6604 = scmp.lt.s32.totalorder %s18, 1
      %s6605 = scalar_select %p6604, %s18, 1
      %p6606 = scmp.lt.s32.totalorder %s19, 0
      %s6607 = scalar_select %p6606, %s19, 0
      %s6608 = smul.addr %s6605, 64
      %s6609 = sadd.s32 %s6607, %s6608
      %s6610 = smul.addr %s6609, 8
      %s6611 = scalar_lea.vmem %s3, %s6610
      // Predicated region
      $region40: #{visible_net_resnet_forward.1} parent=31 // pred_check
        %p6612 = pneg %p114
      $region41: #{visible_net_resnet_forward.1} parent=31 // pred_check_branch
        %6614 = sbr.rel (%p6612) target = $region43
      $region42: #{visible_net_resnet_forward.1} parent=31 // pred_region
        _
      $region43: #{visible_net_resnet_forward.1} parent=31 // pred_fallthru
        _
    $region32: #{visible_net_resnet_forward.1} parent=5 // pred_fallthru
      _
    %p6615 = scmp.le.s32.totalorder 2, %s9
    // Predicated region
    $region44: #{visible_net_resnet_forward.1} parent=5 // pred_check
      %p6616 = pneg %p6615
    $region45: #{visible_net_resnet_forward.1} parent=5 // pred_check_branch
      %6618 = sbr.rel (%p6616) target = $region47
    $region46: #{visible_net_resnet_forward.1} parent=5 // pred_region
      %s6619 = ssub.s32 %s9, 2
      // Predicated region
      $region48: #{visible_net_resnet_forward.1} parent=46 // pred_check
        %p6620 = pneg %p120
      $region49: #{visible_net_resnet_forward.1} parent=46 // pred_check_branch
        %6622 = sbr.rel (%p6620) target = $region51
      $region50: #{visible_net_resnet_forward.1} parent=46 // pred_region
        %p6623 = scmp.lt.s32.totalorder %s20, 1
        %s6624 = scalar_select %p6623, %s20, 1
        %p6625 = scmp.lt.s32.totalorder %s21, 0
        %s6626 = scalar_select %p6625, %s21, 0
        %s6627 = smul.addr %s6624, 64
        %s6628 = sadd.s32 %s6626, %s6627
        %s6629 = smul.addr %s6628, 8
        %s6630 = scalar_lea.vmem %s3, %s6629
      $region51: #{visible_net_resnet_forward.1} parent=46 // pred_fallthru
        _
    $region47: #{visible_net_resnet_forward.1} parent=5 // pred_fallthru
      _
  $region6: #{visible_net_resnet_forward.1} parent=0 // loop_footer
    %s13 = sadd.s32 1, %s9
  $region7: #{visible_net_resnet_forward.1} parent=0 // loop_footer_branch
    %8 = sbr.rel target = $region3
  $region8: #{visible_net_resnet_forward.1} parent=0 // loop_exit
    _

</llo_original>
